<compile_context>
chip_gen: v6e
topology: v6e:2x2x1
jax: 0.10.0
libtpu: 0.0.40
codegen_flags: <defaults>
</compile_context>

<pallas_src>
import jax
import jax.numpy as jnp
from jax.experimental import pallas as pl
from jax.experimental.pallas import tpu as pltpu


def _global_attention_kernel(x_ref, w_ref, sx_ref, sy_ref, exy_ref, o_ref):
    # x_ref   : (1, in_c, HW)          per-batch input (native NCHW-flattened layout)
    # w_ref   : (1, 3*head_c, in_c)    fused [Wq ; Wk ; Wv] for head h
    # sx_ref  : (1, H, rel_c, Kc)      [I_q1 | pos_x(i) | 0]   Kc = head_c + H + W
    # sy_ref  : (1, W, rel_c, Kc)      [I_q2 | 0 | pos_y(j)]
    # exy_ref : (H+W, HW)              0/1 expansion rows: [ex ; ey]
    # o_ref   : (1, 1, head_c, HW)
    H = sx_ref.shape[1]
    W = sy_ref.shape[1]
    rel_c = sx_ref.shape[2]
    head_c = 2 * rel_c
    HW = x_ref.shape[2]

    x = x_ref[0]                                                     # (in_c, HW)

    # Fused q/k/v projection in the native layout: (3*head_c, in_c) @ (in_c, HW).
    qkv = jnp.dot(w_ref[0], x, preferred_element_type=jnp.float32)   # (3*head_c, HW)
    q = qkv[:head_c]                                                 # (head_c, HW)
    k = qkv[head_c:2 * head_c]                                       # (head_c, HW)
    v = qkv[2 * head_c:]                                             # (head_c, HW)

    # Query channels last for the per-query positional tables (one tiny transpose).
    q_t = q.T                                                        # (HW, head_c)
    q1 = q_t[:, :rel_c].reshape(H, W, rel_c)
    q2 = q_t[:, rel_c:].reshape(H, W, rel_c)

    # Fused logits LHS (HW, Kc) = [q | px | py], assembled with NO lane-dim
    # concatenation: the identity blocks inside sx/sy place q, the pos_x/pos_y
    # blocks produce the separable relative-position terms (VPU reduce, rel_c deep).
    lhs = (jnp.sum(q1[:, :, :, None] * sx_ref[0][:, None, :, :], axis=2)
           + jnp.sum(q2[:, :, :, None] * sy_ref[0][None, :, :, :], axis=2))   # (H, W, Kc)
    lhs = lhs.reshape(HW, head_c + H + W)

    # Fused logits RHS (Kc, HW) = [k ; ex ; ey]  (8-aligned sublane concat).
    rhs = jnp.concatenate([k, exy_ref[...]], axis=0)

    # Single MXU pass over the (HW, HW) logits: bf16 operands, f32 accumulation.
    logits = jnp.dot(lhs.astype(jnp.bfloat16), rhs.astype(jnp.bfloat16),
                     preferred_element_type=jnp.float32)             # (HW, HW)

    # Softmax over key positions (max/exp in f32).  The row-sum is folded into
    # the PV matmul below via appended ones rows on V (no XLU reduce).
    m = jnp.max(logits, axis=-1, keepdims=True)
    e = jnp.exp(logits - m)

    # V extended with 8 ones rows (keeps every shape a multiple of 8 sublanes;
    # the MXU result tile pads to 128 lanes anyway, so the extra columns are free).
    v_ext = jnp.concatenate([v, jnp.ones((8, HW), jnp.float32)], axis=0).T   # (HW, head_c+8)
    acc_ext = jnp.dot(e.astype(jnp.bfloat16), v_ext.astype(jnp.bfloat16),
                      preferred_element_type=jnp.float32)            # (HW, head_c+8)

    # Normalize AFTER the tiny transpose, in the dense (head_c, HW) layout.
    acc_t = acc_ext.T                                                # (head_c+8, HW)
    out = acc_t[:head_c] * pl.reciprocal(acc_t[head_c:head_c + 1], approx=False)
    o_ref[0, 0] = out


def global_attention(x, wq, wk, wv, rel_x, rel_y, n_head):
    B, in_c, H, W = x.shape
    out_c = wq.shape[0]
    assert out_c % n_head == 0, "out_c must be divisible by n_head"
    head_c = out_c // n_head
    assert head_c % 2 == 0, "channel dimension per head must be even"
    rel_c = head_c // 2
    HW = H * W
    Kc = head_c + H + W

    # Native NCHW-flattened layout; no wrapper-side transpose of x.
    x_r = x.reshape(B, in_c, HW)

    # Per-head fused projection weights: (n_head, 3*head_c, in_c) = [Wq ; Wk ; Wv].
    w_qkv = jnp.concatenate([wq.reshape(n_head, head_c, in_c),
                             wk.reshape(n_head, head_c, in_c),
                             wv.reshape(n_head, head_c, in_c)], axis=1)

    # Separable relative-position tables (tiny).
    idx_r = jnp.arange(H)[:, None] - jnp.arange(H)[None, :] + (H - 1)     # [i, a]
    idx_c = jnp.arange(W)[:, None] - jnp.arange(W)[None, :] + (W - 1)     # [j, b]
    pos_x = jnp.transpose(rel_x[:, :, :, 0][:, :, idx_r], (0, 2, 1, 3))   # (n_head, H, rel_c, H)
    pos_y = jnp.transpose(rel_y[:, :, 0, :][:, :, idx_c], (0, 2, 1, 3))   # (n_head, W, rel_c, W)

    # Identity blocks that place q into columns [0, head_c) of the fused LHS.
    id_q1 = jnp.eye(rel_c, head_c, dtype=jnp.float32)                 # 1 at [c, c]
    id_q2 = jnp.eye(rel_c, head_c, k=rel_c, dtype=jnp.float32)        # 1 at [c, rel_c + c]
    sx = jnp.concatenate([jnp.broadcast_to(id_q1, (n_head, H, rel_c, head_c)),
                          pos_x,
                          jnp.zeros((n_head, H, rel_c, W), jnp.float32)], axis=-1)
    sy = jnp.concatenate([jnp.broadcast_to(id_q2, (n_head, W, rel_c, head_c)),
                          jnp.zeros((n_head, W, rel_c, H), jnp.float32),
                          pos_y], axis=-1)

    # Constant 0/1 expansion rows: ex[a, m] = (m // W == a), ey[b, m] = (m % W == b).
    ex = (jnp.arange(HW)[None, :] // W == jnp.arange(H)[:, None])
    ey = (jnp.arange(HW)[None, :] % W == jnp.arange(W)[:, None])
    exy = jnp.concatenate([ex, ey], axis=0).astype(jnp.float32)       # (H+W, HW)

    # Grid (B outer, n_head inner): the large x block depends only on the outer
    # axis and stays VMEM-resident across all heads; per-head tables are tiny.
    out = pl.pallas_call(
        _global_attention_kernel,
        out_shape=jax.ShapeDtypeStruct((B, n_head, head_c, HW), jnp.float32),
        grid_spec=pltpu.PrefetchScalarGridSpec(
            num_scalar_prefetch=0,
            grid=(B, n_head),
            in_specs=[
                pl.BlockSpec((1, in_c, HW), lambda b, h: (b, 0, 0)),
                pl.BlockSpec((1, 3 * head_c, in_c), lambda b, h: (h, 0, 0)),
                pl.BlockSpec((1, H, rel_c, Kc), lambda b, h: (h, 0, 0, 0)),
                pl.BlockSpec((1, W, rel_c, Kc), lambda b, h: (h, 0, 0, 0)),
                pl.BlockSpec((H + W, HW), lambda b, h: (0, 0)),
            ],
            out_specs=pl.BlockSpec((1, 1, head_c, HW),
                                   lambda b, h: (b, h, 0, 0)),
        ),
        compiler_params=pltpu.CompilerParams(
            # No reduction axis -> both grid axes parallel (uses both TCs on v7x).
            dimension_semantics=("parallel", "parallel"),
            # ~2 MiB used at demo sizes; raise toward 100 MiB on v5e/v6e for
            # larger HW, keep <= ~56 MiB on v7x (then key-tile, see TODO above).
            vmem_limit_bytes=48 * 1024 * 1024),
    )(x_r, w_qkv, sx, sy, exy)

    return out.reshape(B, out_c, H, W)


# ---------------------------------------------------------------------------
# Pure-JAX reference mirroring the PyTorch forward (builds the full positional
# tensor, i.e. it does NOT use the separable decomposition -> independent check).
# ---------------------------------------------------------------------------
def _build_pos_rel(rel_x, rel_y, H, W):
    n_head, rel_c, rel_dim, _ = rel_x.shape
    base = jnp.concatenate(
        [jnp.broadcast_to(rel_x, (n_head, rel_c, rel_dim, rel_dim)),
         jnp.broadcast_to(rel_y, (n_head, rel_c, rel_dim, rel_dim))], axis=1)
    idx_r = jnp.arange(H)[:, None] - jnp.arange(H)[None, :] + (H - 1)   # [i, a]
    idx_c = jnp.arange(W)[:, None] - jnp.arange(W)[None, :] + (W - 1)   # [j, b]
    g = base[:, :, idx_r, :]              # (n_head, head_c, H, H, rel_dim)
    g = g[:, :, :, :, idx_c]              # (n_head, head_c, H, H, W, W)
    g = jnp.transpose(g, (0, 1, 2, 4, 3, 5))   # [h, c, i, j, a, b]
    return g.reshape(n_head, 2 * rel_c, H * W, H * W)


def reference(x, wq, wk, wv, rel_x, rel_y, n_head):
    B, in_c, H, W = x.shape
    out_c = wq.shape[0]
    head_c = out_c // n_head
    HW = H * W
    xf = x.reshape(B, in_c, HW)
    q = jnp.einsum('oi,bip->bop', wq, xf).reshape(B, n_head, head_c, HW)
    k = jnp.einsum('oi,bip->bop', wk, xf).reshape(B, n_head, head_c, HW)
    v = jnp.einsum('oi,bip->bop', wv, xf).reshape(B, n_head, head_c, HW)
    pos = _build_pos_rel(rel_x, rel_y, H, W)
    logits = (jnp.einsum('bhcp,bhcm->bhpm', q, k)
              + jnp.einsum('bhcp,hcpm->bhpm', q, pos))
    soft = jax.nn.softmax(logits, axis=-1)
    out = jnp.einsum('bhpm,bhcm->bhcp', soft, v)
    return out.reshape(B, out_c, H, W)


if __name__ == "__main__":
    key = jax.random.PRNGKey(0)
    B, in_c, out_c, n_head, dims = 2, 4, 16, 2, 16
    H = W = dims                       # forward requires spatial size == dims
    head_c = out_c // n_head
    rel_c = head_c // 2
    rel_dim = dims * 2 - 1

    k1, k2, k3, k4, k5, k6 = jax.random.split(key, 6)
    x = jax.random.normal(k1, (B, in_c, H, W), jnp.float32)
    # 1x1 conv weights (out_c, in_c, 1, 1) -> (out_c, in_c), bias=False
    wq = jax.random.normal(k2, (out_c, in_c), jnp.float32) * 0.1
    wk = jax.random.normal(k3, (out_c, in_c), jnp.float32) * 0.1
    wv = jax.random.normal(k4, (out_c, in_c), jnp.float32) * 0.1
    rel_x = jax.random.normal(k5, (n_head, rel_c, rel_dim, 1), jnp.float32)
    rel_y = jax.random.normal(k6, (n_head, rel_c, 1, rel_dim), jnp.float32)

    out = global_attention(x, wq, wk, wv, rel_x, rel_y, n_head)
    jax.block_until_ready(out)

    ref = reference(x, wq, wk, wv, rel_x, rel_y, n_head)
    max_err = float(jnp.max(jnp.abs(out - ref)))
    # 5e-3 tolerance: covers MXU rounding with bf16 operands (f32 accumulation).
    assert jnp.allclose(out, ref, atol=5e-3, rtol=5e-3), f"max_err={max_err}"
    print("KERNEL_OK")
</pallas_src>

<mosaic_0001>
module attributes {stable_mosaic.version = 11 : i64} {
  func.func @_global_attention_kernel(%arg0: i32, %arg1: i32, %arg2: memref<1x4x256xf32, #tpu.memory_space<vmem>>, %arg3: memref<1x24x4xf32, #tpu.memory_space<vmem>>, %arg4: memref<1x16x4x40xf32, #tpu.memory_space<vmem>>, %arg5: memref<1x16x4x40xf32, #tpu.memory_space<vmem>>, %arg6: memref<32x256xf32, #tpu.memory_space<vmem>>, %arg7: memref<1x1x8x256xf32, #tpu.memory_space<vmem>>) attributes {dimension_semantics = [#tpu.dimension_semantics<parallel>, #tpu.dimension_semantics<parallel>], iteration_bounds = array<i64: 2, 2>, scalar_prefetch = 0 : i64, scratch_operands = 0 : i64, tpu.core_type = #tpu.core_type<tc>, window_params = [{transform_indices = @transform_0, window_bounds = array<i64: 1, 4, 256>}, {transform_indices = @transform_1, window_bounds = array<i64: 1, 24, 4>}, {transform_indices = @transform_2, window_bounds = array<i64: 1, 16, 4, 40>}, {transform_indices = @transform_3, window_bounds = array<i64: 1, 16, 4, 40>}, {pipeline_mode = #tpu.pipeline_mode<synchronous>, transform_indices = @transform_4, window_bounds = array<i64: 32, 256>}, {transform_indices = @transform_5, window_bounds = array<i64: 1, 1, 8, 256>}]} {
    %c0 = arith.constant 0 : index
    %c0_0 = arith.constant 0 : index
    %c0_1 = arith.constant 0 : index
    %0 = vector.load %arg2[%c0, %c0_0, %c0_1] : memref<1x4x256xf32, #tpu.memory_space<vmem>>, vector<1x4x256xf32>
    %1 = vector.shape_cast %0 : vector<1x4x256xf32> to vector<4x256xf32>
    %c0_2 = arith.constant 0 : index
    %c0_3 = arith.constant 0 : index
    %c0_4 = arith.constant 0 : index
    %2 = vector.load %arg3[%c0_2, %c0_3, %c0_4] : memref<1x24x4xf32, #tpu.memory_space<vmem>>, vector<1x24x4xf32>
    %3 = vector.shape_cast %2 : vector<1x24x4xf32> to vector<24x4xf32>
    %cst = arith.constant dense<0.000000e+00> : vector<24x256xf32>
    %4 = tpu.matmul %3, %1, %cst {dimension_numbers = #tpu.dot_dimension_numbers<[1], [0], [0], [1], [0, 0, 1, 1], [], []>} : vector<24x4xf32>, vector<4x256xf32>, vector<24x256xf32> -> vector<24x256xf32>
    %5 = vector.extract_strided_slice %4 {offsets = [0, 0], sizes = [8, 256], strides = [1, 1]} : vector<24x256xf32> to vector<8x256xf32>
    %6 = vector.extract_strided_slice %4 {offsets = [8, 0], sizes = [8, 256], strides = [1, 1]} : vector<24x256xf32> to vector<8x256xf32>
    %7 = vector.extract_strided_slice %4 {offsets = [16, 0], sizes = [8, 256], strides = [1, 1]} : vector<24x256xf32> to vector<8x256xf32>
    %8 = tpu.transpose %5, [1, 0] : vector<8x256xf32> -> vector<256x8xf32>
    %9 = vector.extract_strided_slice %8 {offsets = [0, 0], sizes = [256, 4], strides = [1, 1]} : vector<256x8xf32> to vector<256x4xf32>
    %10 = vector.shape_cast %9 : vector<256x4xf32> to vector<16x16x4xf32>
    %11 = vector.extract_strided_slice %8 {offsets = [0, 4], sizes = [256, 4], strides = [1, 1]} : vector<256x8xf32> to vector<256x4xf32>
    %12 = vector.shape_cast %11 : vector<256x4xf32> to vector<16x16x4xf32>
    %13 = vector.shape_cast %10 : vector<16x16x4xf32> to vector<16x16x4x1xf32>
    %c0_5 = arith.constant 0 : index
    %c0_6 = arith.constant 0 : index
    %c0_7 = arith.constant 0 : index
    %c0_8 = arith.constant 0 : index
    %14 = vector.load %arg4[%c0_5, %c0_6, %c0_7, %c0_8] : memref<1x16x4x40xf32, #tpu.memory_space<vmem>>, vector<1x16x4x40xf32>
    %15 = vector.shape_cast %14 : vector<1x16x4x40xf32> to vector<16x4x40xf32>
    %16 = vector.shape_cast %15 : vector<16x4x40xf32> to vector<16x1x4x40xf32>
    %17 = vector.broadcast %13 : vector<16x16x4x1xf32> to vector<16x16x4x40xf32>
    %18 = vector.broadcast %16 : vector<16x1x4x40xf32> to vector<16x16x4x40xf32>
    %19 = arith.mulf %17, %18 : vector<16x16x4x40xf32>
    %cst_9 = arith.constant dense<0.000000e+00> : vector<16x16x40xf32>
    %20 = vector.multi_reduction <add>, %19, %cst_9 [2] : vector<16x16x4x40xf32> to vector<16x16x40xf32>
    %21 = vector.shape_cast %12 : vector<16x16x4xf32> to vector<16x16x4x1xf32>
    %c0_10 = arith.constant 0 : index
    %c0_11 = arith.constant 0 : index
    %c0_12 = arith.constant 0 : index
    %c0_13 = arith.constant 0 : index
    %22 = vector.load %arg5[%c0_10, %c0_11, %c0_12, %c0_13] : memref<1x16x4x40xf32, #tpu.memory_space<vmem>>, vector<1x16x4x40xf32>
    %23 = vector.shape_cast %22 : vector<1x16x4x40xf32> to vector<16x4x40xf32>
    %24 = vector.shape_cast %23 : vector<16x4x40xf32> to vector<1x16x4x40xf32>
    %25 = vector.broadcast %21 : vector<16x16x4x1xf32> to vector<16x16x4x40xf32>
    %26 = vector.broadcast %24 : vector<1x16x4x40xf32> to vector<16x16x4x40xf32>
    %27 = arith.mulf %25, %26 : vector<16x16x4x40xf32>
    %cst_14 = arith.constant dense<0.000000e+00> : vector<16x16x40xf32>
    %28 = vector.multi_reduction <add>, %27, %cst_14 [2] : vector<16x16x4x40xf32> to vector<16x16x40xf32>
    %29 = arith.addf %20, %28 : vector<16x16x40xf32>
    %30 = vector.shape_cast %29 : vector<16x16x40xf32> to vector<256x40xf32>
    %c0_15 = arith.constant 0 : index
    %c0_16 = arith.constant 0 : index
    %31 = vector.load %arg6[%c0_15, %c0_16] : memref<32x256xf32, #tpu.memory_space<vmem>>, vector<32x256xf32>
    %32 = tpu.concatenate %6, %31 in 0 : vector<8x256xf32>, vector<32x256xf32> -> vector<40x256xf32>
    %33 = arith.truncf %30 : vector<256x40xf32> to vector<256x40xbf16>
    %34 = arith.truncf %32 : vector<40x256xf32> to vector<40x256xbf16>
    %cst_17 = arith.constant dense<0.000000e+00> : vector<256x256xf32>
    %35 = tpu.matmul %33, %34, %cst_17 {dimension_numbers = #tpu.dot_dimension_numbers<[1], [0], [0], [1], [0, 0, 1, 1], [], []>} : vector<256x40xbf16>, vector<40x256xbf16>, vector<256x256xf32> -> vector<256x256xf32>
    %cst_18 = arith.constant dense<0xFF800000> : vector<256xf32>
    %36 = vector.multi_reduction <maximumf>, %35, %cst_18 [1] : vector<256x256xf32> to vector<256xf32>
    %37 = vector.shape_cast %36 : vector<256xf32> to vector<256x1xf32>
    %38 = vector.broadcast %37 : vector<256x1xf32> to vector<256x256xf32>
    %39 = arith.subf %35, %38 : vector<256x256xf32>
    %40 = math.exp %39 : vector<256x256xf32>
    %cst_19 = arith.constant 1.000000e+00 : f32
    %41 = vector.broadcast %cst_19 : f32 to vector<8x256xf32>
    %42 = tpu.concatenate %7, %41 in 0 : vector<8x256xf32>, vector<8x256xf32> -> vector<16x256xf32>
    %43 = tpu.transpose %42, [1, 0] : vector<16x256xf32> -> vector<256x16xf32>
    %44 = arith.truncf %40 : vector<256x256xf32> to vector<256x256xbf16>
    %45 = arith.truncf %43 : vector<256x16xf32> to vector<256x16xbf16>
    %cst_20 = arith.constant dense<0.000000e+00> : vector<256x16xf32>
    %46 = tpu.matmul %44, %45, %cst_20 {dimension_numbers = #tpu.dot_dimension_numbers<[1], [0], [0], [1], [0, 0, 1, 1], [], []>} : vector<256x256xbf16>, vector<256x16xbf16>, vector<256x16xf32> -> vector<256x16xf32>
    %47 = tpu.transpose %46, [1, 0] : vector<256x16xf32> -> vector<16x256xf32>
    %48 = vector.extract_strided_slice %47 {offsets = [0, 0], sizes = [8, 256], strides = [1, 1]} : vector<16x256xf32> to vector<8x256xf32>
    %49 = vector.extract_strided_slice %47 {offsets = [8, 0], sizes = [1, 256], strides = [1, 1]} : vector<16x256xf32> to vector<1x256xf32>
    %50 = tpu.reciprocal %49 : vector<1x256xf32> -> vector<1x256xf32>
    %51 = vector.broadcast %50 : vector<1x256xf32> to vector<8x256xf32>
    %52 = arith.mulf %48, %51 : vector<8x256xf32>
    %c0_21 = arith.constant 0 : index
    %c0_22 = arith.constant 0 : index
    %c0_23 = arith.constant 0 : index
    %c0_24 = arith.constant 0 : index
    %53 = vector.load %arg7[%c0_21, %c0_22, %c0_23, %c0_24] : memref<1x1x8x256xf32, #tpu.memory_space<vmem>>, vector<1x1x8x256xf32>
    %54 = vector.shape_cast %53 : vector<1x1x8x256xf32> to vector<8x256xf32>
    %55 = vector.shape_cast %52 : vector<8x256xf32> to vector<1x1x8x256xf32>
    tpu.vector_store %arg7[%c0_21, %c0_22, %c0_23, %c0_24], %55 {strides = array<i32>} : memref<1x1x8x256xf32, #tpu.memory_space<vmem>>, vector<1x1x8x256xf32>,
    return
  }
  func.func @transform_0(%arg0: i32, %arg1: i32) -> (i32, i32, i32) {
    %c0_i32 = arith.constant 0 : i32
    %c0_i32_0 = arith.constant 0 : i32
    %c0_i32_1 = arith.constant 0 : i32
    return %arg0, %c0_i32, %c0_i32_0 : i32, i32, i32
  }
  func.func @transform_1(%arg0: i32, %arg1: i32) -> (i32, i32, i32) {
    %c0_i32 = arith.constant 0 : i32
    %c0_i32_0 = arith.constant 0 : i32
    %c0_i32_1 = arith.constant 0 : i32
    return %arg1, %c0_i32, %c0_i32_0 : i32, i32, i32
  }
  func.func @transform_2(%arg0: i32, %arg1: i32) -> (i32, i32, i32, i32) {
    %c0_i32 = arith.constant 0 : i32
    %c0_i32_0 = arith.constant 0 : i32
    %c0_i32_1 = arith.constant 0 : i32
    %c0_i32_2 = arith.constant 0 : i32
    return %arg1, %c0_i32, %c0_i32_0, %c0_i32_1 : i32, i32, i32, i32
  }
  func.func @transform_3(%arg0: i32, %arg1: i32) -> (i32, i32, i32, i32) {
    %c0_i32 = arith.constant 0 : i32
    %c0_i32_0 = arith.constant 0 : i32
    %c0_i32_1 = arith.constant 0 : i32
    %c0_i32_2 = arith.constant 0 : i32
    return %arg1, %c0_i32, %c0_i32_0, %c0_i32_1 : i32, i32, i32, i32
  }
  func.func @transform_4(%arg0: i32, %arg1: i32) -> (i32, i32) {
    %c0_i32 = arith.constant 0 : i32
    %c0_i32_0 = arith.constant 0 : i32
    %c0_i32_1 = arith.constant 0 : i32
    return %c0_i32, %c0_i32_0 : i32, i32
  }
  func.func @transform_5(%arg0: i32, %arg1: i32) -> (i32, i32, i32, i32) {
    %c0_i32 = arith.constant 0 : i32
    %c0_i32_0 = arith.constant 0 : i32
    %c0_i32_1 = arith.constant 0 : i32
    return %arg0, %arg1, %c0_i32, %c0_i32_0 : i32, i32, i32, i32
  }
}

</mosaic_0001>

<llo_original>
// kernel: tpu_custom_call.1
$region0: #{tpu_custom_call.1}
  #allocation0 [shape = 'u32[]', space=smem, size = 0x4, offset = 0x4, fixed_abs, tag = 'smem constant byte address 0x4 - core index']
  #allocation1 [shape = 'u32[144,128]{1,0:T(1,128)}', space=vmem, size = 0x12000, scoped, tag = 'internal scratch']
  %s0 = inlined_call_operand.vmem [shape: f32[2,4,256], index: 0, kind: input, shape index: {}]
  %s1 = inlined_call_operand.vmem [shape: f32[2,24,4], index: 1, kind: input, shape index: {}]
  %s2 = inlined_call_operand.hbm [shape: f32[2,16,4,40], index: 2, kind: input, shape index: {}]
  %s3 = inlined_call_operand.hbm [shape: f32[2,16,4,40], index: 3, kind: input, shape index: {}]
  %s4 = inlined_call_operand.hbm [shape: f32[32,256], index: 4, kind: input, shape index: {}]
  %s5 = inlined_call_operand.hbm [shape: f32[2,2,8,256], index: 5, kind: output, shape index: {}]
  %s6 = sld [smem:[#allocation0]]
  $region65: #{tpu_custom_call.1} parent=0
    _
  %s8 = ssub.s32 1, %s6
  %s9 = scalar_select 0, %s8, %s6
  $region1: #{tpu_custom_call.1} parent=0
    #allocation2 [shape = 'u8[65536]{0}', space=vmem, size = 0x10000, scoped, tag = 'input window, operand 2']
    #allocation3 [shape = 's32[2]{0}', space=sflag, size = 0x8, scoped, tag = 'scoped memory for tpu_custom_call.1']
    #allocation4 [shape = 's32[2]{0}', space=sflag, size = 0x8, scoped, tag = 'scoped memory for tpu_custom_call.1']
    #allocation5 [shape = 'u8[65536]{0}', space=vmem, size = 0x10000, scoped, tag = 'input window, operand 3']
    #allocation6 [shape = 's32[2]{0}', space=sflag, size = 0x8, scoped, tag = 'scoped memory for tpu_custom_call.1']
    #allocation7 [shape = 'u8[32768]{0}', space=vmem, size = 0x8000, scoped, tag = 'input window, operand 4, single buffered']
    #allocation8 [shape = 'u8[16384]{0}', space=vmem, size = 0x4000, scoped, tag = 'output window, operand 0']
    %10 = vsyncpa [#allocation3], 0
    %s11 = scalar_lea.sflag [#allocation3], 1
    %12 = vsyncpa %s11, 0
    %13 = vsyncpa [#allocation6], 0
    %s14 = scalar_lea.sflag [#allocation6], 1
    %15 = vsyncpa %s14, 0
    %16 = vsyncpa [#allocation4], 0
    %s17 = scalar_lea.sflag [#allocation4], 1
    %18 = vsyncpa %s17, 0
    loop: start=0, step=1, limit=6
    $region2: #{tpu_custom_call.1} parent=1 // loop_pre_header
      _
    $region3: #{tpu_custom_call.1} parent=1 // loop_header
      %s20 = sphi 0, %s24
      %p21 = scmp.ge.s32.totalorder %s20, 6
      %s27 = sphi 0, %s39
      %s28 = sphi 0, %s35
      %s29 = sphi 0, %s27
      %s30 = sphi 0, %s28
      %s31 = sphi 0, %s29
      %s32 = sphi 0, %s30
      %s42 = sphi 0, %s44
      %s45 = sphi 0, %s42
      %s46 = sphi 0, %s45
      %s62 = sphi 0, %s46
      %s68 = sphi 0, %s70
      %s71 = sphi 0, %s68
      %s72 = sphi 0, %s71
      %s88 = sphi 0, %s72
      %s94 = sphi 0, %s96
      %s97 = sphi 0, %s94
      %s98 = sphi 0, %s97
      %s114 = sphi 0, %s98
      %s120 = sphi 0, %s122
      %s123 = sphi 0, %s120
      %s124 = sphi 0, %s123
      %s140 = sphi 0, %s124
      %s144 = sphi 0, %s144
      %s146 = sphi 0, %s144
      %s147 = sphi 0, %s146
      %s161 = sphi 0, %s147
      %s169 = sphi 0, %s171
      %s172 = sphi 0, %s169
      %s173 = sphi 0, %s172
      %s189 = sphi 0, %s173
    $region4: #{tpu_custom_call.1} parent=1 // loop_header_branch
      %23 = sbr.rel (%p21) target = $region8
    $region5: #{tpu_custom_call.1} parent=1 // loop_body
      %s25 = ssub.s32 %s20, 1
      %s26 = ssub.s32 %s20, 2
      %s33 = sadd.s32 1, %s28
      %p34 = scmp.ge.s32.totalorder %s33, 2
      %s35 = scalar_select %p34, 0, %s33
      %s36 = sadd.s32 1, %s27
      %s37 = scalar_select %p34, %s36, %s27
      %p38 = scmp.ge.s32.totalorder %s37, 2
      %s39 = scalar_select %p38, 0, %s37
      %s40 = ssub.s32 %s27, %s39
      %p41 = scmp.eq.s32.totalorder %s40, 0
      %s43 = sadd.s32 %s42, 1
      %s44 = scalar_select %p41, %s42, %s43
      %p47 = pneg %p41
      %p48 = scmp.eq.s32.totalorder %s20, 3
      %p49 = por %p47, %p48
      %p50 = scmp.ne.s32.totalorder %s42, %s45
      %p51 = scmp.eq.s32.totalorder %s20, 0
      %p52 = por %p50, %p51
      %p53 = scmp.ne.s32.totalorder %s42, %s45
      %p54 = scmp.eq.s32.totalorder %s25, 3
      %p55 = por %p53, %p54
      %p56 = scmp.ne.s32.totalorder %s45, %s46
      %p57 = scmp.eq.s32.totalorder %s25, 0
      %p58 = por %p56, %p57
      %p59 = scmp.ne.s32.totalorder %s45, %s46
      %p60 = scmp.eq.s32.totalorder %s26, 3
      %p61 = por %p59, %p60
      %p63 = scmp.ne.s32.totalorder %s46, %s62
      %p64 = scmp.eq.s32.totalorder %s26, 0
      %p65 = por %p63, %p64
      %s66 = ssub.s32 %s28, %s35
      %p67 = scmp.eq.s32.totalorder %s66, 0
      %s69 = sadd.s32 %s68, 1
      %s70 = scalar_select %p67, %s68, %s69
      %p73 = pneg %p67
      %p74 = scmp.eq.s32.totalorder %s20, 3
      %p75 = por %p73, %p74
      %p76 = scmp.ne.s32.totalorder %s68, %s71
      %p77 = scmp.eq.s32.totalorder %s20, 0
      %p78 = por %p76, %p77
      %p79 = scmp.ne.s32.totalorder %s68, %s71
      %p80 = scmp.eq.s32.totalorder %s25, 3
      %p81 = por %p79, %p80
      %p82 = scmp.ne.s32.totalorder %s71, %s72
      %p83 = scmp.eq.s32.totalorder %s25, 0
      %p84 = por %p82, %p83
      %p85 = scmp.ne.s32.totalorder %s71, %s72
      %p86 = scmp.eq.s32.totalorder %s26, 3
      %p87 = por %p85, %p86
      %p89 = scmp.ne.s32.totalorder %s72, %s88
      %p90 = scmp.eq.s32.totalorder %s26, 0
      %p91 = por %p89, %p90
      %s92 = ssub.s32 %s28, %s35
      %p93 = scmp.eq.s32.totalorder %s92, 0
      %s95 = sadd.s32 %s94, 1
      %s96 = scalar_select %p93, %s94, %s95
      %p99 = pneg %p93
      %p100 = scmp.eq.s32.totalorder %s20, 3
      %p101 = por %p99, %p100
      %p102 = scmp.ne.s32.totalorder %s94, %s97
      %p103 = scmp.eq.s32.totalorder %s20, 0
      %p104 = por %p102, %p103
      %p105 = scmp.ne.s32.totalorder %s94, %s97
      %p106 = scmp.eq.s32.totalorder %s25, 3
      %p107 = por %p105, %p106
      %p108 = scmp.ne.s32.totalorder %s97, %s98
      %p109 = scmp.eq.s32.totalorder %s25, 0
      %p110 = por %p108, %p109
      %p111 = scmp.ne.s32.totalorder %s97, %s98
      %p112 = scmp.eq.s32.totalorder %s26, 3
      %p113 = por %p111, %p112
      %p115 = scmp.ne.s32.totalorder %s98, %s114
      %p116 = scmp.eq.s32.totalorder %s26, 0
      %p117 = por %p115, %p116
      %s118 = ssub.s32 %s28, %s35
      %p119 = scmp.eq.s32.totalorder %s118, 0
      %s121 = sadd.s32 %s120, 1
      %s122 = scalar_select %p119, %s120, %s121
      %p125 = pneg %p119
      %p126 = scmp.eq.s32.totalorder %s20, 3
      %p127 = por %p125, %p126
      %p128 = scmp.ne.s32.totalorder %s120, %s123
      %p129 = scmp.eq.s32.totalorder %s20, 0
      %p130 = por %p128, %p129
      %p131 = scmp.ne.s32.totalorder %s120, %s123
      %p132 = scmp.eq.s32.totalorder %s25, 3
      %p133 = por %p131, %p132
      %p134 = scmp.ne.s32.totalorder %s123, %s124
      %p135 = scmp.eq.s32.totalorder %s25, 0
      %p136 = por %p134, %p135
      %p137 = scmp.ne.s32.totalorder %s123, %s124
      %p138 = scmp.eq.s32.totalorder %s26, 3
      %p139 = por %p137, %p138
      %p141 = scmp.ne.s32.totalorder %s124, %s140
      %p142 = scmp.eq.s32.totalorder %s26, 0
      %p143 = por %p141, %p142
      %s145 = sadd.s32 %s144, 1
      %p148 = scmp.eq.s32.totalorder %s20, 3
      %p149 = scmp.ne.s32.totalorder %s144, %s146
      %p150 = scmp.eq.s32.totalorder %s20, 0
      %p151 = por %p149, %p150
      %p152 = scmp.ne.s32.totalorder %s144, %s146
      %p153 = scmp.eq.s32.totalorder %s25, 3
      %p154 = por %p152, %p153
      %p155 = scmp.ne.s32.totalorder %s146, %s147
      %p156 = scmp.eq.s32.totalorder %s25, 0
      %p157 = por %p155, %p156
      %p158 = scmp.ne.s32.totalorder %s146, %s147
      %p159 = scmp.eq.s32.totalorder %s26, 3
      %p160 = por %p158, %p159
      %p162 = scmp.ne.s32.totalorder %s147, %s161
      %p163 = scmp.eq.s32.totalorder %s26, 0
      %p164 = por %p162, %p163
      %s165 = ssub.s32 %s27, %s39
      %s166 = ssub.s32 %s28, %s35
      %s167 = sor.u32 %s165, %s166
      %p168 = scmp.eq.s32.totalorder %s167, 0
      %s170 = sadd.s32 %s169, 1
      %s171 = scalar_select %p168, %s169, %s170
      %p174 = pneg %p168
      %p175 = scmp.eq.s32.totalorder %s20, 3
      %p176 = por %p174, %p175
      %p177 = scmp.ne.s32.totalorder %s169, %s172
      %p178 = scmp.eq.s32.totalorder %s20, 0
      %p179 = por %p177, %p178
      %p180 = scmp.ne.s32.totalorder %s169, %s172
      %p181 = scmp.eq.s32.totalorder %s25, 3
      %p182 = por %p180, %p181
      %p183 = scmp.ne.s32.totalorder %s172, %s173
      %p184 = scmp.eq.s32.totalorder %s25, 0
      %p185 = por %p183, %p184
      %p186 = scmp.ne.s32.totalorder %s172, %s173
      %p187 = scmp.eq.s32.totalorder %s26, 3
      %p188 = por %p186, %p187
      %p190 = scmp.ne.s32.totalorder %s173, %s189
      %p191 = scmp.eq.s32.totalorder %s26, 0
      %p192 = por %p190, %p191
      %p193 = scmp.le.s32.totalorder 1, %s20
      %p194 = scmp.lt.s32.totalorder %s20, 5
      %p195 = pnand %p193, %p194
      %p196 = pneg %p195
      // Predicated region
      $region9: #{tpu_custom_call.1} parent=5 // pred_check
        _
      $region10: #{tpu_custom_call.1} parent=5 // pred_check_branch
        %198 = sbr.rel (%p195) target = $region12
      $region11: #{tpu_custom_call.1} parent=5 // pred_region
        %s199 = ssub.s32 %s20, 1
        // Predicated region
        $region13: #{tpu_custom_call.1} parent=11 // pred_check
          %p200 = pneg %p157
        $region14: #{tpu_custom_call.1} parent=11 // pred_check_branch
          %202 = sbr.rel (%p200) target = $region16
        $region15: #{tpu_custom_call.1} parent=11 // pred_region
          %s204 = ssub.s32 1024, 1024
          %205 = vsyncadd [#allocation6], %s204
          %s206 = sshll.u32 [#allocation7], 4
          %s207 = int_to_ptr.vmem [resolvable:$true] %s206
          %212 = dma.hbm_to_vmem [thread:$0]  %s4, 1024, %s207, [#allocation6], 256, 256, 16
        $region16: #{tpu_custom_call.1} parent=11 // pred_fallthru
          _
      $region12: #{tpu_custom_call.1} parent=5 // pred_fallthru
        _
      %p213 = scmp.lt.s32.totalorder %s20, 4
      // Predicated region
      $region17: #{tpu_custom_call.1} parent=5 // pred_check
        %p214 = pneg %p213
      $region18: #{tpu_custom_call.1} parent=5 // pred_check_branch
        %216 = sbr.rel (%p214) target = $region20
      $region19: #{tpu_custom_call.1} parent=5 // pred_region
        // Predicated region
        $region21: #{tpu_custom_call.1} parent=19 // pred_check
          %p217 = pneg %p52
        $region22: #{tpu_custom_call.1} parent=19 // pred_check_branch
          %219 = sbr.rel (%p217) target = $region24
        $region23: #{tpu_custom_call.1} parent=19 // pred_region
          %p220 = scmp.lt.s32.totalorder %s27, 1
          %s221 = scalar_select %p220, %s27, 1
          %s222 = smul.addr %s221, 2
          %s223 = smul.addr %s222, 4
          %s224 = scalar_lea.vmem %s0, %s223
        $region24: #{tpu_custom_call.1} parent=19 // pred_fallthru
          _
        // Predicated region
        $region25: #{tpu_custom_call.1} parent=19 // pred_check
          %p225 = pneg %p78
        $region26: #{tpu_custom_call.1} parent=19 // pred_check_branch
          %227 = sbr.rel (%p225) target = $region28
        $region27: #{tpu_custom_call.1} parent=19 // pred_region
          %p228 = scmp.lt.s32.totalorder %s28, 1
          %s229 = scalar_select %p228, %s28, 1
          %s230 = smul.addr %s229, 3
          %s231 = smul.addr %s230, 8
          %s232 = scalar_lea.vmem %s1, %s231
        $region28: #{tpu_custom_call.1} parent=19 // pred_fallthru
          _
        // Predicated region
        $region29: #{tpu_custom_call.1} parent=19 // pred_check
          %p233 = pneg %p104
        $region30: #{tpu_custom_call.1} parent=19 // pred_check_branch
          %235 = sbr.rel (%p233) target = $region32
        $region31: #{tpu_custom_call.1} parent=19 // pred_region
          %s236 = sand.u32 %s94, 1
          %s237 = scalar_lea.sflag [#allocation3], %s236
          %s238 = sand.u32 %s94, 1
          %s239 = smul.addr %s238, 64
          %s240 = scalar_lea.vmem [#allocation2], %s239
          %s242 = ssub.s32 1024, 1024
          %243 = vsyncadd %s237, %s242
          %s244 = smul.addr %s28, 16
          %s245 = smul.addr %s244, 64
          %s246 = scalar_lea.hbm %s2, %s245
          %s247 = sshll.u32 %s240, 4
          %s248 = int_to_ptr.vmem [resolvable:$true] %s247
          %253 = dma.hbm_to_vmem [thread:$0]  %s246, 1024, %s248, %s237, 64, 64, 4
        $region32: #{tpu_custom_call.1} parent=19 // pred_fallthru
          _
        // Predicated region
        $region33: #{tpu_custom_call.1} parent=19 // pred_check
          %p254 = pneg %p130
        $region34: #{tpu_custom_call.1} parent=19 // pred_check_branch
          %256 = sbr.rel (%p254) target = $region36
        $region35: #{tpu_custom_call.1} parent=19 // pred_region
          %s257 = sand.u32 %s20, 1
          %s258 = scalar_lea.sflag [#allocation6], %s257
          %s259 = sand.u32 %s120, 1
          %s260 = smul.addr %s259, 64
          %s261 = scalar_lea.vmem [#allocation5], %s260
          %s263 = ssub.s32 1024, 1024
          %264 = vsyncadd %s258, %s263
          %s265 = smul.addr %s28, 16
          %s266 = smul.addr %s265, 64
          %s267 = scalar_lea.hbm %s3, %s266
          %s268 = sshll.u32 %s261, 4
          %s269 = int_to_ptr.vmem [resolvable:$true] %s268
          %274 = dma.hbm_to_vmem [thread:$0]  %s267, 1024, %s269, %s258, 64, 64, 4
        $region36: #{tpu_custom_call.1} parent=19 // pred_fallthru
          _
      $region20: #{tpu_custom_call.1} parent=5 // pred_fallthru
        _
      %p275 = scmp.le.s32.totalorder 1, %s20
      %p276 = scmp.lt.s32.totalorder %s20, 5
      %p277 = pnand %p275, %p276
      %p278 = pneg %p277
      // Predicated region
      $region37: #{tpu_custom_call.1} parent=5 // pred_check
        _
      $region38: #{tpu_custom_call.1} parent=5 // pred_check_branch
        %280 = sbr.rel (%p277) target = $region40
      $region39: #{tpu_custom_call.1} parent=5 // pred_region
        %s281 = ssub.s32 %s20, 1
        %s282 = sand.u32 %s97, 1
        %s283 = scalar_lea.sflag [#allocation3], %s282
        %s284 = sand.u32 %s97, 1
        %s285 = smul.addr %s284, 64
        %s286 = scalar_lea.vmem [#allocation2], %s285
        // Predicated region
        $region41: #{tpu_custom_call.1} parent=39 // pred_check
          %p287 = pneg %p110
        $region42: #{tpu_custom_call.1} parent=39 // pred_check_branch
          %289 = sbr.rel (%p287) target = $region44
        $region43: #{tpu_custom_call.1} parent=39 // pred_region
          %290 = dma.done %s283, 1024
        $region44: #{tpu_custom_call.1} parent=39 // pred_fallthru
          _
        %s291 = sand.u32 %s25, 1
        %s292 = scalar_lea.sflag [#allocation6], %s291
        %s293 = sand.u32 %s123, 1
        %s294 = smul.addr %s293, 64
        %s295 = scalar_lea.vmem [#allocation5], %s294
        // Predicated region
        $region45: #{tpu_custom_call.1} parent=39 // pred_check
          %p296 = pneg %p136
        $region46: #{tpu_custom_call.1} parent=39 // pred_check_branch
          %298 = sbr.rel (%p296) target = $region48
        $region47: #{tpu_custom_call.1} parent=39 // pred_region
          %299 = dma.done %s292, 1024
        $region48: #{tpu_custom_call.1} parent=39 // pred_fallthru
          _
        // Predicated region
        $region49: #{tpu_custom_call.1} parent=39 // pred_check
          %p300 = pneg %p157
        $region50: #{tpu_custom_call.1} parent=39 // pred_check_branch
          %302 = sbr.rel (%p300) target = $region52
        $region51: #{tpu_custom_call.1} parent=39 // pred_region
          %303 = dma.done [#allocation6], 1024
        $region52: #{tpu_custom_call.1} parent=39 // pred_fallthru
          _
        %p304 = scmp.lt.s32.totalorder %s29, 1
        %s305 = scalar_select %p304, %s29, 1
        %s306 = smul.addr %s305, 2
        %s307 = smul.addr %s306, 4
        %s308 = scalar_lea.vmem %s0, %s307
        %p309 = pneg %p58
        %p310 = pneg %p55
        %p311 = scmp.lt.s32.totalorder %s30, 1
        %s312 = scalar_select %p311, %s30, 1
        %s313 = smul.addr %s312, 3
        %s314 = smul.addr %s313, 8
        %s315 = scalar_lea.vmem %s1, %s314
        %p316 = pneg %p84
        %p317 = pneg %p81
        %s318 = sand.u32 %s97, 1
        %s319 = scalar_lea.sflag [#allocation3], %s318
        %s320 = sand.u32 %s97, 1
        %s321 = smul.addr %s320, 64
        %s322 = scalar_lea.vmem [#allocation2], %s321
        %p323 = pneg %p110
        %p324 = pneg %p107
        %s325 = sand.u32 %s25, 1
        %s326 = scalar_lea.sflag [#allocation6], %s325
        %s327 = sand.u32 %s123, 1
        %s328 = smul.addr %s327, 64
        %s329 = scalar_lea.vmem [#allocation5], %s328
        %p330 = pneg %p136
        %p331 = pneg %p133
        %p332 = pneg %p157
        %p333 = pneg %p154
        %p334 = pneg %p185
        %p335 = pneg %p182
        %s336 = sand.u32 %s172, 1
        %s337 = scalar_lea.sflag [#allocation4], %s336
        %s338 = sand.u32 %s172, 1
        %s339 = smul.addr %s338, 16
        %s340 = scalar_lea.vmem [#allocation8], %s339
        %p341 = scmp.lt.s32.totalorder %s29, 1
        %s342 = scalar_select %p341, %s29, 1
        %s343 = smul.addr %s342, 2
        %s344 = smul.addr %s343, 4
        %s345 = scalar_lea.vmem %s0, %s344
        %p346 = scmp.lt.s32.totalorder %s30, 1
        %s347 = scalar_select %p346, %s30, 1
        %s348 = smul.addr %s347, 3
        %s349 = smul.addr %s348, 8
        %s350 = scalar_lea.vmem %s1, %s349
        %v352 = vld [vmem:[%s345] sm:$0xff]
        %v353 = vld [vmem:[%s350] sm:$0xff]
        %v354 = vld [vmem:[%s350 + $0x8] sm:$0xff]
        %v355 = vld [vmem:[%s350 + $0x10] sm:$0xff]
        %v357 = vcombine.high %v352, %v352
        %vm358 = vcmask 31744
        %v360 = vsel %vm358, %v353, 0
        %v363 = vsel %vm358, %v354, 0
        %v366 = vsel %vm358, %v355, 0
        %vm368 = vcmask 1043456
        %v369 = vsel %vm368, %v352, 0
        %v371 = vsel %vm368, %v357, 0
        %373 = vmatprep.subr.mxu0 0.0
        %374 = vmatpush1.msra.mxu0 0.0
        %375 = vmatprep.subr.mxu0 0.0
        %376 = vmatpush1.msra.mxu0 0.0
        %377 = vmatprep.subr.mxu0 0.0
        %378 = vmatpush1.msra.mxu0 0.0
        %379 = vmatprep.subr.mxu0 0.0
        %380 = vmatpush1.msra.mxu0 0.0
        %381 = vmatprep.subr.mxu0 0.0
        %382 = vmatpush1.msra.mxu0 0.0
        %383 = vmatprep.subr.mxu0 0.0
        %384 = vmatpush1.msra.mxu0 0.0
        %385 = vmatprep.subr.mxu0 0.0
        %386 = vmatpush1.msra.mxu0 0.0
        %387 = vmatprep.subr.mxu0 0.0
        %388 = vmatpush1.msra.mxu0 0.0
        %389 = vmatprep.subr.mxu0 0.0
        %390 = vmatpush1.msra.mxu0 0.0
        %391 = vmatprep.subr.mxu0 0.0
        %392 = vmatpush1.msra.mxu0 0.0
        %393 = vmatprep.subr.mxu0 0.0
        %394 = vmatpush1.msra.mxu0 0.0
        %395 = vmatprep.subr.mxu0 0.0
        %396 = vmatpush1.msra.mxu0 0.0
        %397 = vmatprep.subr.mxu0 0.0
        %398 = vmatpush1.msra.mxu0 0.0
        %399 = vmatprep.subr.mxu0 0.0
        %400 = vmatpush1.msra.mxu0 0.0
        %401 = vmatprep.subr.mxu0 0.0
        %402 = vmatpush1.msra.mxu0 0.0
        %403 = vmatprep.subr.mxu0 %v371
        %404 = vmatpush1.msra.mxu0 %v369
        %405 = vmatprep.subr.mxu0 0.0
        %406 = vmatpush2.msra.mxu0 0.0
        %407 = vmatprep.subr.mxu0 0.0
        %408 = vmatpush2.msra.mxu0 0.0
        %409 = vmatprep.subr.mxu0 0.0
        %410 = vmatpush2.msra.mxu0 0.0
        %411 = vmatprep.subr.mxu0 0.0
        %412 = vmatpush2.msra.mxu0 0.0
        %413 = vmatprep.subr.mxu0 0.0
        %414 = vmatpush2.msra.mxu0 0.0
        %415 = vmatprep.subr.mxu0 0.0
        %416 = vmatpush2.msra.mxu0 0.0
        %417 = vmatprep.subr.mxu0 0.0
        %418 = vmatpush2.msra.mxu0 0.0
        %419 = vmatprep.subr.mxu0 0.0
        %420 = vmatpush2.msra.mxu0 0.0
        %421 = vmatprep.subr.mxu0 0.0
        %422 = vmatpush2.msra.mxu0 0.0
        %423 = vmatprep.subr.mxu0 0.0
        %424 = vmatpush2.msra.mxu0 0.0
        %425 = vmatprep.subr.mxu0 0.0
        %426 = vmatpush2.msra.mxu0 0.0
        %427 = vmatprep.subr.mxu0 0.0
        %428 = vmatpush2.msra.mxu0 0.0
        %429 = vmatprep.subr.mxu0 0.0
        %430 = vmatpush2.msra.mxu0 0.0
        %431 = vmatprep.subr.mxu0 0.0
        %432 = vmatpush2.msra.mxu0 0.0
        %433 = vmatprep.subr.mxu0 0.0
        %434 = vmatpush2.msra.mxu0 0.0
        %435 = vmatprep.subr.mxu0 0.0
        %436 = vmatpush2.msra.mxu0 0.0
        %437 = vmatprep.mubr.f32.mxu0 0.0
        %438 = vmatmul.mubr.f32.gmra.mxu0 %v360
        %v439 = vpop.f32.mrf.mxu0
        %v440 = vadd.f32 0.0, %v439
        %v441 = vpop.f32.mrf.mxu0
        %v442 = vadd.f32 0.0, %v441
        %443 = vmatprep.mubr.f32.mxu0 0.0
        %444 = vmatmul.mubr.f32.gmra.mxu0 %v363
        %v445 = vpop.f32.mrf.mxu0
        %v446 = vadd.f32 0.0, %v445
        %v447 = vpop.f32.mrf.mxu0
        %v448 = vadd.f32 0.0, %v447
        %449 = vmatprep.mubr.f32.mxu0 0.0
        %450 = vmatmul.mubr.f32.gmra.mxu0 %v366
        %v451 = vpop.f32.mrf.mxu0
        %v452 = vadd.f32 0.0, %v451
        %v453 = vpop.f32.mrf.mxu0
        %v454 = vadd.f32 0.0, %v453
        %455 = vdwg.mxu0
        %456 = vxpose.xlu0.b32.start [1/16] %v440, 128
        %457 = vxpose.xlu0.b32.cont [2/16] 0.0, 128
        %458 = vxpose.xlu0.b32.cont [3/16] 0.0, 128
        %459 = vxpose.xlu0.b32.cont [4/16] 0.0, 128
        %460 = vxpose.xlu0.b32.cont [5/16] 0.0, 128
        %461 = vxpose.xlu0.b32.cont [6/16] 0.0, 128
        %462 = vxpose.xlu0.b32.cont [7/16] 0.0, 128
        %463 = vxpose.xlu0.b32.cont [8/16] 0.0, 128
        %464 = vxpose.xlu0.b32.cont [9/16] 0.0, 128
        %465 = vxpose.xlu0.b32.cont [10/16] 0.0, 128
        %466 = vxpose.xlu0.b32.cont [11/16] 0.0, 128
        %467 = vxpose.xlu0.b32.cont [12/16] 0.0, 128
        %468 = vxpose.xlu0.b32.cont [13/16] 0.0, 128
        %469 = vxpose.xlu0.b32.cont [14/16] 0.0, 128
        %470 = vxpose.xlu0.b32.cont [15/16] 0.0, 128
        %471 = vxpose.xlu0.b32.end [16/16] 0.0, 128
        %v472 = vpop.trf.xlu0
        %v473 = vpop.trf.xlu0
        %v474 = vpop.trf.xlu0
        %v475 = vpop.trf.xlu0
        %v476 = vpop.trf.xlu0
        %v477 = vpop.trf.xlu0
        %v478 = vpop.trf.xlu0
        %v479 = vpop.trf.xlu0
        %v480 = vpop.trf.xlu0
        %v481 = vpop.trf.xlu0
        %v482 = vpop.trf.xlu0
        %v483 = vpop.trf.xlu0
        %v484 = vpop.trf.xlu0
        %v485 = vpop.trf.xlu0
        %v486 = vpop.trf.xlu0
        %v487 = vpop.trf.xlu0
        %488 = vxpose.xlu0.b32.start [1/16] %v442, 128
        %489 = vxpose.xlu0.b32.cont [2/16] 0.0, 128
        %490 = vxpose.xlu0.b32.cont [3/16] 0.0, 128
        %491 = vxpose.xlu0.b32.cont [4/16] 0.0, 128
        %492 = vxpose.xlu0.b32.cont [5/16] 0.0, 128
        %493 = vxpose.xlu0.b32.cont [6/16] 0.0, 128
        %494 = vxpose.xlu0.b32.cont [7/16] 0.0, 128
        %495 = vxpose.xlu0.b32.cont [8/16] 0.0, 128
        %496 = vxpose.xlu0.b32.cont [9/16] 0.0, 128
        %497 = vxpose.xlu0.b32.cont [10/16] 0.0, 128
        %498 = vxpose.xlu0.b32.cont [11/16] 0.0, 128
        %499 = vxpose.xlu0.b32.cont [12/16] 0.0, 128
        %500 = vxpose.xlu0.b32.cont [13/16] 0.0, 128
        %501 = vxpose.xlu0.b32.cont [14/16] 0.0, 128
        %502 = vxpose.xlu0.b32.cont [15/16] 0.0, 128
        %503 = vxpose.xlu0.b32.end [16/16] 0.0, 128
        %v504 = vpop.trf.xlu0
        %v505 = vpop.trf.xlu0
        %v506 = vpop.trf.xlu0
        %v507 = vpop.trf.xlu0
        %v508 = vpop.trf.xlu0
        %v509 = vpop.trf.xlu0
        %v510 = vpop.trf.xlu0
        %v511 = vpop.trf.xlu0
        %v512 = vpop.trf.xlu0
        %v513 = vpop.trf.xlu0
        %v514 = vpop.trf.xlu0
        %v515 = vpop.trf.xlu0
        %v516 = vpop.trf.xlu0
        %v517 = vpop.trf.xlu0
        %v518 = vpop.trf.xlu0
        %v519 = vpop.trf.xlu0
        %v520 = vlaneseq
        %v521 = vshrl.u32 %v520, 7
        %v522 = vsub.s32 0, %v521
        %v523 = vrot.slane %v472, %v522
        %525 = vbcast.lane.b32.xlu0 %v523, 256
        %v526 = vpop.permute.xlu0 %525
        %v527 = vlaneseq
        %v528 = vshrl.u32 %v527, 7
        %v529 = vsub.s32 1, %v528
        %v530 = vrot.slane %v472, %v529
        %532 = vbcast.lane.b32.xlu0 %v530, 256
        %v533 = vpop.permute.xlu0 %532
        %v534 = vlaneseq
        %v535 = vshrl.u32 %v534, 7
        %v536 = vsub.s32 2, %v535
        %v537 = vrot.slane %v472, %v536
        %539 = vbcast.lane.b32.xlu0 %v537, 256
        %v540 = vpop.permute.xlu0 %539
        %v541 = vlaneseq
        %v542 = vshrl.u32 %v541, 7
        %v543 = vsub.s32 3, %v542
        %v544 = vrot.slane %v472, %v543
        %546 = vbcast.lane.b32.xlu0 %v544, 256
        %v547 = vpop.permute.xlu0 %546
        %v548 = vlaneseq
        %v549 = vshrl.u32 %v548, 7
        %v550 = vsub.s32 4, %v549
        %v551 = vrot.slane %v472, %v550
        %553 = vbcast.lane.b32.xlu0 %v551, 256
        %v554 = vpop.permute.xlu0 %553
        %v555 = vlaneseq
        %v556 = vshrl.u32 %v555, 7
        %v557 = vsub.s32 5, %v556
        %v558 = vrot.slane %v472, %v557
        %560 = vbcast.lane.b32.xlu0 %v558, 256
        %v561 = vpop.permute.xlu0 %560
        %v562 = vlaneseq
        %v563 = vshrl.u32 %v562, 7
        %v564 = vsub.s32 6, %v563
        %v565 = vrot.slane %v472, %v564
        %567 = vbcast.lane.b32.xlu0 %v565, 256
        %v568 = vpop.permute.xlu0 %567
        %v569 = vlaneseq
        %v570 = vshrl.u32 %v569, 7
        %v571 = vsub.s32 7, %v570
        %v572 = vrot.slane %v472, %v571
        %574 = vbcast.lane.b32.xlu0 %v572, 256
        %v575 = vpop.permute.xlu0 %574
        %v576 = vlaneseq
        %v577 = vshrl.u32 %v576, 7
        %v578 = vsub.s32 0, %v577
        %v579 = vrot.slane %v473, %v578
        %581 = vbcast.lane.b32.xlu0 %v579, 256
        %v582 = vpop.permute.xlu0 %581
        %v583 = vlaneseq
        %v584 = vshrl.u32 %v583, 7
        %v585 = vsub.s32 1, %v584
        %v586 = vrot.slane %v473, %v585
        %588 = vbcast.lane.b32.xlu0 %v586, 256
        %v589 = vpop.permute.xlu0 %588
        %v590 = vlaneseq
        %v591 = vshrl.u32 %v590, 7
        %v592 = vsub.s32 2, %v591
        %v593 = vrot.slane %v473, %v592
        %595 = vbcast.lane.b32.xlu0 %v593, 256
        %v596 = vpop.permute.xlu0 %595
        %v597 = vlaneseq
        %v598 = vshrl.u32 %v597, 7
        %v599 = vsub.s32 3, %v598
        %v600 = vrot.slane %v473, %v599
        %602 = vbcast.lane.b32.xlu0 %v600, 256
        %v603 = vpop.permute.xlu0 %602
        %v604 = vlaneseq
        %v605 = vshrl.u32 %v604, 7
        %v606 = vsub.s32 4, %v605
        %v607 = vrot.slane %v473, %v606
        %609 = vbcast.lane.b32.xlu0 %v607, 256
        %v610 = vpop.permute.xlu0 %609
        %v611 = vlaneseq
        %v612 = vshrl.u32 %v611, 7
        %v613 = vsub.s32 5, %v612
        %v614 = vrot.slane %v473, %v613
        %616 = vbcast.lane.b32.xlu0 %v614, 256
        %v617 = vpop.permute.xlu0 %616
        %v618 = vlaneseq
        %v619 = vshrl.u32 %v618, 7
        %v620 = vsub.s32 6, %v619
        %v621 = vrot.slane %v473, %v620
        %623 = vbcast.lane.b32.xlu0 %v621, 256
        %v624 = vpop.permute.xlu0 %623
        %v625 = vlaneseq
        %v626 = vshrl.u32 %v625, 7
        %v627 = vsub.s32 7, %v626
        %v628 = vrot.slane %v473, %v627
        %630 = vbcast.lane.b32.xlu0 %v628, 256
        %v631 = vpop.permute.xlu0 %630
        %v632 = vlaneseq
        %v633 = vshrl.u32 %v632, 7
        %v634 = vsub.s32 0, %v633
        %v635 = vrot.slane %v474, %v634
        %637 = vbcast.lane.b32.xlu0 %v635, 256
        %v638 = vpop.permute.xlu0 %637
        %v639 = vlaneseq
        %v640 = vshrl.u32 %v639, 7
        %v641 = vsub.s32 1, %v640
        %v642 = vrot.slane %v474, %v641
        %644 = vbcast.lane.b32.xlu0 %v642, 256
        %v645 = vpop.permute.xlu0 %644
        %v646 = vlaneseq
        %v647 = vshrl.u32 %v646, 7
        %v648 = vsub.s32 2, %v647
        %v649 = vrot.slane %v474, %v648
        %651 = vbcast.lane.b32.xlu0 %v649, 256
        %v652 = vpop.permute.xlu0 %651
        %v653 = vlaneseq
        %v654 = vshrl.u32 %v653, 7
        %v655 = vsub.s32 3, %v654
        %v656 = vrot.slane %v474, %v655
        %658 = vbcast.lane.b32.xlu0 %v656, 256
        %v659 = vpop.permute.xlu0 %658
        %v660 = vlaneseq
        %v661 = vshrl.u32 %v660, 7
        %v662 = vsub.s32 4, %v661
        %v663 = vrot.slane %v474, %v662
        %665 = vbcast.lane.b32.xlu0 %v663, 256
        %v666 = vpop.permute.xlu0 %665
        %v667 = vlaneseq
        %v668 = vshrl.u32 %v667, 7
        %v669 = vsub.s32 5, %v668
        %v670 = vrot.slane %v474, %v669
        %672 = vbcast.lane.b32.xlu0 %v670, 256
        %v673 = vpop.permute.xlu0 %672
        %v674 = vlaneseq
        %v675 = vshrl.u32 %v674, 7
        %v676 = vsub.s32 6, %v675
        %v677 = vrot.slane %v474, %v676
        %679 = vbcast.lane.b32.xlu0 %v677, 256
        %v680 = vpop.permute.xlu0 %679
        %v681 = vlaneseq
        %v682 = vshrl.u32 %v681, 7
        %v683 = vsub.s32 7, %v682
        %v684 = vrot.slane %v474, %v683
        %686 = vbcast.lane.b32.xlu0 %v684, 256
        %v687 = vpop.permute.xlu0 %686
        %v688 = vlaneseq
        %v689 = vshrl.u32 %v688, 7
        %v690 = vsub.s32 0, %v689
        %v691 = vrot.slane %v475, %v690
        %693 = vbcast.lane.b32.xlu0 %v691, 256
        %v694 = vpop.permute.xlu0 %693
        %v695 = vlaneseq
        %v696 = vshrl.u32 %v695, 7
        %v697 = vsub.s32 1, %v696
        %v698 = vrot.slane %v475, %v697
        %700 = vbcast.lane.b32.xlu0 %v698, 256
        %v701 = vpop.permute.xlu0 %700
        %v702 = vlaneseq
        %v703 = vshrl.u32 %v702, 7
        %v704 = vsub.s32 2, %v703
        %v705 = vrot.slane %v475, %v704
        %707 = vbcast.lane.b32.xlu0 %v705, 256
        %v708 = vpop.permute.xlu0 %707
        %v709 = vlaneseq
        %v710 = vshrl.u32 %v709, 7
        %v711 = vsub.s32 3, %v710
        %v712 = vrot.slane %v475, %v711
        %714 = vbcast.lane.b32.xlu0 %v712, 256
        %v715 = vpop.permute.xlu0 %714
        %v716 = vlaneseq
        %v717 = vshrl.u32 %v716, 7
        %v718 = vsub.s32 4, %v717
        %v719 = vrot.slane %v475, %v718
        %721 = vbcast.lane.b32.xlu0 %v719, 256
        %v722 = vpop.permute.xlu0 %721
        %v723 = vlaneseq
        %v724 = vshrl.u32 %v723, 7
        %v725 = vsub.s32 5, %v724
        %v726 = vrot.slane %v475, %v725
        %728 = vbcast.lane.b32.xlu0 %v726, 256
        %v729 = vpop.permute.xlu0 %728
        %v730 = vlaneseq
        %v731 = vshrl.u32 %v730, 7
        %v732 = vsub.s32 6, %v731
        %v733 = vrot.slane %v475, %v732
        %735 = vbcast.lane.b32.xlu0 %v733, 256
        %v736 = vpop.permute.xlu0 %735
        %v737 = vlaneseq
        %v738 = vshrl.u32 %v737, 7
        %v739 = vsub.s32 7, %v738
        %v740 = vrot.slane %v475, %v739
        %742 = vbcast.lane.b32.xlu0 %v740, 256
        %v743 = vpop.permute.xlu0 %742
        %v744 = vlaneseq
        %v745 = vshrl.u32 %v744, 7
        %v746 = vsub.s32 0, %v745
        %v747 = vrot.slane %v476, %v746
        %749 = vbcast.lane.b32.xlu0 %v747, 256
        %v750 = vpop.permute.xlu0 %749
        %v751 = vlaneseq
        %v752 = vshrl.u32 %v751, 7
        %v753 = vsub.s32 1, %v752
        %v754 = vrot.slane %v476, %v753
        %756 = vbcast.lane.b32.xlu0 %v754, 256
        %v757 = vpop.permute.xlu0 %756
        %v758 = vlaneseq
        %v759 = vshrl.u32 %v758, 7
        %v760 = vsub.s32 2, %v759
        %v761 = vrot.slane %v476, %v760
        %763 = vbcast.lane.b32.xlu0 %v761, 256
        %v764 = vpop.permute.xlu0 %763
        %v765 = vlaneseq
        %v766 = vshrl.u32 %v765, 7
        %v767 = vsub.s32 3, %v766
        %v768 = vrot.slane %v476, %v767
        %770 = vbcast.lane.b32.xlu0 %v768, 256
        %v771 = vpop.permute.xlu0 %770
        %v772 = vlaneseq
        %v773 = vshrl.u32 %v772, 7
        %v774 = vsub.s32 4, %v773
        %v775 = vrot.slane %v476, %v774
        %777 = vbcast.lane.b32.xlu0 %v775, 256
        %v778 = vpop.permute.xlu0 %777
        %v779 = vlaneseq
        %v780 = vshrl.u32 %v779, 7
        %v781 = vsub.s32 5, %v780
        %v782 = vrot.slane %v476, %v781
        %784 = vbcast.lane.b32.xlu0 %v782, 256
        %v785 = vpop.permute.xlu0 %784
        %v786 = vlaneseq
        %v787 = vshrl.u32 %v786, 7
        %v788 = vsub.s32 6, %v787
        %v789 = vrot.slane %v476, %v788
        %791 = vbcast.lane.b32.xlu0 %v789, 256
        %v792 = vpop.permute.xlu0 %791
        %v793 = vlaneseq
        %v794 = vshrl.u32 %v793, 7
        %v795 = vsub.s32 7, %v794
        %v796 = vrot.slane %v476, %v795
        %798 = vbcast.lane.b32.xlu0 %v796, 256
        %v799 = vpop.permute.xlu0 %798
        %v800 = vlaneseq
        %v801 = vshrl.u32 %v800, 7
        %v802 = vsub.s32 0, %v801
        %v803 = vrot.slane %v477, %v802
        %805 = vbcast.lane.b32.xlu0 %v803, 256
        %v806 = vpop.permute.xlu0 %805
        %v807 = vlaneseq
        %v808 = vshrl.u32 %v807, 7
        %v809 = vsub.s32 1, %v808
        %v810 = vrot.slane %v477, %v809
        %812 = vbcast.lane.b32.xlu0 %v810, 256
        %v813 = vpop.permute.xlu0 %812
        %v814 = vlaneseq
        %v815 = vshrl.u32 %v814, 7
        %v816 = vsub.s32 2, %v815
        %v817 = vrot.slane %v477, %v816
        %819 = vbcast.lane.b32.xlu0 %v817, 256
        %v820 = vpop.permute.xlu0 %819
        %v821 = vlaneseq
        %v822 = vshrl.u32 %v821, 7
        %v823 = vsub.s32 3, %v822
        %v824 = vrot.slane %v477, %v823
        %826 = vbcast.lane.b32.xlu0 %v824, 256
        %v827 = vpop.permute.xlu0 %826
        %v828 = vlaneseq
        %v829 = vshrl.u32 %v828, 7
        %v830 = vsub.s32 4, %v829
        %v831 = vrot.slane %v477, %v830
        %833 = vbcast.lane.b32.xlu0 %v831, 256
        %v834 = vpop.permute.xlu0 %833
        %v835 = vlaneseq
        %v836 = vshrl.u32 %v835, 7
        %v837 = vsub.s32 5, %v836
        %v838 = vrot.slane %v477, %v837
        %840 = vbcast.lane.b32.xlu0 %v838, 256
        %v841 = vpop.permute.xlu0 %840
        %v842 = vlaneseq
        %v843 = vshrl.u32 %v842, 7
        %v844 = vsub.s32 6, %v843
        %v845 = vrot.slane %v477, %v844
        %847 = vbcast.lane.b32.xlu0 %v845, 256
        %v848 = vpop.permute.xlu0 %847
        %v849 = vlaneseq
        %v850 = vshrl.u32 %v849, 7
        %v851 = vsub.s32 7, %v850
        %v852 = vrot.slane %v477, %v851
        %854 = vbcast.lane.b32.xlu0 %v852, 256
        %v855 = vpop.permute.xlu0 %854
        %v856 = vlaneseq
        %v857 = vshrl.u32 %v856, 7
        %v858 = vsub.s32 0, %v857
        %v859 = vrot.slane %v478, %v858
        %861 = vbcast.lane.b32.xlu0 %v859, 256
        %v862 = vpop.permute.xlu0 %861
        %v863 = vlaneseq
        %v864 = vshrl.u32 %v863, 7
        %v865 = vsub.s32 1, %v864
        %v866 = vrot.slane %v478, %v865
        %868 = vbcast.lane.b32.xlu0 %v866, 256
        %v869 = vpop.permute.xlu0 %868
        %v870 = vlaneseq
        %v871 = vshrl.u32 %v870, 7
        %v872 = vsub.s32 2, %v871
        %v873 = vrot.slane %v478, %v872
        %875 = vbcast.lane.b32.xlu0 %v873, 256
        %v876 = vpop.permute.xlu0 %875
        %v877 = vlaneseq
        %v878 = vshrl.u32 %v877, 7
        %v879 = vsub.s32 3, %v878
        %v880 = vrot.slane %v478, %v879
        %882 = vbcast.lane.b32.xlu0 %v880, 256
        %v883 = vpop.permute.xlu0 %882
        %v884 = vlaneseq
        %v885 = vshrl.u32 %v884, 7
        %v886 = vsub.s32 4, %v885
        %v887 = vrot.slane %v478, %v886
        %889 = vbcast.lane.b32.xlu0 %v887, 256
        %v890 = vpop.permute.xlu0 %889
        %v891 = vlaneseq
        %v892 = vshrl.u32 %v891, 7
        %v893 = vsub.s32 5, %v892
        %v894 = vrot.slane %v478, %v893
        %896 = vbcast.lane.b32.xlu0 %v894, 256
        %v897 = vpop.permute.xlu0 %896
        %v898 = vlaneseq
        %v899 = vshrl.u32 %v898, 7
        %v900 = vsub.s32 6, %v899
        %v901 = vrot.slane %v478, %v900
        %903 = vbcast.lane.b32.xlu0 %v901, 256
        %v904 = vpop.permute.xlu0 %903
        %v905 = vlaneseq
        %v906 = vshrl.u32 %v905, 7
        %v907 = vsub.s32 7, %v906
        %v908 = vrot.slane %v478, %v907
        %910 = vbcast.lane.b32.xlu0 %v908, 256
        %v911 = vpop.permute.xlu0 %910
        %v912 = vlaneseq
        %v913 = vshrl.u32 %v912, 7
        %v914 = vsub.s32 0, %v913
        %v915 = vrot.slane %v479, %v914
        %917 = vbcast.lane.b32.xlu0 %v915, 256
        %v918 = vpop.permute.xlu0 %917
        %v919 = vlaneseq
        %v920 = vshrl.u32 %v919, 7
        %v921 = vsub.s32 1, %v920
        %v922 = vrot.slane %v479, %v921
        %924 = vbcast.lane.b32.xlu0 %v922, 256
        %v925 = vpop.permute.xlu0 %924
        %v926 = vlaneseq
        %v927 = vshrl.u32 %v926, 7
        %v928 = vsub.s32 2, %v927
        %v929 = vrot.slane %v479, %v928
        %931 = vbcast.lane.b32.xlu0 %v929, 256
        %v932 = vpop.permute.xlu0 %931
        %v933 = vlaneseq
        %v934 = vshrl.u32 %v933, 7
        %v935 = vsub.s32 3, %v934
        %v936 = vrot.slane %v479, %v935
        %938 = vbcast.lane.b32.xlu0 %v936, 256
        %v939 = vpop.permute.xlu0 %938
        %v940 = vlaneseq
        %v941 = vshrl.u32 %v940, 7
        %v942 = vsub.s32 4, %v941
        %v943 = vrot.slane %v479, %v942
        %945 = vbcast.lane.b32.xlu0 %v943, 256
        %v946 = vpop.permute.xlu0 %945
        %v947 = vlaneseq
        %v948 = vshrl.u32 %v947, 7
        %v949 = vsub.s32 5, %v948
        %v950 = vrot.slane %v479, %v949
        %952 = vbcast.lane.b32.xlu0 %v950, 256
        %v953 = vpop.permute.xlu0 %952
        %v954 = vlaneseq
        %v955 = vshrl.u32 %v954, 7
        %v956 = vsub.s32 6, %v955
        %v957 = vrot.slane %v479, %v956
        %959 = vbcast.lane.b32.xlu0 %v957, 256
        %v960 = vpop.permute.xlu0 %959
        %v961 = vlaneseq
        %v962 = vshrl.u32 %v961, 7
        %v963 = vsub.s32 7, %v962
        %v964 = vrot.slane %v479, %v963
        %966 = vbcast.lane.b32.xlu0 %v964, 256
        %v967 = vpop.permute.xlu0 %966
        %v968 = vlaneseq
        %v969 = vshrl.u32 %v968, 7
        %v970 = vsub.s32 0, %v969
        %v971 = vrot.slane %v480, %v970
        %973 = vbcast.lane.b32.xlu0 %v971, 256
        %v974 = vpop.permute.xlu0 %973
        %v975 = vlaneseq
        %v976 = vshrl.u32 %v975, 7
        %v977 = vsub.s32 1, %v976
        %v978 = vrot.slane %v480, %v977
        %980 = vbcast.lane.b32.xlu0 %v978, 256
        %v981 = vpop.permute.xlu0 %980
        %v982 = vlaneseq
        %v983 = vshrl.u32 %v982, 7
        %v984 = vsub.s32 2, %v983
        %v985 = vrot.slane %v480, %v984
        %987 = vbcast.lane.b32.xlu0 %v985, 256
        %v988 = vpop.permute.xlu0 %987
        %v989 = vlaneseq
        %v990 = vshrl.u32 %v989, 7
        %v991 = vsub.s32 3, %v990
        %v992 = vrot.slane %v480, %v991
        %994 = vbcast.lane.b32.xlu0 %v992, 256
        %v995 = vpop.permute.xlu0 %994
        %v996 = vlaneseq
        %v997 = vshrl.u32 %v996, 7
        %v998 = vsub.s32 4, %v997
        %v999 = vrot.slane %v480, %v998
        %1001 = vbcast.lane.b32.xlu0 %v999, 256
        %v1002 = vpop.permute.xlu0 %1001
        %v1003 = vlaneseq
        %v1004 = vshrl.u32 %v1003, 7
        %v1005 = vsub.s32 5, %v1004
        %v1006 = vrot.slane %v480, %v1005
        %1008 = vbcast.lane.b32.xlu0 %v1006, 256
        %v1009 = vpop.permute.xlu0 %1008
        %v1010 = vlaneseq
        %v1011 = vshrl.u32 %v1010, 7
        %v1012 = vsub.s32 6, %v1011
        %v1013 = vrot.slane %v480, %v1012
        %1015 = vbcast.lane.b32.xlu0 %v1013, 256
        %v1016 = vpop.permute.xlu0 %1015
        %v1017 = vlaneseq
        %v1018 = vshrl.u32 %v1017, 7
        %v1019 = vsub.s32 7, %v1018
        %v1020 = vrot.slane %v480, %v1019
        %1022 = vbcast.lane.b32.xlu0 %v1020, 256
        %v1023 = vpop.permute.xlu0 %1022
        %v1024 = vlaneseq
        %v1025 = vshrl.u32 %v1024, 7
        %v1026 = vsub.s32 0, %v1025
        %v1027 = vrot.slane %v481, %v1026
        %1029 = vbcast.lane.b32.xlu0 %v1027, 256
        %v1030 = vpop.permute.xlu0 %1029
        %v1031 = vlaneseq
        %v1032 = vshrl.u32 %v1031, 7
        %v1033 = vsub.s32 1, %v1032
        %v1034 = vrot.slane %v481, %v1033
        %1036 = vbcast.lane.b32.xlu0 %v1034, 256
        %v1037 = vpop.permute.xlu0 %1036
        %v1038 = vlaneseq
        %v1039 = vshrl.u32 %v1038, 7
        %v1040 = vsub.s32 2, %v1039
        %v1041 = vrot.slane %v481, %v1040
        %1043 = vbcast.lane.b32.xlu0 %v1041, 256
        %v1044 = vpop.permute.xlu0 %1043
        %v1045 = vlaneseq
        %v1046 = vshrl.u32 %v1045, 7
        %v1047 = vsub.s32 3, %v1046
        %v1048 = vrot.slane %v481, %v1047
        %1050 = vbcast.lane.b32.xlu0 %v1048, 256
        %v1051 = vpop.permute.xlu0 %1050
        %v1052 = vlaneseq
        %v1053 = vshrl.u32 %v1052, 7
        %v1054 = vsub.s32 4, %v1053
        %v1055 = vrot.slane %v481, %v1054
        %1057 = vbcast.lane.b32.xlu0 %v1055, 256
        %v1058 = vpop.permute.xlu0 %1057
        %v1059 = vlaneseq
        %v1060 = vshrl.u32 %v1059, 7
        %v1061 = vsub.s32 5, %v1060
        %v1062 = vrot.slane %v481, %v1061
        %1064 = vbcast.lane.b32.xlu0 %v1062, 256
        %v1065 = vpop.permute.xlu0 %1064
        %v1066 = vlaneseq
        %v1067 = vshrl.u32 %v1066, 7
        %v1068 = vsub.s32 6, %v1067
        %v1069 = vrot.slane %v481, %v1068
        %1071 = vbcast.lane.b32.xlu0 %v1069, 256
        %v1072 = vpop.permute.xlu0 %1071
        %v1073 = vlaneseq
        %v1074 = vshrl.u32 %v1073, 7
        %v1075 = vsub.s32 7, %v1074
        %v1076 = vrot.slane %v481, %v1075
        %1078 = vbcast.lane.b32.xlu0 %v1076, 256
        %v1079 = vpop.permute.xlu0 %1078
        %v1080 = vlaneseq
        %v1081 = vshrl.u32 %v1080, 7
        %v1082 = vsub.s32 0, %v1081
        %v1083 = vrot.slane %v482, %v1082
        %1085 = vbcast.lane.b32.xlu0 %v1083, 256
        %v1086 = vpop.permute.xlu0 %1085
        %v1087 = vlaneseq
        %v1088 = vshrl.u32 %v1087, 7
        %v1089 = vsub.s32 1, %v1088
        %v1090 = vrot.slane %v482, %v1089
        %1092 = vbcast.lane.b32.xlu0 %v1090, 256
        %v1093 = vpop.permute.xlu0 %1092
        %v1094 = vlaneseq
        %v1095 = vshrl.u32 %v1094, 7
        %v1096 = vsub.s32 2, %v1095
        %v1097 = vrot.slane %v482, %v1096
        %1099 = vbcast.lane.b32.xlu0 %v1097, 256
        %v1100 = vpop.permute.xlu0 %1099
        %v1101 = vlaneseq
        %v1102 = vshrl.u32 %v1101, 7
        %v1103 = vsub.s32 3, %v1102
        %v1104 = vrot.slane %v482, %v1103
        %1106 = vbcast.lane.b32.xlu0 %v1104, 256
        %v1107 = vpop.permute.xlu0 %1106
        %v1108 = vlaneseq
        %v1109 = vshrl.u32 %v1108, 7
        %v1110 = vsub.s32 4, %v1109
        %v1111 = vrot.slane %v482, %v1110
        %1113 = vbcast.lane.b32.xlu0 %v1111, 256
        %v1114 = vpop.permute.xlu0 %1113
        %v1115 = vlaneseq
        %v1116 = vshrl.u32 %v1115, 7
        %v1117 = vsub.s32 5, %v1116
        %v1118 = vrot.slane %v482, %v1117
        %1120 = vbcast.lane.b32.xlu0 %v1118, 256
        %v1121 = vpop.permute.xlu0 %1120
        %v1122 = vlaneseq
        %v1123 = vshrl.u32 %v1122, 7
        %v1124 = vsub.s32 6, %v1123
        %v1125 = vrot.slane %v482, %v1124
        %1127 = vbcast.lane.b32.xlu0 %v1125, 256
        %v1128 = vpop.permute.xlu0 %1127
        %v1129 = vlaneseq
        %v1130 = vshrl.u32 %v1129, 7
        %v1131 = vsub.s32 7, %v1130
        %v1132 = vrot.slane %v482, %v1131
        %1134 = vbcast.lane.b32.xlu0 %v1132, 256
        %v1135 = vpop.permute.xlu0 %1134
        %v1136 = vlaneseq
        %v1137 = vshrl.u32 %v1136, 7
        %v1138 = vsub.s32 0, %v1137
        %v1139 = vrot.slane %v483, %v1138
        %1141 = vbcast.lane.b32.xlu0 %v1139, 256
        %v1142 = vpop.permute.xlu0 %1141
        %v1143 = vlaneseq
        %v1144 = vshrl.u32 %v1143, 7
        %v1145 = vsub.s32 1, %v1144
        %v1146 = vrot.slane %v483, %v1145
        %1148 = vbcast.lane.b32.xlu0 %v1146, 256
        %v1149 = vpop.permute.xlu0 %1148
        %v1150 = vlaneseq
        %v1151 = vshrl.u32 %v1150, 7
        %v1152 = vsub.s32 2, %v1151
        %v1153 = vrot.slane %v483, %v1152
        %1155 = vbcast.lane.b32.xlu0 %v1153, 256
        %v1156 = vpop.permute.xlu0 %1155
        %v1157 = vlaneseq
        %v1158 = vshrl.u32 %v1157, 7
        %v1159 = vsub.s32 3, %v1158
        %v1160 = vrot.slane %v483, %v1159
        %1162 = vbcast.lane.b32.xlu0 %v1160, 256
        %v1163 = vpop.permute.xlu0 %1162
        %v1164 = vlaneseq
        %v1165 = vshrl.u32 %v1164, 7
        %v1166 = vsub.s32 4, %v1165
        %v1167 = vrot.slane %v483, %v1166
        %1169 = vbcast.lane.b32.xlu0 %v1167, 256
        %v1170 = vpop.permute.xlu0 %1169
        %v1171 = vlaneseq
        %v1172 = vshrl.u32 %v1171, 7
        %v1173 = vsub.s32 5, %v1172
        %v1174 = vrot.slane %v483, %v1173
        %1176 = vbcast.lane.b32.xlu0 %v1174, 256
        %v1177 = vpop.permute.xlu0 %1176
        %v1178 = vlaneseq
        %v1179 = vshrl.u32 %v1178, 7
        %v1180 = vsub.s32 6, %v1179
        %v1181 = vrot.slane %v483, %v1180
        %1183 = vbcast.lane.b32.xlu0 %v1181, 256
        %v1184 = vpop.permute.xlu0 %1183
        %v1185 = vlaneseq
        %v1186 = vshrl.u32 %v1185, 7
        %v1187 = vsub.s32 7, %v1186
        %v1188 = vrot.slane %v483, %v1187
        %1190 = vbcast.lane.b32.xlu0 %v1188, 256
        %v1191 = vpop.permute.xlu0 %1190
        %v1192 = vlaneseq
        %v1193 = vshrl.u32 %v1192, 7
        %v1194 = vsub.s32 0, %v1193
        %v1195 = vrot.slane %v484, %v1194
        %1197 = vbcast.lane.b32.xlu0 %v1195, 256
        %v1198 = vpop.permute.xlu0 %1197
        %v1199 = vlaneseq
        %v1200 = vshrl.u32 %v1199, 7
        %v1201 = vsub.s32 1, %v1200
        %v1202 = vrot.slane %v484, %v1201
        %1204 = vbcast.lane.b32.xlu0 %v1202, 256
        %v1205 = vpop.permute.xlu0 %1204
        %v1206 = vlaneseq
        %v1207 = vshrl.u32 %v1206, 7
        %v1208 = vsub.s32 2, %v1207
        %v1209 = vrot.slane %v484, %v1208
        %1211 = vbcast.lane.b32.xlu0 %v1209, 256
        %v1212 = vpop.permute.xlu0 %1211
        %v1213 = vlaneseq
        %v1214 = vshrl.u32 %v1213, 7
        %v1215 = vsub.s32 3, %v1214
        %v1216 = vrot.slane %v484, %v1215
        %1218 = vbcast.lane.b32.xlu0 %v1216, 256
        %v1219 = vpop.permute.xlu0 %1218
        %v1220 = vlaneseq
        %v1221 = vshrl.u32 %v1220, 7
        %v1222 = vsub.s32 4, %v1221
        %v1223 = vrot.slane %v484, %v1222
        %1225 = vbcast.lane.b32.xlu0 %v1223, 256
        %v1226 = vpop.permute.xlu0 %1225
        %v1227 = vlaneseq
        %v1228 = vshrl.u32 %v1227, 7
        %v1229 = vsub.s32 5, %v1228
        %v1230 = vrot.slane %v484, %v1229
        %1232 = vbcast.lane.b32.xlu0 %v1230, 256
        %v1233 = vpop.permute.xlu0 %1232
        %v1234 = vlaneseq
        %v1235 = vshrl.u32 %v1234, 7
        %v1236 = vsub.s32 6, %v1235
        %v1237 = vrot.slane %v484, %v1236
        %1239 = vbcast.lane.b32.xlu0 %v1237, 256
        %v1240 = vpop.permute.xlu0 %1239
        %v1241 = vlaneseq
        %v1242 = vshrl.u32 %v1241, 7
        %v1243 = vsub.s32 7, %v1242
        %v1244 = vrot.slane %v484, %v1243
        %1246 = vbcast.lane.b32.xlu0 %v1244, 256
        %v1247 = vpop.permute.xlu0 %1246
        %v1248 = vlaneseq
        %v1249 = vshrl.u32 %v1248, 7
        %v1250 = vsub.s32 0, %v1249
        %v1251 = vrot.slane %v485, %v1250
        %1253 = vbcast.lane.b32.xlu0 %v1251, 256
        %v1254 = vpop.permute.xlu0 %1253
        %v1255 = vlaneseq
        %v1256 = vshrl.u32 %v1255, 7
        %v1257 = vsub.s32 1, %v1256
        %v1258 = vrot.slane %v485, %v1257
        %1260 = vbcast.lane.b32.xlu0 %v1258, 256
        %v1261 = vpop.permute.xlu0 %1260
        %v1262 = vlaneseq
        %v1263 = vshrl.u32 %v1262, 7
        %v1264 = vsub.s32 2, %v1263
        %v1265 = vrot.slane %v485, %v1264
        %1267 = vbcast.lane.b32.xlu0 %v1265, 256
        %v1268 = vpop.permute.xlu0 %1267
        %v1269 = vlaneseq
        %v1270 = vshrl.u32 %v1269, 7
        %v1271 = vsub.s32 3, %v1270
        %v1272 = vrot.slane %v485, %v1271
        %1274 = vbcast.lane.b32.xlu0 %v1272, 256
        %v1275 = vpop.permute.xlu0 %1274
        %v1276 = vlaneseq
        %v1277 = vshrl.u32 %v1276, 7
        %v1278 = vsub.s32 4, %v1277
        %v1279 = vrot.slane %v485, %v1278
        %1281 = vbcast.lane.b32.xlu0 %v1279, 256
        %v1282 = vpop.permute.xlu0 %1281
        %v1283 = vlaneseq
        %v1284 = vshrl.u32 %v1283, 7
        %v1285 = vsub.s32 5, %v1284
        %v1286 = vrot.slane %v485, %v1285
        %1288 = vbcast.lane.b32.xlu0 %v1286, 256
        %v1289 = vpop.permute.xlu0 %1288
        %v1290 = vlaneseq
        %v1291 = vshrl.u32 %v1290, 7
        %v1292 = vsub.s32 6, %v1291
        %v1293 = vrot.slane %v485, %v1292
        %1295 = vbcast.lane.b32.xlu0 %v1293, 256
        %v1296 = vpop.permute.xlu0 %1295
        %v1297 = vlaneseq
        %v1298 = vshrl.u32 %v1297, 7
        %v1299 = vsub.s32 7, %v1298
        %v1300 = vrot.slane %v485, %v1299
        %1302 = vbcast.lane.b32.xlu0 %v1300, 256
        %v1303 = vpop.permute.xlu0 %1302
        %v1304 = vlaneseq
        %v1305 = vshrl.u32 %v1304, 7
        %v1306 = vsub.s32 0, %v1305
        %v1307 = vrot.slane %v486, %v1306
        %1309 = vbcast.lane.b32.xlu0 %v1307, 256
        %v1310 = vpop.permute.xlu0 %1309
        %v1311 = vlaneseq
        %v1312 = vshrl.u32 %v1311, 7
        %v1313 = vsub.s32 1, %v1312
        %v1314 = vrot.slane %v486, %v1313
        %1316 = vbcast.lane.b32.xlu0 %v1314, 256
        %v1317 = vpop.permute.xlu0 %1316
        %v1318 = vlaneseq
        %v1319 = vshrl.u32 %v1318, 7
        %v1320 = vsub.s32 2, %v1319
        %v1321 = vrot.slane %v486, %v1320
        %1323 = vbcast.lane.b32.xlu0 %v1321, 256
        %v1324 = vpop.permute.xlu0 %1323
        %v1325 = vlaneseq
        %v1326 = vshrl.u32 %v1325, 7
        %v1327 = vsub.s32 3, %v1326
        %v1328 = vrot.slane %v486, %v1327
        %1330 = vbcast.lane.b32.xlu0 %v1328, 256
        %v1331 = vpop.permute.xlu0 %1330
        %v1332 = vlaneseq
        %v1333 = vshrl.u32 %v1332, 7
        %v1334 = vsub.s32 4, %v1333
        %v1335 = vrot.slane %v486, %v1334
        %1337 = vbcast.lane.b32.xlu0 %v1335, 256
        %v1338 = vpop.permute.xlu0 %1337
        %v1339 = vlaneseq
        %v1340 = vshrl.u32 %v1339, 7
        %v1341 = vsub.s32 5, %v1340
        %v1342 = vrot.slane %v486, %v1341
        %1344 = vbcast.lane.b32.xlu0 %v1342, 256
        %v1345 = vpop.permute.xlu0 %1344
        %v1346 = vlaneseq
        %v1347 = vshrl.u32 %v1346, 7
        %v1348 = vsub.s32 6, %v1347
        %v1349 = vrot.slane %v486, %v1348
        %1351 = vbcast.lane.b32.xlu0 %v1349, 256
        %v1352 = vpop.permute.xlu0 %1351
        %v1353 = vlaneseq
        %v1354 = vshrl.u32 %v1353, 7
        %v1355 = vsub.s32 7, %v1354
        %v1356 = vrot.slane %v486, %v1355
        %1358 = vbcast.lane.b32.xlu0 %v1356, 256
        %v1359 = vpop.permute.xlu0 %1358
        %v1360 = vlaneseq
        %v1361 = vshrl.u32 %v1360, 7
        %v1362 = vsub.s32 0, %v1361
        %v1363 = vrot.slane %v487, %v1362
        %1365 = vbcast.lane.b32.xlu0 %v1363, 256
        %v1366 = vpop.permute.xlu0 %1365
        %v1367 = vlaneseq
        %v1368 = vshrl.u32 %v1367, 7
        %v1369 = vsub.s32 1, %v1368
        %v1370 = vrot.slane %v487, %v1369
        %1372 = vbcast.lane.b32.xlu0 %v1370, 256
        %v1373 = vpop.permute.xlu0 %1372
        %v1374 = vlaneseq
        %v1375 = vshrl.u32 %v1374, 7
        %v1376 = vsub.s32 2, %v1375
        %v1377 = vrot.slane %v487, %v1376
        %1379 = vbcast.lane.b32.xlu0 %v1377, 256
        %v1380 = vpop.permute.xlu0 %1379
        %v1381 = vlaneseq
        %v1382 = vshrl.u32 %v1381, 7
        %v1383 = vsub.s32 3, %v1382
        %v1384 = vrot.slane %v487, %v1383
        %1386 = vbcast.lane.b32.xlu0 %v1384, 256
        %v1387 = vpop.permute.xlu0 %1386
        %v1388 = vlaneseq
        %v1389 = vshrl.u32 %v1388, 7
        %v1390 = vsub.s32 4, %v1389
        %v1391 = vrot.slane %v487, %v1390
        %1393 = vbcast.lane.b32.xlu0 %v1391, 256
        %v1394 = vpop.permute.xlu0 %1393
        %v1395 = vlaneseq
        %v1396 = vshrl.u32 %v1395, 7
        %v1397 = vsub.s32 5, %v1396
        %v1398 = vrot.slane %v487, %v1397
        %1400 = vbcast.lane.b32.xlu0 %v1398, 256
        %v1401 = vpop.permute.xlu0 %1400
        %v1402 = vlaneseq
        %v1403 = vshrl.u32 %v1402, 7
        %v1404 = vsub.s32 6, %v1403
        %v1405 = vrot.slane %v487, %v1404
        %1407 = vbcast.lane.b32.xlu0 %v1405, 256
        %v1408 = vpop.permute.xlu0 %1407
        %v1409 = vlaneseq
        %v1410 = vshrl.u32 %v1409, 7
        %v1411 = vsub.s32 7, %v1410
        %v1412 = vrot.slane %v487, %v1411
        %1414 = vbcast.lane.b32.xlu0 %v1412, 256
        %v1415 = vpop.permute.xlu0 %1414
        %v1416 = vlaneseq
        %v1417 = vshrl.u32 %v1416, 7
        %v1418 = vsub.s32 0, %v1417
        %v1419 = vrot.slane %v504, %v1418
        %1421 = vbcast.lane.b32.xlu0 %v1419, 256
        %v1422 = vpop.permute.xlu0 %1421
        %v1423 = vlaneseq
        %v1424 = vshrl.u32 %v1423, 7
        %v1425 = vsub.s32 1, %v1424
        %v1426 = vrot.slane %v504, %v1425
        %1428 = vbcast.lane.b32.xlu0 %v1426, 256
        %v1429 = vpop.permute.xlu0 %1428
        %v1430 = vlaneseq
        %v1431 = vshrl.u32 %v1430, 7
        %v1432 = vsub.s32 2, %v1431
        %v1433 = vrot.slane %v504, %v1432
        %1435 = vbcast.lane.b32.xlu0 %v1433, 256
        %v1436 = vpop.permute.xlu0 %1435
        %v1437 = vlaneseq
        %v1438 = vshrl.u32 %v1437, 7
        %v1439 = vsub.s32 3, %v1438
        %v1440 = vrot.slane %v504, %v1439
        %1442 = vbcast.lane.b32.xlu0 %v1440, 256
        %v1443 = vpop.permute.xlu0 %1442
        %v1444 = vlaneseq
        %v1445 = vshrl.u32 %v1444, 7
        %v1446 = vsub.s32 4, %v1445
        %v1447 = vrot.slane %v504, %v1446
        %1449 = vbcast.lane.b32.xlu0 %v1447, 256
        %v1450 = vpop.permute.xlu0 %1449
        %v1451 = vlaneseq
        %v1452 = vshrl.u32 %v1451, 7
        %v1453 = vsub.s32 5, %v1452
        %v1454 = vrot.slane %v504, %v1453
        %1456 = vbcast.lane.b32.xlu0 %v1454, 256
        %v1457 = vpop.permute.xlu0 %1456
        %v1458 = vlaneseq
        %v1459 = vshrl.u32 %v1458, 7
        %v1460 = vsub.s32 6, %v1459
        %v1461 = vrot.slane %v504, %v1460
        %1463 = vbcast.lane.b32.xlu0 %v1461, 256
        %v1464 = vpop.permute.xlu0 %1463
        %v1465 = vlaneseq
        %v1466 = vshrl.u32 %v1465, 7
        %v1467 = vsub.s32 7, %v1466
        %v1468 = vrot.slane %v504, %v1467
        %1470 = vbcast.lane.b32.xlu0 %v1468, 256
        %v1471 = vpop.permute.xlu0 %1470
        %v1472 = vlaneseq
        %v1473 = vshrl.u32 %v1472, 7
        %v1474 = vsub.s32 0, %v1473
        %v1475 = vrot.slane %v505, %v1474
        %1477 = vbcast.lane.b32.xlu0 %v1475, 256
        %v1478 = vpop.permute.xlu0 %1477
        %v1479 = vlaneseq
        %v1480 = vshrl.u32 %v1479, 7
        %v1481 = vsub.s32 1, %v1480
        %v1482 = vrot.slane %v505, %v1481
        %1484 = vbcast.lane.b32.xlu0 %v1482, 256
        %v1485 = vpop.permute.xlu0 %1484
        %v1486 = vlaneseq
        %v1487 = vshrl.u32 %v1486, 7
        %v1488 = vsub.s32 2, %v1487
        %v1489 = vrot.slane %v505, %v1488
        %1491 = vbcast.lane.b32.xlu0 %v1489, 256
        %v1492 = vpop.permute.xlu0 %1491
        %v1493 = vlaneseq
        %v1494 = vshrl.u32 %v1493, 7
        %v1495 = vsub.s32 3, %v1494
        %v1496 = vrot.slane %v505, %v1495
        %1498 = vbcast.lane.b32.xlu0 %v1496, 256
        %v1499 = vpop.permute.xlu0 %1498
        %v1500 = vlaneseq
        %v1501 = vshrl.u32 %v1500, 7
        %v1502 = vsub.s32 4, %v1501
        %v1503 = vrot.slane %v505, %v1502
        %1505 = vbcast.lane.b32.xlu0 %v1503, 256
        %v1506 = vpop.permute.xlu0 %1505
        %v1507 = vlaneseq
        %v1508 = vshrl.u32 %v1507, 7
        %v1509 = vsub.s32 5, %v1508
        %v1510 = vrot.slane %v505, %v1509
        %1512 = vbcast.lane.b32.xlu0 %v1510, 256
        %v1513 = vpop.permute.xlu0 %1512
        %v1514 = vlaneseq
        %v1515 = vshrl.u32 %v1514, 7
        %v1516 = vsub.s32 6, %v1515
        %v1517 = vrot.slane %v505, %v1516
        %1519 = vbcast.lane.b32.xlu0 %v1517, 256
        %v1520 = vpop.permute.xlu0 %1519
        %v1521 = vlaneseq
        %v1522 = vshrl.u32 %v1521, 7
        %v1523 = vsub.s32 7, %v1522
        %v1524 = vrot.slane %v505, %v1523
        %1526 = vbcast.lane.b32.xlu0 %v1524, 256
        %v1527 = vpop.permute.xlu0 %1526
        %v1528 = vlaneseq
        %v1529 = vshrl.u32 %v1528, 7
        %v1530 = vsub.s32 0, %v1529
        %v1531 = vrot.slane %v506, %v1530
        %1533 = vbcast.lane.b32.xlu0 %v1531, 256
        %v1534 = vpop.permute.xlu0 %1533
        %v1535 = vlaneseq
        %v1536 = vshrl.u32 %v1535, 7
        %v1537 = vsub.s32 1, %v1536
        %v1538 = vrot.slane %v506, %v1537
        %1540 = vbcast.lane.b32.xlu0 %v1538, 256
        %v1541 = vpop.permute.xlu0 %1540
        %v1542 = vlaneseq
        %v1543 = vshrl.u32 %v1542, 7
        %v1544 = vsub.s32 2, %v1543
        %v1545 = vrot.slane %v506, %v1544
        %1547 = vbcast.lane.b32.xlu0 %v1545, 256
        %v1548 = vpop.permute.xlu0 %1547
        %v1549 = vlaneseq
        %v1550 = vshrl.u32 %v1549, 7
        %v1551 = vsub.s32 3, %v1550
        %v1552 = vrot.slane %v506, %v1551
        %1554 = vbcast.lane.b32.xlu0 %v1552, 256
        %v1555 = vpop.permute.xlu0 %1554
        %v1556 = vlaneseq
        %v1557 = vshrl.u32 %v1556, 7
        %v1558 = vsub.s32 4, %v1557
        %v1559 = vrot.slane %v506, %v1558
        %1561 = vbcast.lane.b32.xlu0 %v1559, 256
        %v1562 = vpop.permute.xlu0 %1561
        %v1563 = vlaneseq
        %v1564 = vshrl.u32 %v1563, 7
        %v1565 = vsub.s32 5, %v1564
        %v1566 = vrot.slane %v506, %v1565
        %1568 = vbcast.lane.b32.xlu0 %v1566, 256
        %v1569 = vpop.permute.xlu0 %1568
        %v1570 = vlaneseq
        %v1571 = vshrl.u32 %v1570, 7
        %v1572 = vsub.s32 6, %v1571
        %v1573 = vrot.slane %v506, %v1572
        %1575 = vbcast.lane.b32.xlu0 %v1573, 256
        %v1576 = vpop.permute.xlu0 %1575
        %v1577 = vlaneseq
        %v1578 = vshrl.u32 %v1577, 7
        %v1579 = vsub.s32 7, %v1578
        %v1580 = vrot.slane %v506, %v1579
        %1582 = vbcast.lane.b32.xlu0 %v1580, 256
        %v1583 = vpop.permute.xlu0 %1582
        %v1584 = vlaneseq
        %v1585 = vshrl.u32 %v1584, 7
        %v1586 = vsub.s32 0, %v1585
        %v1587 = vrot.slane %v507, %v1586
        %1589 = vbcast.lane.b32.xlu0 %v1587, 256
        %v1590 = vpop.permute.xlu0 %1589
        %v1591 = vlaneseq
        %v1592 = vshrl.u32 %v1591, 7
        %v1593 = vsub.s32 1, %v1592
        %v1594 = vrot.slane %v507, %v1593
        %1596 = vbcast.lane.b32.xlu0 %v1594, 256
        %v1597 = vpop.permute.xlu0 %1596
        %v1598 = vlaneseq
        %v1599 = vshrl.u32 %v1598, 7
        %v1600 = vsub.s32 2, %v1599
        %v1601 = vrot.slane %v507, %v1600
        %1603 = vbcast.lane.b32.xlu0 %v1601, 256
        %v1604 = vpop.permute.xlu0 %1603
        %v1605 = vlaneseq
        %v1606 = vshrl.u32 %v1605, 7
        %v1607 = vsub.s32 3, %v1606
        %v1608 = vrot.slane %v507, %v1607
        %1610 = vbcast.lane.b32.xlu0 %v1608, 256
        %v1611 = vpop.permute.xlu0 %1610
        %v1612 = vlaneseq
        %v1613 = vshrl.u32 %v1612, 7
        %v1614 = vsub.s32 4, %v1613
        %v1615 = vrot.slane %v507, %v1614
        %1617 = vbcast.lane.b32.xlu0 %v1615, 256
        %v1618 = vpop.permute.xlu0 %1617
        %v1619 = vlaneseq
        %v1620 = vshrl.u32 %v1619, 7
        %v1621 = vsub.s32 5, %v1620
        %v1622 = vrot.slane %v507, %v1621
        %1624 = vbcast.lane.b32.xlu0 %v1622, 256
        %v1625 = vpop.permute.xlu0 %1624
        %v1626 = vlaneseq
        %v1627 = vshrl.u32 %v1626, 7
        %v1628 = vsub.s32 6, %v1627
        %v1629 = vrot.slane %v507, %v1628
        %1631 = vbcast.lane.b32.xlu0 %v1629, 256
        %v1632 = vpop.permute.xlu0 %1631
        %v1633 = vlaneseq
        %v1634 = vshrl.u32 %v1633, 7
        %v1635 = vsub.s32 7, %v1634
        %v1636 = vrot.slane %v507, %v1635
        %1638 = vbcast.lane.b32.xlu0 %v1636, 256
        %v1639 = vpop.permute.xlu0 %1638
        %v1640 = vlaneseq
        %v1641 = vshrl.u32 %v1640, 7
        %v1642 = vsub.s32 0, %v1641
        %v1643 = vrot.slane %v508, %v1642
        %1645 = vbcast.lane.b32.xlu0 %v1643, 256
        %v1646 = vpop.permute.xlu0 %1645
        %v1647 = vlaneseq
        %v1648 = vshrl.u32 %v1647, 7
        %v1649 = vsub.s32 1, %v1648
        %v1650 = vrot.slane %v508, %v1649
        %1652 = vbcast.lane.b32.xlu0 %v1650, 256
        %v1653 = vpop.permute.xlu0 %1652
        %v1654 = vlaneseq
        %v1655 = vshrl.u32 %v1654, 7
        %v1656 = vsub.s32 2, %v1655
        %v1657 = vrot.slane %v508, %v1656
        %1659 = vbcast.lane.b32.xlu0 %v1657, 256
        %v1660 = vpop.permute.xlu0 %1659
        %v1661 = vlaneseq
        %v1662 = vshrl.u32 %v1661, 7
        %v1663 = vsub.s32 3, %v1662
        %v1664 = vrot.slane %v508, %v1663
        %1666 = vbcast.lane.b32.xlu0 %v1664, 256
        %v1667 = vpop.permute.xlu0 %1666
        %v1668 = vlaneseq
        %v1669 = vshrl.u32 %v1668, 7
        %v1670 = vsub.s32 4, %v1669
        %v1671 = vrot.slane %v508, %v1670
        %1673 = vbcast.lane.b32.xlu0 %v1671, 256
        %v1674 = vpop.permute.xlu0 %1673
        %v1675 = vlaneseq
        %v1676 = vshrl.u32 %v1675, 7
        %v1677 = vsub.s32 5, %v1676
        %v1678 = vrot.slane %v508, %v1677
        %1680 = vbcast.lane.b32.xlu0 %v1678, 256
        %v1681 = vpop.permute.xlu0 %1680
        %v1682 = vlaneseq
        %v1683 = vshrl.u32 %v1682, 7
        %v1684 = vsub.s32 6, %v1683
        %v1685 = vrot.slane %v508, %v1684
        %1687 = vbcast.lane.b32.xlu0 %v1685, 256
        %v1688 = vpop.permute.xlu0 %1687
        %v1689 = vlaneseq
        %v1690 = vshrl.u32 %v1689, 7
        %v1691 = vsub.s32 7, %v1690
        %v1692 = vrot.slane %v508, %v1691
        %1694 = vbcast.lane.b32.xlu0 %v1692, 256
        %v1695 = vpop.permute.xlu0 %1694
        %v1696 = vlaneseq
        %v1697 = vshrl.u32 %v1696, 7
        %v1698 = vsub.s32 0, %v1697
        %v1699 = vrot.slane %v509, %v1698
        %1701 = vbcast.lane.b32.xlu0 %v1699, 256
        %v1702 = vpop.permute.xlu0 %1701
        %v1703 = vlaneseq
        %v1704 = vshrl.u32 %v1703, 7
        %v1705 = vsub.s32 1, %v1704
        %v1706 = vrot.slane %v509, %v1705
        %1708 = vbcast.lane.b32.xlu0 %v1706, 256
        %v1709 = vpop.permute.xlu0 %1708
        %v1710 = vlaneseq
        %v1711 = vshrl.u32 %v1710, 7
        %v1712 = vsub.s32 2, %v1711
        %v1713 = vrot.slane %v509, %v1712
        %1715 = vbcast.lane.b32.xlu0 %v1713, 256
        %v1716 = vpop.permute.xlu0 %1715
        %v1717 = vlaneseq
        %v1718 = vshrl.u32 %v1717, 7
        %v1719 = vsub.s32 3, %v1718
        %v1720 = vrot.slane %v509, %v1719
        %1722 = vbcast.lane.b32.xlu0 %v1720, 256
        %v1723 = vpop.permute.xlu0 %1722
        %v1724 = vlaneseq
        %v1725 = vshrl.u32 %v1724, 7
        %v1726 = vsub.s32 4, %v1725
        %v1727 = vrot.slane %v509, %v1726
        %1729 = vbcast.lane.b32.xlu0 %v1727, 256
        %v1730 = vpop.permute.xlu0 %1729
        %v1731 = vlaneseq
        %v1732 = vshrl.u32 %v1731, 7
        %v1733 = vsub.s32 5, %v1732
        %v1734 = vrot.slane %v509, %v1733
        %1736 = vbcast.lane.b32.xlu0 %v1734, 256
        %v1737 = vpop.permute.xlu0 %1736
        %v1738 = vlaneseq
        %v1739 = vshrl.u32 %v1738, 7
        %v1740 = vsub.s32 6, %v1739
        %v1741 = vrot.slane %v509, %v1740
        %1743 = vbcast.lane.b32.xlu0 %v1741, 256
        %v1744 = vpop.permute.xlu0 %1743
        %v1745 = vlaneseq
        %v1746 = vshrl.u32 %v1745, 7
        %v1747 = vsub.s32 7, %v1746
        %v1748 = vrot.slane %v509, %v1747
        %1750 = vbcast.lane.b32.xlu0 %v1748, 256
        %v1751 = vpop.permute.xlu0 %1750
        %v1752 = vlaneseq
        %v1753 = vshrl.u32 %v1752, 7
        %v1754 = vsub.s32 0, %v1753
        %v1755 = vrot.slane %v510, %v1754
        %1757 = vbcast.lane.b32.xlu0 %v1755, 256
        %v1758 = vpop.permute.xlu0 %1757
        %v1759 = vlaneseq
        %v1760 = vshrl.u32 %v1759, 7
        %v1761 = vsub.s32 1, %v1760
        %v1762 = vrot.slane %v510, %v1761
        %1764 = vbcast.lane.b32.xlu0 %v1762, 256
        %v1765 = vpop.permute.xlu0 %1764
        %v1766 = vlaneseq
        %v1767 = vshrl.u32 %v1766, 7
        %v1768 = vsub.s32 2, %v1767
        %v1769 = vrot.slane %v510, %v1768
        %1771 = vbcast.lane.b32.xlu0 %v1769, 256
        %v1772 = vpop.permute.xlu0 %1771
        %v1773 = vlaneseq
        %v1774 = vshrl.u32 %v1773, 7
        %v1775 = vsub.s32 3, %v1774
        %v1776 = vrot.slane %v510, %v1775
        %1778 = vbcast.lane.b32.xlu0 %v1776, 256
        %v1779 = vpop.permute.xlu0 %1778
        %v1780 = vlaneseq
        %v1781 = vshrl.u32 %v1780, 7
        %v1782 = vsub.s32 4, %v1781
        %v1783 = vrot.slane %v510, %v1782
        %1785 = vbcast.lane.b32.xlu0 %v1783, 256
        %v1786 = vpop.permute.xlu0 %1785
        %v1787 = vlaneseq
        %v1788 = vshrl.u32 %v1787, 7
        %v1789 = vsub.s32 5, %v1788
        %v1790 = vrot.slane %v510, %v1789
        %1792 = vbcast.lane.b32.xlu0 %v1790, 256
        %v1793 = vpop.permute.xlu0 %1792
        %v1794 = vlaneseq
        %v1795 = vshrl.u32 %v1794, 7
        %v1796 = vsub.s32 6, %v1795
        %v1797 = vrot.slane %v510, %v1796
        %1799 = vbcast.lane.b32.xlu0 %v1797, 256
        %v1800 = vpop.permute.xlu0 %1799
        %v1801 = vlaneseq
        %v1802 = vshrl.u32 %v1801, 7
        %v1803 = vsub.s32 7, %v1802
        %v1804 = vrot.slane %v510, %v1803
        %1806 = vbcast.lane.b32.xlu0 %v1804, 256
        %v1807 = vpop.permute.xlu0 %1806
        %v1808 = vlaneseq
        %v1809 = vshrl.u32 %v1808, 7
        %v1810 = vsub.s32 0, %v1809
        %v1811 = vrot.slane %v511, %v1810
        %1813 = vbcast.lane.b32.xlu0 %v1811, 256
        %v1814 = vpop.permute.xlu0 %1813
        %v1815 = vlaneseq
        %v1816 = vshrl.u32 %v1815, 7
        %v1817 = vsub.s32 1, %v1816
        %v1818 = vrot.slane %v511, %v1817
        %1820 = vbcast.lane.b32.xlu0 %v1818, 256
        %v1821 = vpop.permute.xlu0 %1820
        %v1822 = vlaneseq
        %v1823 = vshrl.u32 %v1822, 7
        %v1824 = vsub.s32 2, %v1823
        %v1825 = vrot.slane %v511, %v1824
        %1827 = vbcast.lane.b32.xlu0 %v1825, 256
        %v1828 = vpop.permute.xlu0 %1827
        %v1829 = vlaneseq
        %v1830 = vshrl.u32 %v1829, 7
        %v1831 = vsub.s32 3, %v1830
        %v1832 = vrot.slane %v511, %v1831
        %1834 = vbcast.lane.b32.xlu0 %v1832, 256
        %v1835 = vpop.permute.xlu0 %1834
        %v1836 = vlaneseq
        %v1837 = vshrl.u32 %v1836, 7
        %v1838 = vsub.s32 4, %v1837
        %v1839 = vrot.slane %v511, %v1838
        %1841 = vbcast.lane.b32.xlu0 %v1839, 256
        %v1842 = vpop.permute.xlu0 %1841
        %v1843 = vlaneseq
        %v1844 = vshrl.u32 %v1843, 7
        %v1845 = vsub.s32 5, %v1844
        %v1846 = vrot.slane %v511, %v1845
        %1848 = vbcast.lane.b32.xlu0 %v1846, 256
        %v1849 = vpop.permute.xlu0 %1848
        %v1850 = vlaneseq
        %v1851 = vshrl.u32 %v1850, 7
        %v1852 = vsub.s32 6, %v1851
        %v1853 = vrot.slane %v511, %v1852
        %1855 = vbcast.lane.b32.xlu0 %v1853, 256
        %v1856 = vpop.permute.xlu0 %1855
        %v1857 = vlaneseq
        %v1858 = vshrl.u32 %v1857, 7
        %v1859 = vsub.s32 7, %v1858
        %v1860 = vrot.slane %v511, %v1859
        %1862 = vbcast.lane.b32.xlu0 %v1860, 256
        %v1863 = vpop.permute.xlu0 %1862
        %v1864 = vlaneseq
        %v1865 = vshrl.u32 %v1864, 7
        %v1866 = vsub.s32 0, %v1865
        %v1867 = vrot.slane %v512, %v1866
        %1869 = vbcast.lane.b32.xlu0 %v1867, 256
        %v1870 = vpop.permute.xlu0 %1869
        %v1871 = vlaneseq
        %v1872 = vshrl.u32 %v1871, 7
        %v1873 = vsub.s32 1, %v1872
        %v1874 = vrot.slane %v512, %v1873
        %1876 = vbcast.lane.b32.xlu0 %v1874, 256
        %v1877 = vpop.permute.xlu0 %1876
        %v1878 = vlaneseq
        %v1879 = vshrl.u32 %v1878, 7
        %v1880 = vsub.s32 2, %v1879
        %v1881 = vrot.slane %v512, %v1880
        %1883 = vbcast.lane.b32.xlu0 %v1881, 256
        %v1884 = vpop.permute.xlu0 %1883
        %v1885 = vlaneseq
        %v1886 = vshrl.u32 %v1885, 7
        %v1887 = vsub.s32 3, %v1886
        %v1888 = vrot.slane %v512, %v1887
        %1890 = vbcast.lane.b32.xlu0 %v1888, 256
        %v1891 = vpop.permute.xlu0 %1890
        %v1892 = vlaneseq
        %v1893 = vshrl.u32 %v1892, 7
        %v1894 = vsub.s32 4, %v1893
        %v1895 = vrot.slane %v512, %v1894
        %1897 = vbcast.lane.b32.xlu0 %v1895, 256
        %v1898 = vpop.permute.xlu0 %1897
        %v1899 = vlaneseq
        %v1900 = vshrl.u32 %v1899, 7
        %v1901 = vsub.s32 5, %v1900
        %v1902 = vrot.slane %v512, %v1901
        %1904 = vbcast.lane.b32.xlu0 %v1902, 256
        %v1905 = vpop.permute.xlu0 %1904
        %v1906 = vlaneseq
        %v1907 = vshrl.u32 %v1906, 7
        %v1908 = vsub.s32 6, %v1907
        %v1909 = vrot.slane %v512, %v1908
        %1911 = vbcast.lane.b32.xlu0 %v1909, 256
        %v1912 = vpop.permute.xlu0 %1911
        %v1913 = vlaneseq
        %v1914 = vshrl.u32 %v1913, 7
        %v1915 = vsub.s32 7, %v1914
        %v1916 = vrot.slane %v512, %v1915
        %1918 = vbcast.lane.b32.xlu0 %v1916, 256
        %v1919 = vpop.permute.xlu0 %1918
        %v1920 = vlaneseq
        %v1921 = vshrl.u32 %v1920, 7
        %v1922 = vsub.s32 0, %v1921
        %v1923 = vrot.slane %v513, %v1922
        %1925 = vbcast.lane.b32.xlu0 %v1923, 256
        %v1926 = vpop.permute.xlu0 %1925
        %v1927 = vlaneseq
        %v1928 = vshrl.u32 %v1927, 7
        %v1929 = vsub.s32 1, %v1928
        %v1930 = vrot.slane %v513, %v1929
        %1932 = vbcast.lane.b32.xlu0 %v1930, 256
        %v1933 = vpop.permute.xlu0 %1932
        %v1934 = vlaneseq
        %v1935 = vshrl.u32 %v1934, 7
        %v1936 = vsub.s32 2, %v1935
        %v1937 = vrot.slane %v513, %v1936
        %1939 = vbcast.lane.b32.xlu0 %v1937, 256
        %v1940 = vpop.permute.xlu0 %1939
        %v1941 = vlaneseq
        %v1942 = vshrl.u32 %v1941, 7
        %v1943 = vsub.s32 3, %v1942
        %v1944 = vrot.slane %v513, %v1943
        %1946 = vbcast.lane.b32.xlu0 %v1944, 256
        %v1947 = vpop.permute.xlu0 %1946
        %v1948 = vlaneseq
        %v1949 = vshrl.u32 %v1948, 7
        %v1950 = vsub.s32 4, %v1949
        %v1951 = vrot.slane %v513, %v1950
        %1953 = vbcast.lane.b32.xlu0 %v1951, 256
        %v1954 = vpop.permute.xlu0 %1953
        %v1955 = vlaneseq
        %v1956 = vshrl.u32 %v1955, 7
        %v1957 = vsub.s32 5, %v1956
        %v1958 = vrot.slane %v513, %v1957
        %1960 = vbcast.lane.b32.xlu0 %v1958, 256
        %v1961 = vpop.permute.xlu0 %1960
        %v1962 = vlaneseq
        %v1963 = vshrl.u32 %v1962, 7
        %v1964 = vsub.s32 6, %v1963
        %v1965 = vrot.slane %v513, %v1964
        %1967 = vbcast.lane.b32.xlu0 %v1965, 256
        %v1968 = vpop.permute.xlu0 %1967
        %v1969 = vlaneseq
        %v1970 = vshrl.u32 %v1969, 7
        %v1971 = vsub.s32 7, %v1970
        %v1972 = vrot.slane %v513, %v1971
        %1974 = vbcast.lane.b32.xlu0 %v1972, 256
        %v1975 = vpop.permute.xlu0 %1974
        %v1976 = vlaneseq
        %v1977 = vshrl.u32 %v1976, 7
        %v1978 = vsub.s32 0, %v1977
        %v1979 = vrot.slane %v514, %v1978
        %1981 = vbcast.lane.b32.xlu0 %v1979, 256
        %v1982 = vpop.permute.xlu0 %1981
        %v1983 = vlaneseq
        %v1984 = vshrl.u32 %v1983, 7
        %v1985 = vsub.s32 1, %v1984
        %v1986 = vrot.slane %v514, %v1985
        %1988 = vbcast.lane.b32.xlu0 %v1986, 256
        %v1989 = vpop.permute.xlu0 %1988
        %v1990 = vlaneseq
        %v1991 = vshrl.u32 %v1990, 7
        %v1992 = vsub.s32 2, %v1991
        %v1993 = vrot.slane %v514, %v1992
        %1995 = vbcast.lane.b32.xlu0 %v1993, 256
        %v1996 = vpop.permute.xlu0 %1995
        %v1997 = vlaneseq
        %v1998 = vshrl.u32 %v1997, 7
        %v1999 = vsub.s32 3, %v1998
        %v2000 = vrot.slane %v514, %v1999
        %2002 = vbcast.lane.b32.xlu0 %v2000, 256
        %v2003 = vpop.permute.xlu0 %2002
        %v2004 = vlaneseq
        %v2005 = vshrl.u32 %v2004, 7
        %v2006 = vsub.s32 4, %v2005
        %v2007 = vrot.slane %v514, %v2006
        %2009 = vbcast.lane.b32.xlu0 %v2007, 256
        %v2010 = vpop.permute.xlu0 %2009
        %v2011 = vlaneseq
        %v2012 = vshrl.u32 %v2011, 7
        %v2013 = vsub.s32 5, %v2012
        %v2014 = vrot.slane %v514, %v2013
        %2016 = vbcast.lane.b32.xlu0 %v2014, 256
        %v2017 = vpop.permute.xlu0 %2016
        %v2018 = vlaneseq
        %v2019 = vshrl.u32 %v2018, 7
        %v2020 = vsub.s32 6, %v2019
        %v2021 = vrot.slane %v514, %v2020
        %2023 = vbcast.lane.b32.xlu0 %v2021, 256
        %v2024 = vpop.permute.xlu0 %2023
        %v2025 = vlaneseq
        %v2026 = vshrl.u32 %v2025, 7
        %v2027 = vsub.s32 7, %v2026
        %v2028 = vrot.slane %v514, %v2027
        %2030 = vbcast.lane.b32.xlu0 %v2028, 256
        %v2031 = vpop.permute.xlu0 %2030
        %v2032 = vlaneseq
        %v2033 = vshrl.u32 %v2032, 7
        %v2034 = vsub.s32 0, %v2033
        %v2035 = vrot.slane %v515, %v2034
        %2037 = vbcast.lane.b32.xlu0 %v2035, 256
        %v2038 = vpop.permute.xlu0 %2037
        %v2039 = vlaneseq
        %v2040 = vshrl.u32 %v2039, 7
        %v2041 = vsub.s32 1, %v2040
        %v2042 = vrot.slane %v515, %v2041
        %2044 = vbcast.lane.b32.xlu0 %v2042, 256
        %v2045 = vpop.permute.xlu0 %2044
        %v2046 = vlaneseq
        %v2047 = vshrl.u32 %v2046, 7
        %v2048 = vsub.s32 2, %v2047
        %v2049 = vrot.slane %v515, %v2048
        %2051 = vbcast.lane.b32.xlu0 %v2049, 256
        %v2052 = vpop.permute.xlu0 %2051
        %v2053 = vlaneseq
        %v2054 = vshrl.u32 %v2053, 7
        %v2055 = vsub.s32 3, %v2054
        %v2056 = vrot.slane %v515, %v2055
        %2058 = vbcast.lane.b32.xlu0 %v2056, 256
        %v2059 = vpop.permute.xlu0 %2058
        %v2060 = vlaneseq
        %v2061 = vshrl.u32 %v2060, 7
        %v2062 = vsub.s32 4, %v2061
        %v2063 = vrot.slane %v515, %v2062
        %2065 = vbcast.lane.b32.xlu0 %v2063, 256
        %v2066 = vpop.permute.xlu0 %2065
        %v2067 = vlaneseq
        %v2068 = vshrl.u32 %v2067, 7
        %v2069 = vsub.s32 5, %v2068
        %v2070 = vrot.slane %v515, %v2069
        %2072 = vbcast.lane.b32.xlu0 %v2070, 256
        %v2073 = vpop.permute.xlu0 %2072
        %v2074 = vlaneseq
        %v2075 = vshrl.u32 %v2074, 7
        %v2076 = vsub.s32 6, %v2075
        %v2077 = vrot.slane %v515, %v2076
        %2079 = vbcast.lane.b32.xlu0 %v2077, 256
        %v2080 = vpop.permute.xlu0 %2079
        %v2081 = vlaneseq
        %v2082 = vshrl.u32 %v2081, 7
        %v2083 = vsub.s32 7, %v2082
        %v2084 = vrot.slane %v515, %v2083
        %2086 = vbcast.lane.b32.xlu0 %v2084, 256
        %v2087 = vpop.permute.xlu0 %2086
        %v2088 = vlaneseq
        %v2089 = vshrl.u32 %v2088, 7
        %v2090 = vsub.s32 0, %v2089
        %v2091 = vrot.slane %v516, %v2090
        %2093 = vbcast.lane.b32.xlu0 %v2091, 256
        %v2094 = vpop.permute.xlu0 %2093
        %v2095 = vlaneseq
        %v2096 = vshrl.u32 %v2095, 7
        %v2097 = vsub.s32 1, %v2096
        %v2098 = vrot.slane %v516, %v2097
        %2100 = vbcast.lane.b32.xlu0 %v2098, 256
        %v2101 = vpop.permute.xlu0 %2100
        %v2102 = vlaneseq
        %v2103 = vshrl.u32 %v2102, 7
        %v2104 = vsub.s32 2, %v2103
        %v2105 = vrot.slane %v516, %v2104
        %2107 = vbcast.lane.b32.xlu0 %v2105, 256
        %v2108 = vpop.permute.xlu0 %2107
        %v2109 = vlaneseq
        %v2110 = vshrl.u32 %v2109, 7
        %v2111 = vsub.s32 3, %v2110
        %v2112 = vrot.slane %v516, %v2111
        %2114 = vbcast.lane.b32.xlu0 %v2112, 256
        %v2115 = vpop.permute.xlu0 %2114
        %v2116 = vlaneseq
        %v2117 = vshrl.u32 %v2116, 7
        %v2118 = vsub.s32 4, %v2117
        %v2119 = vrot.slane %v516, %v2118
        %2121 = vbcast.lane.b32.xlu0 %v2119, 256
        %v2122 = vpop.permute.xlu0 %2121
        %v2123 = vlaneseq
        %v2124 = vshrl.u32 %v2123, 7
        %v2125 = vsub.s32 5, %v2124
        %v2126 = vrot.slane %v516, %v2125
        %2128 = vbcast.lane.b32.xlu0 %v2126, 256
        %v2129 = vpop.permute.xlu0 %2128
        %v2130 = vlaneseq
        %v2131 = vshrl.u32 %v2130, 7
        %v2132 = vsub.s32 6, %v2131
        %v2133 = vrot.slane %v516, %v2132
        %2135 = vbcast.lane.b32.xlu0 %v2133, 256
        %v2136 = vpop.permute.xlu0 %2135
        %v2137 = vlaneseq
        %v2138 = vshrl.u32 %v2137, 7
        %v2139 = vsub.s32 7, %v2138
        %v2140 = vrot.slane %v516, %v2139
        %2142 = vbcast.lane.b32.xlu0 %v2140, 256
        %v2143 = vpop.permute.xlu0 %2142
        %v2144 = vlaneseq
        %v2145 = vshrl.u32 %v2144, 7
        %v2146 = vsub.s32 0, %v2145
        %v2147 = vrot.slane %v517, %v2146
        %2149 = vbcast.lane.b32.xlu0 %v2147, 256
        %v2150 = vpop.permute.xlu0 %2149
        %v2151 = vlaneseq
        %v2152 = vshrl.u32 %v2151, 7
        %v2153 = vsub.s32 1, %v2152
        %v2154 = vrot.slane %v517, %v2153
        %2156 = vbcast.lane.b32.xlu0 %v2154, 256
        %v2157 = vpop.permute.xlu0 %2156
        %v2158 = vlaneseq
        %v2159 = vshrl.u32 %v2158, 7
        %v2160 = vsub.s32 2, %v2159
        %v2161 = vrot.slane %v517, %v2160
        %2163 = vbcast.lane.b32.xlu0 %v2161, 256
        %v2164 = vpop.permute.xlu0 %2163
        %v2165 = vlaneseq
        %v2166 = vshrl.u32 %v2165, 7
        %v2167 = vsub.s32 3, %v2166
        %v2168 = vrot.slane %v517, %v2167
        %2170 = vbcast.lane.b32.xlu0 %v2168, 256
        %v2171 = vpop.permute.xlu0 %2170
        %v2172 = vlaneseq
        %v2173 = vshrl.u32 %v2172, 7
        %v2174 = vsub.s32 4, %v2173
        %v2175 = vrot.slane %v517, %v2174
        %2177 = vbcast.lane.b32.xlu0 %v2175, 256
        %v2178 = vpop.permute.xlu0 %2177
        %v2179 = vlaneseq
        %v2180 = vshrl.u32 %v2179, 7
        %v2181 = vsub.s32 5, %v2180
        %v2182 = vrot.slane %v517, %v2181
        %2184 = vbcast.lane.b32.xlu0 %v2182, 256
        %v2185 = vpop.permute.xlu0 %2184
        %v2186 = vlaneseq
        %v2187 = vshrl.u32 %v2186, 7
        %v2188 = vsub.s32 6, %v2187
        %v2189 = vrot.slane %v517, %v2188
        %2191 = vbcast.lane.b32.xlu0 %v2189, 256
        %v2192 = vpop.permute.xlu0 %2191
        %v2193 = vlaneseq
        %v2194 = vshrl.u32 %v2193, 7
        %v2195 = vsub.s32 7, %v2194
        %v2196 = vrot.slane %v517, %v2195
        %2198 = vbcast.lane.b32.xlu0 %v2196, 256
        %v2199 = vpop.permute.xlu0 %2198
        %v2200 = vlaneseq
        %v2201 = vshrl.u32 %v2200, 7
        %v2202 = vsub.s32 0, %v2201
        %v2203 = vrot.slane %v518, %v2202
        %2205 = vbcast.lane.b32.xlu0 %v2203, 256
        %v2206 = vpop.permute.xlu0 %2205
        %v2207 = vlaneseq
        %v2208 = vshrl.u32 %v2207, 7
        %v2209 = vsub.s32 1, %v2208
        %v2210 = vrot.slane %v518, %v2209
        %2212 = vbcast.lane.b32.xlu0 %v2210, 256
        %v2213 = vpop.permute.xlu0 %2212
        %v2214 = vlaneseq
        %v2215 = vshrl.u32 %v2214, 7
        %v2216 = vsub.s32 2, %v2215
        %v2217 = vrot.slane %v518, %v2216
        %2219 = vbcast.lane.b32.xlu0 %v2217, 256
        %v2220 = vpop.permute.xlu0 %2219
        %v2221 = vlaneseq
        %v2222 = vshrl.u32 %v2221, 7
        %v2223 = vsub.s32 3, %v2222
        %v2224 = vrot.slane %v518, %v2223
        %2226 = vbcast.lane.b32.xlu0 %v2224, 256
        %v2227 = vpop.permute.xlu0 %2226
        %v2228 = vlaneseq
        %v2229 = vshrl.u32 %v2228, 7
        %v2230 = vsub.s32 4, %v2229
        %v2231 = vrot.slane %v518, %v2230
        %2233 = vbcast.lane.b32.xlu0 %v2231, 256
        %v2234 = vpop.permute.xlu0 %2233
        %v2235 = vlaneseq
        %v2236 = vshrl.u32 %v2235, 7
        %v2237 = vsub.s32 5, %v2236
        %v2238 = vrot.slane %v518, %v2237
        %2240 = vbcast.lane.b32.xlu0 %v2238, 256
        %v2241 = vpop.permute.xlu0 %2240
        %v2242 = vlaneseq
        %v2243 = vshrl.u32 %v2242, 7
        %v2244 = vsub.s32 6, %v2243
        %v2245 = vrot.slane %v518, %v2244
        %2247 = vbcast.lane.b32.xlu0 %v2245, 256
        %v2248 = vpop.permute.xlu0 %2247
        %v2249 = vlaneseq
        %v2250 = vshrl.u32 %v2249, 7
        %v2251 = vsub.s32 7, %v2250
        %v2252 = vrot.slane %v518, %v2251
        %2254 = vbcast.lane.b32.xlu0 %v2252, 256
        %v2255 = vpop.permute.xlu0 %2254
        %v2256 = vlaneseq
        %v2257 = vshrl.u32 %v2256, 7
        %v2258 = vsub.s32 0, %v2257
        %v2259 = vrot.slane %v519, %v2258
        %2261 = vbcast.lane.b32.xlu0 %v2259, 256
        %v2262 = vpop.permute.xlu0 %2261
        %v2263 = vlaneseq
        %v2264 = vshrl.u32 %v2263, 7
        %v2265 = vsub.s32 1, %v2264
        %v2266 = vrot.slane %v519, %v2265
        %2268 = vbcast.lane.b32.xlu0 %v2266, 256
        %v2269 = vpop.permute.xlu0 %2268
        %v2270 = vlaneseq
        %v2271 = vshrl.u32 %v2270, 7
        %v2272 = vsub.s32 2, %v2271
        %v2273 = vrot.slane %v519, %v2272
        %2275 = vbcast.lane.b32.xlu0 %v2273, 256
        %v2276 = vpop.permute.xlu0 %2275
        %v2277 = vlaneseq
        %v2278 = vshrl.u32 %v2277, 7
        %v2279 = vsub.s32 3, %v2278
        %v2280 = vrot.slane %v519, %v2279
        %2282 = vbcast.lane.b32.xlu0 %v2280, 256
        %v2283 = vpop.permute.xlu0 %2282
        %v2284 = vlaneseq
        %v2285 = vshrl.u32 %v2284, 7
        %v2286 = vsub.s32 4, %v2285
        %v2287 = vrot.slane %v519, %v2286
        %2289 = vbcast.lane.b32.xlu0 %v2287, 256
        %v2290 = vpop.permute.xlu0 %2289
        %v2291 = vlaneseq
        %v2292 = vshrl.u32 %v2291, 7
        %v2293 = vsub.s32 5, %v2292
        %v2294 = vrot.slane %v519, %v2293
        %2296 = vbcast.lane.b32.xlu0 %v2294, 256
        %v2297 = vpop.permute.xlu0 %2296
        %v2298 = vlaneseq
        %v2299 = vshrl.u32 %v2298, 7
        %v2300 = vsub.s32 6, %v2299
        %v2301 = vrot.slane %v519, %v2300
        %2303 = vbcast.lane.b32.xlu0 %v2301, 256
        %v2304 = vpop.permute.xlu0 %2303
        %v2305 = vlaneseq
        %v2306 = vshrl.u32 %v2305, 7
        %v2307 = vsub.s32 7, %v2306
        %v2308 = vrot.slane %v519, %v2307
        %2310 = vbcast.lane.b32.xlu0 %v2308, 256
        %v2311 = vpop.permute.xlu0 %2310
        %v2312 = vld [vmem:[%s286] sm:$0xf]
        %v2313 = vld [vmem:[%s286 + $0x4] sm:$0xf]
        %v2314 = vld [vmem:[%s286 + $0x8] sm:$0xf]
        %v2315 = vld [vmem:[%s286 + $0xc] sm:$0xf]
        %v2316 = vld [vmem:[%s286 + $0x10] sm:$0xf]
        %v2317 = vld [vmem:[%s286 + $0x14] sm:$0xf]
        %v2318 = vld [vmem:[%s286 + $0x18] sm:$0xf]
        %v2319 = vld [vmem:[%s286 + $0x1c] sm:$0xf]
        %v2320 = vld [vmem:[%s286 + $0x20] sm:$0xf]
        %v2321 = vld [vmem:[%s286 + $0x24] sm:$0xf]
        %v2322 = vld [vmem:[%s286 + $0x28] sm:$0xf]
        %v2323 = vld [vmem:[%s286 + $0x2c] sm:$0xf]
        %v2324 = vld [vmem:[%s286 + $0x30] sm:$0xf]
        %v2325 = vld [vmem:[%s286 + $0x34] sm:$0xf]
        %v2326 = vld [vmem:[%s286 + $0x38] sm:$0xf]
        %v2327 = vld [vmem:[%s286 + $0x3c] sm:$0xf]
        %v2328 = vmul.f32 %v526, %v2312
        %v2329 = vmul.f32 %v533, %v2312
        %v2330 = vmul.f32 %v540, %v2312
        %v2331 = vmul.f32 %v547, %v2312
        %v2332 = vmul.f32 %v554, %v2312
        %v2333 = vmul.f32 %v561, %v2312
        %v2334 = vmul.f32 %v568, %v2312
        %v2335 = vmul.f32 %v575, %v2312
        %v2336 = vmul.f32 %v582, %v2312
        %v2337 = vmul.f32 %v589, %v2312
        %v2338 = vmul.f32 %v596, %v2312
        %v2339 = vmul.f32 %v603, %v2312
        %v2340 = vmul.f32 %v610, %v2312
        %v2341 = vmul.f32 %v617, %v2312
        %v2342 = vmul.f32 %v624, %v2312
        %v2343 = vmul.f32 %v631, %v2312
        %v2344 = vmul.f32 %v638, %v2313
        %v2345 = vmul.f32 %v645, %v2313
        %v2346 = vmul.f32 %v652, %v2313
        %v2347 = vmul.f32 %v659, %v2313
        %v2348 = vmul.f32 %v666, %v2313
        %v2349 = vmul.f32 %v673, %v2313
        %v2350 = vmul.f32 %v680, %v2313
        %v2351 = vmul.f32 %v687, %v2313
        %v2352 = vmul.f32 %v694, %v2313
        %v2353 = vmul.f32 %v701, %v2313
        %v2354 = vmul.f32 %v708, %v2313
        %v2355 = vmul.f32 %v715, %v2313
        %v2356 = vmul.f32 %v722, %v2313
        %v2357 = vmul.f32 %v729, %v2313
        %v2358 = vmul.f32 %v736, %v2313
        %v2359 = vmul.f32 %v743, %v2313
        %v2360 = vmul.f32 %v750, %v2314
        %v2361 = vmul.f32 %v757, %v2314
        %v2362 = vmul.f32 %v764, %v2314
        %v2363 = vmul.f32 %v771, %v2314
        %v2364 = vmul.f32 %v778, %v2314
        %v2365 = vmul.f32 %v785, %v2314
        %v2366 = vmul.f32 %v792, %v2314
        %v2367 = vmul.f32 %v799, %v2314
        %v2368 = vmul.f32 %v806, %v2314
        %v2369 = vmul.f32 %v813, %v2314
        %v2370 = vmul.f32 %v820, %v2314
        %v2371 = vmul.f32 %v827, %v2314
        %v2372 = vmul.f32 %v834, %v2314
        %v2373 = vmul.f32 %v841, %v2314
        %v2374 = vmul.f32 %v848, %v2314
        %v2375 = vmul.f32 %v855, %v2314
        %v2376 = vmul.f32 %v862, %v2315
        %v2377 = vmul.f32 %v869, %v2315
        %v2378 = vmul.f32 %v876, %v2315
        %v2379 = vmul.f32 %v883, %v2315
        %v2380 = vmul.f32 %v890, %v2315
        %v2381 = vmul.f32 %v897, %v2315
        %v2382 = vmul.f32 %v904, %v2315
        %v2383 = vmul.f32 %v911, %v2315
        %v2384 = vmul.f32 %v918, %v2315
        %v2385 = vmul.f32 %v925, %v2315
        %v2386 = vmul.f32 %v932, %v2315
        %v2387 = vmul.f32 %v939, %v2315
        %v2388 = vmul.f32 %v946, %v2315
        %v2389 = vmul.f32 %v953, %v2315
        %v2390 = vmul.f32 %v960, %v2315
        %v2391 = vmul.f32 %v967, %v2315
        %v2392 = vmul.f32 %v974, %v2316
        %v2393 = vmul.f32 %v981, %v2316
        %v2394 = vmul.f32 %v988, %v2316
        %v2395 = vmul.f32 %v995, %v2316
        %v2396 = vmul.f32 %v1002, %v2316
        %v2397 = vmul.f32 %v1009, %v2316
        %v2398 = vmul.f32 %v1016, %v2316
        %v2399 = vmul.f32 %v1023, %v2316
        %v2400 = vmul.f32 %v1030, %v2316
        %v2401 = vmul.f32 %v1037, %v2316
        %v2402 = vmul.f32 %v1044, %v2316
        %v2403 = vmul.f32 %v1051, %v2316
        %v2404 = vmul.f32 %v1058, %v2316
        %v2405 = vmul.f32 %v1065, %v2316
        %v2406 = vmul.f32 %v1072, %v2316
        %v2407 = vmul.f32 %v1079, %v2316
        %v2408 = vmul.f32 %v1086, %v2317
        %v2409 = vmul.f32 %v1093, %v2317
        %v2410 = vmul.f32 %v1100, %v2317
        %v2411 = vmul.f32 %v1107, %v2317
        %v2412 = vmul.f32 %v1114, %v2317
        %v2413 = vmul.f32 %v1121, %v2317
        %v2414 = vmul.f32 %v1128, %v2317
        %v2415 = vmul.f32 %v1135, %v2317
        %v2416 = vmul.f32 %v1142, %v2317
        %v2417 = vmul.f32 %v1149, %v2317
        %v2418 = vmul.f32 %v1156, %v2317
        %v2419 = vmul.f32 %v1163, %v2317
        %v2420 = vmul.f32 %v1170, %v2317
        %v2421 = vmul.f32 %v1177, %v2317
        %v2422 = vmul.f32 %v1184, %v2317
        %v2423 = vmul.f32 %v1191, %v2317
        %v2424 = vmul.f32 %v1198, %v2318
        %v2425 = vmul.f32 %v1205, %v2318
        %v2426 = vmul.f32 %v1212, %v2318
        %v2427 = vmul.f32 %v1219, %v2318
        %v2428 = vmul.f32 %v1226, %v2318
        %v2429 = vmul.f32 %v1233, %v2318
        %v2430 = vmul.f32 %v1240, %v2318
        %v2431 = vmul.f32 %v1247, %v2318
        %v2432 = vmul.f32 %v1254, %v2318
        %v2433 = vmul.f32 %v1261, %v2318
        %v2434 = vmul.f32 %v1268, %v2318
        %v2435 = vmul.f32 %v1275, %v2318
        %v2436 = vmul.f32 %v1282, %v2318
        %v2437 = vmul.f32 %v1289, %v2318
        %v2438 = vmul.f32 %v1296, %v2318
        %v2439 = vmul.f32 %v1303, %v2318
        %v2440 = vmul.f32 %v1310, %v2319
        %v2441 = vmul.f32 %v1317, %v2319
        %v2442 = vmul.f32 %v1324, %v2319
        %v2443 = vmul.f32 %v1331, %v2319
        %v2444 = vmul.f32 %v1338, %v2319
        %v2445 = vmul.f32 %v1345, %v2319
        %v2446 = vmul.f32 %v1352, %v2319
        %v2447 = vmul.f32 %v1359, %v2319
        %v2448 = vmul.f32 %v1366, %v2319
        %v2449 = vmul.f32 %v1373, %v2319
        %v2450 = vmul.f32 %v1380, %v2319
        %v2451 = vmul.f32 %v1387, %v2319
        %v2452 = vmul.f32 %v1394, %v2319
        %v2453 = vmul.f32 %v1401, %v2319
        %v2454 = vmul.f32 %v1408, %v2319
        %v2455 = vmul.f32 %v1415, %v2319
        %v2456 = vmul.f32 %v1422, %v2320
        %v2457 = vmul.f32 %v1429, %v2320
        %v2458 = vmul.f32 %v1436, %v2320
        %v2459 = vmul.f32 %v1443, %v2320
        %v2460 = vmul.f32 %v1450, %v2320
        %v2461 = vmul.f32 %v1457, %v2320
        %v2462 = vmul.f32 %v1464, %v2320
        %v2463 = vmul.f32 %v1471, %v2320
        %v2464 = vmul.f32 %v1478, %v2320
        %v2465 = vmul.f32 %v1485, %v2320
        %v2466 = vmul.f32 %v1492, %v2320
        %v2467 = vmul.f32 %v1499, %v2320
        %v2468 = vmul.f32 %v1506, %v2320
        %v2469 = vmul.f32 %v1513, %v2320
        %v2470 = vmul.f32 %v1520, %v2320
        %v2471 = vmul.f32 %v1527, %v2320
        %v2472 = vmul.f32 %v1534, %v2321
        %v2473 = vmul.f32 %v1541, %v2321
        %v2474 = vmul.f32 %v1548, %v2321
        %v2475 = vmul.f32 %v1555, %v2321
        %v2476 = vmul.f32 %v1562, %v2321
        %v2477 = vmul.f32 %v1569, %v2321
        %v2478 = vmul.f32 %v1576, %v2321
        %v2479 = vmul.f32 %v1583, %v2321
        %v2480 = vmul.f32 %v1590, %v2321
        %v2481 = vmul.f32 %v1597, %v2321
        %v2482 = vmul.f32 %v1604, %v2321
        %v2483 = vmul.f32 %v1611, %v2321
        %v2484 = vmul.f32 %v1618, %v2321
        %v2485 = vmul.f32 %v1625, %v2321
        %v2486 = vmul.f32 %v1632, %v2321
        %v2487 = vmul.f32 %v1639, %v2321
        %v2488 = vmul.f32 %v1646, %v2322
        %v2489 = vmul.f32 %v1653, %v2322
        %v2490 = vmul.f32 %v1660, %v2322
        %v2491 = vmul.f32 %v1667, %v2322
        %v2492 = vmul.f32 %v1674, %v2322
        %v2493 = vmul.f32 %v1681, %v2322
        %v2494 = vmul.f32 %v1688, %v2322
        %v2495 = vmul.f32 %v1695, %v2322
        %v2496 = vmul.f32 %v1702, %v2322
        %v2497 = vmul.f32 %v1709, %v2322
        %v2498 = vmul.f32 %v1716, %v2322
        %v2499 = vmul.f32 %v1723, %v2322
        %v2500 = vmul.f32 %v1730, %v2322
        %v2501 = vmul.f32 %v1737, %v2322
        %v2502 = vmul.f32 %v1744, %v2322
        %v2503 = vmul.f32 %v1751, %v2322
        %v2504 = vmul.f32 %v1758, %v2323
        %v2505 = vmul.f32 %v1765, %v2323
        %v2506 = vmul.f32 %v1772, %v2323
        %v2507 = vmul.f32 %v1779, %v2323
        %v2508 = vmul.f32 %v1786, %v2323
        %v2509 = vmul.f32 %v1793, %v2323
        %v2510 = vmul.f32 %v1800, %v2323
        %v2511 = vmul.f32 %v1807, %v2323
        %v2512 = vmul.f32 %v1814, %v2323
        %v2513 = vmul.f32 %v1821, %v2323
        %v2514 = vmul.f32 %v1828, %v2323
        %v2515 = vmul.f32 %v1835, %v2323
        %v2516 = vmul.f32 %v1842, %v2323
        %v2517 = vmul.f32 %v1849, %v2323
        %v2518 = vmul.f32 %v1856, %v2323
        %v2519 = vmul.f32 %v1863, %v2323
        %v2520 = vmul.f32 %v1870, %v2324
        %v2521 = vmul.f32 %v1877, %v2324
        %v2522 = vmul.f32 %v1884, %v2324
        %v2523 = vmul.f32 %v1891, %v2324
        %v2524 = vmul.f32 %v1898, %v2324
        %v2525 = vmul.f32 %v1905, %v2324
        %v2526 = vmul.f32 %v1912, %v2324
        %v2527 = vmul.f32 %v1919, %v2324
        %v2528 = vmul.f32 %v1926, %v2324
        %v2529 = vmul.f32 %v1933, %v2324
        %v2530 = vmul.f32 %v1940, %v2324
        %v2531 = vmul.f32 %v1947, %v2324
        %v2532 = vmul.f32 %v1954, %v2324
        %v2533 = vmul.f32 %v1961, %v2324
        %v2534 = vmul.f32 %v1968, %v2324
        %v2535 = vmul.f32 %v1975, %v2324
        %v2536 = vmul.f32 %v1982, %v2325
        %v2537 = vmul.f32 %v1989, %v2325
        %v2538 = vmul.f32 %v1996, %v2325
        %v2539 = vmul.f32 %v2003, %v2325
        %v2540 = vmul.f32 %v2010, %v2325
        %v2541 = vmul.f32 %v2017, %v2325
        %v2542 = vmul.f32 %v2024, %v2325
        %v2543 = vmul.f32 %v2031, %v2325
        %v2544 = vmul.f32 %v2038, %v2325
        %v2545 = vmul.f32 %v2045, %v2325
        %v2546 = vmul.f32 %v2052, %v2325
        %v2547 = vmul.f32 %v2059, %v2325
        %v2548 = vmul.f32 %v2066, %v2325
        %v2549 = vmul.f32 %v2073, %v2325
        %v2550 = vmul.f32 %v2080, %v2325
        %v2551 = vmul.f32 %v2087, %v2325
        %v2552 = vmul.f32 %v2094, %v2326
        %v2553 = vmul.f32 %v2101, %v2326
        %v2554 = vmul.f32 %v2108, %v2326
        %v2555 = vmul.f32 %v2115, %v2326
        %v2556 = vmul.f32 %v2122, %v2326
        %v2557 = vmul.f32 %v2129, %v2326
        %v2558 = vmul.f32 %v2136, %v2326
        %v2559 = vmul.f32 %v2143, %v2326
        %v2560 = vmul.f32 %v2150, %v2326
        %v2561 = vmul.f32 %v2157, %v2326
        %v2562 = vmul.f32 %v2164, %v2326
        %v2563 = vmul.f32 %v2171, %v2326
        %v2564 = vmul.f32 %v2178, %v2326
        %v2565 = vmul.f32 %v2185, %v2326
        %v2566 = vmul.f32 %v2192, %v2326
        %v2567 = vmul.f32 %v2199, %v2326
        %v2568 = vmul.f32 %v2206, %v2327
        %v2569 = vmul.f32 %v2213, %v2327
        %v2570 = vmul.f32 %v2220, %v2327
        %v2571 = vmul.f32 %v2227, %v2327
        %v2572 = vmul.f32 %v2234, %v2327
        %v2573 = vmul.f32 %v2241, %v2327
        %v2574 = vmul.f32 %v2248, %v2327
        %v2575 = vmul.f32 %v2255, %v2327
        %v2576 = vmul.f32 %v2262, %v2327
        %v2577 = vmul.f32 %v2269, %v2327
        %v2578 = vmul.f32 %v2276, %v2327
        %v2579 = vmul.f32 %v2283, %v2327
        %v2580 = vmul.f32 %v2290, %v2327
        %v2581 = vmul.f32 %v2297, %v2327
        %v2582 = vmul.f32 %v2304, %v2327
        %v2583 = vmul.f32 %v2311, %v2327
        %vm2584 = vcmask 322560
        %v2585 = vsel %vm2584, %v2328, 0.0
        %v2586 = vrot.slane %v2585, 4
        %v2587 = vadd.f32 %v2585, %v2586
        %v2588 = vrot.slane %v2587, 2
        %v2589 = vadd.f32 %v2587, %v2588
        %v2590 = vrot.slane %v2589, 1
        %v2591 = vadd.f32 %v2589, %v2590
        %v2592 = vsel %vm2584, %v2329, 0.0
        %v2593 = vrot.slane %v2592, 4
        %v2594 = vadd.f32 %v2592, %v2593
        %v2595 = vrot.slane %v2594, 2
        %v2596 = vadd.f32 %v2594, %v2595
        %v2597 = vrot.slane %v2596, 1
        %v2598 = vadd.f32 %v2596, %v2597
        %v2599 = vsel %vm2584, %v2330, 0.0
        %v2600 = vrot.slane %v2599, 4
        %v2601 = vadd.f32 %v2599, %v2600
        %v2602 = vrot.slane %v2601, 2
        %v2603 = vadd.f32 %v2601, %v2602
        %v2604 = vrot.slane %v2603, 1
        %v2605 = vadd.f32 %v2603, %v2604
        %v2606 = vsel %vm2584, %v2331, 0.0
        %v2607 = vrot.slane %v2606, 4
        %v2608 = vadd.f32 %v2606, %v2607
        %v2609 = vrot.slane %v2608, 2
        %v2610 = vadd.f32 %v2608, %v2609
        %v2611 = vrot.slane %v2610, 1
        %v2612 = vadd.f32 %v2610, %v2611
        %v2613 = vsel %vm2584, %v2332, 0.0
        %v2614 = vrot.slane %v2613, 4
        %v2615 = vadd.f32 %v2613, %v2614
        %v2616 = vrot.slane %v2615, 2
        %v2617 = vadd.f32 %v2615, %v2616
        %v2618 = vrot.slane %v2617, 1
        %v2619 = vadd.f32 %v2617, %v2618
        %v2620 = vsel %vm2584, %v2333, 0.0
        %v2621 = vrot.slane %v2620, 4
        %v2622 = vadd.f32 %v2620, %v2621
        %v2623 = vrot.slane %v2622, 2
        %v2624 = vadd.f32 %v2622, %v2623
        %v2625 = vrot.slane %v2624, 1
        %v2626 = vadd.f32 %v2624, %v2625
        %v2627 = vsel %vm2584, %v2334, 0.0
        %v2628 = vrot.slane %v2627, 4
        %v2629 = vadd.f32 %v2627, %v2628
        %v2630 = vrot.slane %v2629, 2
        %v2631 = vadd.f32 %v2629, %v2630
        %v2632 = vrot.slane %v2631, 1
        %v2633 = vadd.f32 %v2631, %v2632
        %v2634 = vsel %vm2584, %v2335, 0.0
        %v2635 = vrot.slane %v2634, 4
        %v2636 = vadd.f32 %v2634, %v2635
        %v2637 = vrot.slane %v2636, 2
        %v2638 = vadd.f32 %v2636, %v2637
        %v2639 = vrot.slane %v2638, 1
        %v2640 = vadd.f32 %v2638, %v2639
        %v2641 = vsel %vm2584, %v2336, 0.0
        %v2642 = vrot.slane %v2641, 4
        %v2643 = vadd.f32 %v2641, %v2642
        %v2644 = vrot.slane %v2643, 2
        %v2645 = vadd.f32 %v2643, %v2644
        %v2646 = vrot.slane %v2645, 1
        %v2647 = vadd.f32 %v2645, %v2646
        %v2648 = vsel %vm2584, %v2337, 0.0
        %v2649 = vrot.slane %v2648, 4
        %v2650 = vadd.f32 %v2648, %v2649
        %v2651 = vrot.slane %v2650, 2
        %v2652 = vadd.f32 %v2650, %v2651
        %v2653 = vrot.slane %v2652, 1
        %v2654 = vadd.f32 %v2652, %v2653
        %v2655 = vsel %vm2584, %v2338, 0.0
        %v2656 = vrot.slane %v2655, 4
        %v2657 = vadd.f32 %v2655, %v2656
        %v2658 = vrot.slane %v2657, 2
        %v2659 = vadd.f32 %v2657, %v2658
        %v2660 = vrot.slane %v2659, 1
        %v2661 = vadd.f32 %v2659, %v2660
        %v2662 = vsel %vm2584, %v2339, 0.0
        %v2663 = vrot.slane %v2662, 4
        %v2664 = vadd.f32 %v2662, %v2663
        %v2665 = vrot.slane %v2664, 2
        %v2666 = vadd.f32 %v2664, %v2665
        %v2667 = vrot.slane %v2666, 1
        %v2668 = vadd.f32 %v2666, %v2667
        %v2669 = vsel %vm2584, %v2340, 0.0
        %v2670 = vrot.slane %v2669, 4
        %v2671 = vadd.f32 %v2669, %v2670
        %v2672 = vrot.slane %v2671, 2
        %v2673 = vadd.f32 %v2671, %v2672
        %v2674 = vrot.slane %v2673, 1
        %v2675 = vadd.f32 %v2673, %v2674
        %v2676 = vsel %vm2584, %v2341, 0.0
        %v2677 = vrot.slane %v2676, 4
        %v2678 = vadd.f32 %v2676, %v2677
        %v2679 = vrot.slane %v2678, 2
        %v2680 = vadd.f32 %v2678, %v2679
        %v2681 = vrot.slane %v2680, 1
        %v2682 = vadd.f32 %v2680, %v2681
        %v2683 = vsel %vm2584, %v2342, 0.0
        %v2684 = vrot.slane %v2683, 4
        %v2685 = vadd.f32 %v2683, %v2684
        %v2686 = vrot.slane %v2685, 2
        %v2687 = vadd.f32 %v2685, %v2686
        %v2688 = vrot.slane %v2687, 1
        %v2689 = vadd.f32 %v2687, %v2688
        %v2690 = vsel %vm2584, %v2343, 0.0
        %v2691 = vrot.slane %v2690, 4
        %v2692 = vadd.f32 %v2690, %v2691
        %v2693 = vrot.slane %v2692, 2
        %v2694 = vadd.f32 %v2692, %v2693
        %v2695 = vrot.slane %v2694, 1
        %v2696 = vadd.f32 %v2694, %v2695
        %v2697 = vsel %vm2584, %v2344, 0.0
        %v2698 = vrot.slane %v2697, 4
        %v2699 = vadd.f32 %v2697, %v2698
        %v2700 = vrot.slane %v2699, 2
        %v2701 = vadd.f32 %v2699, %v2700
        %v2702 = vrot.slane %v2701, 1
        %v2703 = vadd.f32 %v2701, %v2702
        %v2704 = vsel %vm2584, %v2345, 0.0
        %v2705 = vrot.slane %v2704, 4
        %v2706 = vadd.f32 %v2704, %v2705
        %v2707 = vrot.slane %v2706, 2
        %v2708 = vadd.f32 %v2706, %v2707
        %v2709 = vrot.slane %v2708, 1
        %v2710 = vadd.f32 %v2708, %v2709
        %v2711 = vsel %vm2584, %v2346, 0.0
        %v2712 = vrot.slane %v2711, 4
        %v2713 = vadd.f32 %v2711, %v2712
        %v2714 = vrot.slane %v2713, 2
        %v2715 = vadd.f32 %v2713, %v2714
        %v2716 = vrot.slane %v2715, 1
        %v2717 = vadd.f32 %v2715, %v2716
        %v2718 = vsel %vm2584, %v2347, 0.0
        %v2719 = vrot.slane %v2718, 4
        %v2720 = vadd.f32 %v2718, %v2719
        %v2721 = vrot.slane %v2720, 2
        %v2722 = vadd.f32 %v2720, %v2721
        %v2723 = vrot.slane %v2722, 1
        %v2724 = vadd.f32 %v2722, %v2723
        %v2725 = vsel %vm2584, %v2348, 0.0
        %v2726 = vrot.slane %v2725, 4
        %v2727 = vadd.f32 %v2725, %v2726
        %v2728 = vrot.slane %v2727, 2
        %v2729 = vadd.f32 %v2727, %v2728
        %v2730 = vrot.slane %v2729, 1
        %v2731 = vadd.f32 %v2729, %v2730
        %v2732 = vsel %vm2584, %v2349, 0.0
        %v2733 = vrot.slane %v2732, 4
        %v2734 = vadd.f32 %v2732, %v2733
        %v2735 = vrot.slane %v2734, 2
        %v2736 = vadd.f32 %v2734, %v2735
        %v2737 = vrot.slane %v2736, 1
        %v2738 = vadd.f32 %v2736, %v2737
        %v2739 = vsel %vm2584, %v2350, 0.0
        %v2740 = vrot.slane %v2739, 4
        %v2741 = vadd.f32 %v2739, %v2740
        %v2742 = vrot.slane %v2741, 2
        %v2743 = vadd.f32 %v2741, %v2742
        %v2744 = vrot.slane %v2743, 1
        %v2745 = vadd.f32 %v2743, %v2744
        %v2746 = vsel %vm2584, %v2351, 0.0
        %v2747 = vrot.slane %v2746, 4
        %v2748 = vadd.f32 %v2746, %v2747
        %v2749 = vrot.slane %v2748, 2
        %v2750 = vadd.f32 %v2748, %v2749
        %v2751 = vrot.slane %v2750, 1
        %v2752 = vadd.f32 %v2750, %v2751
        %v2753 = vsel %vm2584, %v2352, 0.0
        %v2754 = vrot.slane %v2753, 4
        %v2755 = vadd.f32 %v2753, %v2754
        %v2756 = vrot.slane %v2755, 2
        %v2757 = vadd.f32 %v2755, %v2756
        %v2758 = vrot.slane %v2757, 1
        %v2759 = vadd.f32 %v2757, %v2758
        %v2760 = vsel %vm2584, %v2353, 0.0
        %v2761 = vrot.slane %v2760, 4
        %v2762 = vadd.f32 %v2760, %v2761
        %v2763 = vrot.slane %v2762, 2
        %v2764 = vadd.f32 %v2762, %v2763
        %v2765 = vrot.slane %v2764, 1
        %v2766 = vadd.f32 %v2764, %v2765
        %v2767 = vsel %vm2584, %v2354, 0.0
        %v2768 = vrot.slane %v2767, 4
        %v2769 = vadd.f32 %v2767, %v2768
        %v2770 = vrot.slane %v2769, 2
        %v2771 = vadd.f32 %v2769, %v2770
        %v2772 = vrot.slane %v2771, 1
        %v2773 = vadd.f32 %v2771, %v2772
        %v2774 = vsel %vm2584, %v2355, 0.0
        %v2775 = vrot.slane %v2774, 4
        %v2776 = vadd.f32 %v2774, %v2775
        %v2777 = vrot.slane %v2776, 2
        %v2778 = vadd.f32 %v2776, %v2777
        %v2779 = vrot.slane %v2778, 1
        %v2780 = vadd.f32 %v2778, %v2779
        %v2781 = vsel %vm2584, %v2356, 0.0
        %v2782 = vrot.slane %v2781, 4
        %v2783 = vadd.f32 %v2781, %v2782
        %v2784 = vrot.slane %v2783, 2
        %v2785 = vadd.f32 %v2783, %v2784
        %v2786 = vrot.slane %v2785, 1
        %v2787 = vadd.f32 %v2785, %v2786
        %v2788 = vsel %vm2584, %v2357, 0.0
        %v2789 = vrot.slane %v2788, 4
        %v2790 = vadd.f32 %v2788, %v2789
        %v2791 = vrot.slane %v2790, 2
        %v2792 = vadd.f32 %v2790, %v2791
        %v2793 = vrot.slane %v2792, 1
        %v2794 = vadd.f32 %v2792, %v2793
        %v2795 = vsel %vm2584, %v2358, 0.0
        %v2796 = vrot.slane %v2795, 4
        %v2797 = vadd.f32 %v2795, %v2796
        %v2798 = vrot.slane %v2797, 2
        %v2799 = vadd.f32 %v2797, %v2798
        %v2800 = vrot.slane %v2799, 1
        %v2801 = vadd.f32 %v2799, %v2800
        %v2802 = vsel %vm2584, %v2359, 0.0
        %v2803 = vrot.slane %v2802, 4
        %v2804 = vadd.f32 %v2802, %v2803
        %v2805 = vrot.slane %v2804, 2
        %v2806 = vadd.f32 %v2804, %v2805
        %v2807 = vrot.slane %v2806, 1
        %v2808 = vadd.f32 %v2806, %v2807
        %v2809 = vsel %vm2584, %v2360, 0.0
        %v2810 = vrot.slane %v2809, 4
        %v2811 = vadd.f32 %v2809, %v2810
        %v2812 = vrot.slane %v2811, 2
        %v2813 = vadd.f32 %v2811, %v2812
        %v2814 = vrot.slane %v2813, 1
        %v2815 = vadd.f32 %v2813, %v2814
        %v2816 = vsel %vm2584, %v2361, 0.0
        %v2817 = vrot.slane %v2816, 4
        %v2818 = vadd.f32 %v2816, %v2817
        %v2819 = vrot.slane %v2818, 2
        %v2820 = vadd.f32 %v2818, %v2819
        %v2821 = vrot.slane %v2820, 1
        %v2822 = vadd.f32 %v2820, %v2821
        %v2823 = vsel %vm2584, %v2362, 0.0
        %v2824 = vrot.slane %v2823, 4
        %v2825 = vadd.f32 %v2823, %v2824
        %v2826 = vrot.slane %v2825, 2
        %v2827 = vadd.f32 %v2825, %v2826
        %v2828 = vrot.slane %v2827, 1
        %v2829 = vadd.f32 %v2827, %v2828
        %v2830 = vsel %vm2584, %v2363, 0.0
        %v2831 = vrot.slane %v2830, 4
        %v2832 = vadd.f32 %v2830, %v2831
        %v2833 = vrot.slane %v2832, 2
        %v2834 = vadd.f32 %v2832, %v2833
        %v2835 = vrot.slane %v2834, 1
        %v2836 = vadd.f32 %v2834, %v2835
        %v2837 = vsel %vm2584, %v2364, 0.0
        %v2838 = vrot.slane %v2837, 4
        %v2839 = vadd.f32 %v2837, %v2838
        %v2840 = vrot.slane %v2839, 2
        %v2841 = vadd.f32 %v2839, %v2840
        %v2842 = vrot.slane %v2841, 1
        %v2843 = vadd.f32 %v2841, %v2842
        %v2844 = vsel %vm2584, %v2365, 0.0
        %v2845 = vrot.slane %v2844, 4
        %v2846 = vadd.f32 %v2844, %v2845
        %v2847 = vrot.slane %v2846, 2
        %v2848 = vadd.f32 %v2846, %v2847
        %v2849 = vrot.slane %v2848, 1
        %v2850 = vadd.f32 %v2848, %v2849
        %v2851 = vsel %vm2584, %v2366, 0.0
        %v2852 = vrot.slane %v2851, 4
        %v2853 = vadd.f32 %v2851, %v2852
        %v2854 = vrot.slane %v2853, 2
        %v2855 = vadd.f32 %v2853, %v2854
        %v2856 = vrot.slane %v2855, 1
        %v2857 = vadd.f32 %v2855, %v2856
        %v2858 = vsel %vm2584, %v2367, 0.0
        %v2859 = vrot.slane %v2858, 4
        %v2860 = vadd.f32 %v2858, %v2859
        %v2861 = vrot.slane %v2860, 2
        %v2862 = vadd.f32 %v2860, %v2861
        %v2863 = vrot.slane %v2862, 1
        %v2864 = vadd.f32 %v2862, %v2863
        %v2865 = vsel %vm2584, %v2368, 0.0
        %v2866 = vrot.slane %v2865, 4
        %v2867 = vadd.f32 %v2865, %v2866
        %v2868 = vrot.slane %v2867, 2
        %v2869 = vadd.f32 %v2867, %v2868
        %v2870 = vrot.slane %v2869, 1
        %v2871 = vadd.f32 %v2869, %v2870
        %v2872 = vsel %vm2584, %v2369, 0.0
        %v2873 = vrot.slane %v2872, 4
        %v2874 = vadd.f32 %v2872, %v2873
        %v2875 = vrot.slane %v2874, 2
        %v2876 = vadd.f32 %v2874, %v2875
        %v2877 = vrot.slane %v2876, 1
        %v2878 = vadd.f32 %v2876, %v2877
        %v2879 = vsel %vm2584, %v2370, 0.0
        %v2880 = vrot.slane %v2879, 4
        %v2881 = vadd.f32 %v2879, %v2880
        %v2882 = vrot.slane %v2881, 2
        %v2883 = vadd.f32 %v2881, %v2882
        %v2884 = vrot.slane %v2883, 1
        %v2885 = vadd.f32 %v2883, %v2884
        %v2886 = vsel %vm2584, %v2371, 0.0
        %v2887 = vrot.slane %v2886, 4
        %v2888 = vadd.f32 %v2886, %v2887
        %v2889 = vrot.slane %v2888, 2
        %v2890 = vadd.f32 %v2888, %v2889
        %v2891 = vrot.slane %v2890, 1
        %v2892 = vadd.f32 %v2890, %v2891
        %v2893 = vsel %vm2584, %v2372, 0.0
        %v2894 = vrot.slane %v2893, 4
        %v2895 = vadd.f32 %v2893, %v2894
        %v2896 = vrot.slane %v2895, 2
        %v2897 = vadd.f32 %v2895, %v2896
        %v2898 = vrot.slane %v2897, 1
        %v2899 = vadd.f32 %v2897, %v2898
        %v2900 = vsel %vm2584, %v2373, 0.0
        %v2901 = vrot.slane %v2900, 4
        %v2902 = vadd.f32 %v2900, %v2901
        %v2903 = vrot.slane %v2902, 2
        %v2904 = vadd.f32 %v2902, %v2903
        %v2905 = vrot.slane %v2904, 1
        %v2906 = vadd.f32 %v2904, %v2905
        %v2907 = vsel %vm2584, %v2374, 0.0
        %v2908 = vrot.slane %v2907, 4
        %v2909 = vadd.f32 %v2907, %v2908
        %v2910 = vrot.slane %v2909, 2
        %v2911 = vadd.f32 %v2909, %v2910
        %v2912 = vrot.slane %v2911, 1
        %v2913 = vadd.f32 %v2911, %v2912
        %v2914 = vsel %vm2584, %v2375, 0.0
        %v2915 = vrot.slane %v2914, 4
        %v2916 = vadd.f32 %v2914, %v2915
        %v2917 = vrot.slane %v2916, 2
        %v2918 = vadd.f32 %v2916, %v2917
        %v2919 = vrot.slane %v2918, 1
        %v2920 = vadd.f32 %v2918, %v2919
        %v2921 = vsel %vm2584, %v2376, 0.0
        %v2922 = vrot.slane %v2921, 4
        %v2923 = vadd.f32 %v2921, %v2922
        %v2924 = vrot.slane %v2923, 2
        %v2925 = vadd.f32 %v2923, %v2924
        %v2926 = vrot.slane %v2925, 1
        %v2927 = vadd.f32 %v2925, %v2926
        %v2928 = vsel %vm2584, %v2377, 0.0
        %v2929 = vrot.slane %v2928, 4
        %v2930 = vadd.f32 %v2928, %v2929
        %v2931 = vrot.slane %v2930, 2
        %v2932 = vadd.f32 %v2930, %v2931
        %v2933 = vrot.slane %v2932, 1
        %v2934 = vadd.f32 %v2932, %v2933
        %v2935 = vsel %vm2584, %v2378, 0.0
        %v2936 = vrot.slane %v2935, 4
        %v2937 = vadd.f32 %v2935, %v2936
        %v2938 = vrot.slane %v2937, 2
        %v2939 = vadd.f32 %v2937, %v2938
        %v2940 = vrot.slane %v2939, 1
        %v2941 = vadd.f32 %v2939, %v2940
        %v2942 = vsel %vm2584, %v2379, 0.0
        %v2943 = vrot.slane %v2942, 4
        %v2944 = vadd.f32 %v2942, %v2943
        %v2945 = vrot.slane %v2944, 2
        %v2946 = vadd.f32 %v2944, %v2945
        %v2947 = vrot.slane %v2946, 1
        %v2948 = vadd.f32 %v2946, %v2947
        %v2949 = vsel %vm2584, %v2380, 0.0
        %v2950 = vrot.slane %v2949, 4
        %v2951 = vadd.f32 %v2949, %v2950
        %v2952 = vrot.slane %v2951, 2
        %v2953 = vadd.f32 %v2951, %v2952
        %v2954 = vrot.slane %v2953, 1
        %v2955 = vadd.f32 %v2953, %v2954
        %v2956 = vsel %vm2584, %v2381, 0.0
        %v2957 = vrot.slane %v2956, 4
        %v2958 = vadd.f32 %v2956, %v2957
        %v2959 = vrot.slane %v2958, 2
        %v2960 = vadd.f32 %v2958, %v2959
        %v2961 = vrot.slane %v2960, 1
        %v2962 = vadd.f32 %v2960, %v2961
        %v2963 = vsel %vm2584, %v2382, 0.0
        %v2964 = vrot.slane %v2963, 4
        %v2965 = vadd.f32 %v2963, %v2964
        %v2966 = vrot.slane %v2965, 2
        %v2967 = vadd.f32 %v2965, %v2966
        %v2968 = vrot.slane %v2967, 1
        %v2969 = vadd.f32 %v2967, %v2968
        %v2970 = vsel %vm2584, %v2383, 0.0
        %v2971 = vrot.slane %v2970, 4
        %v2972 = vadd.f32 %v2970, %v2971
        %v2973 = vrot.slane %v2972, 2
        %v2974 = vadd.f32 %v2972, %v2973
        %v2975 = vrot.slane %v2974, 1
        %v2976 = vadd.f32 %v2974, %v2975
        %v2977 = vsel %vm2584, %v2384, 0.0
        %v2978 = vrot.slane %v2977, 4
        %v2979 = vadd.f32 %v2977, %v2978
        %v2980 = vrot.slane %v2979, 2
        %v2981 = vadd.f32 %v2979, %v2980
        %v2982 = vrot.slane %v2981, 1
        %v2983 = vadd.f32 %v2981, %v2982
        %v2984 = vsel %vm2584, %v2385, 0.0
        %v2985 = vrot.slane %v2984, 4
        %v2986 = vadd.f32 %v2984, %v2985
        %v2987 = vrot.slane %v2986, 2
        %v2988 = vadd.f32 %v2986, %v2987
        %v2989 = vrot.slane %v2988, 1
        %v2990 = vadd.f32 %v2988, %v2989
        %v2991 = vsel %vm2584, %v2386, 0.0
        %v2992 = vrot.slane %v2991, 4
        %v2993 = vadd.f32 %v2991, %v2992
        %v2994 = vrot.slane %v2993, 2
        %v2995 = vadd.f32 %v2993, %v2994
        %v2996 = vrot.slane %v2995, 1
        %v2997 = vadd.f32 %v2995, %v2996
        %v2998 = vsel %vm2584, %v2387, 0.0
        %v2999 = vrot.slane %v2998, 4
        %v3000 = vadd.f32 %v2998, %v2999
        %v3001 = vrot.slane %v3000, 2
        %v3002 = vadd.f32 %v3000, %v3001
        %v3003 = vrot.slane %v3002, 1
        %v3004 = vadd.f32 %v3002, %v3003
        %v3005 = vsel %vm2584, %v2388, 0.0
        %v3006 = vrot.slane %v3005, 4
        %v3007 = vadd.f32 %v3005, %v3006
        %v3008 = vrot.slane %v3007, 2
        %v3009 = vadd.f32 %v3007, %v3008
        %v3010 = vrot.slane %v3009, 1
        %v3011 = vadd.f32 %v3009, %v3010
        %v3012 = vsel %vm2584, %v2389, 0.0
        %v3013 = vrot.slane %v3012, 4
        %v3014 = vadd.f32 %v3012, %v3013
        %v3015 = vrot.slane %v3014, 2
        %v3016 = vadd.f32 %v3014, %v3015
        %v3017 = vrot.slane %v3016, 1
        %v3018 = vadd.f32 %v3016, %v3017
        %v3019 = vsel %vm2584, %v2390, 0.0
        %v3020 = vrot.slane %v3019, 4
        %v3021 = vadd.f32 %v3019, %v3020
        %v3022 = vrot.slane %v3021, 2
        %v3023 = vadd.f32 %v3021, %v3022
        %v3024 = vrot.slane %v3023, 1
        %v3025 = vadd.f32 %v3023, %v3024
        %v3026 = vsel %vm2584, %v2391, 0.0
        %v3027 = vrot.slane %v3026, 4
        %v3028 = vadd.f32 %v3026, %v3027
        %v3029 = vrot.slane %v3028, 2
        %v3030 = vadd.f32 %v3028, %v3029
        %v3031 = vrot.slane %v3030, 1
        %v3032 = vadd.f32 %v3030, %v3031
        %v3033 = vsel %vm2584, %v2392, 0.0
        %v3034 = vrot.slane %v3033, 4
        %v3035 = vadd.f32 %v3033, %v3034
        %v3036 = vrot.slane %v3035, 2
        %v3037 = vadd.f32 %v3035, %v3036
        %v3038 = vrot.slane %v3037, 1
        %v3039 = vadd.f32 %v3037, %v3038
        %v3040 = vsel %vm2584, %v2393, 0.0
        %v3041 = vrot.slane %v3040, 4
        %v3042 = vadd.f32 %v3040, %v3041
        %v3043 = vrot.slane %v3042, 2
        %v3044 = vadd.f32 %v3042, %v3043
        %v3045 = vrot.slane %v3044, 1
        %v3046 = vadd.f32 %v3044, %v3045
        %v3047 = vsel %vm2584, %v2394, 0.0
        %v3048 = vrot.slane %v3047, 4
        %v3049 = vadd.f32 %v3047, %v3048
        %v3050 = vrot.slane %v3049, 2
        %v3051 = vadd.f32 %v3049, %v3050
        %v3052 = vrot.slane %v3051, 1
        %v3053 = vadd.f32 %v3051, %v3052
        %v3054 = vsel %vm2584, %v2395, 0.0
        %v3055 = vrot.slane %v3054, 4
        %v3056 = vadd.f32 %v3054, %v3055
        %v3057 = vrot.slane %v3056, 2
        %v3058 = vadd.f32 %v3056, %v3057
        %v3059 = vrot.slane %v3058, 1
        %v3060 = vadd.f32 %v3058, %v3059
        %v3061 = vsel %vm2584, %v2396, 0.0
        %v3062 = vrot.slane %v3061, 4
        %v3063 = vadd.f32 %v3061, %v3062
        %v3064 = vrot.slane %v3063, 2
        %v3065 = vadd.f32 %v3063, %v3064
        %v3066 = vrot.slane %v3065, 1
        %v3067 = vadd.f32 %v3065, %v3066
        %v3068 = vsel %vm2584, %v2397, 0.0
        %v3069 = vrot.slane %v3068, 4
        %v3070 = vadd.f32 %v3068, %v3069
        %v3071 = vrot.slane %v3070, 2
        %v3072 = vadd.f32 %v3070, %v3071
        %v3073 = vrot.slane %v3072, 1
        %v3074 = vadd.f32 %v3072, %v3073
        %v3075 = vsel %vm2584, %v2398, 0.0
        %v3076 = vrot.slane %v3075, 4
        %v3077 = vadd.f32 %v3075, %v3076
        %v3078 = vrot.slane %v3077, 2
        %v3079 = vadd.f32 %v3077, %v3078
        %v3080 = vrot.slane %v3079, 1
        %v3081 = vadd.f32 %v3079, %v3080
        %v3082 = vsel %vm2584, %v2399, 0.0
        %v3083 = vrot.slane %v3082, 4
        %v3084 = vadd.f32 %v3082, %v3083
        %v3085 = vrot.slane %v3084, 2
        %v3086 = vadd.f32 %v3084, %v3085
        %v3087 = vrot.slane %v3086, 1
        %v3088 = vadd.f32 %v3086, %v3087
        %v3089 = vsel %vm2584, %v2400, 0.0
        %v3090 = vrot.slane %v3089, 4
        %v3091 = vadd.f32 %v3089, %v3090
        %v3092 = vrot.slane %v3091, 2
        %v3093 = vadd.f32 %v3091, %v3092
        %v3094 = vrot.slane %v3093, 1
        %v3095 = vadd.f32 %v3093, %v3094
        %v3096 = vsel %vm2584, %v2401, 0.0
        %v3097 = vrot.slane %v3096, 4
        %v3098 = vadd.f32 %v3096, %v3097
        %v3099 = vrot.slane %v3098, 2
        %v3100 = vadd.f32 %v3098, %v3099
        %v3101 = vrot.slane %v3100, 1
        %v3102 = vadd.f32 %v3100, %v3101
        %v3103 = vsel %vm2584, %v2402, 0.0
        %v3104 = vrot.slane %v3103, 4
        %v3105 = vadd.f32 %v3103, %v3104
        %v3106 = vrot.slane %v3105, 2
        %v3107 = vadd.f32 %v3105, %v3106
        %v3108 = vrot.slane %v3107, 1
        %v3109 = vadd.f32 %v3107, %v3108
        %v3110 = vsel %vm2584, %v2403, 0.0
        %v3111 = vrot.slane %v3110, 4
        %v3112 = vadd.f32 %v3110, %v3111
        %v3113 = vrot.slane %v3112, 2
        %v3114 = vadd.f32 %v3112, %v3113
        %v3115 = vrot.slane %v3114, 1
        %v3116 = vadd.f32 %v3114, %v3115
        %v3117 = vsel %vm2584, %v2404, 0.0
        %v3118 = vrot.slane %v3117, 4
        %v3119 = vadd.f32 %v3117, %v3118
        %v3120 = vrot.slane %v3119, 2
        %v3121 = vadd.f32 %v3119, %v3120
        %v3122 = vrot.slane %v3121, 1
        %v3123 = vadd.f32 %v3121, %v3122
        %v3124 = vsel %vm2584, %v2405, 0.0
        %v3125 = vrot.slane %v3124, 4
        %v3126 = vadd.f32 %v3124, %v3125
        %v3127 = vrot.slane %v3126, 2
        %v3128 = vadd.f32 %v3126, %v3127
        %v3129 = vrot.slane %v3128, 1
        %v3130 = vadd.f32 %v3128, %v3129
        %v3131 = vsel %vm2584, %v2406, 0.0
        %v3132 = vrot.slane %v3131, 4
        %v3133 = vadd.f32 %v3131, %v3132
        %v3134 = vrot.slane %v3133, 2
        %v3135 = vadd.f32 %v3133, %v3134
        %v3136 = vrot.slane %v3135, 1
        %v3137 = vadd.f32 %v3135, %v3136
        %v3138 = vsel %vm2584, %v2407, 0.0
        %v3139 = vrot.slane %v3138, 4
        %v3140 = vadd.f32 %v3138, %v3139
        %v3141 = vrot.slane %v3140, 2
        %v3142 = vadd.f32 %v3140, %v3141
        %v3143 = vrot.slane %v3142, 1
        %v3144 = vadd.f32 %v3142, %v3143
        %v3145 = vsel %vm2584, %v2408, 0.0
        %v3146 = vrot.slane %v3145, 4
        %v3147 = vadd.f32 %v3145, %v3146
        %v3148 = vrot.slane %v3147, 2
        %v3149 = vadd.f32 %v3147, %v3148
        %v3150 = vrot.slane %v3149, 1
        %v3151 = vadd.f32 %v3149, %v3150
        %v3152 = vsel %vm2584, %v2409, 0.0
        %v3153 = vrot.slane %v3152, 4
        %v3154 = vadd.f32 %v3152, %v3153
        %v3155 = vrot.slane %v3154, 2
        %v3156 = vadd.f32 %v3154, %v3155
        %v3157 = vrot.slane %v3156, 1
        %v3158 = vadd.f32 %v3156, %v3157
        %v3159 = vsel %vm2584, %v2410, 0.0
        %v3160 = vrot.slane %v3159, 4
        %v3161 = vadd.f32 %v3159, %v3160
        %v3162 = vrot.slane %v3161, 2
        %v3163 = vadd.f32 %v3161, %v3162
        %v3164 = vrot.slane %v3163, 1
        %v3165 = vadd.f32 %v3163, %v3164
        %v3166 = vsel %vm2584, %v2411, 0.0
        %v3167 = vrot.slane %v3166, 4
        %v3168 = vadd.f32 %v3166, %v3167
        %v3169 = vrot.slane %v3168, 2
        %v3170 = vadd.f32 %v3168, %v3169
        %v3171 = vrot.slane %v3170, 1
        %v3172 = vadd.f32 %v3170, %v3171
        %v3173 = vsel %vm2584, %v2412, 0.0
        %v3174 = vrot.slane %v3173, 4
        %v3175 = vadd.f32 %v3173, %v3174
        %v3176 = vrot.slane %v3175, 2
        %v3177 = vadd.f32 %v3175, %v3176
        %v3178 = vrot.slane %v3177, 1
        %v3179 = vadd.f32 %v3177, %v3178
        %v3180 = vsel %vm2584, %v2413, 0.0
        %v3181 = vrot.slane %v3180, 4
        %v3182 = vadd.f32 %v3180, %v3181
        %v3183 = vrot.slane %v3182, 2
        %v3184 = vadd.f32 %v3182, %v3183
        %v3185 = vrot.slane %v3184, 1
        %v3186 = vadd.f32 %v3184, %v3185
        %v3187 = vsel %vm2584, %v2414, 0.0
        %v3188 = vrot.slane %v3187, 4
        %v3189 = vadd.f32 %v3187, %v3188
        %v3190 = vrot.slane %v3189, 2
        %v3191 = vadd.f32 %v3189, %v3190
        %v3192 = vrot.slane %v3191, 1
        %v3193 = vadd.f32 %v3191, %v3192
        %v3194 = vsel %vm2584, %v2415, 0.0
        %v3195 = vrot.slane %v3194, 4
        %v3196 = vadd.f32 %v3194, %v3195
        %v3197 = vrot.slane %v3196, 2
        %v3198 = vadd.f32 %v3196, %v3197
        %v3199 = vrot.slane %v3198, 1
        %v3200 = vadd.f32 %v3198, %v3199
        %v3201 = vsel %vm2584, %v2416, 0.0
        %v3202 = vrot.slane %v3201, 4
        %v3203 = vadd.f32 %v3201, %v3202
        %v3204 = vrot.slane %v3203, 2
        %v3205 = vadd.f32 %v3203, %v3204
        %v3206 = vrot.slane %v3205, 1
        %v3207 = vadd.f32 %v3205, %v3206
        %v3208 = vsel %vm2584, %v2417, 0.0
        %v3209 = vrot.slane %v3208, 4
        %v3210 = vadd.f32 %v3208, %v3209
        %v3211 = vrot.slane %v3210, 2
        %v3212 = vadd.f32 %v3210, %v3211
        %v3213 = vrot.slane %v3212, 1
        %v3214 = vadd.f32 %v3212, %v3213
        %v3215 = vsel %vm2584, %v2418, 0.0
        %v3216 = vrot.slane %v3215, 4
        %v3217 = vadd.f32 %v3215, %v3216
        %v3218 = vrot.slane %v3217, 2
        %v3219 = vadd.f32 %v3217, %v3218
        %v3220 = vrot.slane %v3219, 1
        %v3221 = vadd.f32 %v3219, %v3220
        %v3222 = vsel %vm2584, %v2419, 0.0
        %v3223 = vrot.slane %v3222, 4
        %v3224 = vadd.f32 %v3222, %v3223
        %v3225 = vrot.slane %v3224, 2
        %v3226 = vadd.f32 %v3224, %v3225
        %v3227 = vrot.slane %v3226, 1
        %v3228 = vadd.f32 %v3226, %v3227
        %v3229 = vsel %vm2584, %v2420, 0.0
        %v3230 = vrot.slane %v3229, 4
        %v3231 = vadd.f32 %v3229, %v3230
        %v3232 = vrot.slane %v3231, 2
        %v3233 = vadd.f32 %v3231, %v3232
        %v3234 = vrot.slane %v3233, 1
        %v3235 = vadd.f32 %v3233, %v3234
        %v3236 = vsel %vm2584, %v2421, 0.0
        %v3237 = vrot.slane %v3236, 4
        %v3238 = vadd.f32 %v3236, %v3237
        %v3239 = vrot.slane %v3238, 2
        %v3240 = vadd.f32 %v3238, %v3239
        %v3241 = vrot.slane %v3240, 1
        %v3242 = vadd.f32 %v3240, %v3241
        %v3243 = vsel %vm2584, %v2422, 0.0
        %v3244 = vrot.slane %v3243, 4
        %v3245 = vadd.f32 %v3243, %v3244
        %v3246 = vrot.slane %v3245, 2
        %v3247 = vadd.f32 %v3245, %v3246
        %v3248 = vrot.slane %v3247, 1
        %v3249 = vadd.f32 %v3247, %v3248
        %v3250 = vsel %vm2584, %v2423, 0.0
        %v3251 = vrot.slane %v3250, 4
        %v3252 = vadd.f32 %v3250, %v3251
        %v3253 = vrot.slane %v3252, 2
        %v3254 = vadd.f32 %v3252, %v3253
        %v3255 = vrot.slane %v3254, 1
        %v3256 = vadd.f32 %v3254, %v3255
        %v3257 = vsel %vm2584, %v2424, 0.0
        %v3258 = vrot.slane %v3257, 4
        %v3259 = vadd.f32 %v3257, %v3258
        %v3260 = vrot.slane %v3259, 2
        %v3261 = vadd.f32 %v3259, %v3260
        %v3262 = vrot.slane %v3261, 1
        %v3263 = vadd.f32 %v3261, %v3262
        %v3264 = vsel %vm2584, %v2425, 0.0
        %v3265 = vrot.slane %v3264, 4
        %v3266 = vadd.f32 %v3264, %v3265
        %v3267 = vrot.slane %v3266, 2
        %v3268 = vadd.f32 %v3266, %v3267
        %v3269 = vrot.slane %v3268, 1
        %v3270 = vadd.f32 %v3268, %v3269
        %v3271 = vsel %vm2584, %v2426, 0.0
        %v3272 = vrot.slane %v3271, 4
        %v3273 = vadd.f32 %v3271, %v3272
        %v3274 = vrot.slane %v3273, 2
        %v3275 = vadd.f32 %v3273, %v3274
        %v3276 = vrot.slane %v3275, 1
        %v3277 = vadd.f32 %v3275, %v3276
        %v3278 = vsel %vm2584, %v2427, 0.0
        %v3279 = vrot.slane %v3278, 4
        %v3280 = vadd.f32 %v3278, %v3279
        %v3281 = vrot.slane %v3280, 2
        %v3282 = vadd.f32 %v3280, %v3281
        %v3283 = vrot.slane %v3282, 1
        %v3284 = vadd.f32 %v3282, %v3283
        %v3285 = vsel %vm2584, %v2428, 0.0
        %v3286 = vrot.slane %v3285, 4
        %v3287 = vadd.f32 %v3285, %v3286
        %v3288 = vrot.slane %v3287, 2
        %v3289 = vadd.f32 %v3287, %v3288
        %v3290 = vrot.slane %v3289, 1
        %v3291 = vadd.f32 %v3289, %v3290
        %v3292 = vsel %vm2584, %v2429, 0.0
        %v3293 = vrot.slane %v3292, 4
        %v3294 = vadd.f32 %v3292, %v3293
        %v3295 = vrot.slane %v3294, 2
        %v3296 = vadd.f32 %v3294, %v3295
        %v3297 = vrot.slane %v3296, 1
        %v3298 = vadd.f32 %v3296, %v3297
        %v3299 = vsel %vm2584, %v2430, 0.0
        %v3300 = vrot.slane %v3299, 4
        %v3301 = vadd.f32 %v3299, %v3300
        %v3302 = vrot.slane %v3301, 2
        %v3303 = vadd.f32 %v3301, %v3302
        %v3304 = vrot.slane %v3303, 1
        %v3305 = vadd.f32 %v3303, %v3304
        %v3306 = vsel %vm2584, %v2431, 0.0
        %v3307 = vrot.slane %v3306, 4
        %v3308 = vadd.f32 %v3306, %v3307
        %v3309 = vrot.slane %v3308, 2
        %v3310 = vadd.f32 %v3308, %v3309
        %v3311 = vrot.slane %v3310, 1
        %v3312 = vadd.f32 %v3310, %v3311
        %v3313 = vsel %vm2584, %v2432, 0.0
        %v3314 = vrot.slane %v3313, 4
        %v3315 = vadd.f32 %v3313, %v3314
        %v3316 = vrot.slane %v3315, 2
        %v3317 = vadd.f32 %v3315, %v3316
        %v3318 = vrot.slane %v3317, 1
        %v3319 = vadd.f32 %v3317, %v3318
        %v3320 = vsel %vm2584, %v2433, 0.0
        %v3321 = vrot.slane %v3320, 4
        %v3322 = vadd.f32 %v3320, %v3321
        %v3323 = vrot.slane %v3322, 2
        %v3324 = vadd.f32 %v3322, %v3323
        %v3325 = vrot.slane %v3324, 1
        %v3326 = vadd.f32 %v3324, %v3325
        %v3327 = vsel %vm2584, %v2434, 0.0
        %v3328 = vrot.slane %v3327, 4
        %v3329 = vadd.f32 %v3327, %v3328
        %v3330 = vrot.slane %v3329, 2
        %v3331 = vadd.f32 %v3329, %v3330
        %v3332 = vrot.slane %v3331, 1
        %v3333 = vadd.f32 %v3331, %v3332
        %v3334 = vsel %vm2584, %v2435, 0.0
        %v3335 = vrot.slane %v3334, 4
        %v3336 = vadd.f32 %v3334, %v3335
        %v3337 = vrot.slane %v3336, 2
        %v3338 = vadd.f32 %v3336, %v3337
        %v3339 = vrot.slane %v3338, 1
        %v3340 = vadd.f32 %v3338, %v3339
        %v3341 = vsel %vm2584, %v2436, 0.0
        %v3342 = vrot.slane %v3341, 4
        %v3343 = vadd.f32 %v3341, %v3342
        %v3344 = vrot.slane %v3343, 2
        %v3345 = vadd.f32 %v3343, %v3344
        %v3346 = vrot.slane %v3345, 1
        %v3347 = vadd.f32 %v3345, %v3346
        %v3348 = vsel %vm2584, %v2437, 0.0
        %v3349 = vrot.slane %v3348, 4
        %v3350 = vadd.f32 %v3348, %v3349
        %v3351 = vrot.slane %v3350, 2
        %v3352 = vadd.f32 %v3350, %v3351
        %v3353 = vrot.slane %v3352, 1
        %v3354 = vadd.f32 %v3352, %v3353
        %v3355 = vsel %vm2584, %v2438, 0.0
        %v3356 = vrot.slane %v3355, 4
        %v3357 = vadd.f32 %v3355, %v3356
        %v3358 = vrot.slane %v3357, 2
        %v3359 = vadd.f32 %v3357, %v3358
        %v3360 = vrot.slane %v3359, 1
        %v3361 = vadd.f32 %v3359, %v3360
        %v3362 = vsel %vm2584, %v2439, 0.0
        %v3363 = vrot.slane %v3362, 4
        %v3364 = vadd.f32 %v3362, %v3363
        %v3365 = vrot.slane %v3364, 2
        %v3366 = vadd.f32 %v3364, %v3365
        %v3367 = vrot.slane %v3366, 1
        %v3368 = vadd.f32 %v3366, %v3367
        %v3369 = vsel %vm2584, %v2440, 0.0
        %v3370 = vrot.slane %v3369, 4
        %v3371 = vadd.f32 %v3369, %v3370
        %v3372 = vrot.slane %v3371, 2
        %v3373 = vadd.f32 %v3371, %v3372
        %v3374 = vrot.slane %v3373, 1
        %v3375 = vadd.f32 %v3373, %v3374
        %v3376 = vsel %vm2584, %v2441, 0.0
        %v3377 = vrot.slane %v3376, 4
        %v3378 = vadd.f32 %v3376, %v3377
        %v3379 = vrot.slane %v3378, 2
        %v3380 = vadd.f32 %v3378, %v3379
        %v3381 = vrot.slane %v3380, 1
        %v3382 = vadd.f32 %v3380, %v3381
        %v3383 = vsel %vm2584, %v2442, 0.0
        %v3384 = vrot.slane %v3383, 4
        %v3385 = vadd.f32 %v3383, %v3384
        %v3386 = vrot.slane %v3385, 2
        %v3387 = vadd.f32 %v3385, %v3386
        %v3388 = vrot.slane %v3387, 1
        %v3389 = vadd.f32 %v3387, %v3388
        %v3390 = vsel %vm2584, %v2443, 0.0
        %v3391 = vrot.slane %v3390, 4
        %v3392 = vadd.f32 %v3390, %v3391
        %v3393 = vrot.slane %v3392, 2
        %v3394 = vadd.f32 %v3392, %v3393
        %v3395 = vrot.slane %v3394, 1
        %v3396 = vadd.f32 %v3394, %v3395
        %v3397 = vsel %vm2584, %v2444, 0.0
        %v3398 = vrot.slane %v3397, 4
        %v3399 = vadd.f32 %v3397, %v3398
        %v3400 = vrot.slane %v3399, 2
        %v3401 = vadd.f32 %v3399, %v3400
        %v3402 = vrot.slane %v3401, 1
        %v3403 = vadd.f32 %v3401, %v3402
        %v3404 = vsel %vm2584, %v2445, 0.0
        %v3405 = vrot.slane %v3404, 4
        %v3406 = vadd.f32 %v3404, %v3405
        %v3407 = vrot.slane %v3406, 2
        %v3408 = vadd.f32 %v3406, %v3407
        %v3409 = vrot.slane %v3408, 1
        %v3410 = vadd.f32 %v3408, %v3409
        %v3411 = vsel %vm2584, %v2446, 0.0
        %v3412 = vrot.slane %v3411, 4
        %v3413 = vadd.f32 %v3411, %v3412
        %v3414 = vrot.slane %v3413, 2
        %v3415 = vadd.f32 %v3413, %v3414
        %v3416 = vrot.slane %v3415, 1
        %v3417 = vadd.f32 %v3415, %v3416
        %v3418 = vsel %vm2584, %v2447, 0.0
        %v3419 = vrot.slane %v3418, 4
        %v3420 = vadd.f32 %v3418, %v3419
        %v3421 = vrot.slane %v3420, 2
        %v3422 = vadd.f32 %v3420, %v3421
        %v3423 = vrot.slane %v3422, 1
        %v3424 = vadd.f32 %v3422, %v3423
        %v3425 = vsel %vm2584, %v2448, 0.0
        %v3426 = vrot.slane %v3425, 4
        %v3427 = vadd.f32 %v3425, %v3426
        %v3428 = vrot.slane %v3427, 2
        %v3429 = vadd.f32 %v3427, %v3428
        %v3430 = vrot.slane %v3429, 1
        %v3431 = vadd.f32 %v3429, %v3430
        %v3432 = vsel %vm2584, %v2449, 0.0
        %v3433 = vrot.slane %v3432, 4
        %v3434 = vadd.f32 %v3432, %v3433
        %v3435 = vrot.slane %v3434, 2
        %v3436 = vadd.f32 %v3434, %v3435
        %v3437 = vrot.slane %v3436, 1
        %v3438 = vadd.f32 %v3436, %v3437
        %v3439 = vsel %vm2584, %v2450, 0.0
        %v3440 = vrot.slane %v3439, 4
        %v3441 = vadd.f32 %v3439, %v3440
        %v3442 = vrot.slane %v3441, 2
        %v3443 = vadd.f32 %v3441, %v3442
        %v3444 = vrot.slane %v3443, 1
        %v3445 = vadd.f32 %v3443, %v3444
        %v3446 = vsel %vm2584, %v2451, 0.0
        %v3447 = vrot.slane %v3446, 4
        %v3448 = vadd.f32 %v3446, %v3447
        %v3449 = vrot.slane %v3448, 2
        %v3450 = vadd.f32 %v3448, %v3449
        %v3451 = vrot.slane %v3450, 1
        %v3452 = vadd.f32 %v3450, %v3451
        %v3453 = vsel %vm2584, %v2452, 0.0
        %v3454 = vrot.slane %v3453, 4
        %v3455 = vadd.f32 %v3453, %v3454
        %v3456 = vrot.slane %v3455, 2
        %v3457 = vadd.f32 %v3455, %v3456
        %v3458 = vrot.slane %v3457, 1
        %v3459 = vadd.f32 %v3457, %v3458
        %v3460 = vsel %vm2584, %v2453, 0.0
        %v3461 = vrot.slane %v3460, 4
        %v3462 = vadd.f32 %v3460, %v3461
        %v3463 = vrot.slane %v3462, 2
        %v3464 = vadd.f32 %v3462, %v3463
        %v3465 = vrot.slane %v3464, 1
        %v3466 = vadd.f32 %v3464, %v3465
        %v3467 = vsel %vm2584, %v2454, 0.0
        %v3468 = vrot.slane %v3467, 4
        %v3469 = vadd.f32 %v3467, %v3468
        %v3470 = vrot.slane %v3469, 2
        %v3471 = vadd.f32 %v3469, %v3470
        %v3472 = vrot.slane %v3471, 1
        %v3473 = vadd.f32 %v3471, %v3472
        %v3474 = vsel %vm2584, %v2455, 0.0
        %v3475 = vrot.slane %v3474, 4
        %v3476 = vadd.f32 %v3474, %v3475
        %v3477 = vrot.slane %v3476, 2
        %v3478 = vadd.f32 %v3476, %v3477
        %v3479 = vrot.slane %v3478, 1
        %v3480 = vadd.f32 %v3478, %v3479
        %v3481 = vsel %vm2584, %v2456, 0.0
        %v3482 = vrot.slane %v3481, 4
        %v3483 = vadd.f32 %v3481, %v3482
        %v3484 = vrot.slane %v3483, 2
        %v3485 = vadd.f32 %v3483, %v3484
        %v3486 = vrot.slane %v3485, 1
        %v3487 = vadd.f32 %v3485, %v3486
        %v3488 = vsel %vm2584, %v2457, 0.0
        %v3489 = vrot.slane %v3488, 4
        %v3490 = vadd.f32 %v3488, %v3489
        %v3491 = vrot.slane %v3490, 2
        %v3492 = vadd.f32 %v3490, %v3491
        %v3493 = vrot.slane %v3492, 1
        %v3494 = vadd.f32 %v3492, %v3493
        %v3495 = vsel %vm2584, %v2458, 0.0
        %v3496 = vrot.slane %v3495, 4
        %v3497 = vadd.f32 %v3495, %v3496
        %v3498 = vrot.slane %v3497, 2
        %v3499 = vadd.f32 %v3497, %v3498
        %v3500 = vrot.slane %v3499, 1
        %v3501 = vadd.f32 %v3499, %v3500
        %v3502 = vsel %vm2584, %v2459, 0.0
        %v3503 = vrot.slane %v3502, 4
        %v3504 = vadd.f32 %v3502, %v3503
        %v3505 = vrot.slane %v3504, 2
        %v3506 = vadd.f32 %v3504, %v3505
        %v3507 = vrot.slane %v3506, 1
        %v3508 = vadd.f32 %v3506, %v3507
        %v3509 = vsel %vm2584, %v2460, 0.0
        %v3510 = vrot.slane %v3509, 4
        %v3511 = vadd.f32 %v3509, %v3510
        %v3512 = vrot.slane %v3511, 2
        %v3513 = vadd.f32 %v3511, %v3512
        %v3514 = vrot.slane %v3513, 1
        %v3515 = vadd.f32 %v3513, %v3514
        %v3516 = vsel %vm2584, %v2461, 0.0
        %v3517 = vrot.slane %v3516, 4
        %v3518 = vadd.f32 %v3516, %v3517
        %v3519 = vrot.slane %v3518, 2
        %v3520 = vadd.f32 %v3518, %v3519
        %v3521 = vrot.slane %v3520, 1
        %v3522 = vadd.f32 %v3520, %v3521
        %v3523 = vsel %vm2584, %v2462, 0.0
        %v3524 = vrot.slane %v3523, 4
        %v3525 = vadd.f32 %v3523, %v3524
        %v3526 = vrot.slane %v3525, 2
        %v3527 = vadd.f32 %v3525, %v3526
        %v3528 = vrot.slane %v3527, 1
        %v3529 = vadd.f32 %v3527, %v3528
        %v3530 = vsel %vm2584, %v2463, 0.0
        %v3531 = vrot.slane %v3530, 4
        %v3532 = vadd.f32 %v3530, %v3531
        %v3533 = vrot.slane %v3532, 2
        %v3534 = vadd.f32 %v3532, %v3533
        %v3535 = vrot.slane %v3534, 1
        %v3536 = vadd.f32 %v3534, %v3535
        %v3537 = vsel %vm2584, %v2464, 0.0
        %v3538 = vrot.slane %v3537, 4
        %v3539 = vadd.f32 %v3537, %v3538
        %v3540 = vrot.slane %v3539, 2
        %v3541 = vadd.f32 %v3539, %v3540
        %v3542 = vrot.slane %v3541, 1
        %v3543 = vadd.f32 %v3541, %v3542
        %v3544 = vsel %vm2584, %v2465, 0.0
        %v3545 = vrot.slane %v3544, 4
        %v3546 = vadd.f32 %v3544, %v3545
        %v3547 = vrot.slane %v3546, 2
        %v3548 = vadd.f32 %v3546, %v3547
        %v3549 = vrot.slane %v3548, 1
        %v3550 = vadd.f32 %v3548, %v3549
        %v3551 = vsel %vm2584, %v2466, 0.0
        %v3552 = vrot.slane %v3551, 4
        %v3553 = vadd.f32 %v3551, %v3552
        %v3554 = vrot.slane %v3553, 2
        %v3555 = vadd.f32 %v3553, %v3554
        %v3556 = vrot.slane %v3555, 1
        %v3557 = vadd.f32 %v3555, %v3556
        %v3558 = vsel %vm2584, %v2467, 0.0
        %v3559 = vrot.slane %v3558, 4
        %v3560 = vadd.f32 %v3558, %v3559
        %v3561 = vrot.slane %v3560, 2
        %v3562 = vadd.f32 %v3560, %v3561
        %v3563 = vrot.slane %v3562, 1
        %v3564 = vadd.f32 %v3562, %v3563
        %v3565 = vsel %vm2584, %v2468, 0.0
        %v3566 = vrot.slane %v3565, 4
        %v3567 = vadd.f32 %v3565, %v3566
        %v3568 = vrot.slane %v3567, 2
        %v3569 = vadd.f32 %v3567, %v3568
        %v3570 = vrot.slane %v3569, 1
        %v3571 = vadd.f32 %v3569, %v3570
        %v3572 = vsel %vm2584, %v2469, 0.0
        %v3573 = vrot.slane %v3572, 4
        %v3574 = vadd.f32 %v3572, %v3573
        %v3575 = vrot.slane %v3574, 2
        %v3576 = vadd.f32 %v3574, %v3575
        %v3577 = vrot.slane %v3576, 1
        %v3578 = vadd.f32 %v3576, %v3577
        %v3579 = vsel %vm2584, %v2470, 0.0
        %v3580 = vrot.slane %v3579, 4
        %v3581 = vadd.f32 %v3579, %v3580
        %v3582 = vrot.slane %v3581, 2
        %v3583 = vadd.f32 %v3581, %v3582
        %v3584 = vrot.slane %v3583, 1
        %v3585 = vadd.f32 %v3583, %v3584
        %v3586 = vsel %vm2584, %v2471, 0.0
        %v3587 = vrot.slane %v3586, 4
        %v3588 = vadd.f32 %v3586, %v3587
        %v3589 = vrot.slane %v3588, 2
        %v3590 = vadd.f32 %v3588, %v3589
        %v3591 = vrot.slane %v3590, 1
        %v3592 = vadd.f32 %v3590, %v3591
        %v3593 = vsel %vm2584, %v2472, 0.0
        %v3594 = vrot.slane %v3593, 4
        %v3595 = vadd.f32 %v3593, %v3594
        %v3596 = vrot.slane %v3595, 2
        %v3597 = vadd.f32 %v3595, %v3596
        %v3598 = vrot.slane %v3597, 1
        %v3599 = vadd.f32 %v3597, %v3598
        %v3600 = vsel %vm2584, %v2473, 0.0
        %v3601 = vrot.slane %v3600, 4
        %v3602 = vadd.f32 %v3600, %v3601
        %v3603 = vrot.slane %v3602, 2
        %v3604 = vadd.f32 %v3602, %v3603
        %v3605 = vrot.slane %v3604, 1
        %v3606 = vadd.f32 %v3604, %v3605
        %v3607 = vsel %vm2584, %v2474, 0.0
        %v3608 = vrot.slane %v3607, 4
        %v3609 = vadd.f32 %v3607, %v3608
        %v3610 = vrot.slane %v3609, 2
        %v3611 = vadd.f32 %v3609, %v3610
        %v3612 = vrot.slane %v3611, 1
        %v3613 = vadd.f32 %v3611, %v3612
        %v3614 = vsel %vm2584, %v2475, 0.0
        %v3615 = vrot.slane %v3614, 4
        %v3616 = vadd.f32 %v3614, %v3615
        %v3617 = vrot.slane %v3616, 2
        %v3618 = vadd.f32 %v3616, %v3617
        %v3619 = vrot.slane %v3618, 1
        %v3620 = vadd.f32 %v3618, %v3619
        %v3621 = vsel %vm2584, %v2476, 0.0
        %v3622 = vrot.slane %v3621, 4
        %v3623 = vadd.f32 %v3621, %v3622
        %v3624 = vrot.slane %v3623, 2
        %v3625 = vadd.f32 %v3623, %v3624
        %v3626 = vrot.slane %v3625, 1
        %v3627 = vadd.f32 %v3625, %v3626
        %v3628 = vsel %vm2584, %v2477, 0.0
        %v3629 = vrot.slane %v3628, 4
        %v3630 = vadd.f32 %v3628, %v3629
        %v3631 = vrot.slane %v3630, 2
        %v3632 = vadd.f32 %v3630, %v3631
        %v3633 = vrot.slane %v3632, 1
        %v3634 = vadd.f32 %v3632, %v3633
        %v3635 = vsel %vm2584, %v2478, 0.0
        %v3636 = vrot.slane %v3635, 4
        %v3637 = vadd.f32 %v3635, %v3636
        %v3638 = vrot.slane %v3637, 2
        %v3639 = vadd.f32 %v3637, %v3638
        %v3640 = vrot.slane %v3639, 1
        %v3641 = vadd.f32 %v3639, %v3640
        %v3642 = vsel %vm2584, %v2479, 0.0
        %v3643 = vrot.slane %v3642, 4
        %v3644 = vadd.f32 %v3642, %v3643
        %v3645 = vrot.slane %v3644, 2
        %v3646 = vadd.f32 %v3644, %v3645
        %v3647 = vrot.slane %v3646, 1
        %v3648 = vadd.f32 %v3646, %v3647
        %v3649 = vsel %vm2584, %v2480, 0.0
        %v3650 = vrot.slane %v3649, 4
        %v3651 = vadd.f32 %v3649, %v3650
        %v3652 = vrot.slane %v3651, 2
        %v3653 = vadd.f32 %v3651, %v3652
        %v3654 = vrot.slane %v3653, 1
        %v3655 = vadd.f32 %v3653, %v3654
        %v3656 = vsel %vm2584, %v2481, 0.0
        %v3657 = vrot.slane %v3656, 4
        %v3658 = vadd.f32 %v3656, %v3657
        %v3659 = vrot.slane %v3658, 2
        %v3660 = vadd.f32 %v3658, %v3659
        %v3661 = vrot.slane %v3660, 1
        %v3662 = vadd.f32 %v3660, %v3661
        %v3663 = vsel %vm2584, %v2482, 0.0
        %v3664 = vrot.slane %v3663, 4
        %v3665 = vadd.f32 %v3663, %v3664
        %v3666 = vrot.slane %v3665, 2
        %v3667 = vadd.f32 %v3665, %v3666
        %v3668 = vrot.slane %v3667, 1
        %v3669 = vadd.f32 %v3667, %v3668
        %v3670 = vsel %vm2584, %v2483, 0.0
        %v3671 = vrot.slane %v3670, 4
        %v3672 = vadd.f32 %v3670, %v3671
        %v3673 = vrot.slane %v3672, 2
        %v3674 = vadd.f32 %v3672, %v3673
        %v3675 = vrot.slane %v3674, 1
        %v3676 = vadd.f32 %v3674, %v3675
        %v3677 = vsel %vm2584, %v2484, 0.0
        %v3678 = vrot.slane %v3677, 4
        %v3679 = vadd.f32 %v3677, %v3678
        %v3680 = vrot.slane %v3679, 2
        %v3681 = vadd.f32 %v3679, %v3680
        %v3682 = vrot.slane %v3681, 1
        %v3683 = vadd.f32 %v3681, %v3682
        %v3684 = vsel %vm2584, %v2485, 0.0
        %v3685 = vrot.slane %v3684, 4
        %v3686 = vadd.f32 %v3684, %v3685
        %v3687 = vrot.slane %v3686, 2
        %v3688 = vadd.f32 %v3686, %v3687
        %v3689 = vrot.slane %v3688, 1
        %v3690 = vadd.f32 %v3688, %v3689
        %v3691 = vsel %vm2584, %v2486, 0.0
        %v3692 = vrot.slane %v3691, 4
        %v3693 = vadd.f32 %v3691, %v3692
        %v3694 = vrot.slane %v3693, 2
        %v3695 = vadd.f32 %v3693, %v3694
        %v3696 = vrot.slane %v3695, 1
        %v3697 = vadd.f32 %v3695, %v3696
        %v3698 = vsel %vm2584, %v2487, 0.0
        %v3699 = vrot.slane %v3698, 4
        %v3700 = vadd.f32 %v3698, %v3699
        %v3701 = vrot.slane %v3700, 2
        %v3702 = vadd.f32 %v3700, %v3701
        %v3703 = vrot.slane %v3702, 1
        %v3704 = vadd.f32 %v3702, %v3703
        %v3705 = vsel %vm2584, %v2488, 0.0
        %v3706 = vrot.slane %v3705, 4
        %v3707 = vadd.f32 %v3705, %v3706
        %v3708 = vrot.slane %v3707, 2
        %v3709 = vadd.f32 %v3707, %v3708
        %v3710 = vrot.slane %v3709, 1
        %v3711 = vadd.f32 %v3709, %v3710
        %v3712 = vsel %vm2584, %v2489, 0.0
        %v3713 = vrot.slane %v3712, 4
        %v3714 = vadd.f32 %v3712, %v3713
        %v3715 = vrot.slane %v3714, 2
        %v3716 = vadd.f32 %v3714, %v3715
        %v3717 = vrot.slane %v3716, 1
        %v3718 = vadd.f32 %v3716, %v3717
        %v3719 = vsel %vm2584, %v2490, 0.0
        %v3720 = vrot.slane %v3719, 4
        %v3721 = vadd.f32 %v3719, %v3720
        %v3722 = vrot.slane %v3721, 2
        %v3723 = vadd.f32 %v3721, %v3722
        %v3724 = vrot.slane %v3723, 1
        %v3725 = vadd.f32 %v3723, %v3724
        %v3726 = vsel %vm2584, %v2491, 0.0
        %v3727 = vrot.slane %v3726, 4
        %v3728 = vadd.f32 %v3726, %v3727
        %v3729 = vrot.slane %v3728, 2
        %v3730 = vadd.f32 %v3728, %v3729
        %v3731 = vrot.slane %v3730, 1
        %v3732 = vadd.f32 %v3730, %v3731
        %v3733 = vsel %vm2584, %v2492, 0.0
        %v3734 = vrot.slane %v3733, 4
        %v3735 = vadd.f32 %v3733, %v3734
        %v3736 = vrot.slane %v3735, 2
        %v3737 = vadd.f32 %v3735, %v3736
        %v3738 = vrot.slane %v3737, 1
        %v3739 = vadd.f32 %v3737, %v3738
        %v3740 = vsel %vm2584, %v2493, 0.0
        %v3741 = vrot.slane %v3740, 4
        %v3742 = vadd.f32 %v3740, %v3741
        %v3743 = vrot.slane %v3742, 2
        %v3744 = vadd.f32 %v3742, %v3743
        %v3745 = vrot.slane %v3744, 1
        %v3746 = vadd.f32 %v3744, %v3745
        %v3747 = vsel %vm2584, %v2494, 0.0
        %v3748 = vrot.slane %v3747, 4
        %v3749 = vadd.f32 %v3747, %v3748
        %v3750 = vrot.slane %v3749, 2
        %v3751 = vadd.f32 %v3749, %v3750
        %v3752 = vrot.slane %v3751, 1
        %v3753 = vadd.f32 %v3751, %v3752
        %v3754 = vsel %vm2584, %v2495, 0.0
        %v3755 = vrot.slane %v3754, 4
        %v3756 = vadd.f32 %v3754, %v3755
        %v3757 = vrot.slane %v3756, 2
        %v3758 = vadd.f32 %v3756, %v3757
        %v3759 = vrot.slane %v3758, 1
        %v3760 = vadd.f32 %v3758, %v3759
        %v3761 = vsel %vm2584, %v2496, 0.0
        %v3762 = vrot.slane %v3761, 4
        %v3763 = vadd.f32 %v3761, %v3762
        %v3764 = vrot.slane %v3763, 2
        %v3765 = vadd.f32 %v3763, %v3764
        %v3766 = vrot.slane %v3765, 1
        %v3767 = vadd.f32 %v3765, %v3766
        %v3768 = vsel %vm2584, %v2497, 0.0
        %v3769 = vrot.slane %v3768, 4
        %v3770 = vadd.f32 %v3768, %v3769
        %v3771 = vrot.slane %v3770, 2
        %v3772 = vadd.f32 %v3770, %v3771
        %v3773 = vrot.slane %v3772, 1
        %v3774 = vadd.f32 %v3772, %v3773
        %v3775 = vsel %vm2584, %v2498, 0.0
        %v3776 = vrot.slane %v3775, 4
        %v3777 = vadd.f32 %v3775, %v3776
        %v3778 = vrot.slane %v3777, 2
        %v3779 = vadd.f32 %v3777, %v3778
        %v3780 = vrot.slane %v3779, 1
        %v3781 = vadd.f32 %v3779, %v3780
        %v3782 = vsel %vm2584, %v2499, 0.0
        %v3783 = vrot.slane %v3782, 4
        %v3784 = vadd.f32 %v3782, %v3783
        %v3785 = vrot.slane %v3784, 2
        %v3786 = vadd.f32 %v3784, %v3785
        %v3787 = vrot.slane %v3786, 1
        %v3788 = vadd.f32 %v3786, %v3787
        %v3789 = vsel %vm2584, %v2500, 0.0
        %v3790 = vrot.slane %v3789, 4
        %v3791 = vadd.f32 %v3789, %v3790
        %v3792 = vrot.slane %v3791, 2
        %v3793 = vadd.f32 %v3791, %v3792
        %v3794 = vrot.slane %v3793, 1
        %v3795 = vadd.f32 %v3793, %v3794
        %v3796 = vsel %vm2584, %v2501, 0.0
        %v3797 = vrot.slane %v3796, 4
        %v3798 = vadd.f32 %v3796, %v3797
        %v3799 = vrot.slane %v3798, 2
        %v3800 = vadd.f32 %v3798, %v3799
        %v3801 = vrot.slane %v3800, 1
        %v3802 = vadd.f32 %v3800, %v3801
        %v3803 = vsel %vm2584, %v2502, 0.0
        %v3804 = vrot.slane %v3803, 4
        %v3805 = vadd.f32 %v3803, %v3804
        %v3806 = vrot.slane %v3805, 2
        %v3807 = vadd.f32 %v3805, %v3806
        %v3808 = vrot.slane %v3807, 1
        %v3809 = vadd.f32 %v3807, %v3808
        %v3810 = vsel %vm2584, %v2503, 0.0
        %v3811 = vrot.slane %v3810, 4
        %v3812 = vadd.f32 %v3810, %v3811
        %v3813 = vrot.slane %v3812, 2
        %v3814 = vadd.f32 %v3812, %v3813
        %v3815 = vrot.slane %v3814, 1
        %v3816 = vadd.f32 %v3814, %v3815
        %v3817 = vsel %vm2584, %v2504, 0.0
        %v3818 = vrot.slane %v3817, 4
        %v3819 = vadd.f32 %v3817, %v3818
        %v3820 = vrot.slane %v3819, 2
        %v3821 = vadd.f32 %v3819, %v3820
        %v3822 = vrot.slane %v3821, 1
        %v3823 = vadd.f32 %v3821, %v3822
        %v3824 = vsel %vm2584, %v2505, 0.0
        %v3825 = vrot.slane %v3824, 4
        %v3826 = vadd.f32 %v3824, %v3825
        %v3827 = vrot.slane %v3826, 2
        %v3828 = vadd.f32 %v3826, %v3827
        %v3829 = vrot.slane %v3828, 1
        %v3830 = vadd.f32 %v3828, %v3829
        %v3831 = vsel %vm2584, %v2506, 0.0
        %v3832 = vrot.slane %v3831, 4
        %v3833 = vadd.f32 %v3831, %v3832
        %v3834 = vrot.slane %v3833, 2
        %v3835 = vadd.f32 %v3833, %v3834
        %v3836 = vrot.slane %v3835, 1
        %v3837 = vadd.f32 %v3835, %v3836
        %v3838 = vsel %vm2584, %v2507, 0.0
        %v3839 = vrot.slane %v3838, 4
        %v3840 = vadd.f32 %v3838, %v3839
        %v3841 = vrot.slane %v3840, 2
        %v3842 = vadd.f32 %v3840, %v3841
        %v3843 = vrot.slane %v3842, 1
        %v3844 = vadd.f32 %v3842, %v3843
        %v3845 = vsel %vm2584, %v2508, 0.0
        %v3846 = vrot.slane %v3845, 4
        %v3847 = vadd.f32 %v3845, %v3846
        %v3848 = vrot.slane %v3847, 2
        %v3849 = vadd.f32 %v3847, %v3848
        %v3850 = vrot.slane %v3849, 1
        %v3851 = vadd.f32 %v3849, %v3850
        %v3852 = vsel %vm2584, %v2509, 0.0
        %v3853 = vrot.slane %v3852, 4
        %v3854 = vadd.f32 %v3852, %v3853
        %v3855 = vrot.slane %v3854, 2
        %v3856 = vadd.f32 %v3854, %v3855
        %v3857 = vrot.slane %v3856, 1
        %v3858 = vadd.f32 %v3856, %v3857
        %v3859 = vsel %vm2584, %v2510, 0.0
        %v3860 = vrot.slane %v3859, 4
        %v3861 = vadd.f32 %v3859, %v3860
        %v3862 = vrot.slane %v3861, 2
        %v3863 = vadd.f32 %v3861, %v3862
        %v3864 = vrot.slane %v3863, 1
        %v3865 = vadd.f32 %v3863, %v3864
        %v3866 = vsel %vm2584, %v2511, 0.0
        %v3867 = vrot.slane %v3866, 4
        %v3868 = vadd.f32 %v3866, %v3867
        %v3869 = vrot.slane %v3868, 2
        %v3870 = vadd.f32 %v3868, %v3869
        %v3871 = vrot.slane %v3870, 1
        %v3872 = vadd.f32 %v3870, %v3871
        %v3873 = vsel %vm2584, %v2512, 0.0
        %v3874 = vrot.slane %v3873, 4
        %v3875 = vadd.f32 %v3873, %v3874
        %v3876 = vrot.slane %v3875, 2
        %v3877 = vadd.f32 %v3875, %v3876
        %v3878 = vrot.slane %v3877, 1
        %v3879 = vadd.f32 %v3877, %v3878
        %v3880 = vsel %vm2584, %v2513, 0.0
        %v3881 = vrot.slane %v3880, 4
        %v3882 = vadd.f32 %v3880, %v3881
        %v3883 = vrot.slane %v3882, 2
        %v3884 = vadd.f32 %v3882, %v3883
        %v3885 = vrot.slane %v3884, 1
        %v3886 = vadd.f32 %v3884, %v3885
        %v3887 = vsel %vm2584, %v2514, 0.0
        %v3888 = vrot.slane %v3887, 4
        %v3889 = vadd.f32 %v3887, %v3888
        %v3890 = vrot.slane %v3889, 2
        %v3891 = vadd.f32 %v3889, %v3890
        %v3892 = vrot.slane %v3891, 1
        %v3893 = vadd.f32 %v3891, %v3892
        %v3894 = vsel %vm2584, %v2515, 0.0
        %v3895 = vrot.slane %v3894, 4
        %v3896 = vadd.f32 %v3894, %v3895
        %v3897 = vrot.slane %v3896, 2
        %v3898 = vadd.f32 %v3896, %v3897
        %v3899 = vrot.slane %v3898, 1
        %v3900 = vadd.f32 %v3898, %v3899
        %v3901 = vsel %vm2584, %v2516, 0.0
        %v3902 = vrot.slane %v3901, 4
        %v3903 = vadd.f32 %v3901, %v3902
        %v3904 = vrot.slane %v3903, 2
        %v3905 = vadd.f32 %v3903, %v3904
        %v3906 = vrot.slane %v3905, 1
        %v3907 = vadd.f32 %v3905, %v3906
        %v3908 = vsel %vm2584, %v2517, 0.0
        %v3909 = vrot.slane %v3908, 4
        %v3910 = vadd.f32 %v3908, %v3909
        %v3911 = vrot.slane %v3910, 2
        %v3912 = vadd.f32 %v3910, %v3911
        %v3913 = vrot.slane %v3912, 1
        %v3914 = vadd.f32 %v3912, %v3913
        %v3915 = vsel %vm2584, %v2518, 0.0
        %v3916 = vrot.slane %v3915, 4
        %v3917 = vadd.f32 %v3915, %v3916
        %v3918 = vrot.slane %v3917, 2
        %v3919 = vadd.f32 %v3917, %v3918
        %v3920 = vrot.slane %v3919, 1
        %v3921 = vadd.f32 %v3919, %v3920
        %v3922 = vsel %vm2584, %v2519, 0.0
        %v3923 = vrot.slane %v3922, 4
        %v3924 = vadd.f32 %v3922, %v3923
        %v3925 = vrot.slane %v3924, 2
        %v3926 = vadd.f32 %v3924, %v3925
        %v3927 = vrot.slane %v3926, 1
        %v3928 = vadd.f32 %v3926, %v3927
        %v3929 = vsel %vm2584, %v2520, 0.0
        %v3930 = vrot.slane %v3929, 4
        %v3931 = vadd.f32 %v3929, %v3930
        %v3932 = vrot.slane %v3931, 2
        %v3933 = vadd.f32 %v3931, %v3932
        %v3934 = vrot.slane %v3933, 1
        %v3935 = vadd.f32 %v3933, %v3934
        %v3936 = vsel %vm2584, %v2521, 0.0
        %v3937 = vrot.slane %v3936, 4
        %v3938 = vadd.f32 %v3936, %v3937
        %v3939 = vrot.slane %v3938, 2
        %v3940 = vadd.f32 %v3938, %v3939
        %v3941 = vrot.slane %v3940, 1
        %v3942 = vadd.f32 %v3940, %v3941
        %v3943 = vsel %vm2584, %v2522, 0.0
        %v3944 = vrot.slane %v3943, 4
        %v3945 = vadd.f32 %v3943, %v3944
        %v3946 = vrot.slane %v3945, 2
        %v3947 = vadd.f32 %v3945, %v3946
        %v3948 = vrot.slane %v3947, 1
        %v3949 = vadd.f32 %v3947, %v3948
        %v3950 = vsel %vm2584, %v2523, 0.0
        %v3951 = vrot.slane %v3950, 4
        %v3952 = vadd.f32 %v3950, %v3951
        %v3953 = vrot.slane %v3952, 2
        %v3954 = vadd.f32 %v3952, %v3953
        %v3955 = vrot.slane %v3954, 1
        %v3956 = vadd.f32 %v3954, %v3955
        %v3957 = vsel %vm2584, %v2524, 0.0
        %v3958 = vrot.slane %v3957, 4
        %v3959 = vadd.f32 %v3957, %v3958
        %v3960 = vrot.slane %v3959, 2
        %v3961 = vadd.f32 %v3959, %v3960
        %v3962 = vrot.slane %v3961, 1
        %v3963 = vadd.f32 %v3961, %v3962
        %v3964 = vsel %vm2584, %v2525, 0.0
        %v3965 = vrot.slane %v3964, 4
        %v3966 = vadd.f32 %v3964, %v3965
        %v3967 = vrot.slane %v3966, 2
        %v3968 = vadd.f32 %v3966, %v3967
        %v3969 = vrot.slane %v3968, 1
        %v3970 = vadd.f32 %v3968, %v3969
        %v3971 = vsel %vm2584, %v2526, 0.0
        %v3972 = vrot.slane %v3971, 4
        %v3973 = vadd.f32 %v3971, %v3972
        %v3974 = vrot.slane %v3973, 2
        %v3975 = vadd.f32 %v3973, %v3974
        %v3976 = vrot.slane %v3975, 1
        %v3977 = vadd.f32 %v3975, %v3976
        %v3978 = vsel %vm2584, %v2527, 0.0
        %v3979 = vrot.slane %v3978, 4
        %v3980 = vadd.f32 %v3978, %v3979
        %v3981 = vrot.slane %v3980, 2
        %v3982 = vadd.f32 %v3980, %v3981
        %v3983 = vrot.slane %v3982, 1
        %v3984 = vadd.f32 %v3982, %v3983
        %v3985 = vsel %vm2584, %v2528, 0.0
        %v3986 = vrot.slane %v3985, 4
        %v3987 = vadd.f32 %v3985, %v3986
        %v3988 = vrot.slane %v3987, 2
        %v3989 = vadd.f32 %v3987, %v3988
        %v3990 = vrot.slane %v3989, 1
        %v3991 = vadd.f32 %v3989, %v3990
        %v3992 = vsel %vm2584, %v2529, 0.0
        %v3993 = vrot.slane %v3992, 4
        %v3994 = vadd.f32 %v3992, %v3993
        %v3995 = vrot.slane %v3994, 2
        %v3996 = vadd.f32 %v3994, %v3995
        %v3997 = vrot.slane %v3996, 1
        %v3998 = vadd.f32 %v3996, %v3997
        %v3999 = vsel %vm2584, %v2530, 0.0
        %v4000 = vrot.slane %v3999, 4
        %v4001 = vadd.f32 %v3999, %v4000
        %v4002 = vrot.slane %v4001, 2
        %v4003 = vadd.f32 %v4001, %v4002
        %v4004 = vrot.slane %v4003, 1
        %v4005 = vadd.f32 %v4003, %v4004
        %v4006 = vsel %vm2584, %v2531, 0.0
        %v4007 = vrot.slane %v4006, 4
        %v4008 = vadd.f32 %v4006, %v4007
        %v4009 = vrot.slane %v4008, 2
        %v4010 = vadd.f32 %v4008, %v4009
        %v4011 = vrot.slane %v4010, 1
        %v4012 = vadd.f32 %v4010, %v4011
        %v4013 = vsel %vm2584, %v2532, 0.0
        %v4014 = vrot.slane %v4013, 4
        %v4015 = vadd.f32 %v4013, %v4014
        %v4016 = vrot.slane %v4015, 2
        %v4017 = vadd.f32 %v4015, %v4016
        %v4018 = vrot.slane %v4017, 1
        %v4019 = vadd.f32 %v4017, %v4018
        %v4020 = vsel %vm2584, %v2533, 0.0
        %v4021 = vrot.slane %v4020, 4
        %v4022 = vadd.f32 %v4020, %v4021
        %v4023 = vrot.slane %v4022, 2
        %v4024 = vadd.f32 %v4022, %v4023
        %v4025 = vrot.slane %v4024, 1
        %v4026 = vadd.f32 %v4024, %v4025
        %v4027 = vsel %vm2584, %v2534, 0.0
        %v4028 = vrot.slane %v4027, 4
        %v4029 = vadd.f32 %v4027, %v4028
        %v4030 = vrot.slane %v4029, 2
        %v4031 = vadd.f32 %v4029, %v4030
        %v4032 = vrot.slane %v4031, 1
        %v4033 = vadd.f32 %v4031, %v4032
        %v4034 = vsel %vm2584, %v2535, 0.0
        %v4035 = vrot.slane %v4034, 4
        %v4036 = vadd.f32 %v4034, %v4035
        %v4037 = vrot.slane %v4036, 2
        %v4038 = vadd.f32 %v4036, %v4037
        %v4039 = vrot.slane %v4038, 1
        %v4040 = vadd.f32 %v4038, %v4039
        %v4041 = vsel %vm2584, %v2536, 0.0
        %v4042 = vrot.slane %v4041, 4
        %v4043 = vadd.f32 %v4041, %v4042
        %v4044 = vrot.slane %v4043, 2
        %v4045 = vadd.f32 %v4043, %v4044
        %v4046 = vrot.slane %v4045, 1
        %v4047 = vadd.f32 %v4045, %v4046
        %v4048 = vsel %vm2584, %v2537, 0.0
        %v4049 = vrot.slane %v4048, 4
        %v4050 = vadd.f32 %v4048, %v4049
        %v4051 = vrot.slane %v4050, 2
        %v4052 = vadd.f32 %v4050, %v4051
        %v4053 = vrot.slane %v4052, 1
        %v4054 = vadd.f32 %v4052, %v4053
        %v4055 = vsel %vm2584, %v2538, 0.0
        %v4056 = vrot.slane %v4055, 4
        %v4057 = vadd.f32 %v4055, %v4056
        %v4058 = vrot.slane %v4057, 2
        %v4059 = vadd.f32 %v4057, %v4058
        %v4060 = vrot.slane %v4059, 1
        %v4061 = vadd.f32 %v4059, %v4060
        %v4062 = vsel %vm2584, %v2539, 0.0
        %v4063 = vrot.slane %v4062, 4
        %v4064 = vadd.f32 %v4062, %v4063
        %v4065 = vrot.slane %v4064, 2
        %v4066 = vadd.f32 %v4064, %v4065
        %v4067 = vrot.slane %v4066, 1
        %v4068 = vadd.f32 %v4066, %v4067
        %v4069 = vsel %vm2584, %v2540, 0.0
        %v4070 = vrot.slane %v4069, 4
        %v4071 = vadd.f32 %v4069, %v4070
        %v4072 = vrot.slane %v4071, 2
        %v4073 = vadd.f32 %v4071, %v4072
        %v4074 = vrot.slane %v4073, 1
        %v4075 = vadd.f32 %v4073, %v4074
        %v4076 = vsel %vm2584, %v2541, 0.0
        %v4077 = vrot.slane %v4076, 4
        %v4078 = vadd.f32 %v4076, %v4077
        %v4079 = vrot.slane %v4078, 2
        %v4080 = vadd.f32 %v4078, %v4079
        %v4081 = vrot.slane %v4080, 1
        %v4082 = vadd.f32 %v4080, %v4081
        %v4083 = vsel %vm2584, %v2542, 0.0
        %v4084 = vrot.slane %v4083, 4
        %v4085 = vadd.f32 %v4083, %v4084
        %v4086 = vrot.slane %v4085, 2
        %v4087 = vadd.f32 %v4085, %v4086
        %v4088 = vrot.slane %v4087, 1
        %v4089 = vadd.f32 %v4087, %v4088
        %v4090 = vsel %vm2584, %v2543, 0.0
        %v4091 = vrot.slane %v4090, 4
        %v4092 = vadd.f32 %v4090, %v4091
        %v4093 = vrot.slane %v4092, 2
        %v4094 = vadd.f32 %v4092, %v4093
        %v4095 = vrot.slane %v4094, 1
        %v4096 = vadd.f32 %v4094, %v4095
        %v4097 = vsel %vm2584, %v2544, 0.0
        %v4098 = vrot.slane %v4097, 4
        %v4099 = vadd.f32 %v4097, %v4098
        %v4100 = vrot.slane %v4099, 2
        %v4101 = vadd.f32 %v4099, %v4100
        %v4102 = vrot.slane %v4101, 1
        %v4103 = vadd.f32 %v4101, %v4102
        %v4104 = vsel %vm2584, %v2545, 0.0
        %v4105 = vrot.slane %v4104, 4
        %v4106 = vadd.f32 %v4104, %v4105
        %v4107 = vrot.slane %v4106, 2
        %v4108 = vadd.f32 %v4106, %v4107
        %v4109 = vrot.slane %v4108, 1
        %v4110 = vadd.f32 %v4108, %v4109
        %v4111 = vsel %vm2584, %v2546, 0.0
        %v4112 = vrot.slane %v4111, 4
        %v4113 = vadd.f32 %v4111, %v4112
        %v4114 = vrot.slane %v4113, 2
        %v4115 = vadd.f32 %v4113, %v4114
        %v4116 = vrot.slane %v4115, 1
        %v4117 = vadd.f32 %v4115, %v4116
        %v4118 = vsel %vm2584, %v2547, 0.0
        %v4119 = vrot.slane %v4118, 4
        %v4120 = vadd.f32 %v4118, %v4119
        %v4121 = vrot.slane %v4120, 2
        %v4122 = vadd.f32 %v4120, %v4121
        %v4123 = vrot.slane %v4122, 1
        %v4124 = vadd.f32 %v4122, %v4123
        %v4125 = vsel %vm2584, %v2548, 0.0
        %v4126 = vrot.slane %v4125, 4
        %v4127 = vadd.f32 %v4125, %v4126
        %v4128 = vrot.slane %v4127, 2
        %v4129 = vadd.f32 %v4127, %v4128
        %v4130 = vrot.slane %v4129, 1
        %v4131 = vadd.f32 %v4129, %v4130
        %v4132 = vsel %vm2584, %v2549, 0.0
        %v4133 = vrot.slane %v4132, 4
        %v4134 = vadd.f32 %v4132, %v4133
        %v4135 = vrot.slane %v4134, 2
        %v4136 = vadd.f32 %v4134, %v4135
        %v4137 = vrot.slane %v4136, 1
        %v4138 = vadd.f32 %v4136, %v4137
        %v4139 = vsel %vm2584, %v2550, 0.0
        %v4140 = vrot.slane %v4139, 4
        %v4141 = vadd.f32 %v4139, %v4140
        %v4142 = vrot.slane %v4141, 2
        %v4143 = vadd.f32 %v4141, %v4142
        %v4144 = vrot.slane %v4143, 1
        %v4145 = vadd.f32 %v4143, %v4144
        %v4146 = vsel %vm2584, %v2551, 0.0
        %v4147 = vrot.slane %v4146, 4
        %v4148 = vadd.f32 %v4146, %v4147
        %v4149 = vrot.slane %v4148, 2
        %v4150 = vadd.f32 %v4148, %v4149
        %v4151 = vrot.slane %v4150, 1
        %v4152 = vadd.f32 %v4150, %v4151
        %v4153 = vsel %vm2584, %v2552, 0.0
        %v4154 = vrot.slane %v4153, 4
        %v4155 = vadd.f32 %v4153, %v4154
        %v4156 = vrot.slane %v4155, 2
        %v4157 = vadd.f32 %v4155, %v4156
        %v4158 = vrot.slane %v4157, 1
        %v4159 = vadd.f32 %v4157, %v4158
        %v4160 = vsel %vm2584, %v2553, 0.0
        %v4161 = vrot.slane %v4160, 4
        %v4162 = vadd.f32 %v4160, %v4161
        %v4163 = vrot.slane %v4162, 2
        %v4164 = vadd.f32 %v4162, %v4163
        %v4165 = vrot.slane %v4164, 1
        %v4166 = vadd.f32 %v4164, %v4165
        %v4167 = vsel %vm2584, %v2554, 0.0
        %v4168 = vrot.slane %v4167, 4
        %v4169 = vadd.f32 %v4167, %v4168
        %v4170 = vrot.slane %v4169, 2
        %v4171 = vadd.f32 %v4169, %v4170
        %v4172 = vrot.slane %v4171, 1
        %v4173 = vadd.f32 %v4171, %v4172
        %v4174 = vsel %vm2584, %v2555, 0.0
        %v4175 = vrot.slane %v4174, 4
        %v4176 = vadd.f32 %v4174, %v4175
        %v4177 = vrot.slane %v4176, 2
        %v4178 = vadd.f32 %v4176, %v4177
        %v4179 = vrot.slane %v4178, 1
        %v4180 = vadd.f32 %v4178, %v4179
        %v4181 = vsel %vm2584, %v2556, 0.0
        %v4182 = vrot.slane %v4181, 4
        %v4183 = vadd.f32 %v4181, %v4182
        %v4184 = vrot.slane %v4183, 2
        %v4185 = vadd.f32 %v4183, %v4184
        %v4186 = vrot.slane %v4185, 1
        %v4187 = vadd.f32 %v4185, %v4186
        %v4188 = vsel %vm2584, %v2557, 0.0
        %v4189 = vrot.slane %v4188, 4
        %v4190 = vadd.f32 %v4188, %v4189
        %v4191 = vrot.slane %v4190, 2
        %v4192 = vadd.f32 %v4190, %v4191
        %v4193 = vrot.slane %v4192, 1
        %v4194 = vadd.f32 %v4192, %v4193
        %v4195 = vsel %vm2584, %v2558, 0.0
        %v4196 = vrot.slane %v4195, 4
        %v4197 = vadd.f32 %v4195, %v4196
        %v4198 = vrot.slane %v4197, 2
        %v4199 = vadd.f32 %v4197, %v4198
        %v4200 = vrot.slane %v4199, 1
        %v4201 = vadd.f32 %v4199, %v4200
        %v4202 = vsel %vm2584, %v2559, 0.0
        %v4203 = vrot.slane %v4202, 4
        %v4204 = vadd.f32 %v4202, %v4203
        %v4205 = vrot.slane %v4204, 2
        %v4206 = vadd.f32 %v4204, %v4205
        %v4207 = vrot.slane %v4206, 1
        %v4208 = vadd.f32 %v4206, %v4207
        %v4209 = vsel %vm2584, %v2560, 0.0
        %v4210 = vrot.slane %v4209, 4
        %v4211 = vadd.f32 %v4209, %v4210
        %v4212 = vrot.slane %v4211, 2
        %v4213 = vadd.f32 %v4211, %v4212
        %v4214 = vrot.slane %v4213, 1
        %v4215 = vadd.f32 %v4213, %v4214
        %v4216 = vsel %vm2584, %v2561, 0.0
        %v4217 = vrot.slane %v4216, 4
        %v4218 = vadd.f32 %v4216, %v4217
        %v4219 = vrot.slane %v4218, 2
        %v4220 = vadd.f32 %v4218, %v4219
        %v4221 = vrot.slane %v4220, 1
        %v4222 = vadd.f32 %v4220, %v4221
        %v4223 = vsel %vm2584, %v2562, 0.0
        %v4224 = vrot.slane %v4223, 4
        %v4225 = vadd.f32 %v4223, %v4224
        %v4226 = vrot.slane %v4225, 2
        %v4227 = vadd.f32 %v4225, %v4226
        %v4228 = vrot.slane %v4227, 1
        %v4229 = vadd.f32 %v4227, %v4228
        %v4230 = vsel %vm2584, %v2563, 0.0
        %v4231 = vrot.slane %v4230, 4
        %v4232 = vadd.f32 %v4230, %v4231
        %v4233 = vrot.slane %v4232, 2
        %v4234 = vadd.f32 %v4232, %v4233
        %v4235 = vrot.slane %v4234, 1
        %v4236 = vadd.f32 %v4234, %v4235
        %v4237 = vsel %vm2584, %v2564, 0.0
        %v4238 = vrot.slane %v4237, 4
        %v4239 = vadd.f32 %v4237, %v4238
        %v4240 = vrot.slane %v4239, 2
        %v4241 = vadd.f32 %v4239, %v4240
        %v4242 = vrot.slane %v4241, 1
        %v4243 = vadd.f32 %v4241, %v4242
        %v4244 = vsel %vm2584, %v2565, 0.0
        %v4245 = vrot.slane %v4244, 4
        %v4246 = vadd.f32 %v4244, %v4245
        %v4247 = vrot.slane %v4246, 2
        %v4248 = vadd.f32 %v4246, %v4247
        %v4249 = vrot.slane %v4248, 1
        %v4250 = vadd.f32 %v4248, %v4249
        %v4251 = vsel %vm2584, %v2566, 0.0
        %v4252 = vrot.slane %v4251, 4
        %v4253 = vadd.f32 %v4251, %v4252
        %v4254 = vrot.slane %v4253, 2
        %v4255 = vadd.f32 %v4253, %v4254
        %v4256 = vrot.slane %v4255, 1
        %v4257 = vadd.f32 %v4255, %v4256
        %v4258 = vsel %vm2584, %v2567, 0.0
        %v4259 = vrot.slane %v4258, 4
        %v4260 = vadd.f32 %v4258, %v4259
        %v4261 = vrot.slane %v4260, 2
        %v4262 = vadd.f32 %v4260, %v4261
        %v4263 = vrot.slane %v4262, 1
        %v4264 = vadd.f32 %v4262, %v4263
        %v4265 = vsel %vm2584, %v2568, 0.0
        %v4266 = vrot.slane %v4265, 4
        %v4267 = vadd.f32 %v4265, %v4266
        %v4268 = vrot.slane %v4267, 2
        %v4269 = vadd.f32 %v4267, %v4268
        %v4270 = vrot.slane %v4269, 1
        %v4271 = vadd.f32 %v4269, %v4270
        %v4272 = vsel %vm2584, %v2569, 0.0
        %v4273 = vrot.slane %v4272, 4
        %v4274 = vadd.f32 %v4272, %v4273
        %v4275 = vrot.slane %v4274, 2
        %v4276 = vadd.f32 %v4274, %v4275
        %v4277 = vrot.slane %v4276, 1
        %v4278 = vadd.f32 %v4276, %v4277
        %v4279 = vsel %vm2584, %v2570, 0.0
        %v4280 = vrot.slane %v4279, 4
        %v4281 = vadd.f32 %v4279, %v4280
        %v4282 = vrot.slane %v4281, 2
        %v4283 = vadd.f32 %v4281, %v4282
        %v4284 = vrot.slane %v4283, 1
        %v4285 = vadd.f32 %v4283, %v4284
        %v4286 = vsel %vm2584, %v2571, 0.0
        %v4287 = vrot.slane %v4286, 4
        %v4288 = vadd.f32 %v4286, %v4287
        %v4289 = vrot.slane %v4288, 2
        %v4290 = vadd.f32 %v4288, %v4289
        %v4291 = vrot.slane %v4290, 1
        %v4292 = vadd.f32 %v4290, %v4291
        %v4293 = vsel %vm2584, %v2572, 0.0
        %v4294 = vrot.slane %v4293, 4
        %v4295 = vadd.f32 %v4293, %v4294
        %v4296 = vrot.slane %v4295, 2
        %v4297 = vadd.f32 %v4295, %v4296
        %v4298 = vrot.slane %v4297, 1
        %v4299 = vadd.f32 %v4297, %v4298
        %v4300 = vsel %vm2584, %v2573, 0.0
        %v4301 = vrot.slane %v4300, 4
        %v4302 = vadd.f32 %v4300, %v4301
        %v4303 = vrot.slane %v4302, 2
        %v4304 = vadd.f32 %v4302, %v4303
        %v4305 = vrot.slane %v4304, 1
        %v4306 = vadd.f32 %v4304, %v4305
        %v4307 = vsel %vm2584, %v2574, 0.0
        %v4308 = vrot.slane %v4307, 4
        %v4309 = vadd.f32 %v4307, %v4308
        %v4310 = vrot.slane %v4309, 2
        %v4311 = vadd.f32 %v4309, %v4310
        %v4312 = vrot.slane %v4311, 1
        %v4313 = vadd.f32 %v4311, %v4312
        %v4314 = vsel %vm2584, %v2575, 0.0
        %v4315 = vrot.slane %v4314, 4
        %v4316 = vadd.f32 %v4314, %v4315
        %v4317 = vrot.slane %v4316, 2
        %v4318 = vadd.f32 %v4316, %v4317
        %v4319 = vrot.slane %v4318, 1
        %v4320 = vadd.f32 %v4318, %v4319
        %v4321 = vsel %vm2584, %v2576, 0.0
        %v4322 = vrot.slane %v4321, 4
        %v4323 = vadd.f32 %v4321, %v4322
        %v4324 = vrot.slane %v4323, 2
        %v4325 = vadd.f32 %v4323, %v4324
        %v4326 = vrot.slane %v4325, 1
        %v4327 = vadd.f32 %v4325, %v4326
        %v4328 = vsel %vm2584, %v2577, 0.0
        %v4329 = vrot.slane %v4328, 4
        %v4330 = vadd.f32 %v4328, %v4329
        %v4331 = vrot.slane %v4330, 2
        %v4332 = vadd.f32 %v4330, %v4331
        %v4333 = vrot.slane %v4332, 1
        %v4334 = vadd.f32 %v4332, %v4333
        %v4335 = vsel %vm2584, %v2578, 0.0
        %v4336 = vrot.slane %v4335, 4
        %v4337 = vadd.f32 %v4335, %v4336
        %v4338 = vrot.slane %v4337, 2
        %v4339 = vadd.f32 %v4337, %v4338
        %v4340 = vrot.slane %v4339, 1
        %v4341 = vadd.f32 %v4339, %v4340
        %v4342 = vsel %vm2584, %v2579, 0.0
        %v4343 = vrot.slane %v4342, 4
        %v4344 = vadd.f32 %v4342, %v4343
        %v4345 = vrot.slane %v4344, 2
        %v4346 = vadd.f32 %v4344, %v4345
        %v4347 = vrot.slane %v4346, 1
        %v4348 = vadd.f32 %v4346, %v4347
        %v4349 = vsel %vm2584, %v2580, 0.0
        %v4350 = vrot.slane %v4349, 4
        %v4351 = vadd.f32 %v4349, %v4350
        %v4352 = vrot.slane %v4351, 2
        %v4353 = vadd.f32 %v4351, %v4352
        %v4354 = vrot.slane %v4353, 1
        %v4355 = vadd.f32 %v4353, %v4354
        %v4356 = vsel %vm2584, %v2581, 0.0
        %v4357 = vrot.slane %v4356, 4
        %v4358 = vadd.f32 %v4356, %v4357
        %v4359 = vrot.slane %v4358, 2
        %v4360 = vadd.f32 %v4358, %v4359
        %v4361 = vrot.slane %v4360, 1
        %v4362 = vadd.f32 %v4360, %v4361
        %v4363 = vsel %vm2584, %v2582, 0.0
        %v4364 = vrot.slane %v4363, 4
        %v4365 = vadd.f32 %v4363, %v4364
        %v4366 = vrot.slane %v4365, 2
        %v4367 = vadd.f32 %v4365, %v4366
        %v4368 = vrot.slane %v4367, 1
        %v4369 = vadd.f32 %v4367, %v4368
        %v4370 = vsel %vm2584, %v2583, 0.0
        %v4371 = vrot.slane %v4370, 4
        %v4372 = vadd.f32 %v4370, %v4371
        %v4373 = vrot.slane %v4372, 2
        %v4374 = vadd.f32 %v4372, %v4373
        %v4375 = vrot.slane %v4374, 1
        %v4376 = vadd.f32 %v4374, %v4375
        %s4378 = sor.u32 256, 4
        %4379 = vbcast.lane.b32.xlu0 %v523, %s4378
        %v4380 = vpop.permute.xlu0 %4379
        %s4382 = sor.u32 256, 4
        %4383 = vbcast.lane.b32.xlu0 %v530, %s4382
        %v4384 = vpop.permute.xlu0 %4383
        %s4386 = sor.u32 256, 4
        %4387 = vbcast.lane.b32.xlu0 %v537, %s4386
        %v4388 = vpop.permute.xlu0 %4387
        %s4390 = sor.u32 256, 4
        %4391 = vbcast.lane.b32.xlu0 %v544, %s4390
        %v4392 = vpop.permute.xlu0 %4391
        %s4394 = sor.u32 256, 4
        %4395 = vbcast.lane.b32.xlu0 %v551, %s4394
        %v4396 = vpop.permute.xlu0 %4395
        %s4398 = sor.u32 256, 4
        %4399 = vbcast.lane.b32.xlu0 %v558, %s4398
        %v4400 = vpop.permute.xlu0 %4399
        %s4402 = sor.u32 256, 4
        %4403 = vbcast.lane.b32.xlu0 %v565, %s4402
        %v4404 = vpop.permute.xlu0 %4403
        %s4406 = sor.u32 256, 4
        %4407 = vbcast.lane.b32.xlu0 %v572, %s4406
        %v4408 = vpop.permute.xlu0 %4407
        %s4410 = sor.u32 256, 4
        %4411 = vbcast.lane.b32.xlu0 %v579, %s4410
        %v4412 = vpop.permute.xlu0 %4411
        %s4414 = sor.u32 256, 4
        %4415 = vbcast.lane.b32.xlu0 %v586, %s4414
        %v4416 = vpop.permute.xlu0 %4415
        %s4418 = sor.u32 256, 4
        %4419 = vbcast.lane.b32.xlu0 %v593, %s4418
        %v4420 = vpop.permute.xlu0 %4419
        %s4422 = sor.u32 256, 4
        %4423 = vbcast.lane.b32.xlu0 %v600, %s4422
        %v4424 = vpop.permute.xlu0 %4423
        %s4426 = sor.u32 256, 4
        %4427 = vbcast.lane.b32.xlu0 %v607, %s4426
        %v4428 = vpop.permute.xlu0 %4427
        %s4430 = sor.u32 256, 4
        %4431 = vbcast.lane.b32.xlu0 %v614, %s4430
        %v4432 = vpop.permute.xlu0 %4431
        %s4434 = sor.u32 256, 4
        %4435 = vbcast.lane.b32.xlu0 %v621, %s4434
        %v4436 = vpop.permute.xlu0 %4435
        %s4438 = sor.u32 256, 4
        %4439 = vbcast.lane.b32.xlu0 %v628, %s4438
        %v4440 = vpop.permute.xlu0 %4439
        %s4442 = sor.u32 256, 4
        %4443 = vbcast.lane.b32.xlu0 %v635, %s4442
        %v4444 = vpop.permute.xlu0 %4443
        %s4446 = sor.u32 256, 4
        %4447 = vbcast.lane.b32.xlu0 %v642, %s4446
        %v4448 = vpop.permute.xlu0 %4447
        %s4450 = sor.u32 256, 4
        %4451 = vbcast.lane.b32.xlu0 %v649, %s4450
        %v4452 = vpop.permute.xlu0 %4451
        %s4454 = sor.u32 256, 4
        %4455 = vbcast.lane.b32.xlu0 %v656, %s4454
        %v4456 = vpop.permute.xlu0 %4455
        %s4458 = sor.u32 256, 4
        %4459 = vbcast.lane.b32.xlu0 %v663, %s4458
        %v4460 = vpop.permute.xlu0 %4459
        %s4462 = sor.u32 256, 4
        %4463 = vbcast.lane.b32.xlu0 %v670, %s4462
        %v4464 = vpop.permute.xlu0 %4463
        %s4466 = sor.u32 256, 4
        %4467 = vbcast.lane.b32.xlu0 %v677, %s4466
        %v4468 = vpop.permute.xlu0 %4467
        %s4470 = sor.u32 256, 4
        %4471 = vbcast.lane.b32.xlu0 %v684, %s4470
        %v4472 = vpop.permute.xlu0 %4471
        %s4474 = sor.u32 256, 4
        %4475 = vbcast.lane.b32.xlu0 %v691, %s4474
        %v4476 = vpop.permute.xlu0 %4475
        %s4478 = sor.u32 256, 4
        %4479 = vbcast.lane.b32.xlu0 %v698, %s4478
        %v4480 = vpop.permute.xlu0 %4479
        %s4482 = sor.u32 256, 4
        %4483 = vbcast.lane.b32.xlu0 %v705, %s4482
        %v4484 = vpop.permute.xlu0 %4483
        %s4486 = sor.u32 256, 4
        %4487 = vbcast.lane.b32.xlu0 %v712, %s4486
        %v4488 = vpop.permute.xlu0 %4487
        %s4490 = sor.u32 256, 4
        %4491 = vbcast.lane.b32.xlu0 %v719, %s4490
        %v4492 = vpop.permute.xlu0 %4491
        %s4494 = sor.u32 256, 4
        %4495 = vbcast.lane.b32.xlu0 %v726, %s4494
        %v4496 = vpop.permute.xlu0 %4495
        %s4498 = sor.u32 256, 4
        %4499 = vbcast.lane.b32.xlu0 %v733, %s4498
        %v4500 = vpop.permute.xlu0 %4499
        %s4502 = sor.u32 256, 4
        %4503 = vbcast.lane.b32.xlu0 %v740, %s4502
        %v4504 = vpop.permute.xlu0 %4503
        %s4506 = sor.u32 256, 4
        %4507 = vbcast.lane.b32.xlu0 %v747, %s4506
        %v4508 = vpop.permute.xlu0 %4507
        %s4510 = sor.u32 256, 4
        %4511 = vbcast.lane.b32.xlu0 %v754, %s4510
        %v4512 = vpop.permute.xlu0 %4511
        %s4514 = sor.u32 256, 4
        %4515 = vbcast.lane.b32.xlu0 %v761, %s4514
        %v4516 = vpop.permute.xlu0 %4515
        %s4518 = sor.u32 256, 4
        %4519 = vbcast.lane.b32.xlu0 %v768, %s4518
        %v4520 = vpop.permute.xlu0 %4519
        %s4522 = sor.u32 256, 4
        %4523 = vbcast.lane.b32.xlu0 %v775, %s4522
        %v4524 = vpop.permute.xlu0 %4523
        %s4526 = sor.u32 256, 4
        %4527 = vbcast.lane.b32.xlu0 %v782, %s4526
        %v4528 = vpop.permute.xlu0 %4527
        %s4530 = sor.u32 256, 4
        %4531 = vbcast.lane.b32.xlu0 %v789, %s4530
        %v4532 = vpop.permute.xlu0 %4531
        %s4534 = sor.u32 256, 4
        %4535 = vbcast.lane.b32.xlu0 %v796, %s4534
        %v4536 = vpop.permute.xlu0 %4535
        %s4538 = sor.u32 256, 4
        %4539 = vbcast.lane.b32.xlu0 %v803, %s4538
        %v4540 = vpop.permute.xlu0 %4539
        %s4542 = sor.u32 256, 4
        %4543 = vbcast.lane.b32.xlu0 %v810, %s4542
        %v4544 = vpop.permute.xlu0 %4543
        %s4546 = sor.u32 256, 4
        %4547 = vbcast.lane.b32.xlu0 %v817, %s4546
        %v4548 = vpop.permute.xlu0 %4547
        %s4550 = sor.u32 256, 4
        %4551 = vbcast.lane.b32.xlu0 %v824, %s4550
        %v4552 = vpop.permute.xlu0 %4551
        %s4554 = sor.u32 256, 4
        %4555 = vbcast.lane.b32.xlu0 %v831, %s4554
        %v4556 = vpop.permute.xlu0 %4555
        %s4558 = sor.u32 256, 4
        %4559 = vbcast.lane.b32.xlu0 %v838, %s4558
        %v4560 = vpop.permute.xlu0 %4559
        %s4562 = sor.u32 256, 4
        %4563 = vbcast.lane.b32.xlu0 %v845, %s4562
        %v4564 = vpop.permute.xlu0 %4563
        %s4566 = sor.u32 256, 4
        %4567 = vbcast.lane.b32.xlu0 %v852, %s4566
        %v4568 = vpop.permute.xlu0 %4567
        %s4570 = sor.u32 256, 4
        %4571 = vbcast.lane.b32.xlu0 %v859, %s4570
        %v4572 = vpop.permute.xlu0 %4571
        %s4574 = sor.u32 256, 4
        %4575 = vbcast.lane.b32.xlu0 %v866, %s4574
        %v4576 = vpop.permute.xlu0 %4575
        %s4578 = sor.u32 256, 4
        %4579 = vbcast.lane.b32.xlu0 %v873, %s4578
        %v4580 = vpop.permute.xlu0 %4579
        %s4582 = sor.u32 256, 4
        %4583 = vbcast.lane.b32.xlu0 %v880, %s4582
        %v4584 = vpop.permute.xlu0 %4583
        %s4586 = sor.u32 256, 4
        %4587 = vbcast.lane.b32.xlu0 %v887, %s4586
        %v4588 = vpop.permute.xlu0 %4587
        %s4590 = sor.u32 256, 4
        %4591 = vbcast.lane.b32.xlu0 %v894, %s4590
        %v4592 = vpop.permute.xlu0 %4591
        %s4594 = sor.u32 256, 4
        %4595 = vbcast.lane.b32.xlu0 %v901, %s4594
        %v4596 = vpop.permute.xlu0 %4595
        %s4598 = sor.u32 256, 4
        %4599 = vbcast.lane.b32.xlu0 %v908, %s4598
        %v4600 = vpop.permute.xlu0 %4599
        %s4602 = sor.u32 256, 4
        %4603 = vbcast.lane.b32.xlu0 %v915, %s4602
        %v4604 = vpop.permute.xlu0 %4603
        %s4606 = sor.u32 256, 4
        %4607 = vbcast.lane.b32.xlu0 %v922, %s4606
        %v4608 = vpop.permute.xlu0 %4607
        %s4610 = sor.u32 256, 4
        %4611 = vbcast.lane.b32.xlu0 %v929, %s4610
        %v4612 = vpop.permute.xlu0 %4611
        %s4614 = sor.u32 256, 4
        %4615 = vbcast.lane.b32.xlu0 %v936, %s4614
        %v4616 = vpop.permute.xlu0 %4615
        %s4618 = sor.u32 256, 4
        %4619 = vbcast.lane.b32.xlu0 %v943, %s4618
        %v4620 = vpop.permute.xlu0 %4619
        %s4622 = sor.u32 256, 4
        %4623 = vbcast.lane.b32.xlu0 %v950, %s4622
        %v4624 = vpop.permute.xlu0 %4623
        %s4626 = sor.u32 256, 4
        %4627 = vbcast.lane.b32.xlu0 %v957, %s4626
        %v4628 = vpop.permute.xlu0 %4627
        %s4630 = sor.u32 256, 4
        %4631 = vbcast.lane.b32.xlu0 %v964, %s4630
        %v4632 = vpop.permute.xlu0 %4631
        %s4634 = sor.u32 256, 4
        %4635 = vbcast.lane.b32.xlu0 %v971, %s4634
        %v4636 = vpop.permute.xlu0 %4635
        %s4638 = sor.u32 256, 4
        %4639 = vbcast.lane.b32.xlu0 %v978, %s4638
        %v4640 = vpop.permute.xlu0 %4639
        %s4642 = sor.u32 256, 4
        %4643 = vbcast.lane.b32.xlu0 %v985, %s4642
        %v4644 = vpop.permute.xlu0 %4643
        %s4646 = sor.u32 256, 4
        %4647 = vbcast.lane.b32.xlu0 %v992, %s4646
        %v4648 = vpop.permute.xlu0 %4647
        %s4650 = sor.u32 256, 4
        %4651 = vbcast.lane.b32.xlu0 %v999, %s4650
        %v4652 = vpop.permute.xlu0 %4651
        %s4654 = sor.u32 256, 4
        %4655 = vbcast.lane.b32.xlu0 %v1006, %s4654
        %v4656 = vpop.permute.xlu0 %4655
        %s4658 = sor.u32 256, 4
        %4659 = vbcast.lane.b32.xlu0 %v1013, %s4658
        %v4660 = vpop.permute.xlu0 %4659
        %s4662 = sor.u32 256, 4
        %4663 = vbcast.lane.b32.xlu0 %v1020, %s4662
        %v4664 = vpop.permute.xlu0 %4663
        %s4666 = sor.u32 256, 4
        %4667 = vbcast.lane.b32.xlu0 %v1027, %s4666
        %v4668 = vpop.permute.xlu0 %4667
        %s4670 = sor.u32 256, 4
        %4671 = vbcast.lane.b32.xlu0 %v1034, %s4670
        %v4672 = vpop.permute.xlu0 %4671
        %s4674 = sor.u32 256, 4
        %4675 = vbcast.lane.b32.xlu0 %v1041, %s4674
        %v4676 = vpop.permute.xlu0 %4675
        %s4678 = sor.u32 256, 4
        %4679 = vbcast.lane.b32.xlu0 %v1048, %s4678
        %v4680 = vpop.permute.xlu0 %4679
        %s4682 = sor.u32 256, 4
        %4683 = vbcast.lane.b32.xlu0 %v1055, %s4682
        %v4684 = vpop.permute.xlu0 %4683
        %s4686 = sor.u32 256, 4
        %4687 = vbcast.lane.b32.xlu0 %v1062, %s4686
        %v4688 = vpop.permute.xlu0 %4687
        %s4690 = sor.u32 256, 4
        %4691 = vbcast.lane.b32.xlu0 %v1069, %s4690
        %v4692 = vpop.permute.xlu0 %4691
        %s4694 = sor.u32 256, 4
        %4695 = vbcast.lane.b32.xlu0 %v1076, %s4694
        %v4696 = vpop.permute.xlu0 %4695
        %s4698 = sor.u32 256, 4
        %4699 = vbcast.lane.b32.xlu0 %v1083, %s4698
        %v4700 = vpop.permute.xlu0 %4699
        %s4702 = sor.u32 256, 4
        %4703 = vbcast.lane.b32.xlu0 %v1090, %s4702
        %v4704 = vpop.permute.xlu0 %4703
        %s4706 = sor.u32 256, 4
        %4707 = vbcast.lane.b32.xlu0 %v1097, %s4706
        %v4708 = vpop.permute.xlu0 %4707
        %s4710 = sor.u32 256, 4
        %4711 = vbcast.lane.b32.xlu0 %v1104, %s4710
        %v4712 = vpop.permute.xlu0 %4711
        %s4714 = sor.u32 256, 4
        %4715 = vbcast.lane.b32.xlu0 %v1111, %s4714
        %v4716 = vpop.permute.xlu0 %4715
        %s4718 = sor.u32 256, 4
        %4719 = vbcast.lane.b32.xlu0 %v1118, %s4718
        %v4720 = vpop.permute.xlu0 %4719
        %s4722 = sor.u32 256, 4
        %4723 = vbcast.lane.b32.xlu0 %v1125, %s4722
        %v4724 = vpop.permute.xlu0 %4723
        %s4726 = sor.u32 256, 4
        %4727 = vbcast.lane.b32.xlu0 %v1132, %s4726
        %v4728 = vpop.permute.xlu0 %4727
        %s4730 = sor.u32 256, 4
        %4731 = vbcast.lane.b32.xlu0 %v1139, %s4730
        %v4732 = vpop.permute.xlu0 %4731
        %s4734 = sor.u32 256, 4
        %4735 = vbcast.lane.b32.xlu0 %v1146, %s4734
        %v4736 = vpop.permute.xlu0 %4735
        %s4738 = sor.u32 256, 4
        %4739 = vbcast.lane.b32.xlu0 %v1153, %s4738
        %v4740 = vpop.permute.xlu0 %4739
        %s4742 = sor.u32 256, 4
        %4743 = vbcast.lane.b32.xlu0 %v1160, %s4742
        %v4744 = vpop.permute.xlu0 %4743
        %s4746 = sor.u32 256, 4
        %4747 = vbcast.lane.b32.xlu0 %v1167, %s4746
        %v4748 = vpop.permute.xlu0 %4747
        %s4750 = sor.u32 256, 4
        %4751 = vbcast.lane.b32.xlu0 %v1174, %s4750
        %v4752 = vpop.permute.xlu0 %4751
        %s4754 = sor.u32 256, 4
        %4755 = vbcast.lane.b32.xlu0 %v1181, %s4754
        %v4756 = vpop.permute.xlu0 %4755
        %s4758 = sor.u32 256, 4
        %4759 = vbcast.lane.b32.xlu0 %v1188, %s4758
        %v4760 = vpop.permute.xlu0 %4759
        %s4762 = sor.u32 256, 4
        %4763 = vbcast.lane.b32.xlu0 %v1195, %s4762
        %v4764 = vpop.permute.xlu0 %4763
        %s4766 = sor.u32 256, 4
        %4767 = vbcast.lane.b32.xlu0 %v1202, %s4766
        %v4768 = vpop.permute.xlu0 %4767
        %s4770 = sor.u32 256, 4
        %4771 = vbcast.lane.b32.xlu0 %v1209, %s4770
        %v4772 = vpop.permute.xlu0 %4771
        %s4774 = sor.u32 256, 4
        %4775 = vbcast.lane.b32.xlu0 %v1216, %s4774
        %v4776 = vpop.permute.xlu0 %4775
        %s4778 = sor.u32 256, 4
        %4779 = vbcast.lane.b32.xlu0 %v1223, %s4778
        %v4780 = vpop.permute.xlu0 %4779
        %s4782 = sor.u32 256, 4
        %4783 = vbcast.lane.b32.xlu0 %v1230, %s4782
        %v4784 = vpop.permute.xlu0 %4783
        %s4786 = sor.u32 256, 4
        %4787 = vbcast.lane.b32.xlu0 %v1237, %s4786
        %v4788 = vpop.permute.xlu0 %4787
        %s4790 = sor.u32 256, 4
        %4791 = vbcast.lane.b32.xlu0 %v1244, %s4790
        %v4792 = vpop.permute.xlu0 %4791
        %s4794 = sor.u32 256, 4
        %4795 = vbcast.lane.b32.xlu0 %v1251, %s4794
        %v4796 = vpop.permute.xlu0 %4795
        %s4798 = sor.u32 256, 4
        %4799 = vbcast.lane.b32.xlu0 %v1258, %s4798
        %v4800 = vpop.permute.xlu0 %4799
        %s4802 = sor.u32 256, 4
        %4803 = vbcast.lane.b32.xlu0 %v1265, %s4802
        %v4804 = vpop.permute.xlu0 %4803
        %s4806 = sor.u32 256, 4
        %4807 = vbcast.lane.b32.xlu0 %v1272, %s4806
        %v4808 = vpop.permute.xlu0 %4807
        %s4810 = sor.u32 256, 4
        %4811 = vbcast.lane.b32.xlu0 %v1279, %s4810
        %v4812 = vpop.permute.xlu0 %4811
        %s4814 = sor.u32 256, 4
        %4815 = vbcast.lane.b32.xlu0 %v1286, %s4814
        %v4816 = vpop.permute.xlu0 %4815
        %s4818 = sor.u32 256, 4
        %4819 = vbcast.lane.b32.xlu0 %v1293, %s4818
        %v4820 = vpop.permute.xlu0 %4819
        %s4822 = sor.u32 256, 4
        %4823 = vbcast.lane.b32.xlu0 %v1300, %s4822
        %v4824 = vpop.permute.xlu0 %4823
        %s4826 = sor.u32 256, 4
        %4827 = vbcast.lane.b32.xlu0 %v1307, %s4826
        %v4828 = vpop.permute.xlu0 %4827
        %s4830 = sor.u32 256, 4
        %4831 = vbcast.lane.b32.xlu0 %v1314, %s4830
        %v4832 = vpop.permute.xlu0 %4831
        %s4834 = sor.u32 256, 4
        %4835 = vbcast.lane.b32.xlu0 %v1321, %s4834
        %v4836 = vpop.permute.xlu0 %4835
        %s4838 = sor.u32 256, 4
        %4839 = vbcast.lane.b32.xlu0 %v1328, %s4838
        %v4840 = vpop.permute.xlu0 %4839
        %s4842 = sor.u32 256, 4
        %4843 = vbcast.lane.b32.xlu0 %v1335, %s4842
        %v4844 = vpop.permute.xlu0 %4843
        %s4846 = sor.u32 256, 4
        %4847 = vbcast.lane.b32.xlu0 %v1342, %s4846
        %v4848 = vpop.permute.xlu0 %4847
        %s4850 = sor.u32 256, 4
        %4851 = vbcast.lane.b32.xlu0 %v1349, %s4850
        %v4852 = vpop.permute.xlu0 %4851
        %s4854 = sor.u32 256, 4
        %4855 = vbcast.lane.b32.xlu0 %v1356, %s4854
        %v4856 = vpop.permute.xlu0 %4855
        %s4858 = sor.u32 256, 4
        %4859 = vbcast.lane.b32.xlu0 %v1363, %s4858
        %v4860 = vpop.permute.xlu0 %4859
        %s4862 = sor.u32 256, 4
        %4863 = vbcast.lane.b32.xlu0 %v1370, %s4862
        %v4864 = vpop.permute.xlu0 %4863
        %s4866 = sor.u32 256, 4
        %4867 = vbcast.lane.b32.xlu0 %v1377, %s4866
        %v4868 = vpop.permute.xlu0 %4867
        %s4870 = sor.u32 256, 4
        %4871 = vbcast.lane.b32.xlu0 %v1384, %s4870
        %v4872 = vpop.permute.xlu0 %4871
        %s4874 = sor.u32 256, 4
        %4875 = vbcast.lane.b32.xlu0 %v1391, %s4874
        %v4876 = vpop.permute.xlu0 %4875
        %s4878 = sor.u32 256, 4
        %4879 = vbcast.lane.b32.xlu0 %v1398, %s4878
        %v4880 = vpop.permute.xlu0 %4879
        %s4882 = sor.u32 256, 4
        %4883 = vbcast.lane.b32.xlu0 %v1405, %s4882
        %v4884 = vpop.permute.xlu0 %4883
        %s4886 = sor.u32 256, 4
        %4887 = vbcast.lane.b32.xlu0 %v1412, %s4886
        %v4888 = vpop.permute.xlu0 %4887
        %s4890 = sor.u32 256, 4
        %4891 = vbcast.lane.b32.xlu0 %v1419, %s4890
        %v4892 = vpop.permute.xlu0 %4891
        %s4894 = sor.u32 256, 4
        %4895 = vbcast.lane.b32.xlu0 %v1426, %s4894
        %v4896 = vpop.permute.xlu0 %4895
        %s4898 = sor.u32 256, 4
        %4899 = vbcast.lane.b32.xlu0 %v1433, %s4898
        %v4900 = vpop.permute.xlu0 %4899
        %s4902 = sor.u32 256, 4
        %4903 = vbcast.lane.b32.xlu0 %v1440, %s4902
        %v4904 = vpop.permute.xlu0 %4903
        %s4906 = sor.u32 256, 4
        %4907 = vbcast.lane.b32.xlu0 %v1447, %s4906
        %v4908 = vpop.permute.xlu0 %4907
        %s4910 = sor.u32 256, 4
        %4911 = vbcast.lane.b32.xlu0 %v1454, %s4910
        %v4912 = vpop.permute.xlu0 %4911
        %s4914 = sor.u32 256, 4
        %4915 = vbcast.lane.b32.xlu0 %v1461, %s4914
        %v4916 = vpop.permute.xlu0 %4915
        %s4918 = sor.u32 256, 4
        %4919 = vbcast.lane.b32.xlu0 %v1468, %s4918
        %v4920 = vpop.permute.xlu0 %4919
        %s4922 = sor.u32 256, 4
        %4923 = vbcast.lane.b32.xlu0 %v1475, %s4922
        %v4924 = vpop.permute.xlu0 %4923
        %s4926 = sor.u32 256, 4
        %4927 = vbcast.lane.b32.xlu0 %v1482, %s4926
        %v4928 = vpop.permute.xlu0 %4927
        %s4930 = sor.u32 256, 4
        %4931 = vbcast.lane.b32.xlu0 %v1489, %s4930
        %v4932 = vpop.permute.xlu0 %4931
        %s4934 = sor.u32 256, 4
        %4935 = vbcast.lane.b32.xlu0 %v1496, %s4934
        %v4936 = vpop.permute.xlu0 %4935
        %s4938 = sor.u32 256, 4
        %4939 = vbcast.lane.b32.xlu0 %v1503, %s4938
        %v4940 = vpop.permute.xlu0 %4939
        %s4942 = sor.u32 256, 4
        %4943 = vbcast.lane.b32.xlu0 %v1510, %s4942
        %v4944 = vpop.permute.xlu0 %4943
        %s4946 = sor.u32 256, 4
        %4947 = vbcast.lane.b32.xlu0 %v1517, %s4946
        %v4948 = vpop.permute.xlu0 %4947
        %s4950 = sor.u32 256, 4
        %4951 = vbcast.lane.b32.xlu0 %v1524, %s4950
        %v4952 = vpop.permute.xlu0 %4951
        %s4954 = sor.u32 256, 4
        %4955 = vbcast.lane.b32.xlu0 %v1531, %s4954
        %v4956 = vpop.permute.xlu0 %4955
        %s4958 = sor.u32 256, 4
        %4959 = vbcast.lane.b32.xlu0 %v1538, %s4958
        %v4960 = vpop.permute.xlu0 %4959
        %s4962 = sor.u32 256, 4
        %4963 = vbcast.lane.b32.xlu0 %v1545, %s4962
        %v4964 = vpop.permute.xlu0 %4963
        %s4966 = sor.u32 256, 4
        %4967 = vbcast.lane.b32.xlu0 %v1552, %s4966
        %v4968 = vpop.permute.xlu0 %4967
        %s4970 = sor.u32 256, 4
        %4971 = vbcast.lane.b32.xlu0 %v1559, %s4970
        %v4972 = vpop.permute.xlu0 %4971
        %s4974 = sor.u32 256, 4
        %4975 = vbcast.lane.b32.xlu0 %v1566, %s4974
        %v4976 = vpop.permute.xlu0 %4975
        %s4978 = sor.u32 256, 4
        %4979 = vbcast.lane.b32.xlu0 %v1573, %s4978
        %v4980 = vpop.permute.xlu0 %4979
        %s4982 = sor.u32 256, 4
        %4983 = vbcast.lane.b32.xlu0 %v1580, %s4982
        %v4984 = vpop.permute.xlu0 %4983
        %s4986 = sor.u32 256, 4
        %4987 = vbcast.lane.b32.xlu0 %v1587, %s4986
        %v4988 = vpop.permute.xlu0 %4987
        %s4990 = sor.u32 256, 4
        %4991 = vbcast.lane.b32.xlu0 %v1594, %s4990
        %v4992 = vpop.permute.xlu0 %4991
        %s4994 = sor.u32 256, 4
        %4995 = vbcast.lane.b32.xlu0 %v1601, %s4994
        %v4996 = vpop.permute.xlu0 %4995
        %s4998 = sor.u32 256, 4
        %4999 = vbcast.lane.b32.xlu0 %v1608, %s4998
        %v5000 = vpop.permute.xlu0 %4999
        %s5002 = sor.u32 256, 4
        %5003 = vbcast.lane.b32.xlu0 %v1615, %s5002
        %v5004 = vpop.permute.xlu0 %5003
        %s5006 = sor.u32 256, 4
        %5007 = vbcast.lane.b32.xlu0 %v1622, %s5006
        %v5008 = vpop.permute.xlu0 %5007
        %s5010 = sor.u32 256, 4
        %5011 = vbcast.lane.b32.xlu0 %v1629, %s5010
        %v5012 = vpop.permute.xlu0 %5011
        %s5014 = sor.u32 256, 4
        %5015 = vbcast.lane.b32.xlu0 %v1636, %s5014
        %v5016 = vpop.permute.xlu0 %5015
        %s5018 = sor.u32 256, 4
        %5019 = vbcast.lane.b32.xlu0 %v1643, %s5018
        %v5020 = vpop.permute.xlu0 %5019
        %s5022 = sor.u32 256, 4
        %5023 = vbcast.lane.b32.xlu0 %v1650, %s5022
        %v5024 = vpop.permute.xlu0 %5023
        %s5026 = sor.u32 256, 4
        %5027 = vbcast.lane.b32.xlu0 %v1657, %s5026
        %v5028 = vpop.permute.xlu0 %5027
        %s5030 = sor.u32 256, 4
        %5031 = vbcast.lane.b32.xlu0 %v1664, %s5030
        %v5032 = vpop.permute.xlu0 %5031
        %s5034 = sor.u32 256, 4
        %5035 = vbcast.lane.b32.xlu0 %v1671, %s5034
        %v5036 = vpop.permute.xlu0 %5035
        %s5038 = sor.u32 256, 4
        %5039 = vbcast.lane.b32.xlu0 %v1678, %s5038
        %v5040 = vpop.permute.xlu0 %5039
        %s5042 = sor.u32 256, 4
        %5043 = vbcast.lane.b32.xlu0 %v1685, %s5042
        %v5044 = vpop.permute.xlu0 %5043
        %s5046 = sor.u32 256, 4
        %5047 = vbcast.lane.b32.xlu0 %v1692, %s5046
        %v5048 = vpop.permute.xlu0 %5047
        %s5050 = sor.u32 256, 4
        %5051 = vbcast.lane.b32.xlu0 %v1699, %s5050
        %v5052 = vpop.permute.xlu0 %5051
        %s5054 = sor.u32 256, 4
        %5055 = vbcast.lane.b32.xlu0 %v1706, %s5054
        %v5056 = vpop.permute.xlu0 %5055
        %s5058 = sor.u32 256, 4
        %5059 = vbcast.lane.b32.xlu0 %v1713, %s5058
        %v5060 = vpop.permute.xlu0 %5059
        %s5062 = sor.u32 256, 4
        %5063 = vbcast.lane.b32.xlu0 %v1720, %s5062
        %v5064 = vpop.permute.xlu0 %5063
        %s5066 = sor.u32 256, 4
        %5067 = vbcast.lane.b32.xlu0 %v1727, %s5066
        %v5068 = vpop.permute.xlu0 %5067
        %s5070 = sor.u32 256, 4
        %5071 = vbcast.lane.b32.xlu0 %v1734, %s5070
        %v5072 = vpop.permute.xlu0 %5071
        %s5074 = sor.u32 256, 4
        %5075 = vbcast.lane.b32.xlu0 %v1741, %s5074
        %v5076 = vpop.permute.xlu0 %5075
        %s5078 = sor.u32 256, 4
        %5079 = vbcast.lane.b32.xlu0 %v1748, %s5078
        %v5080 = vpop.permute.xlu0 %5079
        %s5082 = sor.u32 256, 4
        %5083 = vbcast.lane.b32.xlu0 %v1755, %s5082
        %v5084 = vpop.permute.xlu0 %5083
        %s5086 = sor.u32 256, 4
        %5087 = vbcast.lane.b32.xlu0 %v1762, %s5086
        %v5088 = vpop.permute.xlu0 %5087
        %s5090 = sor.u32 256, 4
        %5091 = vbcast.lane.b32.xlu0 %v1769, %s5090
        %v5092 = vpop.permute.xlu0 %5091
        %s5094 = sor.u32 256, 4
        %5095 = vbcast.lane.b32.xlu0 %v1776, %s5094
        %v5096 = vpop.permute.xlu0 %5095
        %s5098 = sor.u32 256, 4
        %5099 = vbcast.lane.b32.xlu0 %v1783, %s5098
        %v5100 = vpop.permute.xlu0 %5099
        %s5102 = sor.u32 256, 4
        %5103 = vbcast.lane.b32.xlu0 %v1790, %s5102
        %v5104 = vpop.permute.xlu0 %5103
        %s5106 = sor.u32 256, 4
        %5107 = vbcast.lane.b32.xlu0 %v1797, %s5106
        %v5108 = vpop.permute.xlu0 %5107
        %s5110 = sor.u32 256, 4
        %5111 = vbcast.lane.b32.xlu0 %v1804, %s5110
        %v5112 = vpop.permute.xlu0 %5111
        %s5114 = sor.u32 256, 4
        %5115 = vbcast.lane.b32.xlu0 %v1811, %s5114
        %v5116 = vpop.permute.xlu0 %5115
        %s5118 = sor.u32 256, 4
        %5119 = vbcast.lane.b32.xlu0 %v1818, %s5118
        %v5120 = vpop.permute.xlu0 %5119
        %s5122 = sor.u32 256, 4
        %5123 = vbcast.lane.b32.xlu0 %v1825, %s5122
        %v5124 = vpop.permute.xlu0 %5123
        %s5126 = sor.u32 256, 4
        %5127 = vbcast.lane.b32.xlu0 %v1832, %s5126
        %v5128 = vpop.permute.xlu0 %5127
        %s5130 = sor.u32 256, 4
        %5131 = vbcast.lane.b32.xlu0 %v1839, %s5130
        %v5132 = vpop.permute.xlu0 %5131
        %s5134 = sor.u32 256, 4
        %5135 = vbcast.lane.b32.xlu0 %v1846, %s5134
        %v5136 = vpop.permute.xlu0 %5135
        %s5138 = sor.u32 256, 4
        %5139 = vbcast.lane.b32.xlu0 %v1853, %s5138
        %v5140 = vpop.permute.xlu0 %5139
        %s5142 = sor.u32 256, 4
        %5143 = vbcast.lane.b32.xlu0 %v1860, %s5142
        %v5144 = vpop.permute.xlu0 %5143
        %s5146 = sor.u32 256, 4
        %5147 = vbcast.lane.b32.xlu0 %v1867, %s5146
        %v5148 = vpop.permute.xlu0 %5147
        %s5150 = sor.u32 256, 4
        %5151 = vbcast.lane.b32.xlu0 %v1874, %s5150
        %v5152 = vpop.permute.xlu0 %5151
        %s5154 = sor.u32 256, 4
        %5155 = vbcast.lane.b32.xlu0 %v1881, %s5154
        %v5156 = vpop.permute.xlu0 %5155
        %s5158 = sor.u32 256, 4
        %5159 = vbcast.lane.b32.xlu0 %v1888, %s5158
        %v5160 = vpop.permute.xlu0 %5159
        %s5162 = sor.u32 256, 4
        %5163 = vbcast.lane.b32.xlu0 %v1895, %s5162
        %v5164 = vpop.permute.xlu0 %5163
        %s5166 = sor.u32 256, 4
        %5167 = vbcast.lane.b32.xlu0 %v1902, %s5166
        %v5168 = vpop.permute.xlu0 %5167
        %s5170 = sor.u32 256, 4
        %5171 = vbcast.lane.b32.xlu0 %v1909, %s5170
        %v5172 = vpop.permute.xlu0 %5171
        %s5174 = sor.u32 256, 4
        %5175 = vbcast.lane.b32.xlu0 %v1916, %s5174
        %v5176 = vpop.permute.xlu0 %5175
        %s5178 = sor.u32 256, 4
        %5179 = vbcast.lane.b32.xlu0 %v1923, %s5178
        %v5180 = vpop.permute.xlu0 %5179
        %s5182 = sor.u32 256, 4
        %5183 = vbcast.lane.b32.xlu0 %v1930, %s5182
        %v5184 = vpop.permute.xlu0 %5183
        %s5186 = sor.u32 256, 4
        %5187 = vbcast.lane.b32.xlu0 %v1937, %s5186
        %v5188 = vpop.permute.xlu0 %5187
        %s5190 = sor.u32 256, 4
        %5191 = vbcast.lane.b32.xlu0 %v1944, %s5190
        %v5192 = vpop.permute.xlu0 %5191
        %s5194 = sor.u32 256, 4
        %5195 = vbcast.lane.b32.xlu0 %v1951, %s5194
        %v5196 = vpop.permute.xlu0 %5195
        %s5198 = sor.u32 256, 4
        %5199 = vbcast.lane.b32.xlu0 %v1958, %s5198
        %v5200 = vpop.permute.xlu0 %5199
        %s5202 = sor.u32 256, 4
        %5203 = vbcast.lane.b32.xlu0 %v1965, %s5202
        %v5204 = vpop.permute.xlu0 %5203
        %s5206 = sor.u32 256, 4
        %5207 = vbcast.lane.b32.xlu0 %v1972, %s5206
        %v5208 = vpop.permute.xlu0 %5207
        %s5210 = sor.u32 256, 4
        %5211 = vbcast.lane.b32.xlu0 %v1979, %s5210
        %v5212 = vpop.permute.xlu0 %5211
        %s5214 = sor.u32 256, 4
        %5215 = vbcast.lane.b32.xlu0 %v1986, %s5214
        %v5216 = vpop.permute.xlu0 %5215
        %s5218 = sor.u32 256, 4
        %5219 = vbcast.lane.b32.xlu0 %v1993, %s5218
        %v5220 = vpop.permute.xlu0 %5219
        %s5222 = sor.u32 256, 4
        %5223 = vbcast.lane.b32.xlu0 %v2000, %s5222
        %v5224 = vpop.permute.xlu0 %5223
        %s5226 = sor.u32 256, 4
        %5227 = vbcast.lane.b32.xlu0 %v2007, %s5226
        %v5228 = vpop.permute.xlu0 %5227
        %s5230 = sor.u32 256, 4
        %5231 = vbcast.lane.b32.xlu0 %v2014, %s5230
        %v5232 = vpop.permute.xlu0 %5231
        %s5234 = sor.u32 256, 4
        %5235 = vbcast.lane.b32.xlu0 %v2021, %s5234
        %v5236 = vpop.permute.xlu0 %5235
        %s5238 = sor.u32 256, 4
        %5239 = vbcast.lane.b32.xlu0 %v2028, %s5238
        %v5240 = vpop.permute.xlu0 %5239
        %s5242 = sor.u32 256, 4
        %5243 = vbcast.lane.b32.xlu0 %v2035, %s5242
        %v5244 = vpop.permute.xlu0 %5243
        %s5246 = sor.u32 256, 4
        %5247 = vbcast.lane.b32.xlu0 %v2042, %s5246
        %v5248 = vpop.permute.xlu0 %5247
        %s5250 = sor.u32 256, 4
        %5251 = vbcast.lane.b32.xlu0 %v2049, %s5250
        %v5252 = vpop.permute.xlu0 %5251
        %s5254 = sor.u32 256, 4
        %5255 = vbcast.lane.b32.xlu0 %v2056, %s5254
        %v5256 = vpop.permute.xlu0 %5255
        %s5258 = sor.u32 256, 4
        %5259 = vbcast.lane.b32.xlu0 %v2063, %s5258
        %v5260 = vpop.permute.xlu0 %5259
        %s5262 = sor.u32 256, 4
        %5263 = vbcast.lane.b32.xlu0 %v2070, %s5262
        %v5264 = vpop.permute.xlu0 %5263
        %s5266 = sor.u32 256, 4
        %5267 = vbcast.lane.b32.xlu0 %v2077, %s5266
        %v5268 = vpop.permute.xlu0 %5267
        %s5270 = sor.u32 256, 4
        %5271 = vbcast.lane.b32.xlu0 %v2084, %s5270
        %v5272 = vpop.permute.xlu0 %5271
        %s5274 = sor.u32 256, 4
        %5275 = vbcast.lane.b32.xlu0 %v2091, %s5274
        %v5276 = vpop.permute.xlu0 %5275
        %s5278 = sor.u32 256, 4
        %5279 = vbcast.lane.b32.xlu0 %v2098, %s5278
        %v5280 = vpop.permute.xlu0 %5279
        %s5282 = sor.u32 256, 4
        %5283 = vbcast.lane.b32.xlu0 %v2105, %s5282
        %v5284 = vpop.permute.xlu0 %5283
        %s5286 = sor.u32 256, 4
        %5287 = vbcast.lane.b32.xlu0 %v2112, %s5286
        %v5288 = vpop.permute.xlu0 %5287
        %s5290 = sor.u32 256, 4
        %5291 = vbcast.lane.b32.xlu0 %v2119, %s5290
        %v5292 = vpop.permute.xlu0 %5291
        %s5294 = sor.u32 256, 4
        %5295 = vbcast.lane.b32.xlu0 %v2126, %s5294
        %v5296 = vpop.permute.xlu0 %5295
        %s5298 = sor.u32 256, 4
        %5299 = vbcast.lane.b32.xlu0 %v2133, %s5298
        %v5300 = vpop.permute.xlu0 %5299
        %s5302 = sor.u32 256, 4
        %5303 = vbcast.lane.b32.xlu0 %v2140, %s5302
        %v5304 = vpop.permute.xlu0 %5303
        %s5306 = sor.u32 256, 4
        %5307 = vbcast.lane.b32.xlu0 %v2147, %s5306
        %v5308 = vpop.permute.xlu0 %5307
        %s5310 = sor.u32 256, 4
        %5311 = vbcast.lane.b32.xlu0 %v2154, %s5310
        %v5312 = vpop.permute.xlu0 %5311
        %s5314 = sor.u32 256, 4
        %5315 = vbcast.lane.b32.xlu0 %v2161, %s5314
        %v5316 = vpop.permute.xlu0 %5315
        %s5318 = sor.u32 256, 4
        %5319 = vbcast.lane.b32.xlu0 %v2168, %s5318
        %v5320 = vpop.permute.xlu0 %5319
        %s5322 = sor.u32 256, 4
        %5323 = vbcast.lane.b32.xlu0 %v2175, %s5322
        %v5324 = vpop.permute.xlu0 %5323
        %s5326 = sor.u32 256, 4
        %5327 = vbcast.lane.b32.xlu0 %v2182, %s5326
        %v5328 = vpop.permute.xlu0 %5327
        %s5330 = sor.u32 256, 4
        %5331 = vbcast.lane.b32.xlu0 %v2189, %s5330
        %v5332 = vpop.permute.xlu0 %5331
        %s5334 = sor.u32 256, 4
        %5335 = vbcast.lane.b32.xlu0 %v2196, %s5334
        %v5336 = vpop.permute.xlu0 %5335
        %s5338 = sor.u32 256, 4
        %5339 = vbcast.lane.b32.xlu0 %v2203, %s5338
        %v5340 = vpop.permute.xlu0 %5339
        %s5342 = sor.u32 256, 4
        %5343 = vbcast.lane.b32.xlu0 %v2210, %s5342
        %v5344 = vpop.permute.xlu0 %5343
        %s5346 = sor.u32 256, 4
        %5347 = vbcast.lane.b32.xlu0 %v2217, %s5346
        %v5348 = vpop.permute.xlu0 %5347
        %s5350 = sor.u32 256, 4
        %5351 = vbcast.lane.b32.xlu0 %v2224, %s5350
        %v5352 = vpop.permute.xlu0 %5351
        %s5354 = sor.u32 256, 4
        %5355 = vbcast.lane.b32.xlu0 %v2231, %s5354
        %v5356 = vpop.permute.xlu0 %5355
        %s5358 = sor.u32 256, 4
        %5359 = vbcast.lane.b32.xlu0 %v2238, %s5358
        %v5360 = vpop.permute.xlu0 %5359
        %s5362 = sor.u32 256, 4
        %5363 = vbcast.lane.b32.xlu0 %v2245, %s5362
        %v5364 = vpop.permute.xlu0 %5363
        %s5366 = sor.u32 256, 4
        %5367 = vbcast.lane.b32.xlu0 %v2252, %s5366
        %v5368 = vpop.permute.xlu0 %5367
        %s5370 = sor.u32 256, 4
        %5371 = vbcast.lane.b32.xlu0 %v2259, %s5370
        %v5372 = vpop.permute.xlu0 %5371
        %s5374 = sor.u32 256, 4
        %5375 = vbcast.lane.b32.xlu0 %v2266, %s5374
        %v5376 = vpop.permute.xlu0 %5375
        %s5378 = sor.u32 256, 4
        %5379 = vbcast.lane.b32.xlu0 %v2273, %s5378
        %v5380 = vpop.permute.xlu0 %5379
        %s5382 = sor.u32 256, 4
        %5383 = vbcast.lane.b32.xlu0 %v2280, %s5382
        %v5384 = vpop.permute.xlu0 %5383
        %s5386 = sor.u32 256, 4
        %5387 = vbcast.lane.b32.xlu0 %v2287, %s5386
        %v5388 = vpop.permute.xlu0 %5387
        %s5390 = sor.u32 256, 4
        %5391 = vbcast.lane.b32.xlu0 %v2294, %s5390
        %v5392 = vpop.permute.xlu0 %5391
        %s5394 = sor.u32 256, 4
        %5395 = vbcast.lane.b32.xlu0 %v2301, %s5394
        %v5396 = vpop.permute.xlu0 %5395
        %s5398 = sor.u32 256, 4
        %5399 = vbcast.lane.b32.xlu0 %v2308, %s5398
        %v5400 = vpop.permute.xlu0 %5399
        %v5401 = vld [vmem:[%s295] sm:$0xf]
        %v5402 = vld [vmem:[%s295 + $0x4] sm:$0xf]
        %v5403 = vld [vmem:[%s295 + $0x8] sm:$0xf]
        %v5404 = vld [vmem:[%s295 + $0xc] sm:$0xf]
        %v5405 = vld [vmem:[%s295 + $0x10] sm:$0xf]
        %v5406 = vld [vmem:[%s295 + $0x14] sm:$0xf]
        %v5407 = vld [vmem:[%s295 + $0x18] sm:$0xf]
        %v5408 = vld [vmem:[%s295 + $0x1c] sm:$0xf]
        %v5409 = vld [vmem:[%s295 + $0x20] sm:$0xf]
        %v5410 = vld [vmem:[%s295 + $0x24] sm:$0xf]
        %v5411 = vld [vmem:[%s295 + $0x28] sm:$0xf]
        %v5412 = vld [vmem:[%s295 + $0x2c] sm:$0xf]
        %v5413 = vld [vmem:[%s295 + $0x30] sm:$0xf]
        %v5414 = vld [vmem:[%s295 + $0x34] sm:$0xf]
        %v5415 = vld [vmem:[%s295 + $0x38] sm:$0xf]
        %v5416 = vld [vmem:[%s295 + $0x3c] sm:$0xf]
        %v5417 = vmul.f32 %v4380, %v5401
        %v5418 = vmul.f32 %v4384, %v5402
        %v5419 = vmul.f32 %v4388, %v5403
        %v5420 = vmul.f32 %v4392, %v5404
        %v5421 = vmul.f32 %v4396, %v5405
        %v5422 = vmul.f32 %v4400, %v5406
        %v5423 = vmul.f32 %v4404, %v5407
        %v5424 = vmul.f32 %v4408, %v5408
        %v5425 = vmul.f32 %v4412, %v5409
        %v5426 = vmul.f32 %v4416, %v5410
        %v5427 = vmul.f32 %v4420, %v5411
        %v5428 = vmul.f32 %v4424, %v5412
        %v5429 = vmul.f32 %v4428, %v5413
        %v5430 = vmul.f32 %v4432, %v5414
        %v5431 = vmul.f32 %v4436, %v5415
        %v5432 = vmul.f32 %v4440, %v5416
        %v5433 = vmul.f32 %v4444, %v5401
        %v5434 = vmul.f32 %v4448, %v5402
        %v5435 = vmul.f32 %v4452, %v5403
        %v5436 = vmul.f32 %v4456, %v5404
        %v5437 = vmul.f32 %v4460, %v5405
        %v5438 = vmul.f32 %v4464, %v5406
        %v5439 = vmul.f32 %v4468, %v5407
        %v5440 = vmul.f32 %v4472, %v5408
        %v5441 = vmul.f32 %v4476, %v5409
        %v5442 = vmul.f32 %v4480, %v5410
        %v5443 = vmul.f32 %v4484, %v5411
        %v5444 = vmul.f32 %v4488, %v5412
        %v5445 = vmul.f32 %v4492, %v5413
        %v5446 = vmul.f32 %v4496, %v5414
        %v5447 = vmul.f32 %v4500, %v5415
        %v5448 = vmul.f32 %v4504, %v5416
        %v5449 = vmul.f32 %v4508, %v5401
        %v5450 = vmul.f32 %v4512, %v5402
        %v5451 = vmul.f32 %v4516, %v5403
        %v5452 = vmul.f32 %v4520, %v5404
        %v5453 = vmul.f32 %v4524, %v5405
        %v5454 = vmul.f32 %v4528, %v5406
        %v5455 = vmul.f32 %v4532, %v5407
        %v5456 = vmul.f32 %v4536, %v5408
        %v5457 = vmul.f32 %v4540, %v5409
        %v5458 = vmul.f32 %v4544, %v5410
        %v5459 = vmul.f32 %v4548, %v5411
        %v5460 = vmul.f32 %v4552, %v5412
        %v5461 = vmul.f32 %v4556, %v5413
        %v5462 = vmul.f32 %v4560, %v5414
        %v5463 = vmul.f32 %v4564, %v5415
        %v5464 = vmul.f32 %v4568, %v5416
        %v5465 = vmul.f32 %v4572, %v5401
        %v5466 = vmul.f32 %v4576, %v5402
        %v5467 = vmul.f32 %v4580, %v5403
        %v5468 = vmul.f32 %v4584, %v5404
        %v5469 = vmul.f32 %v4588, %v5405
        %v5470 = vmul.f32 %v4592, %v5406
        %v5471 = vmul.f32 %v4596, %v5407
        %v5472 = vmul.f32 %v4600, %v5408
        %v5473 = vmul.f32 %v4604, %v5409
        %v5474 = vmul.f32 %v4608, %v5410
        %v5475 = vmul.f32 %v4612, %v5411
        %v5476 = vmul.f32 %v4616, %v5412
        %v5477 = vmul.f32 %v4620, %v5413
        %v5478 = vmul.f32 %v4624, %v5414
        %v5479 = vmul.f32 %v4628, %v5415
        %v5480 = vmul.f32 %v4632, %v5416
        %v5481 = vmul.f32 %v4636, %v5401
        %v5482 = vmul.f32 %v4640, %v5402
        %v5483 = vmul.f32 %v4644, %v5403
        %v5484 = vmul.f32 %v4648, %v5404
        %v5485 = vmul.f32 %v4652, %v5405
        %v5486 = vmul.f32 %v4656, %v5406
        %v5487 = vmul.f32 %v4660, %v5407
        %v5488 = vmul.f32 %v4664, %v5408
        %v5489 = vmul.f32 %v4668, %v5409
        %v5490 = vmul.f32 %v4672, %v5410
        %v5491 = vmul.f32 %v4676, %v5411
        %v5492 = vmul.f32 %v4680, %v5412
        %v5493 = vmul.f32 %v4684, %v5413
        %v5494 = vmul.f32 %v4688, %v5414
        %v5495 = vmul.f32 %v4692, %v5415
        %v5496 = vmul.f32 %v4696, %v5416
        %v5497 = vmul.f32 %v4700, %v5401
        %v5498 = vmul.f32 %v4704, %v5402
        %v5499 = vmul.f32 %v4708, %v5403
        %v5500 = vmul.f32 %v4712, %v5404
        %v5501 = vmul.f32 %v4716, %v5405
        %v5502 = vmul.f32 %v4720, %v5406
        %v5503 = vmul.f32 %v4724, %v5407
        %v5504 = vmul.f32 %v4728, %v5408
        %v5505 = vmul.f32 %v4732, %v5409
        %v5506 = vmul.f32 %v4736, %v5410
        %v5507 = vmul.f32 %v4740, %v5411
        %v5508 = vmul.f32 %v4744, %v5412
        %v5509 = vmul.f32 %v4748, %v5413
        %v5510 = vmul.f32 %v4752, %v5414
        %v5511 = vmul.f32 %v4756, %v5415
        %v5512 = vmul.f32 %v4760, %v5416
        %v5513 = vmul.f32 %v4764, %v5401
        %v5514 = vmul.f32 %v4768, %v5402
        %v5515 = vmul.f32 %v4772, %v5403
        %v5516 = vmul.f32 %v4776, %v5404
        %v5517 = vmul.f32 %v4780, %v5405
        %v5518 = vmul.f32 %v4784, %v5406
        %v5519 = vmul.f32 %v4788, %v5407
        %v5520 = vmul.f32 %v4792, %v5408
        %v5521 = vmul.f32 %v4796, %v5409
        %v5522 = vmul.f32 %v4800, %v5410
        %v5523 = vmul.f32 %v4804, %v5411
        %v5524 = vmul.f32 %v4808, %v5412
        %v5525 = vmul.f32 %v4812, %v5413
        %v5526 = vmul.f32 %v4816, %v5414
        %v5527 = vmul.f32 %v4820, %v5415
        %v5528 = vmul.f32 %v4824, %v5416
        %v5529 = vmul.f32 %v4828, %v5401
        %v5530 = vmul.f32 %v4832, %v5402
        %v5531 = vmul.f32 %v4836, %v5403
        %v5532 = vmul.f32 %v4840, %v5404
        %v5533 = vmul.f32 %v4844, %v5405
        %v5534 = vmul.f32 %v4848, %v5406
        %v5535 = vmul.f32 %v4852, %v5407
        %v5536 = vmul.f32 %v4856, %v5408
        %v5537 = vmul.f32 %v4860, %v5409
        %v5538 = vmul.f32 %v4864, %v5410
        %v5539 = vmul.f32 %v4868, %v5411
        %v5540 = vmul.f32 %v4872, %v5412
        %v5541 = vmul.f32 %v4876, %v5413
        %v5542 = vmul.f32 %v4880, %v5414
        %v5543 = vmul.f32 %v4884, %v5415
        %v5544 = vmul.f32 %v4888, %v5416
        %v5545 = vmul.f32 %v4892, %v5401
        %v5546 = vmul.f32 %v4896, %v5402
        %v5547 = vmul.f32 %v4900, %v5403
        %v5548 = vmul.f32 %v4904, %v5404
        %v5549 = vmul.f32 %v4908, %v5405
        %v5550 = vmul.f32 %v4912, %v5406
        %v5551 = vmul.f32 %v4916, %v5407
        %v5552 = vmul.f32 %v4920, %v5408
        %v5553 = vmul.f32 %v4924, %v5409
        %v5554 = vmul.f32 %v4928, %v5410
        %v5555 = vmul.f32 %v4932, %v5411
        %v5556 = vmul.f32 %v4936, %v5412
        %v5557 = vmul.f32 %v4940, %v5413
        %v5558 = vmul.f32 %v4944, %v5414
        %v5559 = vmul.f32 %v4948, %v5415
        %v5560 = vmul.f32 %v4952, %v5416
        %v5561 = vmul.f32 %v4956, %v5401
        %v5562 = vmul.f32 %v4960, %v5402
        %v5563 = vmul.f32 %v4964, %v5403
        %v5564 = vmul.f32 %v4968, %v5404
        %v5565 = vmul.f32 %v4972, %v5405
        %v5566 = vmul.f32 %v4976, %v5406
        %v5567 = vmul.f32 %v4980, %v5407
        %v5568 = vmul.f32 %v4984, %v5408
        %v5569 = vmul.f32 %v4988, %v5409
        %v5570 = vmul.f32 %v4992, %v5410
        %v5571 = vmul.f32 %v4996, %v5411
        %v5572 = vmul.f32 %v5000, %v5412
        %v5573 = vmul.f32 %v5004, %v5413
        %v5574 = vmul.f32 %v5008, %v5414
        %v5575 = vmul.f32 %v5012, %v5415
        %v5576 = vmul.f32 %v5016, %v5416
        %v5577 = vmul.f32 %v5020, %v5401
        %v5578 = vmul.f32 %v5024, %v5402
        %v5579 = vmul.f32 %v5028, %v5403
        %v5580 = vmul.f32 %v5032, %v5404
        %v5581 = vmul.f32 %v5036, %v5405
        %v5582 = vmul.f32 %v5040, %v5406
        %v5583 = vmul.f32 %v5044, %v5407
        %v5584 = vmul.f32 %v5048, %v5408
        %v5585 = vmul.f32 %v5052, %v5409
        %v5586 = vmul.f32 %v5056, %v5410
        %v5587 = vmul.f32 %v5060, %v5411
        %v5588 = vmul.f32 %v5064, %v5412
        %v5589 = vmul.f32 %v5068, %v5413
        %v5590 = vmul.f32 %v5072, %v5414
        %v5591 = vmul.f32 %v5076, %v5415
        %v5592 = vmul.f32 %v5080, %v5416
        %v5593 = vmul.f32 %v5084, %v5401
        %v5594 = vmul.f32 %v5088, %v5402
        %v5595 = vmul.f32 %v5092, %v5403
        %v5596 = vmul.f32 %v5096, %v5404
        %v5597 = vmul.f32 %v5100, %v5405
        %v5598 = vmul.f32 %v5104, %v5406
        %v5599 = vmul.f32 %v5108, %v5407
        %v5600 = vmul.f32 %v5112, %v5408
        %v5601 = vmul.f32 %v5116, %v5409
        %v5602 = vmul.f32 %v5120, %v5410
        %v5603 = vmul.f32 %v5124, %v5411
        %v5604 = vmul.f32 %v5128, %v5412
        %v5605 = vmul.f32 %v5132, %v5413
        %v5606 = vmul.f32 %v5136, %v5414
        %v5607 = vmul.f32 %v5140, %v5415
        %v5608 = vmul.f32 %v5144, %v5416
        %v5609 = vmul.f32 %v5148, %v5401
        %v5610 = vmul.f32 %v5152, %v5402
        %v5611 = vmul.f32 %v5156, %v5403
        %v5612 = vmul.f32 %v5160, %v5404
        %v5613 = vmul.f32 %v5164, %v5405
        %v5614 = vmul.f32 %v5168, %v5406
        %v5615 = vmul.f32 %v5172, %v5407
        %v5616 = vmul.f32 %v5176, %v5408
        %v5617 = vmul.f32 %v5180, %v5409
        %v5618 = vmul.f32 %v5184, %v5410
        %v5619 = vmul.f32 %v5188, %v5411
        %v5620 = vmul.f32 %v5192, %v5412
        %v5621 = vmul.f32 %v5196, %v5413
        %v5622 = vmul.f32 %v5200, %v5414
        %v5623 = vmul.f32 %v5204, %v5415
        %v5624 = vmul.f32 %v5208, %v5416
        %v5625 = vmul.f32 %v5212, %v5401
        %v5626 = vmul.f32 %v5216, %v5402
        %v5627 = vmul.f32 %v5220, %v5403
        %v5628 = vmul.f32 %v5224, %v5404
        %v5629 = vmul.f32 %v5228, %v5405
        %v5630 = vmul.f32 %v5232, %v5406
        %v5631 = vmul.f32 %v5236, %v5407
        %v5632 = vmul.f32 %v5240, %v5408
        %v5633 = vmul.f32 %v5244, %v5409
        %v5634 = vmul.f32 %v5248, %v5410
        %v5635 = vmul.f32 %v5252, %v5411
        %v5636 = vmul.f32 %v5256, %v5412
        %v5637 = vmul.f32 %v5260, %v5413
        %v5638 = vmul.f32 %v5264, %v5414
        %v5639 = vmul.f32 %v5268, %v5415
        %v5640 = vmul.f32 %v5272, %v5416
        %v5641 = vmul.f32 %v5276, %v5401
        %v5642 = vmul.f32 %v5280, %v5402
        %v5643 = vmul.f32 %v5284, %v5403
        %v5644 = vmul.f32 %v5288, %v5404
        %v5645 = vmul.f32 %v5292, %v5405
        %v5646 = vmul.f32 %v5296, %v5406
        %v5647 = vmul.f32 %v5300, %v5407
        %v5648 = vmul.f32 %v5304, %v5408
        %v5649 = vmul.f32 %v5308, %v5409
        %v5650 = vmul.f32 %v5312, %v5410
        %v5651 = vmul.f32 %v5316, %v5411
        %v5652 = vmul.f32 %v5320, %v5412
        %v5653 = vmul.f32 %v5324, %v5413
        %v5654 = vmul.f32 %v5328, %v5414
        %v5655 = vmul.f32 %v5332, %v5415
        %v5656 = vmul.f32 %v5336, %v5416
        %v5657 = vmul.f32 %v5340, %v5401
        %v5658 = vmul.f32 %v5344, %v5402
        %v5659 = vmul.f32 %v5348, %v5403
        %v5660 = vmul.f32 %v5352, %v5404
        %v5661 = vmul.f32 %v5356, %v5405
        %v5662 = vmul.f32 %v5360, %v5406
        %v5663 = vmul.f32 %v5364, %v5407
        %v5664 = vmul.f32 %v5368, %v5408
        %v5665 = vmul.f32 %v5372, %v5409
        %v5666 = vmul.f32 %v5376, %v5410
        %v5667 = vmul.f32 %v5380, %v5411
        %v5668 = vmul.f32 %v5384, %v5412
        %v5669 = vmul.f32 %v5388, %v5413
        %v5670 = vmul.f32 %v5392, %v5414
        %v5671 = vmul.f32 %v5396, %v5415
        %v5672 = vmul.f32 %v5400, %v5416
        %v5673 = vsel %vm2584, %v5417, 0.0
        %v5674 = vrot.slane %v5673, 4
        %v5675 = vadd.f32 %v5673, %v5674
        %v5676 = vrot.slane %v5675, 2
        %v5677 = vadd.f32 %v5675, %v5676
        %v5678 = vrot.slane %v5677, 1
        %v5679 = vadd.f32 %v5677, %v5678
        %v5680 = vsel %vm2584, %v5418, 0.0
        %v5681 = vrot.slane %v5680, 4
        %v5682 = vadd.f32 %v5680, %v5681
        %v5683 = vrot.slane %v5682, 2
        %v5684 = vadd.f32 %v5682, %v5683
        %v5685 = vrot.slane %v5684, 1
        %v5686 = vadd.f32 %v5684, %v5685
        %v5687 = vsel %vm2584, %v5419, 0.0
        %v5688 = vrot.slane %v5687, 4
        %v5689 = vadd.f32 %v5687, %v5688
        %v5690 = vrot.slane %v5689, 2
        %v5691 = vadd.f32 %v5689, %v5690
        %v5692 = vrot.slane %v5691, 1
        %v5693 = vadd.f32 %v5691, %v5692
        %v5694 = vsel %vm2584, %v5420, 0.0
        %v5695 = vrot.slane %v5694, 4
        %v5696 = vadd.f32 %v5694, %v5695
        %v5697 = vrot.slane %v5696, 2
        %v5698 = vadd.f32 %v5696, %v5697
        %v5699 = vrot.slane %v5698, 1
        %v5700 = vadd.f32 %v5698, %v5699
        %v5701 = vsel %vm2584, %v5421, 0.0
        %v5702 = vrot.slane %v5701, 4
        %v5703 = vadd.f32 %v5701, %v5702
        %v5704 = vrot.slane %v5703, 2
        %v5705 = vadd.f32 %v5703, %v5704
        %v5706 = vrot.slane %v5705, 1
        %v5707 = vadd.f32 %v5705, %v5706
        %v5708 = vsel %vm2584, %v5422, 0.0
        %v5709 = vrot.slane %v5708, 4
        %v5710 = vadd.f32 %v5708, %v5709
        %v5711 = vrot.slane %v5710, 2
        %v5712 = vadd.f32 %v5710, %v5711
        %v5713 = vrot.slane %v5712, 1
        %v5714 = vadd.f32 %v5712, %v5713
        %v5715 = vsel %vm2584, %v5423, 0.0
        %v5716 = vrot.slane %v5715, 4
        %v5717 = vadd.f32 %v5715, %v5716
        %v5718 = vrot.slane %v5717, 2
        %v5719 = vadd.f32 %v5717, %v5718
        %v5720 = vrot.slane %v5719, 1
        %v5721 = vadd.f32 %v5719, %v5720
        %v5722 = vsel %vm2584, %v5424, 0.0
        %v5723 = vrot.slane %v5722, 4
        %v5724 = vadd.f32 %v5722, %v5723
        %v5725 = vrot.slane %v5724, 2
        %v5726 = vadd.f32 %v5724, %v5725
        %v5727 = vrot.slane %v5726, 1
        %v5728 = vadd.f32 %v5726, %v5727
        %v5729 = vsel %vm2584, %v5425, 0.0
        %v5730 = vrot.slane %v5729, 4
        %v5731 = vadd.f32 %v5729, %v5730
        %v5732 = vrot.slane %v5731, 2
        %v5733 = vadd.f32 %v5731, %v5732
        %v5734 = vrot.slane %v5733, 1
        %v5735 = vadd.f32 %v5733, %v5734
        %v5736 = vsel %vm2584, %v5426, 0.0
        %v5737 = vrot.slane %v5736, 4
        %v5738 = vadd.f32 %v5736, %v5737
        %v5739 = vrot.slane %v5738, 2
        %v5740 = vadd.f32 %v5738, %v5739
        %v5741 = vrot.slane %v5740, 1
        %v5742 = vadd.f32 %v5740, %v5741
        %v5743 = vsel %vm2584, %v5427, 0.0
        %v5744 = vrot.slane %v5743, 4
        %v5745 = vadd.f32 %v5743, %v5744
        %v5746 = vrot.slane %v5745, 2
        %v5747 = vadd.f32 %v5745, %v5746
        %v5748 = vrot.slane %v5747, 1
        %v5749 = vadd.f32 %v5747, %v5748
        %v5750 = vsel %vm2584, %v5428, 0.0
        %v5751 = vrot.slane %v5750, 4
        %v5752 = vadd.f32 %v5750, %v5751
        %v5753 = vrot.slane %v5752, 2
        %v5754 = vadd.f32 %v5752, %v5753
        %v5755 = vrot.slane %v5754, 1
        %v5756 = vadd.f32 %v5754, %v5755
        %v5757 = vsel %vm2584, %v5429, 0.0
        %v5758 = vrot.slane %v5757, 4
        %v5759 = vadd.f32 %v5757, %v5758
        %v5760 = vrot.slane %v5759, 2
        %v5761 = vadd.f32 %v5759, %v5760
        %v5762 = vrot.slane %v5761, 1
        %v5763 = vadd.f32 %v5761, %v5762
        %v5764 = vsel %vm2584, %v5430, 0.0
        %v5765 = vrot.slane %v5764, 4
        %v5766 = vadd.f32 %v5764, %v5765
        %v5767 = vrot.slane %v5766, 2
        %v5768 = vadd.f32 %v5766, %v5767
        %v5769 = vrot.slane %v5768, 1
        %v5770 = vadd.f32 %v5768, %v5769
        %v5771 = vsel %vm2584, %v5431, 0.0
        %v5772 = vrot.slane %v5771, 4
        %v5773 = vadd.f32 %v5771, %v5772
        %v5774 = vrot.slane %v5773, 2
        %v5775 = vadd.f32 %v5773, %v5774
        %v5776 = vrot.slane %v5775, 1
        %v5777 = vadd.f32 %v5775, %v5776
        %v5778 = vsel %vm2584, %v5432, 0.0
        %v5779 = vrot.slane %v5778, 4
        %v5780 = vadd.f32 %v5778, %v5779
        %v5781 = vrot.slane %v5780, 2
        %v5782 = vadd.f32 %v5780, %v5781
        %v5783 = vrot.slane %v5782, 1
        %v5784 = vadd.f32 %v5782, %v5783
        %v5785 = vsel %vm2584, %v5433, 0.0
        %v5786 = vrot.slane %v5785, 4
        %v5787 = vadd.f32 %v5785, %v5786
        %v5788 = vrot.slane %v5787, 2
        %v5789 = vadd.f32 %v5787, %v5788
        %v5790 = vrot.slane %v5789, 1
        %v5791 = vadd.f32 %v5789, %v5790
        %v5792 = vsel %vm2584, %v5434, 0.0
        %v5793 = vrot.slane %v5792, 4
        %v5794 = vadd.f32 %v5792, %v5793
        %v5795 = vrot.slane %v5794, 2
        %v5796 = vadd.f32 %v5794, %v5795
        %v5797 = vrot.slane %v5796, 1
        %v5798 = vadd.f32 %v5796, %v5797
        %v5799 = vsel %vm2584, %v5435, 0.0
        %v5800 = vrot.slane %v5799, 4
        %v5801 = vadd.f32 %v5799, %v5800
        %v5802 = vrot.slane %v5801, 2
        %v5803 = vadd.f32 %v5801, %v5802
        %v5804 = vrot.slane %v5803, 1
        %v5805 = vadd.f32 %v5803, %v5804
        %v5806 = vsel %vm2584, %v5436, 0.0
        %v5807 = vrot.slane %v5806, 4
        %v5808 = vadd.f32 %v5806, %v5807
        %v5809 = vrot.slane %v5808, 2
        %v5810 = vadd.f32 %v5808, %v5809
        %v5811 = vrot.slane %v5810, 1
        %v5812 = vadd.f32 %v5810, %v5811
        %v5813 = vsel %vm2584, %v5437, 0.0
        %v5814 = vrot.slane %v5813, 4
        %v5815 = vadd.f32 %v5813, %v5814
        %v5816 = vrot.slane %v5815, 2
        %v5817 = vadd.f32 %v5815, %v5816
        %v5818 = vrot.slane %v5817, 1
        %v5819 = vadd.f32 %v5817, %v5818
        %v5820 = vsel %vm2584, %v5438, 0.0
        %v5821 = vrot.slane %v5820, 4
        %v5822 = vadd.f32 %v5820, %v5821
        %v5823 = vrot.slane %v5822, 2
        %v5824 = vadd.f32 %v5822, %v5823
        %v5825 = vrot.slane %v5824, 1
        %v5826 = vadd.f32 %v5824, %v5825
        %v5827 = vsel %vm2584, %v5439, 0.0
        %v5828 = vrot.slane %v5827, 4
        %v5829 = vadd.f32 %v5827, %v5828
        %v5830 = vrot.slane %v5829, 2
        %v5831 = vadd.f32 %v5829, %v5830
        %v5832 = vrot.slane %v5831, 1
        %v5833 = vadd.f32 %v5831, %v5832
        %v5834 = vsel %vm2584, %v5440, 0.0
        %v5835 = vrot.slane %v5834, 4
        %v5836 = vadd.f32 %v5834, %v5835
        %v5837 = vrot.slane %v5836, 2
        %v5838 = vadd.f32 %v5836, %v5837
        %v5839 = vrot.slane %v5838, 1
        %v5840 = vadd.f32 %v5838, %v5839
        %v5841 = vsel %vm2584, %v5441, 0.0
        %v5842 = vrot.slane %v5841, 4
        %v5843 = vadd.f32 %v5841, %v5842
        %v5844 = vrot.slane %v5843, 2
        %v5845 = vadd.f32 %v5843, %v5844
        %v5846 = vrot.slane %v5845, 1
        %v5847 = vadd.f32 %v5845, %v5846
        %v5848 = vsel %vm2584, %v5442, 0.0
        %v5849 = vrot.slane %v5848, 4
        %v5850 = vadd.f32 %v5848, %v5849
        %v5851 = vrot.slane %v5850, 2
        %v5852 = vadd.f32 %v5850, %v5851
        %v5853 = vrot.slane %v5852, 1
        %v5854 = vadd.f32 %v5852, %v5853
        %v5855 = vsel %vm2584, %v5443, 0.0
        %v5856 = vrot.slane %v5855, 4
        %v5857 = vadd.f32 %v5855, %v5856
        %v5858 = vrot.slane %v5857, 2
        %v5859 = vadd.f32 %v5857, %v5858
        %v5860 = vrot.slane %v5859, 1
        %v5861 = vadd.f32 %v5859, %v5860
        %v5862 = vsel %vm2584, %v5444, 0.0
        %v5863 = vrot.slane %v5862, 4
        %v5864 = vadd.f32 %v5862, %v5863
        %v5865 = vrot.slane %v5864, 2
        %v5866 = vadd.f32 %v5864, %v5865
        %v5867 = vrot.slane %v5866, 1
        %v5868 = vadd.f32 %v5866, %v5867
        %v5869 = vsel %vm2584, %v5445, 0.0
        %v5870 = vrot.slane %v5869, 4
        %v5871 = vadd.f32 %v5869, %v5870
        %v5872 = vrot.slane %v5871, 2
        %v5873 = vadd.f32 %v5871, %v5872
        %v5874 = vrot.slane %v5873, 1
        %v5875 = vadd.f32 %v5873, %v5874
        %v5876 = vsel %vm2584, %v5446, 0.0
        %v5877 = vrot.slane %v5876, 4
        %v5878 = vadd.f32 %v5876, %v5877
        %v5879 = vrot.slane %v5878, 2
        %v5880 = vadd.f32 %v5878, %v5879
        %v5881 = vrot.slane %v5880, 1
        %v5882 = vadd.f32 %v5880, %v5881
        %v5883 = vsel %vm2584, %v5447, 0.0
        %v5884 = vrot.slane %v5883, 4
        %v5885 = vadd.f32 %v5883, %v5884
        %v5886 = vrot.slane %v5885, 2
        %v5887 = vadd.f32 %v5885, %v5886
        %v5888 = vrot.slane %v5887, 1
        %v5889 = vadd.f32 %v5887, %v5888
        %v5890 = vsel %vm2584, %v5448, 0.0
        %v5891 = vrot.slane %v5890, 4
        %v5892 = vadd.f32 %v5890, %v5891
        %v5893 = vrot.slane %v5892, 2
        %v5894 = vadd.f32 %v5892, %v5893
        %v5895 = vrot.slane %v5894, 1
        %v5896 = vadd.f32 %v5894, %v5895
        %v5897 = vsel %vm2584, %v5449, 0.0
        %v5898 = vrot.slane %v5897, 4
        %v5899 = vadd.f32 %v5897, %v5898
        %v5900 = vrot.slane %v5899, 2
        %v5901 = vadd.f32 %v5899, %v5900
        %v5902 = vrot.slane %v5901, 1
        %v5903 = vadd.f32 %v5901, %v5902
        %v5904 = vsel %vm2584, %v5450, 0.0
        %v5905 = vrot.slane %v5904, 4
        %v5906 = vadd.f32 %v5904, %v5905
        %v5907 = vrot.slane %v5906, 2
        %v5908 = vadd.f32 %v5906, %v5907
        %v5909 = vrot.slane %v5908, 1
        %v5910 = vadd.f32 %v5908, %v5909
        %v5911 = vsel %vm2584, %v5451, 0.0
        %v5912 = vrot.slane %v5911, 4
        %v5913 = vadd.f32 %v5911, %v5912
        %v5914 = vrot.slane %v5913, 2
        %v5915 = vadd.f32 %v5913, %v5914
        %v5916 = vrot.slane %v5915, 1
        %v5917 = vadd.f32 %v5915, %v5916
        %v5918 = vsel %vm2584, %v5452, 0.0
        %v5919 = vrot.slane %v5918, 4
        %v5920 = vadd.f32 %v5918, %v5919
        %v5921 = vrot.slane %v5920, 2
        %v5922 = vadd.f32 %v5920, %v5921
        %v5923 = vrot.slane %v5922, 1
        %v5924 = vadd.f32 %v5922, %v5923
        %v5925 = vsel %vm2584, %v5453, 0.0
        %v5926 = vrot.slane %v5925, 4
        %v5927 = vadd.f32 %v5925, %v5926
        %v5928 = vrot.slane %v5927, 2
        %v5929 = vadd.f32 %v5927, %v5928
        %v5930 = vrot.slane %v5929, 1
        %v5931 = vadd.f32 %v5929, %v5930
        %v5932 = vsel %vm2584, %v5454, 0.0
        %v5933 = vrot.slane %v5932, 4
        %v5934 = vadd.f32 %v5932, %v5933
        %v5935 = vrot.slane %v5934, 2
        %v5936 = vadd.f32 %v5934, %v5935
        %v5937 = vrot.slane %v5936, 1
        %v5938 = vadd.f32 %v5936, %v5937
        %v5939 = vsel %vm2584, %v5455, 0.0
        %v5940 = vrot.slane %v5939, 4
        %v5941 = vadd.f32 %v5939, %v5940
        %v5942 = vrot.slane %v5941, 2
        %v5943 = vadd.f32 %v5941, %v5942
        %v5944 = vrot.slane %v5943, 1
        %v5945 = vadd.f32 %v5943, %v5944
        %v5946 = vsel %vm2584, %v5456, 0.0
        %v5947 = vrot.slane %v5946, 4
        %v5948 = vadd.f32 %v5946, %v5947
        %v5949 = vrot.slane %v5948, 2
        %v5950 = vadd.f32 %v5948, %v5949
        %v5951 = vrot.slane %v5950, 1
        %v5952 = vadd.f32 %v5950, %v5951
        %v5953 = vsel %vm2584, %v5457, 0.0
        %v5954 = vrot.slane %v5953, 4
        %v5955 = vadd.f32 %v5953, %v5954
        %v5956 = vrot.slane %v5955, 2
        %v5957 = vadd.f32 %v5955, %v5956
        %v5958 = vrot.slane %v5957, 1
        %v5959 = vadd.f32 %v5957, %v5958
        %v5960 = vsel %vm2584, %v5458, 0.0
        %v5961 = vrot.slane %v5960, 4
        %v5962 = vadd.f32 %v5960, %v5961
        %v5963 = vrot.slane %v5962, 2
        %v5964 = vadd.f32 %v5962, %v5963
        %v5965 = vrot.slane %v5964, 1
        %v5966 = vadd.f32 %v5964, %v5965
        %v5967 = vsel %vm2584, %v5459, 0.0
        %v5968 = vrot.slane %v5967, 4
        %v5969 = vadd.f32 %v5967, %v5968
        %v5970 = vrot.slane %v5969, 2
        %v5971 = vadd.f32 %v5969, %v5970
        %v5972 = vrot.slane %v5971, 1
        %v5973 = vadd.f32 %v5971, %v5972
        %v5974 = vsel %vm2584, %v5460, 0.0
        %v5975 = vrot.slane %v5974, 4
        %v5976 = vadd.f32 %v5974, %v5975
        %v5977 = vrot.slane %v5976, 2
        %v5978 = vadd.f32 %v5976, %v5977
        %v5979 = vrot.slane %v5978, 1
        %v5980 = vadd.f32 %v5978, %v5979
        %v5981 = vsel %vm2584, %v5461, 0.0
        %v5982 = vrot.slane %v5981, 4
        %v5983 = vadd.f32 %v5981, %v5982
        %v5984 = vrot.slane %v5983, 2
        %v5985 = vadd.f32 %v5983, %v5984
        %v5986 = vrot.slane %v5985, 1
        %v5987 = vadd.f32 %v5985, %v5986
        %v5988 = vsel %vm2584, %v5462, 0.0
        %v5989 = vrot.slane %v5988, 4
        %v5990 = vadd.f32 %v5988, %v5989
        %v5991 = vrot.slane %v5990, 2
        %v5992 = vadd.f32 %v5990, %v5991
        %v5993 = vrot.slane %v5992, 1
        %v5994 = vadd.f32 %v5992, %v5993
        %v5995 = vsel %vm2584, %v5463, 0.0
        %v5996 = vrot.slane %v5995, 4
        %v5997 = vadd.f32 %v5995, %v5996
        %v5998 = vrot.slane %v5997, 2
        %v5999 = vadd.f32 %v5997, %v5998
        %v6000 = vrot.slane %v5999, 1
        %v6001 = vadd.f32 %v5999, %v6000
        %v6002 = vsel %vm2584, %v5464, 0.0
        %v6003 = vrot.slane %v6002, 4
        %v6004 = vadd.f32 %v6002, %v6003
        %v6005 = vrot.slane %v6004, 2
        %v6006 = vadd.f32 %v6004, %v6005
        %v6007 = vrot.slane %v6006, 1
        %v6008 = vadd.f32 %v6006, %v6007
        %v6009 = vsel %vm2584, %v5465, 0.0
        %v6010 = vrot.slane %v6009, 4
        %v6011 = vadd.f32 %v6009, %v6010
        %v6012 = vrot.slane %v6011, 2
        %v6013 = vadd.f32 %v6011, %v6012
        %v6014 = vrot.slane %v6013, 1
        %v6015 = vadd.f32 %v6013, %v6014
        %v6016 = vsel %vm2584, %v5466, 0.0
        %v6017 = vrot.slane %v6016, 4
        %v6018 = vadd.f32 %v6016, %v6017
        %v6019 = vrot.slane %v6018, 2
        %v6020 = vadd.f32 %v6018, %v6019
        %v6021 = vrot.slane %v6020, 1
        %v6022 = vadd.f32 %v6020, %v6021
        %v6023 = vsel %vm2584, %v5467, 0.0
        %v6024 = vrot.slane %v6023, 4
        %v6025 = vadd.f32 %v6023, %v6024
        %v6026 = vrot.slane %v6025, 2
        %v6027 = vadd.f32 %v6025, %v6026
        %v6028 = vrot.slane %v6027, 1
        %v6029 = vadd.f32 %v6027, %v6028
        %v6030 = vsel %vm2584, %v5468, 0.0
        %v6031 = vrot.slane %v6030, 4
        %v6032 = vadd.f32 %v6030, %v6031
        %v6033 = vrot.slane %v6032, 2
        %v6034 = vadd.f32 %v6032, %v6033
        %v6035 = vrot.slane %v6034, 1
        %v6036 = vadd.f32 %v6034, %v6035
        %v6037 = vsel %vm2584, %v5469, 0.0
        %v6038 = vrot.slane %v6037, 4
        %v6039 = vadd.f32 %v6037, %v6038
        %v6040 = vrot.slane %v6039, 2
        %v6041 = vadd.f32 %v6039, %v6040
        %v6042 = vrot.slane %v6041, 1
        %v6043 = vadd.f32 %v6041, %v6042
        %v6044 = vsel %vm2584, %v5470, 0.0
        %v6045 = vrot.slane %v6044, 4
        %v6046 = vadd.f32 %v6044, %v6045
        %v6047 = vrot.slane %v6046, 2
        %v6048 = vadd.f32 %v6046, %v6047
        %v6049 = vrot.slane %v6048, 1
        %v6050 = vadd.f32 %v6048, %v6049
        %v6051 = vsel %vm2584, %v5471, 0.0
        %v6052 = vrot.slane %v6051, 4
        %v6053 = vadd.f32 %v6051, %v6052
        %v6054 = vrot.slane %v6053, 2
        %v6055 = vadd.f32 %v6053, %v6054
        %v6056 = vrot.slane %v6055, 1
        %v6057 = vadd.f32 %v6055, %v6056
        %v6058 = vsel %vm2584, %v5472, 0.0
        %v6059 = vrot.slane %v6058, 4
        %v6060 = vadd.f32 %v6058, %v6059
        %v6061 = vrot.slane %v6060, 2
        %v6062 = vadd.f32 %v6060, %v6061
        %v6063 = vrot.slane %v6062, 1
        %v6064 = vadd.f32 %v6062, %v6063
        %v6065 = vsel %vm2584, %v5473, 0.0
        %v6066 = vrot.slane %v6065, 4
        %v6067 = vadd.f32 %v6065, %v6066
        %v6068 = vrot.slane %v6067, 2
        %v6069 = vadd.f32 %v6067, %v6068
        %v6070 = vrot.slane %v6069, 1
        %v6071 = vadd.f32 %v6069, %v6070
        %v6072 = vsel %vm2584, %v5474, 0.0
        %v6073 = vrot.slane %v6072, 4
        %v6074 = vadd.f32 %v6072, %v6073
        %v6075 = vrot.slane %v6074, 2
        %v6076 = vadd.f32 %v6074, %v6075
        %v6077 = vrot.slane %v6076, 1
        %v6078 = vadd.f32 %v6076, %v6077
        %v6079 = vsel %vm2584, %v5475, 0.0
        %v6080 = vrot.slane %v6079, 4
        %v6081 = vadd.f32 %v6079, %v6080
        %v6082 = vrot.slane %v6081, 2
        %v6083 = vadd.f32 %v6081, %v6082
        %v6084 = vrot.slane %v6083, 1
        %v6085 = vadd.f32 %v6083, %v6084
        %v6086 = vsel %vm2584, %v5476, 0.0
        %v6087 = vrot.slane %v6086, 4
        %v6088 = vadd.f32 %v6086, %v6087
        %v6089 = vrot.slane %v6088, 2
        %v6090 = vadd.f32 %v6088, %v6089
        %v6091 = vrot.slane %v6090, 1
        %v6092 = vadd.f32 %v6090, %v6091
        %v6093 = vsel %vm2584, %v5477, 0.0
        %v6094 = vrot.slane %v6093, 4
        %v6095 = vadd.f32 %v6093, %v6094
        %v6096 = vrot.slane %v6095, 2
        %v6097 = vadd.f32 %v6095, %v6096
        %v6098 = vrot.slane %v6097, 1
        %v6099 = vadd.f32 %v6097, %v6098
        %v6100 = vsel %vm2584, %v5478, 0.0
        %v6101 = vrot.slane %v6100, 4
        %v6102 = vadd.f32 %v6100, %v6101
        %v6103 = vrot.slane %v6102, 2
        %v6104 = vadd.f32 %v6102, %v6103
        %v6105 = vrot.slane %v6104, 1
        %v6106 = vadd.f32 %v6104, %v6105
        %v6107 = vsel %vm2584, %v5479, 0.0
        %v6108 = vrot.slane %v6107, 4
        %v6109 = vadd.f32 %v6107, %v6108
        %v6110 = vrot.slane %v6109, 2
        %v6111 = vadd.f32 %v6109, %v6110
        %v6112 = vrot.slane %v6111, 1
        %v6113 = vadd.f32 %v6111, %v6112
        %v6114 = vsel %vm2584, %v5480, 0.0
        %v6115 = vrot.slane %v6114, 4
        %v6116 = vadd.f32 %v6114, %v6115
        %v6117 = vrot.slane %v6116, 2
        %v6118 = vadd.f32 %v6116, %v6117
        %v6119 = vrot.slane %v6118, 1
        %v6120 = vadd.f32 %v6118, %v6119
        %v6121 = vsel %vm2584, %v5481, 0.0
        %v6122 = vrot.slane %v6121, 4
        %v6123 = vadd.f32 %v6121, %v6122
        %v6124 = vrot.slane %v6123, 2
        %v6125 = vadd.f32 %v6123, %v6124
        %v6126 = vrot.slane %v6125, 1
        %v6127 = vadd.f32 %v6125, %v6126
        %v6128 = vsel %vm2584, %v5482, 0.0
        %v6129 = vrot.slane %v6128, 4
        %v6130 = vadd.f32 %v6128, %v6129
        %v6131 = vrot.slane %v6130, 2
        %v6132 = vadd.f32 %v6130, %v6131
        %v6133 = vrot.slane %v6132, 1
        %v6134 = vadd.f32 %v6132, %v6133
        %v6135 = vsel %vm2584, %v5483, 0.0
        %v6136 = vrot.slane %v6135, 4
        %v6137 = vadd.f32 %v6135, %v6136
        %v6138 = vrot.slane %v6137, 2
        %v6139 = vadd.f32 %v6137, %v6138
        %v6140 = vrot.slane %v6139, 1
        %v6141 = vadd.f32 %v6139, %v6140
        %v6142 = vsel %vm2584, %v5484, 0.0
        %v6143 = vrot.slane %v6142, 4
        %v6144 = vadd.f32 %v6142, %v6143
        %v6145 = vrot.slane %v6144, 2
        %v6146 = vadd.f32 %v6144, %v6145
        %v6147 = vrot.slane %v6146, 1
        %v6148 = vadd.f32 %v6146, %v6147
        %v6149 = vsel %vm2584, %v5485, 0.0
        %v6150 = vrot.slane %v6149, 4
        %v6151 = vadd.f32 %v6149, %v6150
        %v6152 = vrot.slane %v6151, 2
        %v6153 = vadd.f32 %v6151, %v6152
        %v6154 = vrot.slane %v6153, 1
        %v6155 = vadd.f32 %v6153, %v6154
        %v6156 = vsel %vm2584, %v5486, 0.0
        %v6157 = vrot.slane %v6156, 4
        %v6158 = vadd.f32 %v6156, %v6157
        %v6159 = vrot.slane %v6158, 2
        %v6160 = vadd.f32 %v6158, %v6159
        %v6161 = vrot.slane %v6160, 1
        %v6162 = vadd.f32 %v6160, %v6161
        %v6163 = vsel %vm2584, %v5487, 0.0
        %v6164 = vrot.slane %v6163, 4
        %v6165 = vadd.f32 %v6163, %v6164
        %v6166 = vrot.slane %v6165, 2
        %v6167 = vadd.f32 %v6165, %v6166
        %v6168 = vrot.slane %v6167, 1
        %v6169 = vadd.f32 %v6167, %v6168
        %v6170 = vsel %vm2584, %v5488, 0.0
        %v6171 = vrot.slane %v6170, 4
        %v6172 = vadd.f32 %v6170, %v6171
        %v6173 = vrot.slane %v6172, 2
        %v6174 = vadd.f32 %v6172, %v6173
        %v6175 = vrot.slane %v6174, 1
        %v6176 = vadd.f32 %v6174, %v6175
        %v6177 = vsel %vm2584, %v5489, 0.0
        %v6178 = vrot.slane %v6177, 4
        %v6179 = vadd.f32 %v6177, %v6178
        %v6180 = vrot.slane %v6179, 2
        %v6181 = vadd.f32 %v6179, %v6180
        %v6182 = vrot.slane %v6181, 1
        %v6183 = vadd.f32 %v6181, %v6182
        %v6184 = vsel %vm2584, %v5490, 0.0
        %v6185 = vrot.slane %v6184, 4
        %v6186 = vadd.f32 %v6184, %v6185
        %v6187 = vrot.slane %v6186, 2
        %v6188 = vadd.f32 %v6186, %v6187
        %v6189 = vrot.slane %v6188, 1
        %v6190 = vadd.f32 %v6188, %v6189
        %v6191 = vsel %vm2584, %v5491, 0.0
        %v6192 = vrot.slane %v6191, 4
        %v6193 = vadd.f32 %v6191, %v6192
        %v6194 = vrot.slane %v6193, 2
        %v6195 = vadd.f32 %v6193, %v6194
        %v6196 = vrot.slane %v6195, 1
        %v6197 = vadd.f32 %v6195, %v6196
        %v6198 = vsel %vm2584, %v5492, 0.0
        %v6199 = vrot.slane %v6198, 4
        %v6200 = vadd.f32 %v6198, %v6199
        %v6201 = vrot.slane %v6200, 2
        %v6202 = vadd.f32 %v6200, %v6201
        %v6203 = vrot.slane %v6202, 1
        %v6204 = vadd.f32 %v6202, %v6203
        %v6205 = vsel %vm2584, %v5493, 0.0
        %v6206 = vrot.slane %v6205, 4
        %v6207 = vadd.f32 %v6205, %v6206
        %v6208 = vrot.slane %v6207, 2
        %v6209 = vadd.f32 %v6207, %v6208
        %v6210 = vrot.slane %v6209, 1
        %v6211 = vadd.f32 %v6209, %v6210
        %v6212 = vsel %vm2584, %v5494, 0.0
        %v6213 = vrot.slane %v6212, 4
        %v6214 = vadd.f32 %v6212, %v6213
        %v6215 = vrot.slane %v6214, 2
        %v6216 = vadd.f32 %v6214, %v6215
        %v6217 = vrot.slane %v6216, 1
        %v6218 = vadd.f32 %v6216, %v6217
        %v6219 = vsel %vm2584, %v5495, 0.0
        %v6220 = vrot.slane %v6219, 4
        %v6221 = vadd.f32 %v6219, %v6220
        %v6222 = vrot.slane %v6221, 2
        %v6223 = vadd.f32 %v6221, %v6222
        %v6224 = vrot.slane %v6223, 1
        %v6225 = vadd.f32 %v6223, %v6224
        %v6226 = vsel %vm2584, %v5496, 0.0
        %v6227 = vrot.slane %v6226, 4
        %v6228 = vadd.f32 %v6226, %v6227
        %v6229 = vrot.slane %v6228, 2
        %v6230 = vadd.f32 %v6228, %v6229
        %v6231 = vrot.slane %v6230, 1
        %v6232 = vadd.f32 %v6230, %v6231
        %v6233 = vsel %vm2584, %v5497, 0.0
        %v6234 = vrot.slane %v6233, 4
        %v6235 = vadd.f32 %v6233, %v6234
        %v6236 = vrot.slane %v6235, 2
        %v6237 = vadd.f32 %v6235, %v6236
        %v6238 = vrot.slane %v6237, 1
        %v6239 = vadd.f32 %v6237, %v6238
        %v6240 = vsel %vm2584, %v5498, 0.0
        %v6241 = vrot.slane %v6240, 4
        %v6242 = vadd.f32 %v6240, %v6241
        %v6243 = vrot.slane %v6242, 2
        %v6244 = vadd.f32 %v6242, %v6243
        %v6245 = vrot.slane %v6244, 1
        %v6246 = vadd.f32 %v6244, %v6245
        %v6247 = vsel %vm2584, %v5499, 0.0
        %v6248 = vrot.slane %v6247, 4
        %v6249 = vadd.f32 %v6247, %v6248
        %v6250 = vrot.slane %v6249, 2
        %v6251 = vadd.f32 %v6249, %v6250
        %v6252 = vrot.slane %v6251, 1
        %v6253 = vadd.f32 %v6251, %v6252
        %v6254 = vsel %vm2584, %v5500, 0.0
        %v6255 = vrot.slane %v6254, 4
        %v6256 = vadd.f32 %v6254, %v6255
        %v6257 = vrot.slane %v6256, 2
        %v6258 = vadd.f32 %v6256, %v6257
        %v6259 = vrot.slane %v6258, 1
        %v6260 = vadd.f32 %v6258, %v6259
        %v6261 = vsel %vm2584, %v5501, 0.0
        %v6262 = vrot.slane %v6261, 4
        %v6263 = vadd.f32 %v6261, %v6262
        %v6264 = vrot.slane %v6263, 2
        %v6265 = vadd.f32 %v6263, %v6264
        %v6266 = vrot.slane %v6265, 1
        %v6267 = vadd.f32 %v6265, %v6266
        %v6268 = vsel %vm2584, %v5502, 0.0
        %v6269 = vrot.slane %v6268, 4
        %v6270 = vadd.f32 %v6268, %v6269
        %v6271 = vrot.slane %v6270, 2
        %v6272 = vadd.f32 %v6270, %v6271
        %v6273 = vrot.slane %v6272, 1
        %v6274 = vadd.f32 %v6272, %v6273
        %v6275 = vsel %vm2584, %v5503, 0.0
        %v6276 = vrot.slane %v6275, 4
        %v6277 = vadd.f32 %v6275, %v6276
        %v6278 = vrot.slane %v6277, 2
        %v6279 = vadd.f32 %v6277, %v6278
        %v6280 = vrot.slane %v6279, 1
        %v6281 = vadd.f32 %v6279, %v6280
        %v6282 = vsel %vm2584, %v5504, 0.0
        %v6283 = vrot.slane %v6282, 4
        %v6284 = vadd.f32 %v6282, %v6283
        %v6285 = vrot.slane %v6284, 2
        %v6286 = vadd.f32 %v6284, %v6285
        %v6287 = vrot.slane %v6286, 1
        %v6288 = vadd.f32 %v6286, %v6287
        %v6289 = vsel %vm2584, %v5505, 0.0
        %v6290 = vrot.slane %v6289, 4
        %v6291 = vadd.f32 %v6289, %v6290
        %v6292 = vrot.slane %v6291, 2
        %v6293 = vadd.f32 %v6291, %v6292
        %v6294 = vrot.slane %v6293, 1
        %v6295 = vadd.f32 %v6293, %v6294
        %v6296 = vsel %vm2584, %v5506, 0.0
        %v6297 = vrot.slane %v6296, 4
        %v6298 = vadd.f32 %v6296, %v6297
        %v6299 = vrot.slane %v6298, 2
        %v6300 = vadd.f32 %v6298, %v6299
        %v6301 = vrot.slane %v6300, 1
        %v6302 = vadd.f32 %v6300, %v6301
        %v6303 = vsel %vm2584, %v5507, 0.0
        %v6304 = vrot.slane %v6303, 4
        %v6305 = vadd.f32 %v6303, %v6304
        %v6306 = vrot.slane %v6305, 2
        %v6307 = vadd.f32 %v6305, %v6306
        %v6308 = vrot.slane %v6307, 1
        %v6309 = vadd.f32 %v6307, %v6308
        %v6310 = vsel %vm2584, %v5508, 0.0
        %v6311 = vrot.slane %v6310, 4
        %v6312 = vadd.f32 %v6310, %v6311
        %v6313 = vrot.slane %v6312, 2
        %v6314 = vadd.f32 %v6312, %v6313
        %v6315 = vrot.slane %v6314, 1
        %v6316 = vadd.f32 %v6314, %v6315
        %v6317 = vsel %vm2584, %v5509, 0.0
        %v6318 = vrot.slane %v6317, 4
        %v6319 = vadd.f32 %v6317, %v6318
        %v6320 = vrot.slane %v6319, 2
        %v6321 = vadd.f32 %v6319, %v6320
        %v6322 = vrot.slane %v6321, 1
        %v6323 = vadd.f32 %v6321, %v6322
        %v6324 = vsel %vm2584, %v5510, 0.0
        %v6325 = vrot.slane %v6324, 4
        %v6326 = vadd.f32 %v6324, %v6325
        %v6327 = vrot.slane %v6326, 2
        %v6328 = vadd.f32 %v6326, %v6327
        %v6329 = vrot.slane %v6328, 1
        %v6330 = vadd.f32 %v6328, %v6329
        %v6331 = vsel %vm2584, %v5511, 0.0
        %v6332 = vrot.slane %v6331, 4
        %v6333 = vadd.f32 %v6331, %v6332
        %v6334 = vrot.slane %v6333, 2
        %v6335 = vadd.f32 %v6333, %v6334
        %v6336 = vrot.slane %v6335, 1
        %v6337 = vadd.f32 %v6335, %v6336
        %v6338 = vsel %vm2584, %v5512, 0.0
        %v6339 = vrot.slane %v6338, 4
        %v6340 = vadd.f32 %v6338, %v6339
        %v6341 = vrot.slane %v6340, 2
        %v6342 = vadd.f32 %v6340, %v6341
        %v6343 = vrot.slane %v6342, 1
        %v6344 = vadd.f32 %v6342, %v6343
        %v6345 = vsel %vm2584, %v5513, 0.0
        %v6346 = vrot.slane %v6345, 4
        %v6347 = vadd.f32 %v6345, %v6346
        %v6348 = vrot.slane %v6347, 2
        %v6349 = vadd.f32 %v6347, %v6348
        %v6350 = vrot.slane %v6349, 1
        %v6351 = vadd.f32 %v6349, %v6350
        %v6352 = vsel %vm2584, %v5514, 0.0
        %v6353 = vrot.slane %v6352, 4
        %v6354 = vadd.f32 %v6352, %v6353
        %v6355 = vrot.slane %v6354, 2
        %v6356 = vadd.f32 %v6354, %v6355
        %v6357 = vrot.slane %v6356, 1
        %v6358 = vadd.f32 %v6356, %v6357
        %v6359 = vsel %vm2584, %v5515, 0.0
        %v6360 = vrot.slane %v6359, 4
        %v6361 = vadd.f32 %v6359, %v6360
        %v6362 = vrot.slane %v6361, 2
        %v6363 = vadd.f32 %v6361, %v6362
        %v6364 = vrot.slane %v6363, 1
        %v6365 = vadd.f32 %v6363, %v6364
        %v6366 = vsel %vm2584, %v5516, 0.0
        %v6367 = vrot.slane %v6366, 4
        %v6368 = vadd.f32 %v6366, %v6367
        %v6369 = vrot.slane %v6368, 2
        %v6370 = vadd.f32 %v6368, %v6369
        %v6371 = vrot.slane %v6370, 1
        %v6372 = vadd.f32 %v6370, %v6371
        %v6373 = vsel %vm2584, %v5517, 0.0
        %v6374 = vrot.slane %v6373, 4
        %v6375 = vadd.f32 %v6373, %v6374
        %v6376 = vrot.slane %v6375, 2
        %v6377 = vadd.f32 %v6375, %v6376
        %v6378 = vrot.slane %v6377, 1
        %v6379 = vadd.f32 %v6377, %v6378
        %v6380 = vsel %vm2584, %v5518, 0.0
        %v6381 = vrot.slane %v6380, 4
        %v6382 = vadd.f32 %v6380, %v6381
        %v6383 = vrot.slane %v6382, 2
        %v6384 = vadd.f32 %v6382, %v6383
        %v6385 = vrot.slane %v6384, 1
        %v6386 = vadd.f32 %v6384, %v6385
        %v6387 = vsel %vm2584, %v5519, 0.0
        %v6388 = vrot.slane %v6387, 4
        %v6389 = vadd.f32 %v6387, %v6388
        %v6390 = vrot.slane %v6389, 2
        %v6391 = vadd.f32 %v6389, %v6390
        %v6392 = vrot.slane %v6391, 1
        %v6393 = vadd.f32 %v6391, %v6392
        %v6394 = vsel %vm2584, %v5520, 0.0
        %v6395 = vrot.slane %v6394, 4
        %v6396 = vadd.f32 %v6394, %v6395
        %v6397 = vrot.slane %v6396, 2
        %v6398 = vadd.f32 %v6396, %v6397
        %v6399 = vrot.slane %v6398, 1
        %v6400 = vadd.f32 %v6398, %v6399
        %v6401 = vsel %vm2584, %v5521, 0.0
        %v6402 = vrot.slane %v6401, 4
        %v6403 = vadd.f32 %v6401, %v6402
        %v6404 = vrot.slane %v6403, 2
        %v6405 = vadd.f32 %v6403, %v6404
        %v6406 = vrot.slane %v6405, 1
        %v6407 = vadd.f32 %v6405, %v6406
        %v6408 = vsel %vm2584, %v5522, 0.0
        %v6409 = vrot.slane %v6408, 4
        %v6410 = vadd.f32 %v6408, %v6409
        %v6411 = vrot.slane %v6410, 2
        %v6412 = vadd.f32 %v6410, %v6411
        %v6413 = vrot.slane %v6412, 1
        %v6414 = vadd.f32 %v6412, %v6413
        %v6415 = vsel %vm2584, %v5523, 0.0
        %v6416 = vrot.slane %v6415, 4
        %v6417 = vadd.f32 %v6415, %v6416
        %v6418 = vrot.slane %v6417, 2
        %v6419 = vadd.f32 %v6417, %v6418
        %v6420 = vrot.slane %v6419, 1
        %v6421 = vadd.f32 %v6419, %v6420
        %v6422 = vsel %vm2584, %v5524, 0.0
        %v6423 = vrot.slane %v6422, 4
        %v6424 = vadd.f32 %v6422, %v6423
        %v6425 = vrot.slane %v6424, 2
        %v6426 = vadd.f32 %v6424, %v6425
        %v6427 = vrot.slane %v6426, 1
        %v6428 = vadd.f32 %v6426, %v6427
        %v6429 = vsel %vm2584, %v5525, 0.0
        %v6430 = vrot.slane %v6429, 4
        %v6431 = vadd.f32 %v6429, %v6430
        %v6432 = vrot.slane %v6431, 2
        %v6433 = vadd.f32 %v6431, %v6432
        %v6434 = vrot.slane %v6433, 1
        %v6435 = vadd.f32 %v6433, %v6434
        %v6436 = vsel %vm2584, %v5526, 0.0
        %v6437 = vrot.slane %v6436, 4
        %v6438 = vadd.f32 %v6436, %v6437
        %v6439 = vrot.slane %v6438, 2
        %v6440 = vadd.f32 %v6438, %v6439
        %v6441 = vrot.slane %v6440, 1
        %v6442 = vadd.f32 %v6440, %v6441
        %v6443 = vsel %vm2584, %v5527, 0.0
        %v6444 = vrot.slane %v6443, 4
        %v6445 = vadd.f32 %v6443, %v6444
        %v6446 = vrot.slane %v6445, 2
        %v6447 = vadd.f32 %v6445, %v6446
        %v6448 = vrot.slane %v6447, 1
        %v6449 = vadd.f32 %v6447, %v6448
        %v6450 = vsel %vm2584, %v5528, 0.0
        %v6451 = vrot.slane %v6450, 4
        %v6452 = vadd.f32 %v6450, %v6451
        %v6453 = vrot.slane %v6452, 2
        %v6454 = vadd.f32 %v6452, %v6453
        %v6455 = vrot.slane %v6454, 1
        %v6456 = vadd.f32 %v6454, %v6455
        %v6457 = vsel %vm2584, %v5529, 0.0
        %v6458 = vrot.slane %v6457, 4
        %v6459 = vadd.f32 %v6457, %v6458
        %v6460 = vrot.slane %v6459, 2
        %v6461 = vadd.f32 %v6459, %v6460
        %v6462 = vrot.slane %v6461, 1
        %v6463 = vadd.f32 %v6461, %v6462
        %v6464 = vsel %vm2584, %v5530, 0.0
        %v6465 = vrot.slane %v6464, 4
        %v6466 = vadd.f32 %v6464, %v6465
        %v6467 = vrot.slane %v6466, 2
        %v6468 = vadd.f32 %v6466, %v6467
        %v6469 = vrot.slane %v6468, 1
        %v6470 = vadd.f32 %v6468, %v6469
        %v6471 = vsel %vm2584, %v5531, 0.0
        %v6472 = vrot.slane %v6471, 4
        %v6473 = vadd.f32 %v6471, %v6472
        %v6474 = vrot.slane %v6473, 2
        %v6475 = vadd.f32 %v6473, %v6474
        %v6476 = vrot.slane %v6475, 1
        %v6477 = vadd.f32 %v6475, %v6476
        %v6478 = vsel %vm2584, %v5532, 0.0
        %v6479 = vrot.slane %v6478, 4
        %v6480 = vadd.f32 %v6478, %v6479
        %v6481 = vrot.slane %v6480, 2
        %v6482 = vadd.f32 %v6480, %v6481
        %v6483 = vrot.slane %v6482, 1
        %v6484 = vadd.f32 %v6482, %v6483
        %v6485 = vsel %vm2584, %v5533, 0.0
        %v6486 = vrot.slane %v6485, 4
        %v6487 = vadd.f32 %v6485, %v6486
        %v6488 = vrot.slane %v6487, 2
        %v6489 = vadd.f32 %v6487, %v6488
        %v6490 = vrot.slane %v6489, 1
        %v6491 = vadd.f32 %v6489, %v6490
        %v6492 = vsel %vm2584, %v5534, 0.0
        %v6493 = vrot.slane %v6492, 4
        %v6494 = vadd.f32 %v6492, %v6493
        %v6495 = vrot.slane %v6494, 2
        %v6496 = vadd.f32 %v6494, %v6495
        %v6497 = vrot.slane %v6496, 1
        %v6498 = vadd.f32 %v6496, %v6497
        %v6499 = vsel %vm2584, %v5535, 0.0
        %v6500 = vrot.slane %v6499, 4
        %v6501 = vadd.f32 %v6499, %v6500
        %v6502 = vrot.slane %v6501, 2
        %v6503 = vadd.f32 %v6501, %v6502
        %v6504 = vrot.slane %v6503, 1
        %v6505 = vadd.f32 %v6503, %v6504
        %v6506 = vsel %vm2584, %v5536, 0.0
        %v6507 = vrot.slane %v6506, 4
        %v6508 = vadd.f32 %v6506, %v6507
        %v6509 = vrot.slane %v6508, 2
        %v6510 = vadd.f32 %v6508, %v6509
        %v6511 = vrot.slane %v6510, 1
        %v6512 = vadd.f32 %v6510, %v6511
        %v6513 = vsel %vm2584, %v5537, 0.0
        %v6514 = vrot.slane %v6513, 4
        %v6515 = vadd.f32 %v6513, %v6514
        %v6516 = vrot.slane %v6515, 2
        %v6517 = vadd.f32 %v6515, %v6516
        %v6518 = vrot.slane %v6517, 1
        %v6519 = vadd.f32 %v6517, %v6518
        %v6520 = vsel %vm2584, %v5538, 0.0
        %v6521 = vrot.slane %v6520, 4
        %v6522 = vadd.f32 %v6520, %v6521
        %v6523 = vrot.slane %v6522, 2
        %v6524 = vadd.f32 %v6522, %v6523
        %v6525 = vrot.slane %v6524, 1
        %v6526 = vadd.f32 %v6524, %v6525
        %v6527 = vsel %vm2584, %v5539, 0.0
        %v6528 = vrot.slane %v6527, 4
        %v6529 = vadd.f32 %v6527, %v6528
        %v6530 = vrot.slane %v6529, 2
        %v6531 = vadd.f32 %v6529, %v6530
        %v6532 = vrot.slane %v6531, 1
        %v6533 = vadd.f32 %v6531, %v6532
        %v6534 = vsel %vm2584, %v5540, 0.0
        %v6535 = vrot.slane %v6534, 4
        %v6536 = vadd.f32 %v6534, %v6535
        %v6537 = vrot.slane %v6536, 2
        %v6538 = vadd.f32 %v6536, %v6537
        %v6539 = vrot.slane %v6538, 1
        %v6540 = vadd.f32 %v6538, %v6539
        %v6541 = vsel %vm2584, %v5541, 0.0
        %v6542 = vrot.slane %v6541, 4
        %v6543 = vadd.f32 %v6541, %v6542
        %v6544 = vrot.slane %v6543, 2
        %v6545 = vadd.f32 %v6543, %v6544
        %v6546 = vrot.slane %v6545, 1
        %v6547 = vadd.f32 %v6545, %v6546
        %v6548 = vsel %vm2584, %v5542, 0.0
        %v6549 = vrot.slane %v6548, 4
        %v6550 = vadd.f32 %v6548, %v6549
        %v6551 = vrot.slane %v6550, 2
        %v6552 = vadd.f32 %v6550, %v6551
        %v6553 = vrot.slane %v6552, 1
        %v6554 = vadd.f32 %v6552, %v6553
        %v6555 = vsel %vm2584, %v5543, 0.0
        %v6556 = vrot.slane %v6555, 4
        %v6557 = vadd.f32 %v6555, %v6556
        %v6558 = vrot.slane %v6557, 2
        %v6559 = vadd.f32 %v6557, %v6558
        %v6560 = vrot.slane %v6559, 1
        %v6561 = vadd.f32 %v6559, %v6560
        %v6562 = vsel %vm2584, %v5544, 0.0
        %v6563 = vrot.slane %v6562, 4
        %v6564 = vadd.f32 %v6562, %v6563
        %v6565 = vrot.slane %v6564, 2
        %v6566 = vadd.f32 %v6564, %v6565
        %v6567 = vrot.slane %v6566, 1
        %v6568 = vadd.f32 %v6566, %v6567
        %v6569 = vsel %vm2584, %v5545, 0.0
        %v6570 = vrot.slane %v6569, 4
        %v6571 = vadd.f32 %v6569, %v6570
        %v6572 = vrot.slane %v6571, 2
        %v6573 = vadd.f32 %v6571, %v6572
        %v6574 = vrot.slane %v6573, 1
        %v6575 = vadd.f32 %v6573, %v6574
        %v6576 = vsel %vm2584, %v5546, 0.0
        %v6577 = vrot.slane %v6576, 4
        %v6578 = vadd.f32 %v6576, %v6577
        %v6579 = vrot.slane %v6578, 2
        %v6580 = vadd.f32 %v6578, %v6579
        %v6581 = vrot.slane %v6580, 1
        %v6582 = vadd.f32 %v6580, %v6581
        %v6583 = vsel %vm2584, %v5547, 0.0
        %v6584 = vrot.slane %v6583, 4
        %v6585 = vadd.f32 %v6583, %v6584
        %v6586 = vrot.slane %v6585, 2
        %v6587 = vadd.f32 %v6585, %v6586
        %v6588 = vrot.slane %v6587, 1
        %v6589 = vadd.f32 %v6587, %v6588
        %v6590 = vsel %vm2584, %v5548, 0.0
        %v6591 = vrot.slane %v6590, 4
        %v6592 = vadd.f32 %v6590, %v6591
        %v6593 = vrot.slane %v6592, 2
        %v6594 = vadd.f32 %v6592, %v6593
        %v6595 = vrot.slane %v6594, 1
        %v6596 = vadd.f32 %v6594, %v6595
        %v6597 = vsel %vm2584, %v5549, 0.0
        %v6598 = vrot.slane %v6597, 4
        %v6599 = vadd.f32 %v6597, %v6598
        %v6600 = vrot.slane %v6599, 2
        %v6601 = vadd.f32 %v6599, %v6600
        %v6602 = vrot.slane %v6601, 1
        %v6603 = vadd.f32 %v6601, %v6602
        %v6604 = vsel %vm2584, %v5550, 0.0
        %v6605 = vrot.slane %v6604, 4
        %v6606 = vadd.f32 %v6604, %v6605
        %v6607 = vrot.slane %v6606, 2
        %v6608 = vadd.f32 %v6606, %v6607
        %v6609 = vrot.slane %v6608, 1
        %v6610 = vadd.f32 %v6608, %v6609
        %v6611 = vsel %vm2584, %v5551, 0.0
        %v6612 = vrot.slane %v6611, 4
        %v6613 = vadd.f32 %v6611, %v6612
        %v6614 = vrot.slane %v6613, 2
        %v6615 = vadd.f32 %v6613, %v6614
        %v6616 = vrot.slane %v6615, 1
        %v6617 = vadd.f32 %v6615, %v6616
        %v6618 = vsel %vm2584, %v5552, 0.0
        %v6619 = vrot.slane %v6618, 4
        %v6620 = vadd.f32 %v6618, %v6619
        %v6621 = vrot.slane %v6620, 2
        %v6622 = vadd.f32 %v6620, %v6621
        %v6623 = vrot.slane %v6622, 1
        %v6624 = vadd.f32 %v6622, %v6623
        %v6625 = vsel %vm2584, %v5553, 0.0
        %v6626 = vrot.slane %v6625, 4
        %v6627 = vadd.f32 %v6625, %v6626
        %v6628 = vrot.slane %v6627, 2
        %v6629 = vadd.f32 %v6627, %v6628
        %v6630 = vrot.slane %v6629, 1
        %v6631 = vadd.f32 %v6629, %v6630
        %v6632 = vsel %vm2584, %v5554, 0.0
        %v6633 = vrot.slane %v6632, 4
        %v6634 = vadd.f32 %v6632, %v6633
        %v6635 = vrot.slane %v6634, 2
        %v6636 = vadd.f32 %v6634, %v6635
        %v6637 = vrot.slane %v6636, 1
        %v6638 = vadd.f32 %v6636, %v6637
        %v6639 = vsel %vm2584, %v5555, 0.0
        %v6640 = vrot.slane %v6639, 4
        %v6641 = vadd.f32 %v6639, %v6640
        %v6642 = vrot.slane %v6641, 2
        %v6643 = vadd.f32 %v6641, %v6642
        %v6644 = vrot.slane %v6643, 1
        %v6645 = vadd.f32 %v6643, %v6644
        %v6646 = vsel %vm2584, %v5556, 0.0
        %v6647 = vrot.slane %v6646, 4
        %v6648 = vadd.f32 %v6646, %v6647
        %v6649 = vrot.slane %v6648, 2
        %v6650 = vadd.f32 %v6648, %v6649
        %v6651 = vrot.slane %v6650, 1
        %v6652 = vadd.f32 %v6650, %v6651
        %v6653 = vsel %vm2584, %v5557, 0.0
        %v6654 = vrot.slane %v6653, 4
        %v6655 = vadd.f32 %v6653, %v6654
        %v6656 = vrot.slane %v6655, 2
        %v6657 = vadd.f32 %v6655, %v6656
        %v6658 = vrot.slane %v6657, 1
        %v6659 = vadd.f32 %v6657, %v6658
        %v6660 = vsel %vm2584, %v5558, 0.0
        %v6661 = vrot.slane %v6660, 4
        %v6662 = vadd.f32 %v6660, %v6661
        %v6663 = vrot.slane %v6662, 2
        %v6664 = vadd.f32 %v6662, %v6663
        %v6665 = vrot.slane %v6664, 1
        %v6666 = vadd.f32 %v6664, %v6665
        %v6667 = vsel %vm2584, %v5559, 0.0
        %v6668 = vrot.slane %v6667, 4
        %v6669 = vadd.f32 %v6667, %v6668
        %v6670 = vrot.slane %v6669, 2
        %v6671 = vadd.f32 %v6669, %v6670
        %v6672 = vrot.slane %v6671, 1
        %v6673 = vadd.f32 %v6671, %v6672
        %v6674 = vsel %vm2584, %v5560, 0.0
        %v6675 = vrot.slane %v6674, 4
        %v6676 = vadd.f32 %v6674, %v6675
        %v6677 = vrot.slane %v6676, 2
        %v6678 = vadd.f32 %v6676, %v6677
        %v6679 = vrot.slane %v6678, 1
        %v6680 = vadd.f32 %v6678, %v6679
        %v6681 = vsel %vm2584, %v5561, 0.0
        %v6682 = vrot.slane %v6681, 4
        %v6683 = vadd.f32 %v6681, %v6682
        %v6684 = vrot.slane %v6683, 2
        %v6685 = vadd.f32 %v6683, %v6684
        %v6686 = vrot.slane %v6685, 1
        %v6687 = vadd.f32 %v6685, %v6686
        %v6688 = vsel %vm2584, %v5562, 0.0
        %v6689 = vrot.slane %v6688, 4
        %v6690 = vadd.f32 %v6688, %v6689
        %v6691 = vrot.slane %v6690, 2
        %v6692 = vadd.f32 %v6690, %v6691
        %v6693 = vrot.slane %v6692, 1
        %v6694 = vadd.f32 %v6692, %v6693
        %v6695 = vsel %vm2584, %v5563, 0.0
        %v6696 = vrot.slane %v6695, 4
        %v6697 = vadd.f32 %v6695, %v6696
        %v6698 = vrot.slane %v6697, 2
        %v6699 = vadd.f32 %v6697, %v6698
        %v6700 = vrot.slane %v6699, 1
        %v6701 = vadd.f32 %v6699, %v6700
        %v6702 = vsel %vm2584, %v5564, 0.0
        %v6703 = vrot.slane %v6702, 4
        %v6704 = vadd.f32 %v6702, %v6703
        %v6705 = vrot.slane %v6704, 2
        %v6706 = vadd.f32 %v6704, %v6705
        %v6707 = vrot.slane %v6706, 1
        %v6708 = vadd.f32 %v6706, %v6707
        %v6709 = vsel %vm2584, %v5565, 0.0
        %v6710 = vrot.slane %v6709, 4
        %v6711 = vadd.f32 %v6709, %v6710
        %v6712 = vrot.slane %v6711, 2
        %v6713 = vadd.f32 %v6711, %v6712
        %v6714 = vrot.slane %v6713, 1
        %v6715 = vadd.f32 %v6713, %v6714
        %v6716 = vsel %vm2584, %v5566, 0.0
        %v6717 = vrot.slane %v6716, 4
        %v6718 = vadd.f32 %v6716, %v6717
        %v6719 = vrot.slane %v6718, 2
        %v6720 = vadd.f32 %v6718, %v6719
        %v6721 = vrot.slane %v6720, 1
        %v6722 = vadd.f32 %v6720, %v6721
        %v6723 = vsel %vm2584, %v5567, 0.0
        %v6724 = vrot.slane %v6723, 4
        %v6725 = vadd.f32 %v6723, %v6724
        %v6726 = vrot.slane %v6725, 2
        %v6727 = vadd.f32 %v6725, %v6726
        %v6728 = vrot.slane %v6727, 1
        %v6729 = vadd.f32 %v6727, %v6728
        %v6730 = vsel %vm2584, %v5568, 0.0
        %v6731 = vrot.slane %v6730, 4
        %v6732 = vadd.f32 %v6730, %v6731
        %v6733 = vrot.slane %v6732, 2
        %v6734 = vadd.f32 %v6732, %v6733
        %v6735 = vrot.slane %v6734, 1
        %v6736 = vadd.f32 %v6734, %v6735
        %v6737 = vsel %vm2584, %v5569, 0.0
        %v6738 = vrot.slane %v6737, 4
        %v6739 = vadd.f32 %v6737, %v6738
        %v6740 = vrot.slane %v6739, 2
        %v6741 = vadd.f32 %v6739, %v6740
        %v6742 = vrot.slane %v6741, 1
        %v6743 = vadd.f32 %v6741, %v6742
        %v6744 = vsel %vm2584, %v5570, 0.0
        %v6745 = vrot.slane %v6744, 4
        %v6746 = vadd.f32 %v6744, %v6745
        %v6747 = vrot.slane %v6746, 2
        %v6748 = vadd.f32 %v6746, %v6747
        %v6749 = vrot.slane %v6748, 1
        %v6750 = vadd.f32 %v6748, %v6749
        %v6751 = vsel %vm2584, %v5571, 0.0
        %v6752 = vrot.slane %v6751, 4
        %v6753 = vadd.f32 %v6751, %v6752
        %v6754 = vrot.slane %v6753, 2
        %v6755 = vadd.f32 %v6753, %v6754
        %v6756 = vrot.slane %v6755, 1
        %v6757 = vadd.f32 %v6755, %v6756
        %v6758 = vsel %vm2584, %v5572, 0.0
        %v6759 = vrot.slane %v6758, 4
        %v6760 = vadd.f32 %v6758, %v6759
        %v6761 = vrot.slane %v6760, 2
        %v6762 = vadd.f32 %v6760, %v6761
        %v6763 = vrot.slane %v6762, 1
        %v6764 = vadd.f32 %v6762, %v6763
        %v6765 = vsel %vm2584, %v5573, 0.0
        %v6766 = vrot.slane %v6765, 4
        %v6767 = vadd.f32 %v6765, %v6766
        %v6768 = vrot.slane %v6767, 2
        %v6769 = vadd.f32 %v6767, %v6768
        %v6770 = vrot.slane %v6769, 1
        %v6771 = vadd.f32 %v6769, %v6770
        %v6772 = vsel %vm2584, %v5574, 0.0
        %v6773 = vrot.slane %v6772, 4
        %v6774 = vadd.f32 %v6772, %v6773
        %v6775 = vrot.slane %v6774, 2
        %v6776 = vadd.f32 %v6774, %v6775
        %v6777 = vrot.slane %v6776, 1
        %v6778 = vadd.f32 %v6776, %v6777
        %v6779 = vsel %vm2584, %v5575, 0.0
        %v6780 = vrot.slane %v6779, 4
        %v6781 = vadd.f32 %v6779, %v6780
        %v6782 = vrot.slane %v6781, 2
        %v6783 = vadd.f32 %v6781, %v6782
        %v6784 = vrot.slane %v6783, 1
        %v6785 = vadd.f32 %v6783, %v6784
        %v6786 = vsel %vm2584, %v5576, 0.0
        %v6787 = vrot.slane %v6786, 4
        %v6788 = vadd.f32 %v6786, %v6787
        %v6789 = vrot.slane %v6788, 2
        %v6790 = vadd.f32 %v6788, %v6789
        %v6791 = vrot.slane %v6790, 1
        %v6792 = vadd.f32 %v6790, %v6791
        %v6793 = vsel %vm2584, %v5577, 0.0
        %v6794 = vrot.slane %v6793, 4
        %v6795 = vadd.f32 %v6793, %v6794
        %v6796 = vrot.slane %v6795, 2
        %v6797 = vadd.f32 %v6795, %v6796
        %v6798 = vrot.slane %v6797, 1
        %v6799 = vadd.f32 %v6797, %v6798
        %v6800 = vsel %vm2584, %v5578, 0.0
        %v6801 = vrot.slane %v6800, 4
        %v6802 = vadd.f32 %v6800, %v6801
        %v6803 = vrot.slane %v6802, 2
        %v6804 = vadd.f32 %v6802, %v6803
        %v6805 = vrot.slane %v6804, 1
        %v6806 = vadd.f32 %v6804, %v6805
        %v6807 = vsel %vm2584, %v5579, 0.0
        %v6808 = vrot.slane %v6807, 4
        %v6809 = vadd.f32 %v6807, %v6808
        %v6810 = vrot.slane %v6809, 2
        %v6811 = vadd.f32 %v6809, %v6810
        %v6812 = vrot.slane %v6811, 1
        %v6813 = vadd.f32 %v6811, %v6812
        %v6814 = vsel %vm2584, %v5580, 0.0
        %v6815 = vrot.slane %v6814, 4
        %v6816 = vadd.f32 %v6814, %v6815
        %v6817 = vrot.slane %v6816, 2
        %v6818 = vadd.f32 %v6816, %v6817
        %v6819 = vrot.slane %v6818, 1
        %v6820 = vadd.f32 %v6818, %v6819
        %v6821 = vsel %vm2584, %v5581, 0.0
        %v6822 = vrot.slane %v6821, 4
        %v6823 = vadd.f32 %v6821, %v6822
        %v6824 = vrot.slane %v6823, 2
        %v6825 = vadd.f32 %v6823, %v6824
        %v6826 = vrot.slane %v6825, 1
        %v6827 = vadd.f32 %v6825, %v6826
        %v6828 = vsel %vm2584, %v5582, 0.0
        %v6829 = vrot.slane %v6828, 4
        %v6830 = vadd.f32 %v6828, %v6829
        %v6831 = vrot.slane %v6830, 2
        %v6832 = vadd.f32 %v6830, %v6831
        %v6833 = vrot.slane %v6832, 1
        %v6834 = vadd.f32 %v6832, %v6833
        %v6835 = vsel %vm2584, %v5583, 0.0
        %v6836 = vrot.slane %v6835, 4
        %v6837 = vadd.f32 %v6835, %v6836
        %v6838 = vrot.slane %v6837, 2
        %v6839 = vadd.f32 %v6837, %v6838
        %v6840 = vrot.slane %v6839, 1
        %v6841 = vadd.f32 %v6839, %v6840
        %v6842 = vsel %vm2584, %v5584, 0.0
        %v6843 = vrot.slane %v6842, 4
        %v6844 = vadd.f32 %v6842, %v6843
        %v6845 = vrot.slane %v6844, 2
        %v6846 = vadd.f32 %v6844, %v6845
        %v6847 = vrot.slane %v6846, 1
        %v6848 = vadd.f32 %v6846, %v6847
        %v6849 = vsel %vm2584, %v5585, 0.0
        %v6850 = vrot.slane %v6849, 4
        %v6851 = vadd.f32 %v6849, %v6850
        %v6852 = vrot.slane %v6851, 2
        %v6853 = vadd.f32 %v6851, %v6852
        %v6854 = vrot.slane %v6853, 1
        %v6855 = vadd.f32 %v6853, %v6854
        %v6856 = vsel %vm2584, %v5586, 0.0
        %v6857 = vrot.slane %v6856, 4
        %v6858 = vadd.f32 %v6856, %v6857
        %v6859 = vrot.slane %v6858, 2
        %v6860 = vadd.f32 %v6858, %v6859
        %v6861 = vrot.slane %v6860, 1
        %v6862 = vadd.f32 %v6860, %v6861
        %v6863 = vsel %vm2584, %v5587, 0.0
        %v6864 = vrot.slane %v6863, 4
        %v6865 = vadd.f32 %v6863, %v6864
        %v6866 = vrot.slane %v6865, 2
        %v6867 = vadd.f32 %v6865, %v6866
        %v6868 = vrot.slane %v6867, 1
        %v6869 = vadd.f32 %v6867, %v6868
        %v6870 = vsel %vm2584, %v5588, 0.0
        %v6871 = vrot.slane %v6870, 4
        %v6872 = vadd.f32 %v6870, %v6871
        %v6873 = vrot.slane %v6872, 2
        %v6874 = vadd.f32 %v6872, %v6873
        %v6875 = vrot.slane %v6874, 1
        %v6876 = vadd.f32 %v6874, %v6875
        %v6877 = vsel %vm2584, %v5589, 0.0
        %v6878 = vrot.slane %v6877, 4
        %v6879 = vadd.f32 %v6877, %v6878
        %v6880 = vrot.slane %v6879, 2
        %v6881 = vadd.f32 %v6879, %v6880
        %v6882 = vrot.slane %v6881, 1
        %v6883 = vadd.f32 %v6881, %v6882
        %v6884 = vsel %vm2584, %v5590, 0.0
        %v6885 = vrot.slane %v6884, 4
        %v6886 = vadd.f32 %v6884, %v6885
        %v6887 = vrot.slane %v6886, 2
        %v6888 = vadd.f32 %v6886, %v6887
        %v6889 = vrot.slane %v6888, 1
        %v6890 = vadd.f32 %v6888, %v6889
        %v6891 = vsel %vm2584, %v5591, 0.0
        %v6892 = vrot.slane %v6891, 4
        %v6893 = vadd.f32 %v6891, %v6892
        %v6894 = vrot.slane %v6893, 2
        %v6895 = vadd.f32 %v6893, %v6894
        %v6896 = vrot.slane %v6895, 1
        %v6897 = vadd.f32 %v6895, %v6896
        %v6898 = vsel %vm2584, %v5592, 0.0
        %v6899 = vrot.slane %v6898, 4
        %v6900 = vadd.f32 %v6898, %v6899
        %v6901 = vrot.slane %v6900, 2
        %v6902 = vadd.f32 %v6900, %v6901
        %v6903 = vrot.slane %v6902, 1
        %v6904 = vadd.f32 %v6902, %v6903
        %v6905 = vsel %vm2584, %v5593, 0.0
        %v6906 = vrot.slane %v6905, 4
        %v6907 = vadd.f32 %v6905, %v6906
        %v6908 = vrot.slane %v6907, 2
        %v6909 = vadd.f32 %v6907, %v6908
        %v6910 = vrot.slane %v6909, 1
        %v6911 = vadd.f32 %v6909, %v6910
        %v6912 = vsel %vm2584, %v5594, 0.0
        %v6913 = vrot.slane %v6912, 4
        %v6914 = vadd.f32 %v6912, %v6913
        %v6915 = vrot.slane %v6914, 2
        %v6916 = vadd.f32 %v6914, %v6915
        %v6917 = vrot.slane %v6916, 1
        %v6918 = vadd.f32 %v6916, %v6917
        %v6919 = vsel %vm2584, %v5595, 0.0
        %v6920 = vrot.slane %v6919, 4
        %v6921 = vadd.f32 %v6919, %v6920
        %v6922 = vrot.slane %v6921, 2
        %v6923 = vadd.f32 %v6921, %v6922
        %v6924 = vrot.slane %v6923, 1
        %v6925 = vadd.f32 %v6923, %v6924
        %v6926 = vsel %vm2584, %v5596, 0.0
        %v6927 = vrot.slane %v6926, 4
        %v6928 = vadd.f32 %v6926, %v6927
        %v6929 = vrot.slane %v6928, 2
        %v6930 = vadd.f32 %v6928, %v6929
        %v6931 = vrot.slane %v6930, 1
        %v6932 = vadd.f32 %v6930, %v6931
        %v6933 = vsel %vm2584, %v5597, 0.0
        %v6934 = vrot.slane %v6933, 4
        %v6935 = vadd.f32 %v6933, %v6934
        %v6936 = vrot.slane %v6935, 2
        %v6937 = vadd.f32 %v6935, %v6936
        %v6938 = vrot.slane %v6937, 1
        %v6939 = vadd.f32 %v6937, %v6938
        %v6940 = vsel %vm2584, %v5598, 0.0
        %v6941 = vrot.slane %v6940, 4
        %v6942 = vadd.f32 %v6940, %v6941
        %v6943 = vrot.slane %v6942, 2
        %v6944 = vadd.f32 %v6942, %v6943
        %v6945 = vrot.slane %v6944, 1
        %v6946 = vadd.f32 %v6944, %v6945
        %v6947 = vsel %vm2584, %v5599, 0.0
        %v6948 = vrot.slane %v6947, 4
        %v6949 = vadd.f32 %v6947, %v6948
        %v6950 = vrot.slane %v6949, 2
        %v6951 = vadd.f32 %v6949, %v6950
        %v6952 = vrot.slane %v6951, 1
        %v6953 = vadd.f32 %v6951, %v6952
        %v6954 = vsel %vm2584, %v5600, 0.0
        %v6955 = vrot.slane %v6954, 4
        %v6956 = vadd.f32 %v6954, %v6955
        %v6957 = vrot.slane %v6956, 2
        %v6958 = vadd.f32 %v6956, %v6957
        %v6959 = vrot.slane %v6958, 1
        %v6960 = vadd.f32 %v6958, %v6959
        %v6961 = vsel %vm2584, %v5601, 0.0
        %v6962 = vrot.slane %v6961, 4
        %v6963 = vadd.f32 %v6961, %v6962
        %v6964 = vrot.slane %v6963, 2
        %v6965 = vadd.f32 %v6963, %v6964
        %v6966 = vrot.slane %v6965, 1
        %v6967 = vadd.f32 %v6965, %v6966
        %v6968 = vsel %vm2584, %v5602, 0.0
        %v6969 = vrot.slane %v6968, 4
        %v6970 = vadd.f32 %v6968, %v6969
        %v6971 = vrot.slane %v6970, 2
        %v6972 = vadd.f32 %v6970, %v6971
        %v6973 = vrot.slane %v6972, 1
        %v6974 = vadd.f32 %v6972, %v6973
        %v6975 = vsel %vm2584, %v5603, 0.0
        %v6976 = vrot.slane %v6975, 4
        %v6977 = vadd.f32 %v6975, %v6976
        %v6978 = vrot.slane %v6977, 2
        %v6979 = vadd.f32 %v6977, %v6978
        %v6980 = vrot.slane %v6979, 1
        %v6981 = vadd.f32 %v6979, %v6980
        %v6982 = vsel %vm2584, %v5604, 0.0
        %v6983 = vrot.slane %v6982, 4
        %v6984 = vadd.f32 %v6982, %v6983
        %v6985 = vrot.slane %v6984, 2
        %v6986 = vadd.f32 %v6984, %v6985
        %v6987 = vrot.slane %v6986, 1
        %v6988 = vadd.f32 %v6986, %v6987
        %v6989 = vsel %vm2584, %v5605, 0.0
        %v6990 = vrot.slane %v6989, 4
        %v6991 = vadd.f32 %v6989, %v6990
        %v6992 = vrot.slane %v6991, 2
        %v6993 = vadd.f32 %v6991, %v6992
        %v6994 = vrot.slane %v6993, 1
        %v6995 = vadd.f32 %v6993, %v6994
        %v6996 = vsel %vm2584, %v5606, 0.0
        %v6997 = vrot.slane %v6996, 4
        %v6998 = vadd.f32 %v6996, %v6997
        %v6999 = vrot.slane %v6998, 2
        %v7000 = vadd.f32 %v6998, %v6999
        %v7001 = vrot.slane %v7000, 1
        %v7002 = vadd.f32 %v7000, %v7001
        %v7003 = vsel %vm2584, %v5607, 0.0
        %v7004 = vrot.slane %v7003, 4
        %v7005 = vadd.f32 %v7003, %v7004
        %v7006 = vrot.slane %v7005, 2
        %v7007 = vadd.f32 %v7005, %v7006
        %v7008 = vrot.slane %v7007, 1
        %v7009 = vadd.f32 %v7007, %v7008
        %v7010 = vsel %vm2584, %v5608, 0.0
        %v7011 = vrot.slane %v7010, 4
        %v7012 = vadd.f32 %v7010, %v7011
        %v7013 = vrot.slane %v7012, 2
        %v7014 = vadd.f32 %v7012, %v7013
        %v7015 = vrot.slane %v7014, 1
        %v7016 = vadd.f32 %v7014, %v7015
        %v7017 = vsel %vm2584, %v5609, 0.0
        %v7018 = vrot.slane %v7017, 4
        %v7019 = vadd.f32 %v7017, %v7018
        %v7020 = vrot.slane %v7019, 2
        %v7021 = vadd.f32 %v7019, %v7020
        %v7022 = vrot.slane %v7021, 1
        %v7023 = vadd.f32 %v7021, %v7022
        %v7024 = vsel %vm2584, %v5610, 0.0
        %v7025 = vrot.slane %v7024, 4
        %v7026 = vadd.f32 %v7024, %v7025
        %v7027 = vrot.slane %v7026, 2
        %v7028 = vadd.f32 %v7026, %v7027
        %v7029 = vrot.slane %v7028, 1
        %v7030 = vadd.f32 %v7028, %v7029
        %v7031 = vsel %vm2584, %v5611, 0.0
        %v7032 = vrot.slane %v7031, 4
        %v7033 = vadd.f32 %v7031, %v7032
        %v7034 = vrot.slane %v7033, 2
        %v7035 = vadd.f32 %v7033, %v7034
        %v7036 = vrot.slane %v7035, 1
        %v7037 = vadd.f32 %v7035, %v7036
        %v7038 = vsel %vm2584, %v5612, 0.0
        %v7039 = vrot.slane %v7038, 4
        %v7040 = vadd.f32 %v7038, %v7039
        %v7041 = vrot.slane %v7040, 2
        %v7042 = vadd.f32 %v7040, %v7041
        %v7043 = vrot.slane %v7042, 1
        %v7044 = vadd.f32 %v7042, %v7043
        %v7045 = vsel %vm2584, %v5613, 0.0
        %v7046 = vrot.slane %v7045, 4
        %v7047 = vadd.f32 %v7045, %v7046
        %v7048 = vrot.slane %v7047, 2
        %v7049 = vadd.f32 %v7047, %v7048
        %v7050 = vrot.slane %v7049, 1
        %v7051 = vadd.f32 %v7049, %v7050
        %v7052 = vsel %vm2584, %v5614, 0.0
        %v7053 = vrot.slane %v7052, 4
        %v7054 = vadd.f32 %v7052, %v7053
        %v7055 = vrot.slane %v7054, 2
        %v7056 = vadd.f32 %v7054, %v7055
        %v7057 = vrot.slane %v7056, 1
        %v7058 = vadd.f32 %v7056, %v7057
        %v7059 = vsel %vm2584, %v5615, 0.0
        %v7060 = vrot.slane %v7059, 4
        %v7061 = vadd.f32 %v7059, %v7060
        %v7062 = vrot.slane %v7061, 2
        %v7063 = vadd.f32 %v7061, %v7062
        %v7064 = vrot.slane %v7063, 1
        %v7065 = vadd.f32 %v7063, %v7064
        %v7066 = vsel %vm2584, %v5616, 0.0
        %v7067 = vrot.slane %v7066, 4
        %v7068 = vadd.f32 %v7066, %v7067
        %v7069 = vrot.slane %v7068, 2
        %v7070 = vadd.f32 %v7068, %v7069
        %v7071 = vrot.slane %v7070, 1
        %v7072 = vadd.f32 %v7070, %v7071
        %v7073 = vsel %vm2584, %v5617, 0.0
        %v7074 = vrot.slane %v7073, 4
        %v7075 = vadd.f32 %v7073, %v7074
        %v7076 = vrot.slane %v7075, 2
        %v7077 = vadd.f32 %v7075, %v7076
        %v7078 = vrot.slane %v7077, 1
        %v7079 = vadd.f32 %v7077, %v7078
        %v7080 = vsel %vm2584, %v5618, 0.0
        %v7081 = vrot.slane %v7080, 4
        %v7082 = vadd.f32 %v7080, %v7081
        %v7083 = vrot.slane %v7082, 2
        %v7084 = vadd.f32 %v7082, %v7083
        %v7085 = vrot.slane %v7084, 1
        %v7086 = vadd.f32 %v7084, %v7085
        %v7087 = vsel %vm2584, %v5619, 0.0
        %v7088 = vrot.slane %v7087, 4
        %v7089 = vadd.f32 %v7087, %v7088
        %v7090 = vrot.slane %v7089, 2
        %v7091 = vadd.f32 %v7089, %v7090
        %v7092 = vrot.slane %v7091, 1
        %v7093 = vadd.f32 %v7091, %v7092
        %v7094 = vsel %vm2584, %v5620, 0.0
        %v7095 = vrot.slane %v7094, 4
        %v7096 = vadd.f32 %v7094, %v7095
        %v7097 = vrot.slane %v7096, 2
        %v7098 = vadd.f32 %v7096, %v7097
        %v7099 = vrot.slane %v7098, 1
        %v7100 = vadd.f32 %v7098, %v7099
        %v7101 = vsel %vm2584, %v5621, 0.0
        %v7102 = vrot.slane %v7101, 4
        %v7103 = vadd.f32 %v7101, %v7102
        %v7104 = vrot.slane %v7103, 2
        %v7105 = vadd.f32 %v7103, %v7104
        %v7106 = vrot.slane %v7105, 1
        %v7107 = vadd.f32 %v7105, %v7106
        %v7108 = vsel %vm2584, %v5622, 0.0
        %v7109 = vrot.slane %v7108, 4
        %v7110 = vadd.f32 %v7108, %v7109
        %v7111 = vrot.slane %v7110, 2
        %v7112 = vadd.f32 %v7110, %v7111
        %v7113 = vrot.slane %v7112, 1
        %v7114 = vadd.f32 %v7112, %v7113
        %v7115 = vsel %vm2584, %v5623, 0.0
        %v7116 = vrot.slane %v7115, 4
        %v7117 = vadd.f32 %v7115, %v7116
        %v7118 = vrot.slane %v7117, 2
        %v7119 = vadd.f32 %v7117, %v7118
        %v7120 = vrot.slane %v7119, 1
        %v7121 = vadd.f32 %v7119, %v7120
        %v7122 = vsel %vm2584, %v5624, 0.0
        %v7123 = vrot.slane %v7122, 4
        %v7124 = vadd.f32 %v7122, %v7123
        %v7125 = vrot.slane %v7124, 2
        %v7126 = vadd.f32 %v7124, %v7125
        %v7127 = vrot.slane %v7126, 1
        %v7128 = vadd.f32 %v7126, %v7127
        %v7129 = vsel %vm2584, %v5625, 0.0
        %v7130 = vrot.slane %v7129, 4
        %v7131 = vadd.f32 %v7129, %v7130
        %v7132 = vrot.slane %v7131, 2
        %v7133 = vadd.f32 %v7131, %v7132
        %v7134 = vrot.slane %v7133, 1
        %v7135 = vadd.f32 %v7133, %v7134
        %v7136 = vsel %vm2584, %v5626, 0.0
        %v7137 = vrot.slane %v7136, 4
        %v7138 = vadd.f32 %v7136, %v7137
        %v7139 = vrot.slane %v7138, 2
        %v7140 = vadd.f32 %v7138, %v7139
        %v7141 = vrot.slane %v7140, 1
        %v7142 = vadd.f32 %v7140, %v7141
        %v7143 = vsel %vm2584, %v5627, 0.0
        %v7144 = vrot.slane %v7143, 4
        %v7145 = vadd.f32 %v7143, %v7144
        %v7146 = vrot.slane %v7145, 2
        %v7147 = vadd.f32 %v7145, %v7146
        %v7148 = vrot.slane %v7147, 1
        %v7149 = vadd.f32 %v7147, %v7148
        %v7150 = vsel %vm2584, %v5628, 0.0
        %v7151 = vrot.slane %v7150, 4
        %v7152 = vadd.f32 %v7150, %v7151
        %v7153 = vrot.slane %v7152, 2
        %v7154 = vadd.f32 %v7152, %v7153
        %v7155 = vrot.slane %v7154, 1
        %v7156 = vadd.f32 %v7154, %v7155
        %v7157 = vsel %vm2584, %v5629, 0.0
        %v7158 = vrot.slane %v7157, 4
        %v7159 = vadd.f32 %v7157, %v7158
        %v7160 = vrot.slane %v7159, 2
        %v7161 = vadd.f32 %v7159, %v7160
        %v7162 = vrot.slane %v7161, 1
        %v7163 = vadd.f32 %v7161, %v7162
        %v7164 = vsel %vm2584, %v5630, 0.0
        %v7165 = vrot.slane %v7164, 4
        %v7166 = vadd.f32 %v7164, %v7165
        %v7167 = vrot.slane %v7166, 2
        %v7168 = vadd.f32 %v7166, %v7167
        %v7169 = vrot.slane %v7168, 1
        %v7170 = vadd.f32 %v7168, %v7169
        %v7171 = vsel %vm2584, %v5631, 0.0
        %v7172 = vrot.slane %v7171, 4
        %v7173 = vadd.f32 %v7171, %v7172
        %v7174 = vrot.slane %v7173, 2
        %v7175 = vadd.f32 %v7173, %v7174
        %v7176 = vrot.slane %v7175, 1
        %v7177 = vadd.f32 %v7175, %v7176
        %v7178 = vsel %vm2584, %v5632, 0.0
        %v7179 = vrot.slane %v7178, 4
        %v7180 = vadd.f32 %v7178, %v7179
        %v7181 = vrot.slane %v7180, 2
        %v7182 = vadd.f32 %v7180, %v7181
        %v7183 = vrot.slane %v7182, 1
        %v7184 = vadd.f32 %v7182, %v7183
        %v7185 = vsel %vm2584, %v5633, 0.0
        %v7186 = vrot.slane %v7185, 4
        %v7187 = vadd.f32 %v7185, %v7186
        %v7188 = vrot.slane %v7187, 2
        %v7189 = vadd.f32 %v7187, %v7188
        %v7190 = vrot.slane %v7189, 1
        %v7191 = vadd.f32 %v7189, %v7190
        %v7192 = vsel %vm2584, %v5634, 0.0
        %v7193 = vrot.slane %v7192, 4
        %v7194 = vadd.f32 %v7192, %v7193
        %v7195 = vrot.slane %v7194, 2
        %v7196 = vadd.f32 %v7194, %v7195
        %v7197 = vrot.slane %v7196, 1
        %v7198 = vadd.f32 %v7196, %v7197
        %v7199 = vsel %vm2584, %v5635, 0.0
        %v7200 = vrot.slane %v7199, 4
        %v7201 = vadd.f32 %v7199, %v7200
        %v7202 = vrot.slane %v7201, 2
        %v7203 = vadd.f32 %v7201, %v7202
        %v7204 = vrot.slane %v7203, 1
        %v7205 = vadd.f32 %v7203, %v7204
        %v7206 = vsel %vm2584, %v5636, 0.0
        %v7207 = vrot.slane %v7206, 4
        %v7208 = vadd.f32 %v7206, %v7207
        %v7209 = vrot.slane %v7208, 2
        %v7210 = vadd.f32 %v7208, %v7209
        %v7211 = vrot.slane %v7210, 1
        %v7212 = vadd.f32 %v7210, %v7211
        %v7213 = vsel %vm2584, %v5637, 0.0
        %v7214 = vrot.slane %v7213, 4
        %v7215 = vadd.f32 %v7213, %v7214
        %v7216 = vrot.slane %v7215, 2
        %v7217 = vadd.f32 %v7215, %v7216
        %v7218 = vrot.slane %v7217, 1
        %v7219 = vadd.f32 %v7217, %v7218
        %v7220 = vsel %vm2584, %v5638, 0.0
        %v7221 = vrot.slane %v7220, 4
        %v7222 = vadd.f32 %v7220, %v7221
        %v7223 = vrot.slane %v7222, 2
        %v7224 = vadd.f32 %v7222, %v7223
        %v7225 = vrot.slane %v7224, 1
        %v7226 = vadd.f32 %v7224, %v7225
        %v7227 = vsel %vm2584, %v5639, 0.0
        %v7228 = vrot.slane %v7227, 4
        %v7229 = vadd.f32 %v7227, %v7228
        %v7230 = vrot.slane %v7229, 2
        %v7231 = vadd.f32 %v7229, %v7230
        %v7232 = vrot.slane %v7231, 1
        %v7233 = vadd.f32 %v7231, %v7232
        %v7234 = vsel %vm2584, %v5640, 0.0
        %v7235 = vrot.slane %v7234, 4
        %v7236 = vadd.f32 %v7234, %v7235
        %v7237 = vrot.slane %v7236, 2
        %v7238 = vadd.f32 %v7236, %v7237
        %v7239 = vrot.slane %v7238, 1
        %v7240 = vadd.f32 %v7238, %v7239
        %v7241 = vsel %vm2584, %v5641, 0.0
        %v7242 = vrot.slane %v7241, 4
        %v7243 = vadd.f32 %v7241, %v7242
        %v7244 = vrot.slane %v7243, 2
        %v7245 = vadd.f32 %v7243, %v7244
        %v7246 = vrot.slane %v7245, 1
        %v7247 = vadd.f32 %v7245, %v7246
        %v7248 = vsel %vm2584, %v5642, 0.0
        %v7249 = vrot.slane %v7248, 4
        %v7250 = vadd.f32 %v7248, %v7249
        %v7251 = vrot.slane %v7250, 2
        %v7252 = vadd.f32 %v7250, %v7251
        %v7253 = vrot.slane %v7252, 1
        %v7254 = vadd.f32 %v7252, %v7253
        %v7255 = vsel %vm2584, %v5643, 0.0
        %v7256 = vrot.slane %v7255, 4
        %v7257 = vadd.f32 %v7255, %v7256
        %v7258 = vrot.slane %v7257, 2
        %v7259 = vadd.f32 %v7257, %v7258
        %v7260 = vrot.slane %v7259, 1
        %v7261 = vadd.f32 %v7259, %v7260
        %v7262 = vsel %vm2584, %v5644, 0.0
        %v7263 = vrot.slane %v7262, 4
        %v7264 = vadd.f32 %v7262, %v7263
        %v7265 = vrot.slane %v7264, 2
        %v7266 = vadd.f32 %v7264, %v7265
        %v7267 = vrot.slane %v7266, 1
        %v7268 = vadd.f32 %v7266, %v7267
        %v7269 = vsel %vm2584, %v5645, 0.0
        %v7270 = vrot.slane %v7269, 4
        %v7271 = vadd.f32 %v7269, %v7270
        %v7272 = vrot.slane %v7271, 2
        %v7273 = vadd.f32 %v7271, %v7272
        %v7274 = vrot.slane %v7273, 1
        %v7275 = vadd.f32 %v7273, %v7274
        %v7276 = vsel %vm2584, %v5646, 0.0
        %v7277 = vrot.slane %v7276, 4
        %v7278 = vadd.f32 %v7276, %v7277
        %v7279 = vrot.slane %v7278, 2
        %v7280 = vadd.f32 %v7278, %v7279
        %v7281 = vrot.slane %v7280, 1
        %v7282 = vadd.f32 %v7280, %v7281
        %v7283 = vsel %vm2584, %v5647, 0.0
        %v7284 = vrot.slane %v7283, 4
        %v7285 = vadd.f32 %v7283, %v7284
        %v7286 = vrot.slane %v7285, 2
        %v7287 = vadd.f32 %v7285, %v7286
        %v7288 = vrot.slane %v7287, 1
        %v7289 = vadd.f32 %v7287, %v7288
        %v7290 = vsel %vm2584, %v5648, 0.0
        %v7291 = vrot.slane %v7290, 4
        %v7292 = vadd.f32 %v7290, %v7291
        %v7293 = vrot.slane %v7292, 2
        %v7294 = vadd.f32 %v7292, %v7293
        %v7295 = vrot.slane %v7294, 1
        %v7296 = vadd.f32 %v7294, %v7295
        %v7297 = vsel %vm2584, %v5649, 0.0
        %v7298 = vrot.slane %v7297, 4
        %v7299 = vadd.f32 %v7297, %v7298
        %v7300 = vrot.slane %v7299, 2
        %v7301 = vadd.f32 %v7299, %v7300
        %v7302 = vrot.slane %v7301, 1
        %v7303 = vadd.f32 %v7301, %v7302
        %v7304 = vsel %vm2584, %v5650, 0.0
        %v7305 = vrot.slane %v7304, 4
        %v7306 = vadd.f32 %v7304, %v7305
        %v7307 = vrot.slane %v7306, 2
        %v7308 = vadd.f32 %v7306, %v7307
        %v7309 = vrot.slane %v7308, 1
        %v7310 = vadd.f32 %v7308, %v7309
        %v7311 = vsel %vm2584, %v5651, 0.0
        %v7312 = vrot.slane %v7311, 4
        %v7313 = vadd.f32 %v7311, %v7312
        %v7314 = vrot.slane %v7313, 2
        %v7315 = vadd.f32 %v7313, %v7314
        %v7316 = vrot.slane %v7315, 1
        %v7317 = vadd.f32 %v7315, %v7316
        %v7318 = vsel %vm2584, %v5652, 0.0
        %v7319 = vrot.slane %v7318, 4
        %v7320 = vadd.f32 %v7318, %v7319
        %v7321 = vrot.slane %v7320, 2
        %v7322 = vadd.f32 %v7320, %v7321
        %v7323 = vrot.slane %v7322, 1
        %v7324 = vadd.f32 %v7322, %v7323
        %v7325 = vsel %vm2584, %v5653, 0.0
        %v7326 = vrot.slane %v7325, 4
        %v7327 = vadd.f32 %v7325, %v7326
        %v7328 = vrot.slane %v7327, 2
        %v7329 = vadd.f32 %v7327, %v7328
        %v7330 = vrot.slane %v7329, 1
        %v7331 = vadd.f32 %v7329, %v7330
        %v7332 = vsel %vm2584, %v5654, 0.0
        %v7333 = vrot.slane %v7332, 4
        %v7334 = vadd.f32 %v7332, %v7333
        %v7335 = vrot.slane %v7334, 2
        %v7336 = vadd.f32 %v7334, %v7335
        %v7337 = vrot.slane %v7336, 1
        %v7338 = vadd.f32 %v7336, %v7337
        %v7339 = vsel %vm2584, %v5655, 0.0
        %v7340 = vrot.slane %v7339, 4
        %v7341 = vadd.f32 %v7339, %v7340
        %v7342 = vrot.slane %v7341, 2
        %v7343 = vadd.f32 %v7341, %v7342
        %v7344 = vrot.slane %v7343, 1
        %v7345 = vadd.f32 %v7343, %v7344
        %v7346 = vsel %vm2584, %v5656, 0.0
        %v7347 = vrot.slane %v7346, 4
        %v7348 = vadd.f32 %v7346, %v7347
        %v7349 = vrot.slane %v7348, 2
        %v7350 = vadd.f32 %v7348, %v7349
        %v7351 = vrot.slane %v7350, 1
        %v7352 = vadd.f32 %v7350, %v7351
        %v7353 = vsel %vm2584, %v5657, 0.0
        %v7354 = vrot.slane %v7353, 4
        %v7355 = vadd.f32 %v7353, %v7354
        %v7356 = vrot.slane %v7355, 2
        %v7357 = vadd.f32 %v7355, %v7356
        %v7358 = vrot.slane %v7357, 1
        %v7359 = vadd.f32 %v7357, %v7358
        %v7360 = vsel %vm2584, %v5658, 0.0
        %v7361 = vrot.slane %v7360, 4
        %v7362 = vadd.f32 %v7360, %v7361
        %v7363 = vrot.slane %v7362, 2
        %v7364 = vadd.f32 %v7362, %v7363
        %v7365 = vrot.slane %v7364, 1
        %v7366 = vadd.f32 %v7364, %v7365
        %v7367 = vsel %vm2584, %v5659, 0.0
        %v7368 = vrot.slane %v7367, 4
        %v7369 = vadd.f32 %v7367, %v7368
        %v7370 = vrot.slane %v7369, 2
        %v7371 = vadd.f32 %v7369, %v7370
        %v7372 = vrot.slane %v7371, 1
        %v7373 = vadd.f32 %v7371, %v7372
        %v7374 = vsel %vm2584, %v5660, 0.0
        %v7375 = vrot.slane %v7374, 4
        %v7376 = vadd.f32 %v7374, %v7375
        %v7377 = vrot.slane %v7376, 2
        %v7378 = vadd.f32 %v7376, %v7377
        %v7379 = vrot.slane %v7378, 1
        %v7380 = vadd.f32 %v7378, %v7379
        %v7381 = vsel %vm2584, %v5661, 0.0
        %v7382 = vrot.slane %v7381, 4
        %v7383 = vadd.f32 %v7381, %v7382
        %v7384 = vrot.slane %v7383, 2
        %v7385 = vadd.f32 %v7383, %v7384
        %v7386 = vrot.slane %v7385, 1
        %v7387 = vadd.f32 %v7385, %v7386
        %v7388 = vsel %vm2584, %v5662, 0.0
        %v7389 = vrot.slane %v7388, 4
        %v7390 = vadd.f32 %v7388, %v7389
        %v7391 = vrot.slane %v7390, 2
        %v7392 = vadd.f32 %v7390, %v7391
        %v7393 = vrot.slane %v7392, 1
        %v7394 = vadd.f32 %v7392, %v7393
        %v7395 = vsel %vm2584, %v5663, 0.0
        %v7396 = vrot.slane %v7395, 4
        %v7397 = vadd.f32 %v7395, %v7396
        %v7398 = vrot.slane %v7397, 2
        %v7399 = vadd.f32 %v7397, %v7398
        %v7400 = vrot.slane %v7399, 1
        %v7401 = vadd.f32 %v7399, %v7400
        %v7402 = vsel %vm2584, %v5664, 0.0
        %v7403 = vrot.slane %v7402, 4
        %v7404 = vadd.f32 %v7402, %v7403
        %v7405 = vrot.slane %v7404, 2
        %v7406 = vadd.f32 %v7404, %v7405
        %v7407 = vrot.slane %v7406, 1
        %v7408 = vadd.f32 %v7406, %v7407
        %v7409 = vsel %vm2584, %v5665, 0.0
        %v7410 = vrot.slane %v7409, 4
        %v7411 = vadd.f32 %v7409, %v7410
        %v7412 = vrot.slane %v7411, 2
        %v7413 = vadd.f32 %v7411, %v7412
        %v7414 = vrot.slane %v7413, 1
        %v7415 = vadd.f32 %v7413, %v7414
        %v7416 = vsel %vm2584, %v5666, 0.0
        %v7417 = vrot.slane %v7416, 4
        %v7418 = vadd.f32 %v7416, %v7417
        %v7419 = vrot.slane %v7418, 2
        %v7420 = vadd.f32 %v7418, %v7419
        %v7421 = vrot.slane %v7420, 1
        %v7422 = vadd.f32 %v7420, %v7421
        %v7423 = vsel %vm2584, %v5667, 0.0
        %v7424 = vrot.slane %v7423, 4
        %v7425 = vadd.f32 %v7423, %v7424
        %v7426 = vrot.slane %v7425, 2
        %v7427 = vadd.f32 %v7425, %v7426
        %v7428 = vrot.slane %v7427, 1
        %v7429 = vadd.f32 %v7427, %v7428
        %v7430 = vsel %vm2584, %v5668, 0.0
        %v7431 = vrot.slane %v7430, 4
        %v7432 = vadd.f32 %v7430, %v7431
        %v7433 = vrot.slane %v7432, 2
        %v7434 = vadd.f32 %v7432, %v7433
        %v7435 = vrot.slane %v7434, 1
        %v7436 = vadd.f32 %v7434, %v7435
        %v7437 = vsel %vm2584, %v5669, 0.0
        %v7438 = vrot.slane %v7437, 4
        %v7439 = vadd.f32 %v7437, %v7438
        %v7440 = vrot.slane %v7439, 2
        %v7441 = vadd.f32 %v7439, %v7440
        %v7442 = vrot.slane %v7441, 1
        %v7443 = vadd.f32 %v7441, %v7442
        %v7444 = vsel %vm2584, %v5670, 0.0
        %v7445 = vrot.slane %v7444, 4
        %v7446 = vadd.f32 %v7444, %v7445
        %v7447 = vrot.slane %v7446, 2
        %v7448 = vadd.f32 %v7446, %v7447
        %v7449 = vrot.slane %v7448, 1
        %v7450 = vadd.f32 %v7448, %v7449
        %v7451 = vsel %vm2584, %v5671, 0.0
        %v7452 = vrot.slane %v7451, 4
        %v7453 = vadd.f32 %v7451, %v7452
        %v7454 = vrot.slane %v7453, 2
        %v7455 = vadd.f32 %v7453, %v7454
        %v7456 = vrot.slane %v7455, 1
        %v7457 = vadd.f32 %v7455, %v7456
        %v7458 = vsel %vm2584, %v5672, 0.0
        %v7459 = vrot.slane %v7458, 4
        %v7460 = vadd.f32 %v7458, %v7459
        %v7461 = vrot.slane %v7460, 2
        %v7462 = vadd.f32 %v7460, %v7461
        %v7463 = vrot.slane %v7462, 1
        %v7464 = vadd.f32 %v7462, %v7463
        %v7465 = vadd.f32 %v2591, %v5679
        %v7466 = vadd.f32 %v2598, %v5686
        %v7467 = vadd.f32 %v2605, %v5693
        %v7468 = vadd.f32 %v2612, %v5700
        %v7469 = vadd.f32 %v2619, %v5707
        %v7470 = vadd.f32 %v2626, %v5714
        %v7471 = vadd.f32 %v2633, %v5721
        %v7472 = vadd.f32 %v2640, %v5728
        %v7473 = vadd.f32 %v2647, %v5735
        %v7474 = vadd.f32 %v2654, %v5742
        %v7475 = vadd.f32 %v2661, %v5749
        %v7476 = vadd.f32 %v2668, %v5756
        %v7477 = vadd.f32 %v2675, %v5763
        %v7478 = vadd.f32 %v2682, %v5770
        %v7479 = vadd.f32 %v2689, %v5777
        %v7480 = vadd.f32 %v2696, %v5784
        %v7481 = vadd.f32 %v2703, %v5791
        %v7482 = vadd.f32 %v2710, %v5798
        %v7483 = vadd.f32 %v2717, %v5805
        %v7484 = vadd.f32 %v2724, %v5812
        %v7485 = vadd.f32 %v2731, %v5819
        %v7486 = vadd.f32 %v2738, %v5826
        %v7487 = vadd.f32 %v2745, %v5833
        %v7488 = vadd.f32 %v2752, %v5840
        %v7489 = vadd.f32 %v2759, %v5847
        %v7490 = vadd.f32 %v2766, %v5854
        %v7491 = vadd.f32 %v2773, %v5861
        %v7492 = vadd.f32 %v2780, %v5868
        %v7493 = vadd.f32 %v2787, %v5875
        %v7494 = vadd.f32 %v2794, %v5882
        %v7495 = vadd.f32 %v2801, %v5889
        %v7496 = vadd.f32 %v2808, %v5896
        %v7497 = vadd.f32 %v2815, %v5903
        %v7498 = vadd.f32 %v2822, %v5910
        %v7499 = vadd.f32 %v2829, %v5917
        %v7500 = vadd.f32 %v2836, %v5924
        %v7501 = vadd.f32 %v2843, %v5931
        %v7502 = vadd.f32 %v2850, %v5938
        %v7503 = vadd.f32 %v2857, %v5945
        %v7504 = vadd.f32 %v2864, %v5952
        %v7505 = vadd.f32 %v2871, %v5959
        %v7506 = vadd.f32 %v2878, %v5966
        %v7507 = vadd.f32 %v2885, %v5973
        %v7508 = vadd.f32 %v2892, %v5980
        %v7509 = vadd.f32 %v2899, %v5987
        %v7510 = vadd.f32 %v2906, %v5994
        %v7511 = vadd.f32 %v2913, %v6001
        %v7512 = vadd.f32 %v2920, %v6008
        %v7513 = vadd.f32 %v2927, %v6015
        %v7514 = vadd.f32 %v2934, %v6022
        %v7515 = vadd.f32 %v2941, %v6029
        %v7516 = vadd.f32 %v2948, %v6036
        %v7517 = vadd.f32 %v2955, %v6043
        %v7518 = vadd.f32 %v2962, %v6050
        %v7519 = vadd.f32 %v2969, %v6057
        %v7520 = vadd.f32 %v2976, %v6064
        %v7521 = vadd.f32 %v2983, %v6071
        %v7522 = vadd.f32 %v2990, %v6078
        %v7523 = vadd.f32 %v2997, %v6085
        %v7524 = vadd.f32 %v3004, %v6092
        %v7525 = vadd.f32 %v3011, %v6099
        %v7526 = vadd.f32 %v3018, %v6106
        %v7527 = vadd.f32 %v3025, %v6113
        %v7528 = vadd.f32 %v3032, %v6120
        %v7529 = vadd.f32 %v3039, %v6127
        %v7530 = vadd.f32 %v3046, %v6134
        %v7531 = vadd.f32 %v3053, %v6141
        %v7532 = vadd.f32 %v3060, %v6148
        %v7533 = vadd.f32 %v3067, %v6155
        %v7534 = vadd.f32 %v3074, %v6162
        %v7535 = vadd.f32 %v3081, %v6169
        %v7536 = vadd.f32 %v3088, %v6176
        %v7537 = vadd.f32 %v3095, %v6183
        %v7538 = vadd.f32 %v3102, %v6190
        %v7539 = vadd.f32 %v3109, %v6197
        %v7540 = vadd.f32 %v3116, %v6204
        %v7541 = vadd.f32 %v3123, %v6211
        %v7542 = vadd.f32 %v3130, %v6218
        %v7543 = vadd.f32 %v3137, %v6225
        %v7544 = vadd.f32 %v3144, %v6232
        %v7545 = vadd.f32 %v3151, %v6239
        %v7546 = vadd.f32 %v3158, %v6246
        %v7547 = vadd.f32 %v3165, %v6253
        %v7548 = vadd.f32 %v3172, %v6260
        %v7549 = vadd.f32 %v3179, %v6267
        %v7550 = vadd.f32 %v3186, %v6274
        %v7551 = vadd.f32 %v3193, %v6281
        %v7552 = vadd.f32 %v3200, %v6288
        %v7553 = vadd.f32 %v3207, %v6295
        %v7554 = vadd.f32 %v3214, %v6302
        %v7555 = vadd.f32 %v3221, %v6309
        %v7556 = vadd.f32 %v3228, %v6316
        %v7557 = vadd.f32 %v3235, %v6323
        %v7558 = vadd.f32 %v3242, %v6330
        %v7559 = vadd.f32 %v3249, %v6337
        %v7560 = vadd.f32 %v3256, %v6344
        %v7561 = vadd.f32 %v3263, %v6351
        %v7562 = vadd.f32 %v3270, %v6358
        %v7563 = vadd.f32 %v3277, %v6365
        %v7564 = vadd.f32 %v3284, %v6372
        %v7565 = vadd.f32 %v3291, %v6379
        %v7566 = vadd.f32 %v3298, %v6386
        %v7567 = vadd.f32 %v3305, %v6393
        %v7568 = vadd.f32 %v3312, %v6400
        %v7569 = vadd.f32 %v3319, %v6407
        %v7570 = vadd.f32 %v3326, %v6414
        %v7571 = vadd.f32 %v3333, %v6421
        %v7572 = vadd.f32 %v3340, %v6428
        %v7573 = vadd.f32 %v3347, %v6435
        %v7574 = vadd.f32 %v3354, %v6442
        %v7575 = vadd.f32 %v3361, %v6449
        %v7576 = vadd.f32 %v3368, %v6456
        %v7577 = vadd.f32 %v3375, %v6463
        %v7578 = vadd.f32 %v3382, %v6470
        %v7579 = vadd.f32 %v3389, %v6477
        %v7580 = vadd.f32 %v3396, %v6484
        %v7581 = vadd.f32 %v3403, %v6491
        %v7582 = vadd.f32 %v3410, %v6498
        %v7583 = vadd.f32 %v3417, %v6505
        %v7584 = vadd.f32 %v3424, %v6512
        %v7585 = vadd.f32 %v3431, %v6519
        %v7586 = vadd.f32 %v3438, %v6526
        %v7587 = vadd.f32 %v3445, %v6533
        %v7588 = vadd.f32 %v3452, %v6540
        %v7589 = vadd.f32 %v3459, %v6547
        %v7590 = vadd.f32 %v3466, %v6554
        %v7591 = vadd.f32 %v3473, %v6561
        %v7592 = vadd.f32 %v3480, %v6568
        %v7593 = vadd.f32 %v3487, %v6575
        %v7594 = vadd.f32 %v3494, %v6582
        %v7595 = vadd.f32 %v3501, %v6589
        %v7596 = vadd.f32 %v3508, %v6596
        %v7597 = vadd.f32 %v3515, %v6603
        %v7598 = vadd.f32 %v3522, %v6610
        %v7599 = vadd.f32 %v3529, %v6617
        %v7600 = vadd.f32 %v3536, %v6624
        %v7601 = vadd.f32 %v3543, %v6631
        %v7602 = vadd.f32 %v3550, %v6638
        %v7603 = vadd.f32 %v3557, %v6645
        %v7604 = vadd.f32 %v3564, %v6652
        %v7605 = vadd.f32 %v3571, %v6659
        %v7606 = vadd.f32 %v3578, %v6666
        %v7607 = vadd.f32 %v3585, %v6673
        %v7608 = vadd.f32 %v3592, %v6680
        %v7609 = vadd.f32 %v3599, %v6687
        %v7610 = vadd.f32 %v3606, %v6694
        %v7611 = vadd.f32 %v3613, %v6701
        %v7612 = vadd.f32 %v3620, %v6708
        %v7613 = vadd.f32 %v3627, %v6715
        %v7614 = vadd.f32 %v3634, %v6722
        %v7615 = vadd.f32 %v3641, %v6729
        %v7616 = vadd.f32 %v3648, %v6736
        %v7617 = vadd.f32 %v3655, %v6743
        %v7618 = vadd.f32 %v3662, %v6750
        %v7619 = vadd.f32 %v3669, %v6757
        %v7620 = vadd.f32 %v3676, %v6764
        %v7621 = vadd.f32 %v3683, %v6771
        %v7622 = vadd.f32 %v3690, %v6778
        %v7623 = vadd.f32 %v3697, %v6785
        %v7624 = vadd.f32 %v3704, %v6792
        %v7625 = vadd.f32 %v3711, %v6799
        %v7626 = vadd.f32 %v3718, %v6806
        %v7627 = vadd.f32 %v3725, %v6813
        %v7628 = vadd.f32 %v3732, %v6820
        %v7629 = vadd.f32 %v3739, %v6827
        %v7630 = vadd.f32 %v3746, %v6834
        %v7631 = vadd.f32 %v3753, %v6841
        %v7632 = vadd.f32 %v3760, %v6848
        %v7633 = vadd.f32 %v3767, %v6855
        %v7634 = vadd.f32 %v3774, %v6862
        %v7635 = vadd.f32 %v3781, %v6869
        %v7636 = vadd.f32 %v3788, %v6876
        %v7637 = vadd.f32 %v3795, %v6883
        %v7638 = vadd.f32 %v3802, %v6890
        %v7639 = vadd.f32 %v3809, %v6897
        %v7640 = vadd.f32 %v3816, %v6904
        %v7641 = vadd.f32 %v3823, %v6911
        %v7642 = vadd.f32 %v3830, %v6918
        %v7643 = vadd.f32 %v3837, %v6925
        %v7644 = vadd.f32 %v3844, %v6932
        %v7645 = vadd.f32 %v3851, %v6939
        %v7646 = vadd.f32 %v3858, %v6946
        %v7647 = vadd.f32 %v3865, %v6953
        %v7648 = vadd.f32 %v3872, %v6960
        %v7649 = vadd.f32 %v3879, %v6967
        %v7650 = vadd.f32 %v3886, %v6974
        %v7651 = vadd.f32 %v3893, %v6981
        %v7652 = vadd.f32 %v3900, %v6988
        %v7653 = vadd.f32 %v3907, %v6995
        %v7654 = vadd.f32 %v3914, %v7002
        %v7655 = vadd.f32 %v3921, %v7009
        %v7656 = vadd.f32 %v3928, %v7016
        %v7657 = vadd.f32 %v3935, %v7023
        %v7658 = vadd.f32 %v3942, %v7030
        %v7659 = vadd.f32 %v3949, %v7037
        %v7660 = vadd.f32 %v3956, %v7044
        %v7661 = vadd.f32 %v3963, %v7051
        %v7662 = vadd.f32 %v3970, %v7058
        %v7663 = vadd.f32 %v3977, %v7065
        %v7664 = vadd.f32 %v3984, %v7072
        %v7665 = vadd.f32 %v3991, %v7079
        %v7666 = vadd.f32 %v3998, %v7086
        %v7667 = vadd.f32 %v4005, %v7093
        %v7668 = vadd.f32 %v4012, %v7100
        %v7669 = vadd.f32 %v4019, %v7107
        %v7670 = vadd.f32 %v4026, %v7114
        %v7671 = vadd.f32 %v4033, %v7121
        %v7672 = vadd.f32 %v4040, %v7128
        %v7673 = vadd.f32 %v4047, %v7135
        %v7674 = vadd.f32 %v4054, %v7142
        %v7675 = vadd.f32 %v4061, %v7149
        %v7676 = vadd.f32 %v4068, %v7156
        %v7677 = vadd.f32 %v4075, %v7163
        %v7678 = vadd.f32 %v4082, %v7170
        %v7679 = vadd.f32 %v4089, %v7177
        %v7680 = vadd.f32 %v4096, %v7184
        %v7681 = vadd.f32 %v4103, %v7191
        %v7682 = vadd.f32 %v4110, %v7198
        %v7683 = vadd.f32 %v4117, %v7205
        %v7684 = vadd.f32 %v4124, %v7212
        %v7685 = vadd.f32 %v4131, %v7219
        %v7686 = vadd.f32 %v4138, %v7226
        %v7687 = vadd.f32 %v4145, %v7233
        %v7688 = vadd.f32 %v4152, %v7240
        %v7689 = vadd.f32 %v4159, %v7247
        %v7690 = vadd.f32 %v4166, %v7254
        %v7691 = vadd.f32 %v4173, %v7261
        %v7692 = vadd.f32 %v4180, %v7268
        %v7693 = vadd.f32 %v4187, %v7275
        %v7694 = vadd.f32 %v4194, %v7282
        %v7695 = vadd.f32 %v4201, %v7289
        %v7696 = vadd.f32 %v4208, %v7296
        %v7697 = vadd.f32 %v4215, %v7303
        %v7698 = vadd.f32 %v4222, %v7310
        %v7699 = vadd.f32 %v4229, %v7317
        %v7700 = vadd.f32 %v4236, %v7324
        %v7701 = vadd.f32 %v4243, %v7331
        %v7702 = vadd.f32 %v4250, %v7338
        %v7703 = vadd.f32 %v4257, %v7345
        %v7704 = vadd.f32 %v4264, %v7352
        %v7705 = vadd.f32 %v4271, %v7359
        %v7706 = vadd.f32 %v4278, %v7366
        %v7707 = vadd.f32 %v4285, %v7373
        %v7708 = vadd.f32 %v4292, %v7380
        %v7709 = vadd.f32 %v4299, %v7387
        %v7710 = vadd.f32 %v4306, %v7394
        %v7711 = vadd.f32 %v4313, %v7401
        %v7712 = vadd.f32 %v4320, %v7408
        %v7713 = vadd.f32 %v4327, %v7415
        %v7714 = vadd.f32 %v4334, %v7422
        %v7715 = vadd.f32 %v4341, %v7429
        %v7716 = vadd.f32 %v4348, %v7436
        %v7717 = vadd.f32 %v4355, %v7443
        %v7718 = vadd.f32 %v4362, %v7450
        %v7719 = vadd.f32 %v4369, %v7457
        %v7720 = vadd.f32 %v4376, %v7464
        %v7721 = vld [vmem:[#allocation7] sm:$0xff]
        %v7722 = vld [vmem:[#allocation7 + $0x8] sm:$0xff]
        %v7723 = vld [vmem:[#allocation7 + $0x10] sm:$0xff]
        %v7724 = vld [vmem:[#allocation7 + $0x18] sm:$0xff]
        %v7725 = vld [vmem:[#allocation7 + $0x20] sm:$0xff]
        %v7726 = vld [vmem:[#allocation7 + $0x28] sm:$0xff]
        %v7727 = vld [vmem:[#allocation7 + $0x30] sm:$0xff]
        %v7728 = vld [vmem:[#allocation7 + $0x38] sm:$0xff]
        %v7729 = vpack.c.bf16 %v7465, %v7465
        %v7730 = vpack.c.bf16 %v7466, %v7466
        %v7731 = vpack.c.bf16 %v7467, %v7467
        %v7732 = vpack.c.bf16 %v7468, %v7468
        %v7733 = vpack.c.bf16 %v7469, %v7469
        %v7734 = vpack.c.bf16 %v7470, %v7470
        %v7735 = vpack.c.bf16 %v7471, %v7471
        %v7736 = vpack.c.bf16 %v7472, %v7472
        %v7737 = vpack.c.bf16 %v7473, %v7473
        %v7738 = vpack.c.bf16 %v7474, %v7474
        %v7739 = vpack.c.bf16 %v7475, %v7475
        %v7740 = vpack.c.bf16 %v7476, %v7476
        %v7741 = vpack.c.bf16 %v7477, %v7477
        %v7742 = vpack.c.bf16 %v7478, %v7478
        %v7743 = vpack.c.bf16 %v7479, %v7479
        %v7744 = vpack.c.bf16 %v7480, %v7480
        %v7745 = vpack.c.bf16 %v7481, %v7481
        %v7746 = vpack.c.bf16 %v7482, %v7482
        %v7747 = vpack.c.bf16 %v7483, %v7483
        %v7748 = vpack.c.bf16 %v7484, %v7484
        %v7749 = vpack.c.bf16 %v7485, %v7485
        %v7750 = vpack.c.bf16 %v7486, %v7486
        %v7751 = vpack.c.bf16 %v7487, %v7487
        %v7752 = vpack.c.bf16 %v7488, %v7488
        %v7753 = vpack.c.bf16 %v7489, %v7489
        %v7754 = vpack.c.bf16 %v7490, %v7490
        %v7755 = vpack.c.bf16 %v7491, %v7491
        %v7756 = vpack.c.bf16 %v7492, %v7492
        %v7757 = vpack.c.bf16 %v7493, %v7493
        %v7758 = vpack.c.bf16 %v7494, %v7494
        %v7759 = vpack.c.bf16 %v7495, %v7495
        %v7760 = vpack.c.bf16 %v7496, %v7496
        %v7761 = vpack.c.bf16 %v7497, %v7497
        %v7762 = vpack.c.bf16 %v7498, %v7498
        %v7763 = vpack.c.bf16 %v7499, %v7499
        %v7764 = vpack.c.bf16 %v7500, %v7500
        %v7765 = vpack.c.bf16 %v7501, %v7501
        %v7766 = vpack.c.bf16 %v7502, %v7502
        %v7767 = vpack.c.bf16 %v7503, %v7503
        %v7768 = vpack.c.bf16 %v7504, %v7504
        %v7769 = vpack.c.bf16 %v7505, %v7505
        %v7770 = vpack.c.bf16 %v7506, %v7506
        %v7771 = vpack.c.bf16 %v7507, %v7507
        %v7772 = vpack.c.bf16 %v7508, %v7508
        %v7773 = vpack.c.bf16 %v7509, %v7509
        %v7774 = vpack.c.bf16 %v7510, %v7510
        %v7775 = vpack.c.bf16 %v7511, %v7511
        %v7776 = vpack.c.bf16 %v7512, %v7512
        %v7777 = vpack.c.bf16 %v7513, %v7513
        %v7778 = vpack.c.bf16 %v7514, %v7514
        %v7779 = vpack.c.bf16 %v7515, %v7515
        %v7780 = vpack.c.bf16 %v7516, %v7516
        %v7781 = vpack.c.bf16 %v7517, %v7517
        %v7782 = vpack.c.bf16 %v7518, %v7518
        %v7783 = vpack.c.bf16 %v7519, %v7519
        %v7784 = vpack.c.bf16 %v7520, %v7520
        %v7785 = vpack.c.bf16 %v7521, %v7521
        %v7786 = vpack.c.bf16 %v7522, %v7522
        %v7787 = vpack.c.bf16 %v7523, %v7523
        %v7788 = vpack.c.bf16 %v7524, %v7524
        %v7789 = vpack.c.bf16 %v7525, %v7525
        %v7790 = vpack.c.bf16 %v7526, %v7526
        %v7791 = vpack.c.bf16 %v7527, %v7527
        %v7792 = vpack.c.bf16 %v7528, %v7528
        %v7793 = vpack.c.bf16 %v7529, %v7529
        %v7794 = vpack.c.bf16 %v7530, %v7530
        %v7795 = vpack.c.bf16 %v7531, %v7531
        %v7796 = vpack.c.bf16 %v7532, %v7532
        %v7797 = vpack.c.bf16 %v7533, %v7533
        %v7798 = vpack.c.bf16 %v7534, %v7534
        %v7799 = vpack.c.bf16 %v7535, %v7535
        %v7800 = vpack.c.bf16 %v7536, %v7536
        %v7801 = vpack.c.bf16 %v7537, %v7537
        %v7802 = vpack.c.bf16 %v7538, %v7538
        %v7803 = vpack.c.bf16 %v7539, %v7539
        %v7804 = vpack.c.bf16 %v7540, %v7540
        %v7805 = vpack.c.bf16 %v7541, %v7541
        %v7806 = vpack.c.bf16 %v7542, %v7542
        %v7807 = vpack.c.bf16 %v7543, %v7543
        %v7808 = vpack.c.bf16 %v7544, %v7544
        %v7809 = vpack.c.bf16 %v7545, %v7545
        %v7810 = vpack.c.bf16 %v7546, %v7546
        %v7811 = vpack.c.bf16 %v7547, %v7547
        %v7812 = vpack.c.bf16 %v7548, %v7548
        %v7813 = vpack.c.bf16 %v7549, %v7549
        %v7814 = vpack.c.bf16 %v7550, %v7550
        %v7815 = vpack.c.bf16 %v7551, %v7551
        %v7816 = vpack.c.bf16 %v7552, %v7552
        %v7817 = vpack.c.bf16 %v7553, %v7553
        %v7818 = vpack.c.bf16 %v7554, %v7554
        %v7819 = vpack.c.bf16 %v7555, %v7555
        %v7820 = vpack.c.bf16 %v7556, %v7556
        %v7821 = vpack.c.bf16 %v7557, %v7557
        %v7822 = vpack.c.bf16 %v7558, %v7558
        %v7823 = vpack.c.bf16 %v7559, %v7559
        %v7824 = vpack.c.bf16 %v7560, %v7560
        %v7825 = vpack.c.bf16 %v7561, %v7561
        %v7826 = vpack.c.bf16 %v7562, %v7562
        %v7827 = vpack.c.bf16 %v7563, %v7563
        %v7828 = vpack.c.bf16 %v7564, %v7564
        %v7829 = vpack.c.bf16 %v7565, %v7565
        %v7830 = vpack.c.bf16 %v7566, %v7566
        %v7831 = vpack.c.bf16 %v7567, %v7567
        %v7832 = vpack.c.bf16 %v7568, %v7568
        %v7833 = vpack.c.bf16 %v7569, %v7569
        %v7834 = vpack.c.bf16 %v7570, %v7570
        %v7835 = vpack.c.bf16 %v7571, %v7571
        %v7836 = vpack.c.bf16 %v7572, %v7572
        %v7837 = vpack.c.bf16 %v7573, %v7573
        %v7838 = vpack.c.bf16 %v7574, %v7574
        %v7839 = vpack.c.bf16 %v7575, %v7575
        %v7840 = vpack.c.bf16 %v7576, %v7576
        %v7841 = vpack.c.bf16 %v7577, %v7577
        %v7842 = vpack.c.bf16 %v7578, %v7578
        %v7843 = vpack.c.bf16 %v7579, %v7579
        %v7844 = vpack.c.bf16 %v7580, %v7580
        %v7845 = vpack.c.bf16 %v7581, %v7581
        %v7846 = vpack.c.bf16 %v7582, %v7582
        %v7847 = vpack.c.bf16 %v7583, %v7583
        %v7848 = vpack.c.bf16 %v7584, %v7584
        %v7849 = vpack.c.bf16 %v7585, %v7585
        %v7850 = vpack.c.bf16 %v7586, %v7586
        %v7851 = vpack.c.bf16 %v7587, %v7587
        %v7852 = vpack.c.bf16 %v7588, %v7588
        %v7853 = vpack.c.bf16 %v7589, %v7589
        %v7854 = vpack.c.bf16 %v7590, %v7590
        %v7855 = vpack.c.bf16 %v7591, %v7591
        %v7856 = vpack.c.bf16 %v7592, %v7592
        %v7857 = vpack.c.bf16 %v7593, %v7593
        %v7858 = vpack.c.bf16 %v7594, %v7594
        %v7859 = vpack.c.bf16 %v7595, %v7595
        %v7860 = vpack.c.bf16 %v7596, %v7596
        %v7861 = vpack.c.bf16 %v7597, %v7597
        %v7862 = vpack.c.bf16 %v7598, %v7598
        %v7863 = vpack.c.bf16 %v7599, %v7599
        %v7864 = vpack.c.bf16 %v7600, %v7600
        %v7865 = vpack.c.bf16 %v7601, %v7601
        %v7866 = vpack.c.bf16 %v7602, %v7602
        %v7867 = vpack.c.bf16 %v7603, %v7603
        %v7868 = vpack.c.bf16 %v7604, %v7604
        %v7869 = vpack.c.bf16 %v7605, %v7605
        %v7870 = vpack.c.bf16 %v7606, %v7606
        %v7871 = vpack.c.bf16 %v7607, %v7607
        %v7872 = vpack.c.bf16 %v7608, %v7608
        %v7873 = vpack.c.bf16 %v7609, %v7609
        %v7874 = vpack.c.bf16 %v7610, %v7610
        %v7875 = vpack.c.bf16 %v7611, %v7611
        %v7876 = vpack.c.bf16 %v7612, %v7612
        %v7877 = vpack.c.bf16 %v7613, %v7613
        %v7878 = vpack.c.bf16 %v7614, %v7614
        %v7879 = vpack.c.bf16 %v7615, %v7615
        %v7880 = vpack.c.bf16 %v7616, %v7616
        %v7881 = vpack.c.bf16 %v7617, %v7617
        %v7882 = vpack.c.bf16 %v7618, %v7618
        %v7883 = vpack.c.bf16 %v7619, %v7619
        %v7884 = vpack.c.bf16 %v7620, %v7620
        %v7885 = vpack.c.bf16 %v7621, %v7621
        %v7886 = vpack.c.bf16 %v7622, %v7622
        %v7887 = vpack.c.bf16 %v7623, %v7623
        %v7888 = vpack.c.bf16 %v7624, %v7624
        %v7889 = vpack.c.bf16 %v7625, %v7625
        %v7890 = vpack.c.bf16 %v7626, %v7626
        %v7891 = vpack.c.bf16 %v7627, %v7627
        %v7892 = vpack.c.bf16 %v7628, %v7628
        %v7893 = vpack.c.bf16 %v7629, %v7629
        %v7894 = vpack.c.bf16 %v7630, %v7630
        %v7895 = vpack.c.bf16 %v7631, %v7631
        %v7896 = vpack.c.bf16 %v7632, %v7632
        %v7897 = vpack.c.bf16 %v7633, %v7633
        %v7898 = vpack.c.bf16 %v7634, %v7634
        %v7899 = vpack.c.bf16 %v7635, %v7635
        %v7900 = vpack.c.bf16 %v7636, %v7636
        %v7901 = vpack.c.bf16 %v7637, %v7637
        %v7902 = vpack.c.bf16 %v7638, %v7638
        %v7903 = vpack.c.bf16 %v7639, %v7639
        %v7904 = vpack.c.bf16 %v7640, %v7640
        %v7905 = vpack.c.bf16 %v7641, %v7641
        %v7906 = vpack.c.bf16 %v7642, %v7642
        %v7907 = vpack.c.bf16 %v7643, %v7643
        %v7908 = vpack.c.bf16 %v7644, %v7644
        %v7909 = vpack.c.bf16 %v7645, %v7645
        %v7910 = vpack.c.bf16 %v7646, %v7646
        %v7911 = vpack.c.bf16 %v7647, %v7647
        %v7912 = vpack.c.bf16 %v7648, %v7648
        %v7913 = vpack.c.bf16 %v7649, %v7649
        %v7914 = vpack.c.bf16 %v7650, %v7650
        %v7915 = vpack.c.bf16 %v7651, %v7651
        %v7916 = vpack.c.bf16 %v7652, %v7652
        %v7917 = vpack.c.bf16 %v7653, %v7653
        %v7918 = vpack.c.bf16 %v7654, %v7654
        %v7919 = vpack.c.bf16 %v7655, %v7655
        %v7920 = vpack.c.bf16 %v7656, %v7656
        %v7921 = vpack.c.bf16 %v7657, %v7657
        %v7922 = vpack.c.bf16 %v7658, %v7658
        %v7923 = vpack.c.bf16 %v7659, %v7659
        %v7924 = vpack.c.bf16 %v7660, %v7660
        %v7925 = vpack.c.bf16 %v7661, %v7661
        %v7926 = vpack.c.bf16 %v7662, %v7662
        %v7927 = vpack.c.bf16 %v7663, %v7663
        %v7928 = vpack.c.bf16 %v7664, %v7664
        %v7929 = vpack.c.bf16 %v7665, %v7665
        %v7930 = vpack.c.bf16 %v7666, %v7666
        %v7931 = vpack.c.bf16 %v7667, %v7667
        %v7932 = vpack.c.bf16 %v7668, %v7668
        %v7933 = vpack.c.bf16 %v7669, %v7669
        %v7934 = vpack.c.bf16 %v7670, %v7670
        %v7935 = vpack.c.bf16 %v7671, %v7671
        %v7936 = vpack.c.bf16 %v7672, %v7672
        %v7937 = vpack.c.bf16 %v7673, %v7673
        %v7938 = vpack.c.bf16 %v7674, %v7674
        %v7939 = vpack.c.bf16 %v7675, %v7675
        %v7940 = vpack.c.bf16 %v7676, %v7676
        %v7941 = vpack.c.bf16 %v7677, %v7677
        %v7942 = vpack.c.bf16 %v7678, %v7678
        %v7943 = vpack.c.bf16 %v7679, %v7679
        %v7944 = vpack.c.bf16 %v7680, %v7680
        %v7945 = vpack.c.bf16 %v7681, %v7681
        %v7946 = vpack.c.bf16 %v7682, %v7682
        %v7947 = vpack.c.bf16 %v7683, %v7683
        %v7948 = vpack.c.bf16 %v7684, %v7684
        %v7949 = vpack.c.bf16 %v7685, %v7685
        %v7950 = vpack.c.bf16 %v7686, %v7686
        %v7951 = vpack.c.bf16 %v7687, %v7687
        %v7952 = vpack.c.bf16 %v7688, %v7688
        %v7953 = vpack.c.bf16 %v7689, %v7689
        %v7954 = vpack.c.bf16 %v7690, %v7690
        %v7955 = vpack.c.bf16 %v7691, %v7691
        %v7956 = vpack.c.bf16 %v7692, %v7692
        %v7957 = vpack.c.bf16 %v7693, %v7693
        %v7958 = vpack.c.bf16 %v7694, %v7694
        %v7959 = vpack.c.bf16 %v7695, %v7695
        %v7960 = vpack.c.bf16 %v7696, %v7696
        %v7961 = vpack.c.bf16 %v7697, %v7697
        %v7962 = vpack.c.bf16 %v7698, %v7698
        %v7963 = vpack.c.bf16 %v7699, %v7699
        %v7964 = vpack.c.bf16 %v7700, %v7700
        %v7965 = vpack.c.bf16 %v7701, %v7701
        %v7966 = vpack.c.bf16 %v7702, %v7702
        %v7967 = vpack.c.bf16 %v7703, %v7703
        %v7968 = vpack.c.bf16 %v7704, %v7704
        %v7969 = vpack.c.bf16 %v7705, %v7705
        %v7970 = vpack.c.bf16 %v7706, %v7706
        %v7971 = vpack.c.bf16 %v7707, %v7707
        %v7972 = vpack.c.bf16 %v7708, %v7708
        %v7973 = vpack.c.bf16 %v7709, %v7709
        %v7974 = vpack.c.bf16 %v7710, %v7710
        %v7975 = vpack.c.bf16 %v7711, %v7711
        %v7976 = vpack.c.bf16 %v7712, %v7712
        %v7977 = vpack.c.bf16 %v7713, %v7713
        %v7978 = vpack.c.bf16 %v7714, %v7714
        %v7979 = vpack.c.bf16 %v7715, %v7715
        %v7980 = vpack.c.bf16 %v7716, %v7716
        %v7981 = vpack.c.bf16 %v7717, %v7717
        %v7982 = vpack.c.bf16 %v7718, %v7718
        %v7983 = vpack.c.bf16 %v7719, %v7719
        %v7984 = vpack.c.bf16 %v7720, %v7720
        %v7985 = vpack.c.bf16 %v7721, %v446
        %v7986 = vpack.c.bf16 %v7722, %v448
        %v7987 = vpack.c.bf16 %v7725, %v7723
        %v7988 = vpack.c.bf16 %v7726, %v7724
        %v7989 = vpack.c.bf16 %v7727, %v7727
        %v7990 = vpack.c.bf16 %v7728, %v7728
        %v8247 = vunpack.c.l.b16 %v7729
        %v8248 = vunpack.c.l.b16 %v7730
        %v8249 = vunpack.c.l.b16 %v7731
        %v8250 = vunpack.c.l.b16 %v7732
        %v8251 = vunpack.c.l.b16 %v7733
        %v8252 = vunpack.c.l.b16 %v7734
        %v8253 = vunpack.c.l.b16 %v7735
        %v8254 = vunpack.c.l.b16 %v7736
        %v8255 = vunpack.c.l.b16 %v7737
        %v8256 = vunpack.c.l.b16 %v7738
        %v8257 = vunpack.c.l.b16 %v7739
        %v8258 = vunpack.c.l.b16 %v7740
        %v8259 = vunpack.c.l.b16 %v7741
        %v8260 = vunpack.c.l.b16 %v7742
        %v8261 = vunpack.c.l.b16 %v7743
        %v8262 = vunpack.c.l.b16 %v7744
        %v8263 = vunpack.c.l.b16 %v7745
        %v8264 = vunpack.c.l.b16 %v7746
        %v8265 = vunpack.c.l.b16 %v7747
        %v8266 = vunpack.c.l.b16 %v7748
        %v8267 = vunpack.c.l.b16 %v7749
        %v8268 = vunpack.c.l.b16 %v7750
        %v8269 = vunpack.c.l.b16 %v7751
        %v8270 = vunpack.c.l.b16 %v7752
        %v8271 = vunpack.c.l.b16 %v7753
        %v8272 = vunpack.c.l.b16 %v7754
        %v8273 = vunpack.c.l.b16 %v7755
        %v8274 = vunpack.c.l.b16 %v7756
        %v8275 = vunpack.c.l.b16 %v7757
        %v8276 = vunpack.c.l.b16 %v7758
        %v8277 = vunpack.c.l.b16 %v7759
        %v8278 = vunpack.c.l.b16 %v7760
        %v8279 = vunpack.c.l.b16 %v7761
        %v8280 = vunpack.c.l.b16 %v7762
        %v8281 = vunpack.c.l.b16 %v7763
        %v8282 = vunpack.c.l.b16 %v7764
        %v8283 = vunpack.c.l.b16 %v7765
        %v8284 = vunpack.c.l.b16 %v7766
        %v8285 = vunpack.c.l.b16 %v7767
        %v8286 = vunpack.c.l.b16 %v7768
        %v8287 = vunpack.c.l.b16 %v7769
        %v8288 = vunpack.c.l.b16 %v7770
        %v8289 = vunpack.c.l.b16 %v7771
        %v8290 = vunpack.c.l.b16 %v7772
        %v8291 = vunpack.c.l.b16 %v7773
        %v8292 = vunpack.c.l.b16 %v7774
        %v8293 = vunpack.c.l.b16 %v7775
        %v8294 = vunpack.c.l.b16 %v7776
        %v8295 = vunpack.c.l.b16 %v7777
        %v8296 = vunpack.c.l.b16 %v7778
        %v8297 = vunpack.c.l.b16 %v7779
        %v8298 = vunpack.c.l.b16 %v7780
        %v8299 = vunpack.c.l.b16 %v7781
        %v8300 = vunpack.c.l.b16 %v7782
        %v8301 = vunpack.c.l.b16 %v7783
        %v8302 = vunpack.c.l.b16 %v7784
        %v8303 = vunpack.c.l.b16 %v7785
        %v8304 = vunpack.c.l.b16 %v7786
        %v8305 = vunpack.c.l.b16 %v7787
        %v8306 = vunpack.c.l.b16 %v7788
        %v8307 = vunpack.c.l.b16 %v7789
        %v8308 = vunpack.c.l.b16 %v7790
        %v8309 = vunpack.c.l.b16 %v7791
        %v8310 = vunpack.c.l.b16 %v7792
        %v8311 = vunpack.c.l.b16 %v7793
        %v8312 = vunpack.c.l.b16 %v7794
        %v8313 = vunpack.c.l.b16 %v7795
        %v8314 = vunpack.c.l.b16 %v7796
        %v8315 = vunpack.c.l.b16 %v7797
        %v8316 = vunpack.c.l.b16 %v7798
        %v8317 = vunpack.c.l.b16 %v7799
        %v8318 = vunpack.c.l.b16 %v7800
        %v8319 = vunpack.c.l.b16 %v7801
        %v8320 = vunpack.c.l.b16 %v7802
        %v8321 = vunpack.c.l.b16 %v7803
        %v8322 = vunpack.c.l.b16 %v7804
        %v8323 = vunpack.c.l.b16 %v7805
        %v8324 = vunpack.c.l.b16 %v7806
        %v8325 = vunpack.c.l.b16 %v7807
        %v8326 = vunpack.c.l.b16 %v7808
        %v8327 = vunpack.c.l.b16 %v7809
        %v8328 = vunpack.c.l.b16 %v7810
        %v8329 = vunpack.c.l.b16 %v7811
        %v8330 = vunpack.c.l.b16 %v7812
        %v8331 = vunpack.c.l.b16 %v7813
        %v8332 = vunpack.c.l.b16 %v7814
        %v8333 = vunpack.c.l.b16 %v7815
        %v8334 = vunpack.c.l.b16 %v7816
        %v8335 = vunpack.c.l.b16 %v7817
        %v8336 = vunpack.c.l.b16 %v7818
        %v8337 = vunpack.c.l.b16 %v7819
        %v8338 = vunpack.c.l.b16 %v7820
        %v8339 = vunpack.c.l.b16 %v7821
        %v8340 = vunpack.c.l.b16 %v7822
        %v8341 = vunpack.c.l.b16 %v7823
        %v8342 = vunpack.c.l.b16 %v7824
        %v8343 = vunpack.c.l.b16 %v7825
        %v8344 = vunpack.c.l.b16 %v7826
        %v8345 = vunpack.c.l.b16 %v7827
        %v8346 = vunpack.c.l.b16 %v7828
        %v8347 = vunpack.c.l.b16 %v7829
        %v8348 = vunpack.c.l.b16 %v7830
        %v8349 = vunpack.c.l.b16 %v7831
        %v8350 = vunpack.c.l.b16 %v7832
        %v8351 = vunpack.c.l.b16 %v7833
        %v8352 = vunpack.c.l.b16 %v7834
        %v8353 = vunpack.c.l.b16 %v7835
        %v8354 = vunpack.c.l.b16 %v7836
        %v8355 = vunpack.c.l.b16 %v7837
        %v8356 = vunpack.c.l.b16 %v7838
        %v8357 = vunpack.c.l.b16 %v7839
        %v8358 = vunpack.c.l.b16 %v7840
        %v8359 = vunpack.c.l.b16 %v7841
        %v8360 = vunpack.c.l.b16 %v7842
        %v8361 = vunpack.c.l.b16 %v7843
        %v8362 = vunpack.c.l.b16 %v7844
        %v8363 = vunpack.c.l.b16 %v7845
        %v8364 = vunpack.c.l.b16 %v7846
        %v8365 = vunpack.c.l.b16 %v7847
        %v8366 = vunpack.c.l.b16 %v7848
        %v8367 = vunpack.c.l.b16 %v7849
        %v8368 = vunpack.c.l.b16 %v7850
        %v8369 = vunpack.c.l.b16 %v7851
        %v8370 = vunpack.c.l.b16 %v7852
        %v8371 = vunpack.c.l.b16 %v7853
        %v8372 = vunpack.c.l.b16 %v7854
        %v8373 = vunpack.c.l.b16 %v7855
        %v8374 = vunpack.c.l.b16 %v7856
        %v8375 = vunpack.c.l.b16 %v7857
        %v8376 = vunpack.c.l.b16 %v7858
        %v8377 = vunpack.c.l.b16 %v7859
        %v8378 = vunpack.c.l.b16 %v7860
        %v8379 = vunpack.c.l.b16 %v7861
        %v8380 = vunpack.c.l.b16 %v7862
        %v8381 = vunpack.c.l.b16 %v7863
        %v8382 = vunpack.c.l.b16 %v7864
        %v8383 = vunpack.c.l.b16 %v7865
        %v8384 = vunpack.c.l.b16 %v7866
        %v8385 = vunpack.c.l.b16 %v7867
        %v8386 = vunpack.c.l.b16 %v7868
        %v8387 = vunpack.c.l.b16 %v7869
        %v8388 = vunpack.c.l.b16 %v7870
        %v8389 = vunpack.c.l.b16 %v7871
        %v8390 = vunpack.c.l.b16 %v7872
        %v8391 = vunpack.c.l.b16 %v7873
        %v8392 = vunpack.c.l.b16 %v7874
        %v8393 = vunpack.c.l.b16 %v7875
        %v8394 = vunpack.c.l.b16 %v7876
        %v8395 = vunpack.c.l.b16 %v7877
        %v8396 = vunpack.c.l.b16 %v7878
        %v8397 = vunpack.c.l.b16 %v7879
        %v8398 = vunpack.c.l.b16 %v7880
        %v8399 = vunpack.c.l.b16 %v7881
        %v8400 = vunpack.c.l.b16 %v7882
        %v8401 = vunpack.c.l.b16 %v7883
        %v8402 = vunpack.c.l.b16 %v7884
        %v8403 = vunpack.c.l.b16 %v7885
        %v8404 = vunpack.c.l.b16 %v7886
        %v8405 = vunpack.c.l.b16 %v7887
        %v8406 = vunpack.c.l.b16 %v7888
        %v8407 = vunpack.c.l.b16 %v7889
        %v8408 = vunpack.c.l.b16 %v7890
        %v8409 = vunpack.c.l.b16 %v7891
        %v8410 = vunpack.c.l.b16 %v7892
        %v8411 = vunpack.c.l.b16 %v7893
        %v8412 = vunpack.c.l.b16 %v7894
        %v8413 = vunpack.c.l.b16 %v7895
        %v8414 = vunpack.c.l.b16 %v7896
        %v8415 = vunpack.c.l.b16 %v7897
        %v8416 = vunpack.c.l.b16 %v7898
        %v8417 = vunpack.c.l.b16 %v7899
        %v8418 = vunpack.c.l.b16 %v7900
        %v8419 = vunpack.c.l.b16 %v7901
        %v8420 = vunpack.c.l.b16 %v7902
        %v8421 = vunpack.c.l.b16 %v7903
        %v8422 = vunpack.c.l.b16 %v7904
        %v8423 = vunpack.c.l.b16 %v7905
        %v8424 = vunpack.c.l.b16 %v7906
        %v8425 = vunpack.c.l.b16 %v7907
        %v8426 = vunpack.c.l.b16 %v7908
        %v8427 = vunpack.c.l.b16 %v7909
        %v8428 = vunpack.c.l.b16 %v7910
        %v8429 = vunpack.c.l.b16 %v7911
        %v8430 = vunpack.c.l.b16 %v7912
        %v8431 = vunpack.c.l.b16 %v7913
        %v8432 = vunpack.c.l.b16 %v7914
        %v8433 = vunpack.c.l.b16 %v7915
        %v8434 = vunpack.c.l.b16 %v7916
        %v8435 = vunpack.c.l.b16 %v7917
        %v8436 = vunpack.c.l.b16 %v7918
        %v8437 = vunpack.c.l.b16 %v7919
        %v8438 = vunpack.c.l.b16 %v7920
        %v8439 = vunpack.c.l.b16 %v7921
        %v8440 = vunpack.c.l.b16 %v7922
        %v8441 = vunpack.c.l.b16 %v7923
        %v8442 = vunpack.c.l.b16 %v7924
        %v8443 = vunpack.c.l.b16 %v7925
        %v8444 = vunpack.c.l.b16 %v7926
        %v8445 = vunpack.c.l.b16 %v7927
        %v8446 = vunpack.c.l.b16 %v7928
        %v8447 = vunpack.c.l.b16 %v7929
        %v8448 = vunpack.c.l.b16 %v7930
        %v8449 = vunpack.c.l.b16 %v7931
        %v8450 = vunpack.c.l.b16 %v7932
        %v8451 = vunpack.c.l.b16 %v7933
        %v8452 = vunpack.c.l.b16 %v7934
        %v8453 = vunpack.c.l.b16 %v7935
        %v8454 = vunpack.c.l.b16 %v7936
        %v8455 = vunpack.c.l.b16 %v7937
        %v8456 = vunpack.c.l.b16 %v7938
        %v8457 = vunpack.c.l.b16 %v7939
        %v8458 = vunpack.c.l.b16 %v7940
        %v8459 = vunpack.c.l.b16 %v7941
        %v8460 = vunpack.c.l.b16 %v7942
        %v8461 = vunpack.c.l.b16 %v7943
        %v8462 = vunpack.c.l.b16 %v7944
        %v8463 = vunpack.c.l.b16 %v7945
        %v8464 = vunpack.c.l.b16 %v7946
        %v8465 = vunpack.c.l.b16 %v7947
        %v8466 = vunpack.c.l.b16 %v7948
        %v8467 = vunpack.c.l.b16 %v7949
        %v8468 = vunpack.c.l.b16 %v7950
        %v8469 = vunpack.c.l.b16 %v7951
        %v8470 = vunpack.c.l.b16 %v7952
        %v8471 = vunpack.c.l.b16 %v7953
        %v8472 = vunpack.c.l.b16 %v7954
        %v8473 = vunpack.c.l.b16 %v7955
        %v8474 = vunpack.c.l.b16 %v7956
        %v8475 = vunpack.c.l.b16 %v7957
        %v8476 = vunpack.c.l.b16 %v7958
        %v8477 = vunpack.c.l.b16 %v7959
        %v8478 = vunpack.c.l.b16 %v7960
        %v8479 = vunpack.c.l.b16 %v7961
        %v8480 = vunpack.c.l.b16 %v7962
        %v8481 = vunpack.c.l.b16 %v7963
        %v8482 = vunpack.c.l.b16 %v7964
        %v8483 = vunpack.c.l.b16 %v7965
        %v8484 = vunpack.c.l.b16 %v7966
        %v8485 = vunpack.c.l.b16 %v7967
        %v8486 = vunpack.c.l.b16 %v7968
        %v8487 = vunpack.c.l.b16 %v7969
        %v8488 = vunpack.c.l.b16 %v7970
        %v8489 = vunpack.c.l.b16 %v7971
        %v8490 = vunpack.c.l.b16 %v7972
        %v8491 = vunpack.c.l.b16 %v7973
        %v8492 = vunpack.c.l.b16 %v7974
        %v8493 = vunpack.c.l.b16 %v7975
        %v8494 = vunpack.c.l.b16 %v7976
        %v8495 = vunpack.c.l.b16 %v7977
        %v8496 = vunpack.c.l.b16 %v7978
        %v8497 = vunpack.c.l.b16 %v7979
        %v8498 = vunpack.c.l.b16 %v7980
        %v8499 = vunpack.c.l.b16 %v7981
        %v8500 = vunpack.c.l.b16 %v7982
        %v8501 = vunpack.c.l.b16 %v7983
        %v8502 = vunpack.c.l.b16 %v7984
        %vm8503 = vcmask 1041409
        %v8504 = vsel %vm8503, %v8248, %v8247
        %vm8505 = vcmask 1042434
        %v8506 = vsel %vm8505, %v8249, %v8504
        %vm8507 = vcmask 1043459
        %v8508 = vsel %vm8507, %v8250, %v8506
        %vm8509 = vcmask 1044484
        %v8510 = vsel %vm8509, %v8251, %v8508
        %vm8511 = vcmask 1045509
        %v8512 = vsel %vm8511, %v8252, %v8510
        %vm8513 = vcmask 1046534
        %v8514 = vsel %vm8513, %v8253, %v8512
        %vm8515 = vcmask 1047559
        %v8516 = vsel %vm8515, %v8254, %v8514
        %v8517 = vsel %vm8503, %v8256, %v8255
        %v8518 = vsel %vm8505, %v8257, %v8517
        %v8519 = vsel %vm8507, %v8258, %v8518
        %v8520 = vsel %vm8509, %v8259, %v8519
        %v8521 = vsel %vm8511, %v8260, %v8520
        %v8522 = vsel %vm8513, %v8261, %v8521
        %v8523 = vsel %vm8515, %v8262, %v8522
        %v8524 = vsel %vm8503, %v8264, %v8263
        %v8525 = vsel %vm8505, %v8265, %v8524
        %v8526 = vsel %vm8507, %v8266, %v8525
        %v8527 = vsel %vm8509, %v8267, %v8526
        %v8528 = vsel %vm8511, %v8268, %v8527
        %v8529 = vsel %vm8513, %v8269, %v8528
        %v8530 = vsel %vm8515, %v8270, %v8529
        %v8531 = vsel %vm8503, %v8272, %v8271
        %v8532 = vsel %vm8505, %v8273, %v8531
        %v8533 = vsel %vm8507, %v8274, %v8532
        %v8534 = vsel %vm8509, %v8275, %v8533
        %v8535 = vsel %vm8511, %v8276, %v8534
        %v8536 = vsel %vm8513, %v8277, %v8535
        %v8537 = vsel %vm8515, %v8278, %v8536
        %v8538 = vsel %vm8503, %v8280, %v8279
        %v8539 = vsel %vm8505, %v8281, %v8538
        %v8540 = vsel %vm8507, %v8282, %v8539
        %v8541 = vsel %vm8509, %v8283, %v8540
        %v8542 = vsel %vm8511, %v8284, %v8541
        %v8543 = vsel %vm8513, %v8285, %v8542
        %v8544 = vsel %vm8515, %v8286, %v8543
        %v8545 = vsel %vm8503, %v8288, %v8287
        %v8546 = vsel %vm8505, %v8289, %v8545
        %v8547 = vsel %vm8507, %v8290, %v8546
        %v8548 = vsel %vm8509, %v8291, %v8547
        %v8549 = vsel %vm8511, %v8292, %v8548
        %v8550 = vsel %vm8513, %v8293, %v8549
        %v8551 = vsel %vm8515, %v8294, %v8550
        %v8552 = vsel %vm8503, %v8296, %v8295
        %v8553 = vsel %vm8505, %v8297, %v8552
        %v8554 = vsel %vm8507, %v8298, %v8553
        %v8555 = vsel %vm8509, %v8299, %v8554
        %v8556 = vsel %vm8511, %v8300, %v8555
        %v8557 = vsel %vm8513, %v8301, %v8556
        %v8558 = vsel %vm8515, %v8302, %v8557
        %v8559 = vsel %vm8503, %v8304, %v8303
        %v8560 = vsel %vm8505, %v8305, %v8559
        %v8561 = vsel %vm8507, %v8306, %v8560
        %v8562 = vsel %vm8509, %v8307, %v8561
        %v8563 = vsel %vm8511, %v8308, %v8562
        %v8564 = vsel %vm8513, %v8309, %v8563
        %v8565 = vsel %vm8515, %v8310, %v8564
        %v8566 = vsel %vm8503, %v8312, %v8311
        %v8567 = vsel %vm8505, %v8313, %v8566
        %v8568 = vsel %vm8507, %v8314, %v8567
        %v8569 = vsel %vm8509, %v8315, %v8568
        %v8570 = vsel %vm8511, %v8316, %v8569
        %v8571 = vsel %vm8513, %v8317, %v8570
        %v8572 = vsel %vm8515, %v8318, %v8571
        %v8573 = vsel %vm8503, %v8320, %v8319
        %v8574 = vsel %vm8505, %v8321, %v8573
        %v8575 = vsel %vm8507, %v8322, %v8574
        %v8576 = vsel %vm8509, %v8323, %v8575
        %v8577 = vsel %vm8511, %v8324, %v8576
        %v8578 = vsel %vm8513, %v8325, %v8577
        %v8579 = vsel %vm8515, %v8326, %v8578
        %v8580 = vsel %vm8503, %v8328, %v8327
        %v8581 = vsel %vm8505, %v8329, %v8580
        %v8582 = vsel %vm8507, %v8330, %v8581
        %v8583 = vsel %vm8509, %v8331, %v8582
        %v8584 = vsel %vm8511, %v8332, %v8583
        %v8585 = vsel %vm8513, %v8333, %v8584
        %v8586 = vsel %vm8515, %v8334, %v8585
        %v8587 = vsel %vm8503, %v8336, %v8335
        %v8588 = vsel %vm8505, %v8337, %v8587
        %v8589 = vsel %vm8507, %v8338, %v8588
        %v8590 = vsel %vm8509, %v8339, %v8589
        %v8591 = vsel %vm8511, %v8340, %v8590
        %v8592 = vsel %vm8513, %v8341, %v8591
        %v8593 = vsel %vm8515, %v8342, %v8592
        %v8594 = vsel %vm8503, %v8344, %v8343
        %v8595 = vsel %vm8505, %v8345, %v8594
        %v8596 = vsel %vm8507, %v8346, %v8595
        %v8597 = vsel %vm8509, %v8347, %v8596
        %v8598 = vsel %vm8511, %v8348, %v8597
        %v8599 = vsel %vm8513, %v8349, %v8598
        %v8600 = vsel %vm8515, %v8350, %v8599
        %v8601 = vsel %vm8503, %v8352, %v8351
        %v8602 = vsel %vm8505, %v8353, %v8601
        %v8603 = vsel %vm8507, %v8354, %v8602
        %v8604 = vsel %vm8509, %v8355, %v8603
        %v8605 = vsel %vm8511, %v8356, %v8604
        %v8606 = vsel %vm8513, %v8357, %v8605
        %v8607 = vsel %vm8515, %v8358, %v8606
        %v8608 = vsel %vm8503, %v8360, %v8359
        %v8609 = vsel %vm8505, %v8361, %v8608
        %v8610 = vsel %vm8507, %v8362, %v8609
        %v8611 = vsel %vm8509, %v8363, %v8610
        %v8612 = vsel %vm8511, %v8364, %v8611
        %v8613 = vsel %vm8513, %v8365, %v8612
        %v8614 = vsel %vm8515, %v8366, %v8613
        %v8615 = vsel %vm8503, %v8368, %v8367
        %v8616 = vsel %vm8505, %v8369, %v8615
        %v8617 = vsel %vm8507, %v8370, %v8616
        %v8618 = vsel %vm8509, %v8371, %v8617
        %v8619 = vsel %vm8511, %v8372, %v8618
        %v8620 = vsel %vm8513, %v8373, %v8619
        %v8621 = vsel %vm8515, %v8374, %v8620
        %v8622 = vsel %vm8503, %v8376, %v8375
        %v8623 = vsel %vm8505, %v8377, %v8622
        %v8624 = vsel %vm8507, %v8378, %v8623
        %v8625 = vsel %vm8509, %v8379, %v8624
        %v8626 = vsel %vm8511, %v8380, %v8625
        %v8627 = vsel %vm8513, %v8381, %v8626
        %v8628 = vsel %vm8515, %v8382, %v8627
        %v8629 = vsel %vm8503, %v8384, %v8383
        %v8630 = vsel %vm8505, %v8385, %v8629
        %v8631 = vsel %vm8507, %v8386, %v8630
        %v8632 = vsel %vm8509, %v8387, %v8631
        %v8633 = vsel %vm8511, %v8388, %v8632
        %v8634 = vsel %vm8513, %v8389, %v8633
        %v8635 = vsel %vm8515, %v8390, %v8634
        %v8636 = vsel %vm8503, %v8392, %v8391
        %v8637 = vsel %vm8505, %v8393, %v8636
        %v8638 = vsel %vm8507, %v8394, %v8637
        %v8639 = vsel %vm8509, %v8395, %v8638
        %v8640 = vsel %vm8511, %v8396, %v8639
        %v8641 = vsel %vm8513, %v8397, %v8640
        %v8642 = vsel %vm8515, %v8398, %v8641
        %v8643 = vsel %vm8503, %v8400, %v8399
        %v8644 = vsel %vm8505, %v8401, %v8643
        %v8645 = vsel %vm8507, %v8402, %v8644
        %v8646 = vsel %vm8509, %v8403, %v8645
        %v8647 = vsel %vm8511, %v8404, %v8646
        %v8648 = vsel %vm8513, %v8405, %v8647
        %v8649 = vsel %vm8515, %v8406, %v8648
        %v8650 = vsel %vm8503, %v8408, %v8407
        %v8651 = vsel %vm8505, %v8409, %v8650
        %v8652 = vsel %vm8507, %v8410, %v8651
        %v8653 = vsel %vm8509, %v8411, %v8652
        %v8654 = vsel %vm8511, %v8412, %v8653
        %v8655 = vsel %vm8513, %v8413, %v8654
        %v8656 = vsel %vm8515, %v8414, %v8655
        %v8657 = vsel %vm8503, %v8416, %v8415
        %v8658 = vsel %vm8505, %v8417, %v8657
        %v8659 = vsel %vm8507, %v8418, %v8658
        %v8660 = vsel %vm8509, %v8419, %v8659
        %v8661 = vsel %vm8511, %v8420, %v8660
        %v8662 = vsel %vm8513, %v8421, %v8661
        %v8663 = vsel %vm8515, %v8422, %v8662
        %v8664 = vsel %vm8503, %v8424, %v8423
        %v8665 = vsel %vm8505, %v8425, %v8664
        %v8666 = vsel %vm8507, %v8426, %v8665
        %v8667 = vsel %vm8509, %v8427, %v8666
        %v8668 = vsel %vm8511, %v8428, %v8667
        %v8669 = vsel %vm8513, %v8429, %v8668
        %v8670 = vsel %vm8515, %v8430, %v8669
        %v8671 = vsel %vm8503, %v8432, %v8431
        %v8672 = vsel %vm8505, %v8433, %v8671
        %v8673 = vsel %vm8507, %v8434, %v8672
        %v8674 = vsel %vm8509, %v8435, %v8673
        %v8675 = vsel %vm8511, %v8436, %v8674
        %v8676 = vsel %vm8513, %v8437, %v8675
        %v8677 = vsel %vm8515, %v8438, %v8676
        %v8678 = vsel %vm8503, %v8440, %v8439
        %v8679 = vsel %vm8505, %v8441, %v8678
        %v8680 = vsel %vm8507, %v8442, %v8679
        %v8681 = vsel %vm8509, %v8443, %v8680
        %v8682 = vsel %vm8511, %v8444, %v8681
        %v8683 = vsel %vm8513, %v8445, %v8682
        %v8684 = vsel %vm8515, %v8446, %v8683
        %v8685 = vsel %vm8503, %v8448, %v8447
        %v8686 = vsel %vm8505, %v8449, %v8685
        %v8687 = vsel %vm8507, %v8450, %v8686
        %v8688 = vsel %vm8509, %v8451, %v8687
        %v8689 = vsel %vm8511, %v8452, %v8688
        %v8690 = vsel %vm8513, %v8453, %v8689
        %v8691 = vsel %vm8515, %v8454, %v8690
        %v8692 = vsel %vm8503, %v8456, %v8455
        %v8693 = vsel %vm8505, %v8457, %v8692
        %v8694 = vsel %vm8507, %v8458, %v8693
        %v8695 = vsel %vm8509, %v8459, %v8694
        %v8696 = vsel %vm8511, %v8460, %v8695
        %v8697 = vsel %vm8513, %v8461, %v8696
        %v8698 = vsel %vm8515, %v8462, %v8697
        %v8699 = vsel %vm8503, %v8464, %v8463
        %v8700 = vsel %vm8505, %v8465, %v8699
        %v8701 = vsel %vm8507, %v8466, %v8700
        %v8702 = vsel %vm8509, %v8467, %v8701
        %v8703 = vsel %vm8511, %v8468, %v8702
        %v8704 = vsel %vm8513, %v8469, %v8703
        %v8705 = vsel %vm8515, %v8470, %v8704
        %v8706 = vsel %vm8503, %v8472, %v8471
        %v8707 = vsel %vm8505, %v8473, %v8706
        %v8708 = vsel %vm8507, %v8474, %v8707
        %v8709 = vsel %vm8509, %v8475, %v8708
        %v8710 = vsel %vm8511, %v8476, %v8709
        %v8711 = vsel %vm8513, %v8477, %v8710
        %v8712 = vsel %vm8515, %v8478, %v8711
        %v8713 = vsel %vm8503, %v8480, %v8479
        %v8714 = vsel %vm8505, %v8481, %v8713
        %v8715 = vsel %vm8507, %v8482, %v8714
        %v8716 = vsel %vm8509, %v8483, %v8715
        %v8717 = vsel %vm8511, %v8484, %v8716
        %v8718 = vsel %vm8513, %v8485, %v8717
        %v8719 = vsel %vm8515, %v8486, %v8718
        %v8720 = vsel %vm8503, %v8488, %v8487
        %v8721 = vsel %vm8505, %v8489, %v8720
        %v8722 = vsel %vm8507, %v8490, %v8721
        %v8723 = vsel %vm8509, %v8491, %v8722
        %v8724 = vsel %vm8511, %v8492, %v8723
        %v8725 = vsel %vm8513, %v8493, %v8724
        %v8726 = vsel %vm8515, %v8494, %v8725
        %v8727 = vsel %vm8503, %v8496, %v8495
        %v8728 = vsel %vm8505, %v8497, %v8727
        %v8729 = vsel %vm8507, %v8498, %v8728
        %v8730 = vsel %vm8509, %v8499, %v8729
        %v8731 = vsel %vm8511, %v8500, %v8730
        %v8732 = vsel %vm8513, %v8501, %v8731
        %v8733 = vsel %vm8515, %v8502, %v8732
        %v8734 = vpack.c.b16 %v8523, %v8516
        %v8735 = vpack.c.b16 %v8537, %v8530
        %v8736 = vpack.c.b16 %v8551, %v8544
        %v8737 = vpack.c.b16 %v8565, %v8558
        %v8738 = vpack.c.b16 %v8579, %v8572
        %v8739 = vpack.c.b16 %v8593, %v8586
        %v8740 = vpack.c.b16 %v8607, %v8600
        %v8741 = vpack.c.b16 %v8621, %v8614
        %v8742 = vpack.c.b16 %v8635, %v8628
        %v8743 = vpack.c.b16 %v8649, %v8642
        %v8744 = vpack.c.b16 %v8663, %v8656
        %v8745 = vpack.c.b16 %v8677, %v8670
        %v8746 = vpack.c.b16 %v8691, %v8684
        %v8747 = vpack.c.b16 %v8705, %v8698
        %v8748 = vpack.c.b16 %v8719, %v8712
        %v8749 = vpack.c.b16 %v8733, %v8726
        %vm8750 = vcmask 326656
        %v8752 = vsel %vm8750, %v8734, 0
        %v8755 = vsel %vm8750, %v8735, 0
        %v8758 = vsel %vm8750, %v8736, 0
        %v8761 = vsel %vm8750, %v8737, 0
        %v8764 = vsel %vm8750, %v8738, 0
        %v8767 = vsel %vm8750, %v8739, 0
        %v8770 = vsel %vm8750, %v8740, 0
        %v8773 = vsel %vm8750, %v8741, 0
        %v8776 = vsel %vm8750, %v8742, 0
        %v8779 = vsel %vm8750, %v8743, 0
        %v8782 = vsel %vm8750, %v8744, 0
        %v8785 = vsel %vm8750, %v8745, 0
        %v8788 = vsel %vm8750, %v8746, 0
        %v8791 = vsel %vm8750, %v8747, 0
        %v8794 = vsel %vm8750, %v8748, 0
        %v8797 = vsel %vm8750, %v8749, 0
        %v8800 = vsel %vm368, %v7989, 0
        %v8803 = vsel %vm368, %v7990, 0
        %8805 = vmatprep.subr.bf16.mxu0 0
        %8806 = vmatpush1.bf16.msra.mxu0 0
        %8807 = vmatprep.subr.bf16.mxu0 0
        %8808 = vmatpush1.bf16.msra.mxu0 0
        %8809 = vmatprep.subr.bf16.mxu0 0
        %8810 = vmatpush1.bf16.msra.mxu0 0
        %8811 = vmatprep.subr.bf16.mxu0 0
        %8812 = vmatpush1.bf16.msra.mxu0 0
        %8813 = vmatprep.subr.bf16.mxu0 0
        %8814 = vmatpush1.bf16.msra.mxu0 0
        %8815 = vmatprep.subr.bf16.mxu0 %v8803
        %8816 = vmatpush1.bf16.msra.mxu0 %v8800
        %8817 = vmatprep.subr.bf16.mxu0 %v7988
        %8818 = vmatpush1.bf16.msra.mxu0 %v7987
        %8819 = vmatprep.subr.bf16.mxu0 %v7986
        %8820 = vmatpush1.bf16.msra.mxu0 %v7985
        %8821 = vmatprep.subr.bf16.mxu0 0
        %8822 = vmatpush2.bf16.msra.mxu0 0
        %8823 = vmatprep.subr.bf16.mxu0 0
        %8824 = vmatpush2.bf16.msra.mxu0 0
        %8825 = vmatprep.subr.bf16.mxu0 0
        %8826 = vmatpush2.bf16.msra.mxu0 0
        %8827 = vmatprep.subr.bf16.mxu0 0
        %8828 = vmatpush2.bf16.msra.mxu0 0
        %8829 = vmatprep.subr.bf16.mxu0 0
        %8830 = vmatpush2.bf16.msra.mxu0 0
        %8831 = vmatprep.subr.bf16.mxu0 0
        %8832 = vmatpush2.bf16.msra.mxu0 0
        %8833 = vmatprep.subr.bf16.mxu0 0
        %8834 = vmatpush2.bf16.msra.mxu0 0
        %8835 = vmatprep.subr.bf16.mxu0 0
        %8836 = vmatpush2.bf16.msra.mxu0 0
        %8837 = vmatprep.mubr.bf16.mxu0 0
        %8838 = vmatmul.mubr.bf16.gmra.mxu0 %v8752
        %v8839 = vpop.f32.mrf.mxu0
        %v8840 = vadd.f32 0.0, %v8839
        %v8841 = vpop.f32.mrf.mxu0
        %v8842 = vadd.f32 0.0, %v8841
        %v8843 = vpop.f32.mrf.mxu0
        %v8844 = vadd.f32 0.0, %v8843
        %v8845 = vpop.f32.mrf.mxu0
        %v8846 = vadd.f32 0.0, %v8845
        %8847 = vmatprep.mubr.bf16.mxu0 0
        %8848 = vmatmul.mubr.bf16.gmra.mxu0 %v8755
        %v8849 = vpop.f32.mrf.mxu0
        %v8850 = vadd.f32 0.0, %v8849
        %v8851 = vpop.f32.mrf.mxu0
        %v8852 = vadd.f32 0.0, %v8851
        %v8853 = vpop.f32.mrf.mxu0
        %v8854 = vadd.f32 0.0, %v8853
        %v8855 = vpop.f32.mrf.mxu0
        %v8856 = vadd.f32 0.0, %v8855
        %8857 = vmatprep.mubr.bf16.mxu0 0
        %8858 = vmatmul.mubr.bf16.gmra.mxu0 %v8758
        %v8859 = vpop.f32.mrf.mxu0
        %v8860 = vadd.f32 0.0, %v8859
        %v8861 = vpop.f32.mrf.mxu0
        %v8862 = vadd.f32 0.0, %v8861
        %v8863 = vpop.f32.mrf.mxu0
        %v8864 = vadd.f32 0.0, %v8863
        %v8865 = vpop.f32.mrf.mxu0
        %v8866 = vadd.f32 0.0, %v8865
        %8867 = vmatprep.mubr.bf16.mxu0 0
        %8868 = vmatmul.mubr.bf16.gmra.mxu0 %v8761
        %v8869 = vpop.f32.mrf.mxu0
        %v8870 = vadd.f32 0.0, %v8869
        %v8871 = vpop.f32.mrf.mxu0
        %v8872 = vadd.f32 0.0, %v8871
        %v8873 = vpop.f32.mrf.mxu0
        %v8874 = vadd.f32 0.0, %v8873
        %v8875 = vpop.f32.mrf.mxu0
        %v8876 = vadd.f32 0.0, %v8875
        %8877 = vmatprep.mubr.bf16.mxu0 0
        %8878 = vmatmul.mubr.bf16.gmra.mxu0 %v8764
        %v8879 = vpop.f32.mrf.mxu0
        %v8880 = vadd.f32 0.0, %v8879
        %v8881 = vpop.f32.mrf.mxu0
        %v8882 = vadd.f32 0.0, %v8881
        %v8883 = vpop.f32.mrf.mxu0
        %v8884 = vadd.f32 0.0, %v8883
        %v8885 = vpop.f32.mrf.mxu0
        %v8886 = vadd.f32 0.0, %v8885
        %8887 = vmatprep.mubr.bf16.mxu0 0
        %8888 = vmatmul.mubr.bf16.gmra.mxu0 %v8767
        %v8889 = vpop.f32.mrf.mxu0
        %v8890 = vadd.f32 0.0, %v8889
        %v8891 = vpop.f32.mrf.mxu0
        %v8892 = vadd.f32 0.0, %v8891
        %v8893 = vpop.f32.mrf.mxu0
        %v8894 = vadd.f32 0.0, %v8893
        %v8895 = vpop.f32.mrf.mxu0
        %v8896 = vadd.f32 0.0, %v8895
        %8897 = vmatprep.mubr.bf16.mxu0 0
        %8898 = vmatmul.mubr.bf16.gmra.mxu0 %v8770
        %v8899 = vpop.f32.mrf.mxu0
        %v8900 = vadd.f32 0.0, %v8899
        %v8901 = vpop.f32.mrf.mxu0
        %v8902 = vadd.f32 0.0, %v8901
        %v8903 = vpop.f32.mrf.mxu0
        %v8904 = vadd.f32 0.0, %v8903
        %v8905 = vpop.f32.mrf.mxu0
        %v8906 = vadd.f32 0.0, %v8905
        %8907 = vmatprep.mubr.bf16.mxu0 0
        %8908 = vmatmul.mubr.bf16.gmra.mxu0 %v8773
        %v8909 = vpop.f32.mrf.mxu0
        %v8910 = vadd.f32 0.0, %v8909
        %v8911 = vpop.f32.mrf.mxu0
        %v8912 = vadd.f32 0.0, %v8911
        %v8913 = vpop.f32.mrf.mxu0
        %v8914 = vadd.f32 0.0, %v8913
        %v8915 = vpop.f32.mrf.mxu0
        %v8916 = vadd.f32 0.0, %v8915
        %8917 = vmatprep.mubr.bf16.mxu0 0
        %8918 = vmatmul.mubr.bf16.gmra.mxu0 %v8776
        %v8919 = vpop.f32.mrf.mxu0
        %v8920 = vadd.f32 0.0, %v8919
        %v8921 = vpop.f32.mrf.mxu0
        %v8922 = vadd.f32 0.0, %v8921
        %v8923 = vpop.f32.mrf.mxu0
        %v8924 = vadd.f32 0.0, %v8923
        %v8925 = vpop.f32.mrf.mxu0
        %v8926 = vadd.f32 0.0, %v8925
        %8927 = vmatprep.mubr.bf16.mxu0 0
        %8928 = vmatmul.mubr.bf16.gmra.mxu0 %v8779
        %v8929 = vpop.f32.mrf.mxu0
        %v8930 = vadd.f32 0.0, %v8929
        %v8931 = vpop.f32.mrf.mxu0
        %v8932 = vadd.f32 0.0, %v8931
        %v8933 = vpop.f32.mrf.mxu0
        %v8934 = vadd.f32 0.0, %v8933
        %v8935 = vpop.f32.mrf.mxu0
        %v8936 = vadd.f32 0.0, %v8935
        %8937 = vmatprep.mubr.bf16.mxu0 0
        %8938 = vmatmul.mubr.bf16.gmra.mxu0 %v8782
        %v8939 = vpop.f32.mrf.mxu0
        %v8940 = vadd.f32 0.0, %v8939
        %v8941 = vpop.f32.mrf.mxu0
        %v8942 = vadd.f32 0.0, %v8941
        %v8943 = vpop.f32.mrf.mxu0
        %v8944 = vadd.f32 0.0, %v8943
        %v8945 = vpop.f32.mrf.mxu0
        %v8946 = vadd.f32 0.0, %v8945
        %8947 = vmatprep.mubr.bf16.mxu0 0
        %8948 = vmatmul.mubr.bf16.gmra.mxu0 %v8785
        %v8949 = vpop.f32.mrf.mxu0
        %v8950 = vadd.f32 0.0, %v8949
        %v8951 = vpop.f32.mrf.mxu0
        %v8952 = vadd.f32 0.0, %v8951
        %v8953 = vpop.f32.mrf.mxu0
        %v8954 = vadd.f32 0.0, %v8953
        %v8955 = vpop.f32.mrf.mxu0
        %v8956 = vadd.f32 0.0, %v8955
        %8957 = vmatprep.mubr.bf16.mxu0 0
        %8958 = vmatmul.mubr.bf16.gmra.mxu0 %v8788
        %v8959 = vpop.f32.mrf.mxu0
        %v8960 = vadd.f32 0.0, %v8959
        %v8961 = vpop.f32.mrf.mxu0
        %v8962 = vadd.f32 0.0, %v8961
        %v8963 = vpop.f32.mrf.mxu0
        %v8964 = vadd.f32 0.0, %v8963
        %v8965 = vpop.f32.mrf.mxu0
        %v8966 = vadd.f32 0.0, %v8965
        %8967 = vmatprep.mubr.bf16.mxu0 0
        %8968 = vmatmul.mubr.bf16.gmra.mxu0 %v8791
        %v8969 = vpop.f32.mrf.mxu0
        %v8970 = vadd.f32 0.0, %v8969
        %v8971 = vpop.f32.mrf.mxu0
        %v8972 = vadd.f32 0.0, %v8971
        %v8973 = vpop.f32.mrf.mxu0
        %v8974 = vadd.f32 0.0, %v8973
        %v8975 = vpop.f32.mrf.mxu0
        %v8976 = vadd.f32 0.0, %v8975
        %8977 = vmatprep.mubr.bf16.mxu0 0
        %8978 = vmatmul.mubr.bf16.gmra.mxu0 %v8794
        %v8979 = vpop.f32.mrf.mxu0
        %v8980 = vadd.f32 0.0, %v8979
        %v8981 = vpop.f32.mrf.mxu0
        %v8982 = vadd.f32 0.0, %v8981
        %v8983 = vpop.f32.mrf.mxu0
        %v8984 = vadd.f32 0.0, %v8983
        %v8985 = vpop.f32.mrf.mxu0
        %v8986 = vadd.f32 0.0, %v8985
        %8987 = vmatprep.mubr.bf16.mxu0 0
        %8988 = vmatmul.mubr.bf16.gmra.mxu0 %v8797
        %v8989 = vpop.f32.mrf.mxu0
        %v8990 = vadd.f32 0.0, %v8989
        %v8991 = vpop.f32.mrf.mxu0
        %v8992 = vadd.f32 0.0, %v8991
        %v8993 = vpop.f32.mrf.mxu0
        %v8994 = vadd.f32 0.0, %v8993
        %v8995 = vpop.f32.mrf.mxu0
        %v8996 = vadd.f32 0.0, %v8995
        %8997 = vdwg.mxu0
        %v8998 = vmax.f32 %v8840, %v8842
        %8999 = vmax.xlane.f32.xlu0 %v8998
        %v9000 = vpop.xlane.xlu0 %8999
        %v9001 = vmax.f32 %v8844, %v8846
        %9002 = vmax.xlane.f32.xlu0 %v9001
        %v9003 = vpop.xlane.xlu0 %9002
        %v9004 = vmax.f32 %v8850, %v8852
        %9005 = vmax.xlane.f32.xlu0 %v9004
        %v9006 = vpop.xlane.xlu0 %9005
        %v9007 = vmax.f32 %v8854, %v8856
        %9008 = vmax.xlane.f32.xlu0 %v9007
        %v9009 = vpop.xlane.xlu0 %9008
        %v9010 = vmax.f32 %v8860, %v8862
        %9011 = vmax.xlane.f32.xlu0 %v9010
        %v9012 = vpop.xlane.xlu0 %9011
        %v9013 = vmax.f32 %v8864, %v8866
        %9014 = vmax.xlane.f32.xlu0 %v9013
        %v9015 = vpop.xlane.xlu0 %9014
        %v9016 = vmax.f32 %v8870, %v8872
        %9017 = vmax.xlane.f32.xlu0 %v9016
        %v9018 = vpop.xlane.xlu0 %9017
        %v9019 = vmax.f32 %v8874, %v8876
        %9020 = vmax.xlane.f32.xlu0 %v9019
        %v9021 = vpop.xlane.xlu0 %9020
        %v9022 = vmax.f32 %v8880, %v8882
        %9023 = vmax.xlane.f32.xlu0 %v9022
        %v9024 = vpop.xlane.xlu0 %9023
        %v9025 = vmax.f32 %v8884, %v8886
        %9026 = vmax.xlane.f32.xlu0 %v9025
        %v9027 = vpop.xlane.xlu0 %9026
        %v9028 = vmax.f32 %v8890, %v8892
        %9029 = vmax.xlane.f32.xlu0 %v9028
        %v9030 = vpop.xlane.xlu0 %9029
        %v9031 = vmax.f32 %v8894, %v8896
        %9032 = vmax.xlane.f32.xlu0 %v9031
        %v9033 = vpop.xlane.xlu0 %9032
        %v9034 = vmax.f32 %v8900, %v8902
        %9035 = vmax.xlane.f32.xlu0 %v9034
        %v9036 = vpop.xlane.xlu0 %9035
        %v9037 = vmax.f32 %v8904, %v8906
        %9038 = vmax.xlane.f32.xlu0 %v9037
        %v9039 = vpop.xlane.xlu0 %9038
        %v9040 = vmax.f32 %v8910, %v8912
        %9041 = vmax.xlane.f32.xlu0 %v9040
        %v9042 = vpop.xlane.xlu0 %9041
        %v9043 = vmax.f32 %v8914, %v8916
        %9044 = vmax.xlane.f32.xlu0 %v9043
        %v9045 = vpop.xlane.xlu0 %9044
        %v9046 = vmax.f32 %v8920, %v8922
        %9047 = vmax.xlane.f32.xlu0 %v9046
        %v9048 = vpop.xlane.xlu0 %9047
        %v9049 = vmax.f32 %v8924, %v8926
        %9050 = vmax.xlane.f32.xlu0 %v9049
        %v9051 = vpop.xlane.xlu0 %9050
        %v9052 = vmax.f32 %v8930, %v8932
        %9053 = vmax.xlane.f32.xlu0 %v9052
        %v9054 = vpop.xlane.xlu0 %9053
        %v9055 = vmax.f32 %v8934, %v8936
        %9056 = vmax.xlane.f32.xlu0 %v9055
        %v9057 = vpop.xlane.xlu0 %9056
        %v9058 = vmax.f32 %v8940, %v8942
        %9059 = vmax.xlane.f32.xlu0 %v9058
        %v9060 = vpop.xlane.xlu0 %9059
        %v9061 = vmax.f32 %v8944, %v8946
        %9062 = vmax.xlane.f32.xlu0 %v9061
        %v9063 = vpop.xlane.xlu0 %9062
        %v9064 = vmax.f32 %v8950, %v8952
        %9065 = vmax.xlane.f32.xlu0 %v9064
        %v9066 = vpop.xlane.xlu0 %9065
        %v9067 = vmax.f32 %v8954, %v8956
        %9068 = vmax.xlane.f32.xlu0 %v9067
        %v9069 = vpop.xlane.xlu0 %9068
        %v9070 = vmax.f32 %v8960, %v8962
        %9071 = vmax.xlane.f32.xlu0 %v9070
        %v9072 = vpop.xlane.xlu0 %9071
        %v9073 = vmax.f32 %v8964, %v8966
        %9074 = vmax.xlane.f32.xlu0 %v9073
        %v9075 = vpop.xlane.xlu0 %9074
        %v9076 = vmax.f32 %v8970, %v8972
        %9077 = vmax.xlane.f32.xlu0 %v9076
        %v9078 = vpop.xlane.xlu0 %9077
        %v9079 = vmax.f32 %v8974, %v8976
        %9080 = vmax.xlane.f32.xlu0 %v9079
        %v9081 = vpop.xlane.xlu0 %9080
        %v9082 = vmax.f32 %v8980, %v8982
        %9083 = vmax.xlane.f32.xlu0 %v9082
        %v9084 = vpop.xlane.xlu0 %9083
        %v9085 = vmax.f32 %v8984, %v8986
        %9086 = vmax.xlane.f32.xlu0 %v9085
        %v9087 = vpop.xlane.xlu0 %9086
        %v9088 = vmax.f32 %v8990, %v8992
        %9089 = vmax.xlane.f32.xlu0 %v9088
        %v9090 = vpop.xlane.xlu0 %9089
        %v9091 = vmax.f32 %v8994, %v8996
        %9092 = vmax.xlane.f32.xlu0 %v9091
        %v9093 = vpop.xlane.xlu0 %9092
        %v9094 = vsub.f32 %v8840, %v9000
        %v9095 = vsub.f32 %v8842, %v9000
        %v9096 = vsub.f32 %v8844, %v9003
        %v9097 = vsub.f32 %v8846, %v9003
        %v9098 = vsub.f32 %v8850, %v9006
        %v9099 = vsub.f32 %v8852, %v9006
        %v9100 = vsub.f32 %v8854, %v9009
        %v9101 = vsub.f32 %v8856, %v9009
        %v9102 = vsub.f32 %v8860, %v9012
        %v9103 = vsub.f32 %v8862, %v9012
        %v9104 = vsub.f32 %v8864, %v9015
        %v9105 = vsub.f32 %v8866, %v9015
        %v9106 = vsub.f32 %v8870, %v9018
        %v9107 = vsub.f32 %v8872, %v9018
        %v9108 = vsub.f32 %v8874, %v9021
        %v9109 = vsub.f32 %v8876, %v9021
        %v9110 = vsub.f32 %v8880, %v9024
        %v9111 = vsub.f32 %v8882, %v9024
        %v9112 = vsub.f32 %v8884, %v9027
        %v9113 = vsub.f32 %v8886, %v9027
        %v9114 = vsub.f32 %v8890, %v9030
        %v9115 = vsub.f32 %v8892, %v9030
        %v9116 = vsub.f32 %v8894, %v9033
        %v9117 = vsub.f32 %v8896, %v9033
        %v9118 = vsub.f32 %v8900, %v9036
        %v9119 = vsub.f32 %v8902, %v9036
        %v9120 = vsub.f32 %v8904, %v9039
        %v9121 = vsub.f32 %v8906, %v9039
        %v9122 = vsub.f32 %v8910, %v9042
        %v9123 = vsub.f32 %v8912, %v9042
        %v9124 = vsub.f32 %v8914, %v9045
        %v9125 = vsub.f32 %v8916, %v9045
        %v9126 = vsub.f32 %v8920, %v9048
        %v9127 = vsub.f32 %v8922, %v9048
        %v9128 = vsub.f32 %v8924, %v9051
        %v9129 = vsub.f32 %v8926, %v9051
        %v9130 = vsub.f32 %v8930, %v9054
        %v9131 = vsub.f32 %v8932, %v9054
        %v9132 = vsub.f32 %v8934, %v9057
        %v9133 = vsub.f32 %v8936, %v9057
        %v9134 = vsub.f32 %v8940, %v9060
        %v9135 = vsub.f32 %v8942, %v9060
        %v9136 = vsub.f32 %v8944, %v9063
        %v9137 = vsub.f32 %v8946, %v9063
        %v9138 = vsub.f32 %v8950, %v9066
        %v9139 = vsub.f32 %v8952, %v9066
        %v9140 = vsub.f32 %v8954, %v9069
        %v9141 = vsub.f32 %v8956, %v9069
        %v9142 = vsub.f32 %v8960, %v9072
        %v9143 = vsub.f32 %v8962, %v9072
        %v9144 = vsub.f32 %v8964, %v9075
        %v9145 = vsub.f32 %v8966, %v9075
        %v9146 = vsub.f32 %v8970, %v9078
        %v9147 = vsub.f32 %v8972, %v9078
        %v9148 = vsub.f32 %v8974, %v9081
        %v9149 = vsub.f32 %v8976, %v9081
        %v9150 = vsub.f32 %v8980, %v9084
        %v9151 = vsub.f32 %v8982, %v9084
        %v9152 = vsub.f32 %v8984, %v9087
        %v9153 = vsub.f32 %v8986, %v9087
        %v9154 = vsub.f32 %v8990, %v9090
        %v9155 = vsub.f32 %v8992, %v9090
        %v9156 = vsub.f32 %v8994, %v9093
        %v9157 = vsub.f32 %v8996, %v9093
        %v9158 = vmul.f32 %v9094, 1.442695
        %v9159 = vpow.pop %v9158
        %v9160 = vmul.f32 %v9095, 1.442695
        %v9161 = vpow.pop %v9160
        %v9162 = vmul.f32 %v9096, 1.442695
        %v9163 = vpow.pop %v9162
        %v9164 = vmul.f32 %v9097, 1.442695
        %v9165 = vpow.pop %v9164
        %v9166 = vmul.f32 %v9098, 1.442695
        %v9167 = vpow.pop %v9166
        %v9168 = vmul.f32 %v9099, 1.442695
        %v9169 = vpow.pop %v9168
        %v9170 = vmul.f32 %v9100, 1.442695
        %v9171 = vpow.pop %v9170
        %v9172 = vmul.f32 %v9101, 1.442695
        %v9173 = vpow.pop %v9172
        %v9174 = vmul.f32 %v9102, 1.442695
        %v9175 = vpow.pop %v9174
        %v9176 = vmul.f32 %v9103, 1.442695
        %v9177 = vpow.pop %v9176
        %v9178 = vmul.f32 %v9104, 1.442695
        %v9179 = vpow.pop %v9178
        %v9180 = vmul.f32 %v9105, 1.442695
        %v9181 = vpow.pop %v9180
        %v9182 = vmul.f32 %v9106, 1.442695
        %v9183 = vpow.pop %v9182
        %v9184 = vmul.f32 %v9107, 1.442695
        %v9185 = vpow.pop %v9184
        %v9186 = vmul.f32 %v9108, 1.442695
        %v9187 = vpow.pop %v9186
        %v9188 = vmul.f32 %v9109, 1.442695
        %v9189 = vpow.pop %v9188
        %v9190 = vmul.f32 %v9110, 1.442695
        %v9191 = vpow.pop %v9190
        %v9192 = vmul.f32 %v9111, 1.442695
        %v9193 = vpow.pop %v9192
        %v9194 = vmul.f32 %v9112, 1.442695
        %v9195 = vpow.pop %v9194
        %v9196 = vmul.f32 %v9113, 1.442695
        %v9197 = vpow.pop %v9196
        %v9198 = vmul.f32 %v9114, 1.442695
        %v9199 = vpow.pop %v9198
        %v9200 = vmul.f32 %v9115, 1.442695
        %v9201 = vpow.pop %v9200
        %v9202 = vmul.f32 %v9116, 1.442695
        %v9203 = vpow.pop %v9202
        %v9204 = vmul.f32 %v9117, 1.442695
        %v9205 = vpow.pop %v9204
        %v9206 = vmul.f32 %v9118, 1.442695
        %v9207 = vpow.pop %v9206
        %v9208 = vmul.f32 %v9119, 1.442695
        %v9209 = vpow.pop %v9208
        %v9210 = vmul.f32 %v9120, 1.442695
        %v9211 = vpow.pop %v9210
        %v9212 = vmul.f32 %v9121, 1.442695
        %v9213 = vpow.pop %v9212
        %v9214 = vmul.f32 %v9122, 1.442695
        %v9215 = vpow.pop %v9214
        %v9216 = vmul.f32 %v9123, 1.442695
        %v9217 = vpow.pop %v9216
        %v9218 = vmul.f32 %v9124, 1.442695
        %v9219 = vpow.pop %v9218
        %v9220 = vmul.f32 %v9125, 1.442695
        %v9221 = vpow.pop %v9220
        %v9222 = vmul.f32 %v9126, 1.442695
        %v9223 = vpow.pop %v9222
        %v9224 = vmul.f32 %v9127, 1.442695
        %v9225 = vpow.pop %v9224
        %v9226 = vmul.f32 %v9128, 1.442695
        %v9227 = vpow.pop %v9226
        %v9228 = vmul.f32 %v9129, 1.442695
        %v9229 = vpow.pop %v9228
        %v9230 = vmul.f32 %v9130, 1.442695
        %v9231 = vpow.pop %v9230
        %v9232 = vmul.f32 %v9131, 1.442695
        %v9233 = vpow.pop %v9232
        %v9234 = vmul.f32 %v9132, 1.442695
        %v9235 = vpow.pop %v9234
        %v9236 = vmul.f32 %v9133, 1.442695
        %v9237 = vpow.pop %v9236
        %v9238 = vmul.f32 %v9134, 1.442695
        %v9239 = vpow.pop %v9238
        %v9240 = vmul.f32 %v9135, 1.442695
        %v9241 = vpow.pop %v9240
        %v9242 = vmul.f32 %v9136, 1.442695
        %v9243 = vpow.pop %v9242
        %v9244 = vmul.f32 %v9137, 1.442695
        %v9245 = vpow.pop %v9244
        %v9246 = vmul.f32 %v9138, 1.442695
        %v9247 = vpow.pop %v9246
        %v9248 = vmul.f32 %v9139, 1.442695
        %v9249 = vpow.pop %v9248
        %v9250 = vmul.f32 %v9140, 1.442695
        %v9251 = vpow.pop %v9250
        %v9252 = vmul.f32 %v9141, 1.442695
        %v9253 = vpow.pop %v9252
        %v9254 = vmul.f32 %v9142, 1.442695
        %v9255 = vpow.pop %v9254
        %v9256 = vmul.f32 %v9143, 1.442695
        %v9257 = vpow.pop %v9256
        %v9258 = vmul.f32 %v9144, 1.442695
        %v9259 = vpow.pop %v9258
        %v9260 = vmul.f32 %v9145, 1.442695
        %v9261 = vpow.pop %v9260
        %v9262 = vmul.f32 %v9146, 1.442695
        %v9263 = vpow.pop %v9262
        %v9264 = vmul.f32 %v9147, 1.442695
        %v9265 = vpow.pop %v9264
        %v9266 = vmul.f32 %v9148, 1.442695
        %v9267 = vpow.pop %v9266
        %v9268 = vmul.f32 %v9149, 1.442695
        %v9269 = vpow.pop %v9268
        %v9270 = vmul.f32 %v9150, 1.442695
        %v9271 = vpow.pop %v9270
        %v9272 = vmul.f32 %v9151, 1.442695
        %v9273 = vpow.pop %v9272
        %v9274 = vmul.f32 %v9152, 1.442695
        %v9275 = vpow.pop %v9274
        %v9276 = vmul.f32 %v9153, 1.442695
        %v9277 = vpow.pop %v9276
        %v9278 = vmul.f32 %v9154, 1.442695
        %v9279 = vpow.pop %v9278
        %v9280 = vmul.f32 %v9155, 1.442695
        %v9281 = vpow.pop %v9280
        %v9282 = vmul.f32 %v9156, 1.442695
        %v9283 = vpow.pop %v9282
        %v9284 = vmul.f32 %v9157, 1.442695
        %v9285 = vpow.pop %v9284
        %9286 = vxpose.xlu0.b32.start [1/16] %v452, 128
        %9287 = vxpose.xlu0.b32.cont [2/16] 1.0, 128
        %9288 = vxpose.xlu0.b32.cont [3/16] 0.0, 128
        %9289 = vxpose.xlu0.b32.cont [4/16] 0.0, 128
        %9290 = vxpose.xlu0.b32.cont [5/16] 0.0, 128
        %9291 = vxpose.xlu0.b32.cont [6/16] 0.0, 128
        %9292 = vxpose.xlu0.b32.cont [7/16] 0.0, 128
        %9293 = vxpose.xlu0.b32.cont [8/16] 0.0, 128
        %9294 = vxpose.xlu0.b32.cont [9/16] 0.0, 128
        %9295 = vxpose.xlu0.b32.cont [10/16] 0.0, 128
        %9296 = vxpose.xlu0.b32.cont [11/16] 0.0, 128
        %9297 = vxpose.xlu0.b32.cont [12/16] 0.0, 128
        %9298 = vxpose.xlu0.b32.cont [13/16] 0.0, 128
        %9299 = vxpose.xlu0.b32.cont [14/16] 0.0, 128
        %9300 = vxpose.xlu0.b32.cont [15/16] 0.0, 128
        %9301 = vxpose.xlu0.b32.end [16/16] 0.0, 128
        %v9302 = vpop.trf.xlu0
        %v9303 = vpop.trf.xlu0
        %v9304 = vpop.trf.xlu0
        %v9305 = vpop.trf.xlu0
        %v9306 = vpop.trf.xlu0
        %v9307 = vpop.trf.xlu0
        %v9308 = vpop.trf.xlu0
        %v9309 = vpop.trf.xlu0
        %v9310 = vpop.trf.xlu0
        %v9311 = vpop.trf.xlu0
        %v9312 = vpop.trf.xlu0
        %v9313 = vpop.trf.xlu0
        %v9314 = vpop.trf.xlu0
        %v9315 = vpop.trf.xlu0
        %v9316 = vpop.trf.xlu0
        %v9317 = vpop.trf.xlu0
        %9318 = vxpose.xlu0.b32.start [1/16] %v454, 128
        %9319 = vxpose.xlu0.b32.cont [2/16] 1.0, 128
        %9320 = vxpose.xlu0.b32.cont [3/16] 0.0, 128
        %9321 = vxpose.xlu0.b32.cont [4/16] 0.0, 128
        %9322 = vxpose.xlu0.b32.cont [5/16] 0.0, 128
        %9323 = vxpose.xlu0.b32.cont [6/16] 0.0, 128
        %9324 = vxpose.xlu0.b32.cont [7/16] 0.0, 128
        %9325 = vxpose.xlu0.b32.cont [8/16] 0.0, 128
        %9326 = vxpose.xlu0.b32.cont [9/16] 0.0, 128
        %9327 = vxpose.xlu0.b32.cont [10/16] 0.0, 128
        %9328 = vxpose.xlu0.b32.cont [11/16] 0.0, 128
        %9329 = vxpose.xlu0.b32.cont [12/16] 0.0, 128
        %9330 = vxpose.xlu0.b32.cont [13/16] 0.0, 128
        %9331 = vxpose.xlu0.b32.cont [14/16] 0.0, 128
        %9332 = vxpose.xlu0.b32.cont [15/16] 0.0, 128
        %9333 = vxpose.xlu0.b32.end [16/16] 0.0, 128
        %v9334 = vpop.trf.xlu0
        %v9335 = vpop.trf.xlu0
        %v9336 = vpop.trf.xlu0
        %v9337 = vpop.trf.xlu0
        %v9338 = vpop.trf.xlu0
        %v9339 = vpop.trf.xlu0
        %v9340 = vpop.trf.xlu0
        %v9341 = vpop.trf.xlu0
        %v9342 = vpop.trf.xlu0
        %v9343 = vpop.trf.xlu0
        %v9344 = vpop.trf.xlu0
        %v9345 = vpop.trf.xlu0
        %v9346 = vpop.trf.xlu0
        %v9347 = vpop.trf.xlu0
        %v9348 = vpop.trf.xlu0
        %v9349 = vpop.trf.xlu0
        %v9350 = vpack.c.bf16 %v9163, %v9159
        %v9351 = vpack.c.bf16 %v9165, %v9161
        %v9352 = vpack.c.bf16 %v9171, %v9167
        %v9353 = vpack.c.bf16 %v9173, %v9169
        %v9354 = vpack.c.bf16 %v9179, %v9175
        %v9355 = vpack.c.bf16 %v9181, %v9177
        %v9356 = vpack.c.bf16 %v9187, %v9183
        %v9357 = vpack.c.bf16 %v9189, %v9185
        %v9358 = vpack.c.bf16 %v9195, %v9191
        %v9359 = vpack.c.bf16 %v9197, %v9193
        %v9360 = vpack.c.bf16 %v9203, %v9199
        %v9361 = vpack.c.bf16 %v9205, %v9201
        %v9362 = vpack.c.bf16 %v9211, %v9207
        %v9363 = vpack.c.bf16 %v9213, %v9209
        %v9364 = vpack.c.bf16 %v9219, %v9215
        %v9365 = vpack.c.bf16 %v9221, %v9217
        %v9366 = vpack.c.bf16 %v9227, %v9223
        %v9367 = vpack.c.bf16 %v9229, %v9225
        %v9368 = vpack.c.bf16 %v9235, %v9231
        %v9369 = vpack.c.bf16 %v9237, %v9233
        %v9370 = vpack.c.bf16 %v9243, %v9239
        %v9371 = vpack.c.bf16 %v9245, %v9241
        %v9372 = vpack.c.bf16 %v9251, %v9247
        %v9373 = vpack.c.bf16 %v9253, %v9249
        %v9374 = vpack.c.bf16 %v9259, %v9255
        %v9375 = vpack.c.bf16 %v9261, %v9257
        %v9376 = vpack.c.bf16 %v9267, %v9263
        %v9377 = vpack.c.bf16 %v9269, %v9265
        %v9378 = vpack.c.bf16 %v9275, %v9271
        %v9379 = vpack.c.bf16 %v9277, %v9273
        %v9380 = vpack.c.bf16 %v9283, %v9279
        %v9381 = vpack.c.bf16 %v9285, %v9281
        %v9382 = vpack.c.bf16 %v9303, %v9302
        %v9383 = vpack.c.bf16 %v9305, %v9304
        %v9384 = vpack.c.bf16 %v9307, %v9306
        %v9385 = vpack.c.bf16 %v9309, %v9308
        %v9386 = vpack.c.bf16 %v9311, %v9310
        %v9387 = vpack.c.bf16 %v9313, %v9312
        %v9388 = vpack.c.bf16 %v9315, %v9314
        %v9389 = vpack.c.bf16 %v9317, %v9316
        %v9390 = vpack.c.bf16 %v9335, %v9334
        %v9391 = vpack.c.bf16 %v9337, %v9336
        %v9392 = vpack.c.bf16 %v9339, %v9338
        %v9393 = vpack.c.bf16 %v9341, %v9340
        %v9394 = vpack.c.bf16 %v9343, %v9342
        %v9395 = vpack.c.bf16 %v9345, %v9344
        %v9396 = vpack.c.bf16 %v9347, %v9346
        %v9397 = vpack.c.bf16 %v9349, %v9348
        %9398 = vmatprep.subr.bf16.mxu0 0
        %9399 = vmatpush1.bf16.msra.mxu0 %v9389
        %9400 = vmatprep.subr.bf16.mxu0 0
        %9401 = vmatpush1.bf16.msra.mxu0 %v9388
        %9402 = vmatprep.subr.bf16.mxu0 0
        %9403 = vmatpush1.bf16.msra.mxu0 %v9387
        %9404 = vmatprep.subr.bf16.mxu0 0
        %9405 = vmatpush1.bf16.msra.mxu0 %v9386
        %9406 = vmatprep.subr.bf16.mxu0 0
        %9407 = vmatpush1.bf16.msra.mxu0 %v9385
        %9408 = vmatprep.subr.bf16.mxu0 0
        %9409 = vmatpush1.bf16.msra.mxu0 %v9384
        %9410 = vmatprep.subr.bf16.mxu0 0
        %9411 = vmatpush1.bf16.msra.mxu0 %v9383
        %9412 = vmatprep.subr.bf16.mxu0 0
        %9413 = vmatpush1.bf16.msra.mxu0 %v9382
        %9414 = vmatprep.subr.bf16.mxu0 0
        %9415 = vmatpush2.bf16.msra.mxu0 %v9397
        %9416 = vmatprep.subr.bf16.mxu0 0
        %9417 = vmatpush2.bf16.msra.mxu0 %v9396
        %9418 = vmatprep.subr.bf16.mxu0 0
        %9419 = vmatpush2.bf16.msra.mxu0 %v9395
        %9420 = vmatprep.subr.bf16.mxu0 0
        %9421 = vmatpush2.bf16.msra.mxu0 %v9394
        %9422 = vmatprep.subr.bf16.mxu0 0
        %9423 = vmatpush2.bf16.msra.mxu0 %v9393
        %9424 = vmatprep.subr.bf16.mxu0 0
        %9425 = vmatpush2.bf16.msra.mxu0 %v9392
        %9426 = vmatprep.subr.bf16.mxu0 0
        %9427 = vmatpush2.bf16.msra.mxu0 %v9391
        %9428 = vmatprep.subr.bf16.mxu0 0
        %9429 = vmatpush2.bf16.msra.mxu0 %v9390
        %9430 = vmatprep.mubr.bf16.mxu0 %v9351
        %9431 = vmatmul.mubr.bf16.gmra.mxu0 %v9350
        %v9432 = vpop.f32.mrf.mxu0
        %v9433 = vadd.f32 0.0, %v9432
        %v9434 = vpop.f32.mrf.mxu0
        %v9435 = vpop.f32.mrf.mxu0
        %v9436 = vadd.f32 0.0, %v9435
        %v9437 = vpop.f32.mrf.mxu0
        %9438 = vmatprep.mubr.bf16.mxu0 %v9353
        %9439 = vmatmul.mubr.bf16.gmra.mxu0 %v9352
        %v9440 = vpop.f32.mrf.mxu0
        %v9441 = vadd.f32 0.0, %v9440
        %v9442 = vpop.f32.mrf.mxu0
        %v9443 = vpop.f32.mrf.mxu0
        %v9444 = vadd.f32 0.0, %v9443
        %v9445 = vpop.f32.mrf.mxu0
        %9446 = vmatprep.mubr.bf16.mxu0 %v9355
        %9447 = vmatmul.mubr.bf16.gmra.mxu0 %v9354
        %v9448 = vpop.f32.mrf.mxu0
        %v9449 = vadd.f32 0.0, %v9448
        %v9450 = vpop.f32.mrf.mxu0
        %v9451 = vpop.f32.mrf.mxu0
        %v9452 = vadd.f32 0.0, %v9451
        %v9453 = vpop.f32.mrf.mxu0
        %9454 = vmatprep.mubr.bf16.mxu0 %v9357
        %9455 = vmatmul.mubr.bf16.gmra.mxu0 %v9356
        %v9456 = vpop.f32.mrf.mxu0
        %v9457 = vadd.f32 0.0, %v9456
        %v9458 = vpop.f32.mrf.mxu0
        %v9459 = vpop.f32.mrf.mxu0
        %v9460 = vadd.f32 0.0, %v9459
        %v9461 = vpop.f32.mrf.mxu0
        %9462 = vmatprep.mubr.bf16.mxu0 %v9359
        %9463 = vmatmul.mubr.bf16.gmra.mxu0 %v9358
        %v9464 = vpop.f32.mrf.mxu0
        %v9465 = vadd.f32 0.0, %v9464
        %v9466 = vpop.f32.mrf.mxu0
        %v9467 = vpop.f32.mrf.mxu0
        %v9468 = vadd.f32 0.0, %v9467
        %v9469 = vpop.f32.mrf.mxu0
        %9470 = vmatprep.mubr.bf16.mxu0 %v9361
        %9471 = vmatmul.mubr.bf16.gmra.mxu0 %v9360
        %v9472 = vpop.f32.mrf.mxu0
        %v9473 = vadd.f32 0.0, %v9472
        %v9474 = vpop.f32.mrf.mxu0
        %v9475 = vpop.f32.mrf.mxu0
        %v9476 = vadd.f32 0.0, %v9475
        %v9477 = vpop.f32.mrf.mxu0
        %9478 = vmatprep.mubr.bf16.mxu0 %v9363
        %9479 = vmatmul.mubr.bf16.gmra.mxu0 %v9362
        %v9480 = vpop.f32.mrf.mxu0
        %v9481 = vadd.f32 0.0, %v9480
        %v9482 = vpop.f32.mrf.mxu0
        %v9483 = vpop.f32.mrf.mxu0
        %v9484 = vadd.f32 0.0, %v9483
        %v9485 = vpop.f32.mrf.mxu0
        %9486 = vmatprep.mubr.bf16.mxu0 %v9365
        %9487 = vmatmul.mubr.bf16.gmra.mxu0 %v9364
        %v9488 = vpop.f32.mrf.mxu0
        %v9489 = vadd.f32 0.0, %v9488
        %v9490 = vpop.f32.mrf.mxu0
        %v9491 = vpop.f32.mrf.mxu0
        %v9492 = vadd.f32 0.0, %v9491
        %v9493 = vpop.f32.mrf.mxu0
        %9494 = vmatprep.mubr.bf16.mxu0 %v9367
        %9495 = vmatmul.mubr.bf16.gmra.mxu0 %v9366
        %v9496 = vpop.f32.mrf.mxu0
        %v9497 = vadd.f32 0.0, %v9496
        %v9498 = vpop.f32.mrf.mxu0
        %v9499 = vpop.f32.mrf.mxu0
        %v9500 = vadd.f32 0.0, %v9499
        %v9501 = vpop.f32.mrf.mxu0
        %9502 = vmatprep.mubr.bf16.mxu0 %v9369
        %9503 = vmatmul.mubr.bf16.gmra.mxu0 %v9368
        %v9504 = vpop.f32.mrf.mxu0
        %v9505 = vadd.f32 0.0, %v9504
        %v9506 = vpop.f32.mrf.mxu0
        %v9507 = vpop.f32.mrf.mxu0
        %v9508 = vadd.f32 0.0, %v9507
        %v9509 = vpop.f32.mrf.mxu0
        %9510 = vmatprep.mubr.bf16.mxu0 %v9371
        %9511 = vmatmul.mubr.bf16.gmra.mxu0 %v9370
        %v9512 = vpop.f32.mrf.mxu0
        %v9513 = vadd.f32 0.0, %v9512
        %v9514 = vpop.f32.mrf.mxu0
        %v9515 = vpop.f32.mrf.mxu0
        %v9516 = vadd.f32 0.0, %v9515
        %v9517 = vpop.f32.mrf.mxu0
        %9518 = vmatprep.mubr.bf16.mxu0 %v9373
        %9519 = vmatmul.mubr.bf16.gmra.mxu0 %v9372
        %v9520 = vpop.f32.mrf.mxu0
        %v9521 = vadd.f32 0.0, %v9520
        %v9522 = vpop.f32.mrf.mxu0
        %v9523 = vpop.f32.mrf.mxu0
        %v9524 = vadd.f32 0.0, %v9523
        %v9525 = vpop.f32.mrf.mxu0
        %9526 = vmatprep.mubr.bf16.mxu0 %v9375
        %9527 = vmatmul.mubr.bf16.gmra.mxu0 %v9374
        %v9528 = vpop.f32.mrf.mxu0
        %v9529 = vadd.f32 0.0, %v9528
        %v9530 = vpop.f32.mrf.mxu0
        %v9531 = vpop.f32.mrf.mxu0
        %v9532 = vadd.f32 0.0, %v9531
        %v9533 = vpop.f32.mrf.mxu0
        %9534 = vmatprep.mubr.bf16.mxu0 %v9377
        %9535 = vmatmul.mubr.bf16.gmra.mxu0 %v9376
        %v9536 = vpop.f32.mrf.mxu0
        %v9537 = vadd.f32 0.0, %v9536
        %v9538 = vpop.f32.mrf.mxu0
        %v9539 = vpop.f32.mrf.mxu0
        %v9540 = vadd.f32 0.0, %v9539
        %v9541 = vpop.f32.mrf.mxu0
        %9542 = vmatprep.mubr.bf16.mxu0 %v9379
        %9543 = vmatmul.mubr.bf16.gmra.mxu0 %v9378
        %v9544 = vpop.f32.mrf.mxu0
        %v9545 = vadd.f32 0.0, %v9544
        %v9546 = vpop.f32.mrf.mxu0
        %v9547 = vpop.f32.mrf.mxu0
        %v9548 = vadd.f32 0.0, %v9547
        %v9549 = vpop.f32.mrf.mxu0
        %9550 = vmatprep.mubr.bf16.mxu0 %v9381
        %9551 = vmatmul.mubr.bf16.gmra.mxu0 %v9380
        %v9552 = vpop.f32.mrf.mxu0
        %v9553 = vadd.f32 0.0, %v9552
        %v9554 = vpop.f32.mrf.mxu0
        %v9555 = vpop.f32.mrf.mxu0
        %v9556 = vadd.f32 0.0, %v9555
        %v9557 = vpop.f32.mrf.mxu0
        %9558 = vdwg.mxu0
        %9559 = vxpose.xlu0.b32.start [1/16] %v9433, 128
        %9560 = vxpose.xlu0.b32.cont [2/16] %v9436, 128
        %9561 = vxpose.xlu0.b32.cont [3/16] %v9441, 128
        %9562 = vxpose.xlu0.b32.cont [4/16] %v9444, 128
        %9563 = vxpose.xlu0.b32.cont [5/16] %v9449, 128
        %9564 = vxpose.xlu0.b32.cont [6/16] %v9452, 128
        %9565 = vxpose.xlu0.b32.cont [7/16] %v9457, 128
        %9566 = vxpose.xlu0.b32.cont [8/16] %v9460, 128
        %9567 = vxpose.xlu0.b32.cont [9/16] %v9465, 128
        %9568 = vxpose.xlu0.b32.cont [10/16] %v9468, 128
        %9569 = vxpose.xlu0.b32.cont [11/16] %v9473, 128
        %9570 = vxpose.xlu0.b32.cont [12/16] %v9476, 128
        %9571 = vxpose.xlu0.b32.cont [13/16] %v9481, 128
        %9572 = vxpose.xlu0.b32.cont [14/16] %v9484, 128
        %9573 = vxpose.xlu0.b32.cont [15/16] %v9489, 128
        %9574 = vxpose.xlu0.b32.end [16/16] %v9492, 128
        %v9575 = vpop.trf.xlu0
        %v9576 = vpop.trf.xlu0
        %v9577 = vpop.trf.xlu0
        %v9578 = vpop.trf.xlu0
        %v9579 = vpop.trf.xlu0
        %v9580 = vpop.trf.xlu0
        %v9581 = vpop.trf.xlu0
        %v9582 = vpop.trf.xlu0
        %v9583 = vpop.trf.xlu0
        %v9584 = vpop.trf.xlu0
        %v9585 = vpop.trf.xlu0
        %v9586 = vpop.trf.xlu0
        %v9587 = vpop.trf.xlu0
        %v9588 = vpop.trf.xlu0
        %v9589 = vpop.trf.xlu0
        %v9590 = vpop.trf.xlu0
        %9591 = vxpose.xlu0.b32.start [1/16] %v9497, 128
        %9592 = vxpose.xlu0.b32.cont [2/16] %v9500, 128
        %9593 = vxpose.xlu0.b32.cont [3/16] %v9505, 128
        %9594 = vxpose.xlu0.b32.cont [4/16] %v9508, 128
        %9595 = vxpose.xlu0.b32.cont [5/16] %v9513, 128
        %9596 = vxpose.xlu0.b32.cont [6/16] %v9516, 128
        %9597 = vxpose.xlu0.b32.cont [7/16] %v9521, 128
        %9598 = vxpose.xlu0.b32.cont [8/16] %v9524, 128
        %9599 = vxpose.xlu0.b32.cont [9/16] %v9529, 128
        %9600 = vxpose.xlu0.b32.cont [10/16] %v9532, 128
        %9601 = vxpose.xlu0.b32.cont [11/16] %v9537, 128
        %9602 = vxpose.xlu0.b32.cont [12/16] %v9540, 128
        %9603 = vxpose.xlu0.b32.cont [13/16] %v9545, 128
        %9604 = vxpose.xlu0.b32.cont [14/16] %v9548, 128
        %9605 = vxpose.xlu0.b32.cont [15/16] %v9553, 128
        %9606 = vxpose.xlu0.b32.end [16/16] %v9556, 128
        %v9607 = vpop.trf.xlu0
        %v9608 = vpop.trf.xlu0
        %v9609 = vpop.trf.xlu0
        %v9610 = vpop.trf.xlu0
        %v9611 = vpop.trf.xlu0
        %v9612 = vpop.trf.xlu0
        %v9613 = vpop.trf.xlu0
        %v9614 = vpop.trf.xlu0
        %v9615 = vpop.trf.xlu0
        %v9616 = vpop.trf.xlu0
        %v9617 = vpop.trf.xlu0
        %v9618 = vpop.trf.xlu0
        %v9619 = vpop.trf.xlu0
        %v9620 = vpop.trf.xlu0
        %v9621 = vpop.trf.xlu0
        %v9622 = vpop.trf.xlu0
        %v9623 = vrcp.pop %v9576
        %v9624 = vrcp.pop %v9608
        %v9625 = vlaneseq
        %v9626 = vshrl.u32 %v9625, 7
        %v9627 = vsub.s32 0, %v9626
        %v9628 = vrot.slane %v9623, %v9627
        %v9629 = vlaneseq
        %v9630 = vshrl.u32 %v9629, 7
        %v9631 = vsub.s32 0, %v9630
        %v9632 = vrot.slane %v9624, %v9631
        %v9633 = vmul.f32 %v9575, %v9628
        %v9634 = vmul.f32 %v9607, %v9632
        %9635 = vst [vmem:[%s340] sm:$0xff] %v9633
        %9636 = vst [vmem:[%s340 + $0x8] sm:$0xff] %v9634
        %s9637 = sand.u32 %s172, 1
        %s9638 = scalar_lea.sflag [#allocation4], %s9637
        %s9639 = sand.u32 %s172, 1
        %s9640 = smul.addr %s9639, 16
        %s9641 = scalar_lea.vmem [#allocation8], %s9640
        // Predicated region
        $region53: #{tpu_custom_call.1} parent=39 // pred_check
          %p9642 = pneg %p182
        $region54: #{tpu_custom_call.1} parent=39 // pred_check_branch
          %9644 = sbr.rel (%p9642) target = $region56
        $region55: #{tpu_custom_call.1} parent=39 // pred_region
          %s9646 = ssub.s32 256, 256
          %9647 = vsyncadd %s9638, %s9646
          %s9648 = smul.addr %s30, 2
          %s9649 = smul.addr %s29, 4
          %s9650 = sadd.s32 %s9648, %s9649
          %s9651 = smul.addr %s9650, 128
          %s9652 = scalar_lea.hbm %s5, %s9651
          %s9654 = sshll.u32 %s9641, 4
          %s9655 = int_to_ptr.vmem [resolvable:$true] %s9654
          %9657 = dma.vmem_to_hbm [thread:$0]  %s9655, 256, %s9652, %s9638
        $region56: #{tpu_custom_call.1} parent=39 // pred_fallthru
          _
      $region40: #{tpu_custom_call.1} parent=5 // pred_fallthru
        _
      %p9658 = scmp.le.s32.totalorder 2, %s20
      // Predicated region
      $region57: #{tpu_custom_call.1} parent=5 // pred_check
        %p9659 = pneg %p9658
      $region58: #{tpu_custom_call.1} parent=5 // pred_check_branch
        %9661 = sbr.rel (%p9659) target = $region60
      $region59: #{tpu_custom_call.1} parent=5 // pred_region
        %s9662 = ssub.s32 %s20, 2
        // Predicated region
        $region61: #{tpu_custom_call.1} parent=59 // pred_check
          %p9663 = pneg %p188
        $region62: #{tpu_custom_call.1} parent=59 // pred_check_branch
          %9665 = sbr.rel (%p9663) target = $region64
        $region63: #{tpu_custom_call.1} parent=59 // pred_region
          %s9666 = sand.u32 %s173, 1
          %s9667 = scalar_lea.sflag [#allocation4], %s9666
          %s9668 = sand.u32 %s173, 1
          %s9669 = smul.addr %s9668, 16
          %s9670 = scalar_lea.vmem [#allocation8], %s9669
          %9671 = dma.done %s9667, 256
        $region64: #{tpu_custom_call.1} parent=59 // pred_fallthru
          _
      $region60: #{tpu_custom_call.1} parent=5 // pred_fallthru
        _
    $region6: #{tpu_custom_call.1} parent=1 // loop_footer
      %s24 = sadd.s32 1, %s20
    $region7: #{tpu_custom_call.1} parent=1 // loop_footer_branch
      %19 = sbr.rel target = $region3
    $region8: #{tpu_custom_call.1} parent=1 // loop_exit
      _
    %9672 = vsyncpa [#allocation3], 1
    %s9673 = scalar_lea.sflag [#allocation3], 1
    %9674 = vsyncpa %s9673, 1
    %9675 = vsyncpa [#allocation6], 1
    %s9676 = scalar_lea.sflag [#allocation6], 1
    %9677 = vsyncpa %s9676, 1
    %9678 = vsyncpa [#allocation4], 1
    %s9679 = scalar_lea.sflag [#allocation4], 1
    %9680 = vsyncpa %s9679, 1

</llo_original>
